<compile_context>
chip_gen: v6e
topology: v6e:2x2x1
jax: 0.10.0
libtpu: 0.0.40
codegen_flags: <defaults>
</compile_context>

<pallas_src>
import jax
import jax.numpy as jnp
import numpy as np
from jax.experimental import pallas as pl
from jax.experimental.pallas import tpu as pltpu

_FC_K_PAD = 8192   # 7744 zero-padded up to a multiple of the K tile
_FC_TK = 4096      # K tile for FC1 (2 grid steps)
_CONV_MT = 2048    # max lane tile for the fused conv+pool+relu kernel


def _round_up(x, m):
    return (x + m - 1) // m * m


# ----------------------------------------------------------------------------
# Pallas kernels
# ----------------------------------------------------------------------------
def _conv_pool_relu_kernel(w_ref, b_ref, a_ref, o_ref):
    # a_ref: (4, P, Mt) bf16 patches -- leading axis enumerates the 2x2 pool window.
    # out[co, m] = relu(max_pos (w @ a[pos])[co, m] + b[co])   (pooled, lane-dense)
    w = w_ref[...]
    acc = jnp.dot(w, a_ref[0], preferred_element_type=jnp.float32)
    for pos in range(1, 4):
        acc = jnp.maximum(
            acc, jnp.dot(w, a_ref[pos], preferred_element_type=jnp.float32))
    o_ref[...] = jnp.maximum(acc + b_ref[...], 0.0).astype(o_ref.dtype)


def _fc_fused_kernel(a_ref, w1_ref, b1_ref, w2_ref, b2_ref, o_ref, acc_ref):
    # FC1 (K-tiled, bf16 inputs, f32 accumulation) + ReLU + FC2, single kernel.
    k = pl.program_id(0)

    @pl.when(k == 0)
    def _():
        acc_ref[...] = jnp.zeros_like(acc_ref)

    acc_ref[...] += jnp.dot(a_ref[...], w1_ref[...],
                            preferred_element_type=jnp.float32)

    @pl.when(k == pl.num_programs(0) - 1)
    def _():
        h = jnp.maximum(acc_ref[...] + b1_ref[...], 0.0)            # (Nb,256) f32
        logits = jnp.dot(h, w2_ref[...],
                         preferred_element_type=jnp.float32) + b2_ref[...]
        o_ref[...] = logits.astype(o_ref.dtype)


# ----------------------------------------------------------------------------
# Fused conv3x3('same') + 2x2 maxpool(stride 2) + ReLU stage
# ----------------------------------------------------------------------------
def _build_pool_patches(y):
    """y: (Cin, N, H, W) -> (4, 9*Cin, N*(H//2)*(W//2)) such that
    patches[2a+b, (3dh+dw)*Cin+ci, (n,ho,wo)] = ypad[ci, n, 2ho+a+dh, 2wo+b+dw]."""
    # TODO(synk): patch extraction is still XLA-side data movement (bf16, pooled
    # granularity); a fully in-kernel shifted-accumulation conv would remove the
    # remaining 9x read amplification on the conv inputs.
    Cin, N, H, W = y.shape
    Ho, Wo = H // 2, W // 2
    yp = jnp.pad(y, ((0, 0), (0, 0), (1, 1), (1, 1)))
    pos_list = []
    for a in range(2):
        for b in range(2):
            taps = [yp[:, :, a + dh: a + dh + H: 2, b + dw: b + dw + W: 2]
                    for dh in range(3) for dw in range(3)]
            pos_list.append(jnp.stack(taps, axis=0))        # (9, Cin, N, Ho, Wo)
    patches = jnp.stack(pos_list, axis=0)                   # (4, 9, Cin, N, Ho, Wo)
    return patches.reshape(4, 9 * Cin, N * Ho * Wo)


def conv_pool_relu(y, wmat, bcol):
    """relu(maxpool2x2(conv3x3_same(y) + b)); y: (Cin,N,H,W) bf16 -> (Cout,N,H//2,W//2) bf16."""
    Cin, N, H, W = y.shape
    Cout, P = wmat.shape
    assert P == 9 * Cin and H % 2 == 0 and W % 2 == 0
    Ho, Wo = H // 2, W // 2
    Mp = N * Ho * Wo
    patches = _build_pool_patches(y)                        # (4, P, Mp) bf16
    Mt = min(_CONV_MT, _round_up(Mp, 512))
    Mp_pad = _round_up(Mp, Mt)
    if Mp_pad > Mp:                                         # keep every tile lane-dense
        patches = jnp.pad(patches, ((0, 0), (0, 0), (0, Mp_pad - Mp)))
    out = pl.pallas_call(
        _conv_pool_relu_kernel,
        out_shape=jax.ShapeDtypeStruct((Cout, Mp_pad), jnp.bfloat16),
        grid=(Mp_pad // Mt,),
        in_specs=[
            pl.BlockSpec((Cout, P), lambda m: (0, 0)),      # weights: VMEM-resident
            pl.BlockSpec((Cout, 1), lambda m: (0, 0)),      # bias
            pl.BlockSpec((4, P, Mt), lambda m: (0, 0, m)),  # streamed patch tile
        ],
        out_specs=pl.BlockSpec((Cout, Mt), lambda m: (0, m)),
        compiler_params=pltpu.CompilerParams(
            dimension_semantics=("parallel",)),             # v7x: split M over both TCs
    )(wmat, bcol, patches)
    return out[:, :Mp].reshape(Cout, N, Ho, Wo)


# ----------------------------------------------------------------------------
# Fused FC1 + ReLU + FC2
# ----------------------------------------------------------------------------
def fc_fused(a, w1t, b1row, w2t, b2row, *, tk=_FC_TK):
    """relu(a @ w1t + b1) @ w2t + b2, fused; a:(Nb,Kp) bf16, w1t:(Kp,H) bf16."""
    Nb, Kp = a.shape
    K2, H = w1t.shape
    H2, O = w2t.shape
    assert Kp == K2 and H == H2 and Kp % tk == 0
    return pl.pallas_call(
        _fc_fused_kernel,
        out_shape=jax.ShapeDtypeStruct((Nb, O), jnp.float32),
        grid=(Kp // tk,),
        in_specs=[
            pl.BlockSpec((Nb, tk), lambda k: (0, k)),       # activation K-slice
            pl.BlockSpec((tk, H), lambda k: (k, 0)),        # wl1^T K-slice (bf16 stream)
            pl.BlockSpec((1, H), lambda k: (0, 0)),
            pl.BlockSpec((H, O), lambda k: (0, 0)),
            pl.BlockSpec((1, O), lambda k: (0, 0)),
        ],
        out_specs=pl.BlockSpec((Nb, O), lambda k: (0, 0)),
        scratch_shapes=[pltpu.VMEM((Nb, H), jnp.float32)],
        compiler_params=pltpu.CompilerParams(
            dimension_semantics=("arbitrary",)),
    )(a, w1t, b1row, w2t, b2row)


# ----------------------------------------------------------------------------
# Forward pass (XLA glue is data movement only; all MACs run in Pallas)
# ----------------------------------------------------------------------------
def forward(prep, x_nchw):
    N = x_nchw.shape[0]
    y = jnp.transpose(x_nchw, (1, 0, 2, 3)).astype(jnp.bfloat16)   # (1, N, 88, 88) CNHW
    y = conv_pool_relu(y, prep["w0mat"], prep["b0col"])            # (16, N, 44, 44)
    y = conv_pool_relu(y, prep["w1mat"], prep["b1col"])            # (16, N, 22, 22)
    C, _, Ho, Wo = y.shape
    # PyTorch flatten order: per-sample (c, h, w).
    flat = jnp.transpose(y, (1, 0, 2, 3)).reshape(N, C * Ho * Wo)  # (N, 7744) bf16
    k_pad = prep["wl1t"].shape[0]
    flat = jnp.pad(flat, ((0, 0), (0, k_pad - flat.shape[1])))     # (N, 8192) bf16
    return fc_fused(flat, prep["wl1t"], prep["bl1row"],
                    prep["wl2t"], prep["bl2row"])


# ----------------------------------------------------------------------------
# One-time parameter preparation (outside jit): transposes, padding, bf16 cast
# ----------------------------------------------------------------------------
def prepare_params(params):
    w0, b0 = params["w0"], params["b0"]
    w1, b1 = params["w1"], params["b1"]
    wl1, bl1 = params["wl1"], params["bl1"]
    wl2, bl2 = params["wl2"], params["bl2"]
    # Conv weights as (Cout, kh*kw*Cin) matching tap-major patch ordering; bf16 for MXU.
    w0mat = jnp.transpose(w0, (0, 2, 3, 1)).reshape(16, 9).astype(jnp.bfloat16)
    w1mat = jnp.transpose(w1, (0, 2, 3, 1)).reshape(16, 9 * 16).astype(jnp.bfloat16)
    # FC1 weight: pre-transpose to (K, 256), zero-pad K to 8192, cast to bf16.
    wl1t = jnp.pad(wl1.T, ((0, _FC_K_PAD - wl1.shape[1]), (0, 0))).astype(jnp.bfloat16)
    return {
        "w0mat": w0mat, "b0col": b0.reshape(16, 1).astype(jnp.float32),
        "w1mat": w1mat, "b1col": b1.reshape(16, 1).astype(jnp.float32),
        "wl1t": wl1t, "bl1row": bl1.reshape(1, 256).astype(jnp.float32),
        "wl2t": wl2.T.astype(jnp.float32),
        "bl2row": bl2.reshape(1, 10).astype(jnp.float32),
    }


# ----------------------------------------------------------------------------
# Pure-XLA reference (independent path, correctness check only)
# ----------------------------------------------------------------------------
def reference_forward(params, x):
    hi = jax.lax.Precision.HIGHEST
    dn = ("NCHW", "OIHW", "NCHW")
    y = jax.lax.conv_general_dilated(x, params["w0"], (1, 1), ((1, 1), (1, 1)),
                                     dimension_numbers=dn, precision=hi)
    y = y + params["b0"][None, :, None, None]
    y = jax.lax.reduce_window(y, -jnp.inf, jax.lax.max,
                              (1, 1, 2, 2), (1, 1, 2, 2), "VALID")
    y = jnp.maximum(y, 0.0)
    y = jax.lax.conv_general_dilated(y, params["w1"], (1, 1), ((1, 1), (1, 1)),
                                     dimension_numbers=dn, precision=hi)
    y = y + params["b1"][None, :, None, None]
    y = jax.lax.reduce_window(y, -jnp.inf, jax.lax.max,
                              (1, 1, 2, 2), (1, 1, 2, 2), "VALID")
    y = jnp.maximum(y, 0.0)
    flat = y.reshape(x.shape[0], -1)
    h = jnp.maximum(jnp.dot(flat, params["wl1"].T, precision=hi) + params["bl1"], 0.0)
    return jnp.dot(h, params["wl2"].T, precision=hi) + params["bl2"]


# ----------------------------------------------------------------------------
# Deterministic parameter init (PyTorch-style uniform bounds; classif=True)
# ----------------------------------------------------------------------------
def init_params(key):
    ks = jax.random.split(key, 8)

    def u(k, shape, fan_in):
        bound = 1.0 / float(np.sqrt(fan_in))
        return jax.random.uniform(k, shape, jnp.float32, -bound, bound)

    return {
        "w0": u(ks[0], (16, 1, 3, 3), 9),
        "b0": u(ks[1], (16,), 9),
        "w1": u(ks[2], (16, 16, 3, 3), 144),
        "b1": u(ks[3], (16,), 144),
        "wl1": u(ks[4], (256, 7744), 7744),
        "bl1": u(ks[5], (256,), 7744),
        "wl2": u(ks[6], (10, 256), 256),   # classif=True head: 256 -> 10
        "bl2": u(ks[7], (10,), 256),
    }


if __name__ == "__main__":
    root = jax.random.PRNGKey(0)
    pkey, xkey = jax.random.split(root)
    params = init_params(pkey)
    prep = prepare_params(params)      # one-time: transpose / pad / bf16 cast

    # NCHW input; 1 channel, 88x88 spatial (required by the 7744-wide Linear).
    x = jax.random.normal(xkey, (2, 1, 88, 88), jnp.float32)

    logits = jax.jit(forward)(prep, x)
    logits = jax.block_until_ready(logits)

    ref = reference_forward(params, x)
    assert logits.shape == (2, 10), logits.shape
    assert bool(jnp.all(jnp.isfinite(logits)))
    assert bool(jnp.allclose(logits, ref, rtol=2e-2, atol=2e-2)), (
        float(jnp.max(jnp.abs(logits - ref))))
    print("KERNEL_OK")
</pallas_src>

<mosaic_0001>
module attributes {stable_mosaic.version = 11 : i64} {
  func.func @_conv_pool_relu_kernel(%arg0: i32, %arg1: memref<16x9xbf16, #tpu.memory_space<vmem>>, %arg2: memref<16x1xf32, #tpu.memory_space<vmem>>, %arg3: memref<4x9x2048xbf16, #tpu.memory_space<vmem>>, %arg4: memref<16x2048xbf16, #tpu.memory_space<vmem>>) attributes {dimension_semantics = [#tpu.dimension_semantics<parallel>], iteration_bounds = array<i64: 2>, scalar_prefetch = 0 : i64, scratch_operands = 0 : i64, tpu.core_type = #tpu.core_type<tc>, window_params = [{pipeline_mode = #tpu.pipeline_mode<synchronous>, transform_indices = @transform_0, window_bounds = array<i64: 16, 9>}, {pipeline_mode = #tpu.pipeline_mode<synchronous>, transform_indices = @transform_1, window_bounds = array<i64: 16, 1>}, {transform_indices = @transform_2, window_bounds = array<i64: 4, 9, 2048>}, {transform_indices = @transform_3, window_bounds = array<i64: 16, 2048>}]} {
    %c0 = arith.constant 0 : index
    %c0_0 = arith.constant 0 : index
    %0 = vector.load %arg1[%c0, %c0_0] : memref<16x9xbf16, #tpu.memory_space<vmem>>, vector<16x9xbf16>
    %c0_1 = arith.constant 0 : index
    %c0_2 = arith.constant 0 : index
    %c0_3 = arith.constant 0 : index
    %1 = vector.load %arg3[%c0_1, %c0_2, %c0_3] : memref<4x9x2048xbf16, #tpu.memory_space<vmem>>, vector<1x9x2048xbf16>
    %2 = vector.shape_cast %1 : vector<1x9x2048xbf16> to vector<9x2048xbf16>
    %cst = arith.constant dense<0.000000e+00> : vector<16x2048xf32>
    %3 = tpu.matmul %0, %2, %cst {dimension_numbers = #tpu.dot_dimension_numbers<[1], [0], [0], [1], [0, 0, 1, 1], [], []>} : vector<16x9xbf16>, vector<9x2048xbf16>, vector<16x2048xf32> -> vector<16x2048xf32>
    %c1 = arith.constant 1 : index
    %c0_4 = arith.constant 0 : index
    %c0_5 = arith.constant 0 : index
    %4 = vector.load %arg3[%c1, %c0_4, %c0_5] : memref<4x9x2048xbf16, #tpu.memory_space<vmem>>, vector<1x9x2048xbf16>
    %5 = vector.shape_cast %4 : vector<1x9x2048xbf16> to vector<9x2048xbf16>
    %cst_6 = arith.constant dense<0.000000e+00> : vector<16x2048xf32>
    %6 = tpu.matmul %0, %5, %cst_6 {dimension_numbers = #tpu.dot_dimension_numbers<[1], [0], [0], [1], [0, 0, 1, 1], [], []>} : vector<16x9xbf16>, vector<9x2048xbf16>, vector<16x2048xf32> -> vector<16x2048xf32>
    %7 = arith.maximumf %3, %6 : vector<16x2048xf32>
    %c2 = arith.constant 2 : index
    %c0_7 = arith.constant 0 : index
    %c0_8 = arith.constant 0 : index
    %8 = vector.load %arg3[%c2, %c0_7, %c0_8] : memref<4x9x2048xbf16, #tpu.memory_space<vmem>>, vector<1x9x2048xbf16>
    %9 = vector.shape_cast %8 : vector<1x9x2048xbf16> to vector<9x2048xbf16>
    %cst_9 = arith.constant dense<0.000000e+00> : vector<16x2048xf32>
    %10 = tpu.matmul %0, %9, %cst_9 {dimension_numbers = #tpu.dot_dimension_numbers<[1], [0], [0], [1], [0, 0, 1, 1], [], []>} : vector<16x9xbf16>, vector<9x2048xbf16>, vector<16x2048xf32> -> vector<16x2048xf32>
    %11 = arith.maximumf %7, %10 : vector<16x2048xf32>
    %c3 = arith.constant 3 : index
    %c0_10 = arith.constant 0 : index
    %c0_11 = arith.constant 0 : index
    %12 = vector.load %arg3[%c3, %c0_10, %c0_11] : memref<4x9x2048xbf16, #tpu.memory_space<vmem>>, vector<1x9x2048xbf16>
    %13 = vector.shape_cast %12 : vector<1x9x2048xbf16> to vector<9x2048xbf16>
    %cst_12 = arith.constant dense<0.000000e+00> : vector<16x2048xf32>
    %14 = tpu.matmul %0, %13, %cst_12 {dimension_numbers = #tpu.dot_dimension_numbers<[1], [0], [0], [1], [0, 0, 1, 1], [], []>} : vector<16x9xbf16>, vector<9x2048xbf16>, vector<16x2048xf32> -> vector<16x2048xf32>
    %15 = arith.maximumf %11, %14 : vector<16x2048xf32>
    %c0_13 = arith.constant 0 : index
    %c0_14 = arith.constant 0 : index
    %16 = vector.load %arg2[%c0_13, %c0_14] : memref<16x1xf32, #tpu.memory_space<vmem>>, vector<16x1xf32>
    %17 = vector.broadcast %16 : vector<16x1xf32> to vector<16x2048xf32>
    %18 = arith.addf %15, %17 : vector<16x2048xf32>
    %cst_15 = arith.constant 0.000000e+00 : f32
    %19 = vector.broadcast %cst_15 : f32 to vector<16x2048xf32>
    %20 = arith.maximumf %18, %19 : vector<16x2048xf32>
    %21 = arith.truncf %20 : vector<16x2048xf32> to vector<16x2048xbf16>
    %c0_16 = arith.constant 0 : index
    %c0_17 = arith.constant 0 : index
    %22 = vector.load %arg4[%c0_16, %c0_17] : memref<16x2048xbf16, #tpu.memory_space<vmem>>, vector<16x2048xbf16>
    tpu.vector_store %arg4[%c0_16, %c0_17], %21 {strides = array<i32>} : memref<16x2048xbf16, #tpu.memory_space<vmem>>, vector<16x2048xbf16>,
    return
  }
  func.func @transform_0(%arg0: i32) -> (i32, i32) {
    %c0_i32 = arith.constant 0 : i32
    %c0_i32_0 = arith.constant 0 : i32
    %c0_i32_1 = arith.constant 0 : i32
    return %c0_i32, %c0_i32_0 : i32, i32
  }
  func.func @transform_1(%arg0: i32) -> (i32, i32) {
    %c0_i32 = arith.constant 0 : i32
    %c0_i32_0 = arith.constant 0 : i32
    %c0_i32_1 = arith.constant 0 : i32
    return %c0_i32, %c0_i32_0 : i32, i32
  }
  func.func @transform_2(%arg0: i32) -> (i32, i32, i32) {
    %c0_i32 = arith.constant 0 : i32
    %c0_i32_0 = arith.constant 0 : i32
    %c0_i32_1 = arith.constant 0 : i32
    return %c0_i32, %c0_i32_0, %arg0 : i32, i32, i32
  }
  func.func @transform_3(%arg0: i32) -> (i32, i32) {
    %c0_i32 = arith.constant 0 : i32
    %c0_i32_0 = arith.constant 0 : i32
    return %c0_i32, %arg0 : i32, i32
  }
}

module attributes {stable_mosaic.version = 11 : i64} {
  func.func @_conv_pool_relu_kernel(%arg0: i32, %arg1: memref<16x144xbf16, #tpu.memory_space<vmem>>, %arg2: memref<16x1xf32, #tpu.memory_space<vmem>>, %arg3: memref<4x144x1024xbf16, #tpu.memory_space<vmem>>, %arg4: memref<16x1024xbf16, #tpu.memory_space<vmem>>) attributes {dimension_semantics = [#tpu.dimension_semantics<parallel>], iteration_bounds = array<i64: 1>, scalar_prefetch = 0 : i64, scratch_operands = 0 : i64, tpu.core_type = #tpu.core_type<tc>, window_params = [{pipeline_mode = #tpu.pipeline_mode<synchronous>, transform_indices = @transform_0, window_bounds = array<i64: 16, 144>}, {pipeline_mode = #tpu.pipeline_mode<synchronous>, transform_indices = @transform_1, window_bounds = array<i64: 16, 1>}, {transform_indices = @transform_2, window_bounds = array<i64: 4, 144, 1024>}, {transform_indices = @transform_3, window_bounds = array<i64: 16, 1024>}]} {
    %c0 = arith.constant 0 : index
    %c0_0 = arith.constant 0 : index
    %0 = vector.load %arg1[%c0, %c0_0] : memref<16x144xbf16, #tpu.memory_space<vmem>>, vector<16x144xbf16>
    %c0_1 = arith.constant 0 : index
    %c0_2 = arith.constant 0 : index
    %c0_3 = arith.constant 0 : index
    %1 = vector.load %arg3[%c0_1, %c0_2, %c0_3] : memref<4x144x1024xbf16, #tpu.memory_space<vmem>>, vector<1x144x1024xbf16>
    %2 = vector.shape_cast %1 : vector<1x144x1024xbf16> to vector<144x1024xbf16>
    %cst = arith.constant dense<0.000000e+00> : vector<16x1024xf32>
    %3 = tpu.matmul %0, %2, %cst {dimension_numbers = #tpu.dot_dimension_numbers<[1], [0], [0], [1], [0, 0, 1, 1], [], []>} : vector<16x144xbf16>, vector<144x1024xbf16>, vector<16x1024xf32> -> vector<16x1024xf32>
    %c1 = arith.constant 1 : index
    %c0_4 = arith.constant 0 : index
    %c0_5 = arith.constant 0 : index
    %4 = vector.load %arg3[%c1, %c0_4, %c0_5] : memref<4x144x1024xbf16, #tpu.memory_space<vmem>>, vector<1x144x1024xbf16>
    %5 = vector.shape_cast %4 : vector<1x144x1024xbf16> to vector<144x1024xbf16>
    %cst_6 = arith.constant dense<0.000000e+00> : vector<16x1024xf32>
    %6 = tpu.matmul %0, %5, %cst_6 {dimension_numbers = #tpu.dot_dimension_numbers<[1], [0], [0], [1], [0, 0, 1, 1], [], []>} : vector<16x144xbf16>, vector<144x1024xbf16>, vector<16x1024xf32> -> vector<16x1024xf32>
    %7 = arith.maximumf %3, %6 : vector<16x1024xf32>
    %c2 = arith.constant 2 : index
    %c0_7 = arith.constant 0 : index
    %c0_8 = arith.constant 0 : index
    %8 = vector.load %arg3[%c2, %c0_7, %c0_8] : memref<4x144x1024xbf16, #tpu.memory_space<vmem>>, vector<1x144x1024xbf16>
    %9 = vector.shape_cast %8 : vector<1x144x1024xbf16> to vector<144x1024xbf16>
    %cst_9 = arith.constant dense<0.000000e+00> : vector<16x1024xf32>
    %10 = tpu.matmul %0, %9, %cst_9 {dimension_numbers = #tpu.dot_dimension_numbers<[1], [0], [0], [1], [0, 0, 1, 1], [], []>} : vector<16x144xbf16>, vector<144x1024xbf16>, vector<16x1024xf32> -> vector<16x1024xf32>
    %11 = arith.maximumf %7, %10 : vector<16x1024xf32>
    %c3 = arith.constant 3 : index
    %c0_10 = arith.constant 0 : index
    %c0_11 = arith.constant 0 : index
    %12 = vector.load %arg3[%c3, %c0_10, %c0_11] : memref<4x144x1024xbf16, #tpu.memory_space<vmem>>, vector<1x144x1024xbf16>
    %13 = vector.shape_cast %12 : vector<1x144x1024xbf16> to vector<144x1024xbf16>
    %cst_12 = arith.constant dense<0.000000e+00> : vector<16x1024xf32>
    %14 = tpu.matmul %0, %13, %cst_12 {dimension_numbers = #tpu.dot_dimension_numbers<[1], [0], [0], [1], [0, 0, 1, 1], [], []>} : vector<16x144xbf16>, vector<144x1024xbf16>, vector<16x1024xf32> -> vector<16x1024xf32>
    %15 = arith.maximumf %11, %14 : vector<16x1024xf32>
    %c0_13 = arith.constant 0 : index
    %c0_14 = arith.constant 0 : index
    %16 = vector.load %arg2[%c0_13, %c0_14] : memref<16x1xf32, #tpu.memory_space<vmem>>, vector<16x1xf32>
    %17 = vector.broadcast %16 : vector<16x1xf32> to vector<16x1024xf32>
    %18 = arith.addf %15, %17 : vector<16x1024xf32>
    %cst_15 = arith.constant 0.000000e+00 : f32
    %19 = vector.broadcast %cst_15 : f32 to vector<16x1024xf32>
    %20 = arith.maximumf %18, %19 : vector<16x1024xf32>
    %21 = arith.truncf %20 : vector<16x1024xf32> to vector<16x1024xbf16>
    %c0_16 = arith.constant 0 : index
    %c0_17 = arith.constant 0 : index
    %22 = vector.load %arg4[%c0_16, %c0_17] : memref<16x1024xbf16, #tpu.memory_space<vmem>>, vector<16x1024xbf16>
    tpu.vector_store %arg4[%c0_16, %c0_17], %21 {strides = array<i32>} : memref<16x1024xbf16, #tpu.memory_space<vmem>>, vector<16x1024xbf16>,
    return
  }
  func.func @transform_0(%arg0: i32) -> (i32, i32) {
    %c0_i32 = arith.constant 0 : i32
    %c0_i32_0 = arith.constant 0 : i32
    %c0_i32_1 = arith.constant 0 : i32
    return %c0_i32, %c0_i32_0 : i32, i32
  }
  func.func @transform_1(%arg0: i32) -> (i32, i32) {
    %c0_i32 = arith.constant 0 : i32
    %c0_i32_0 = arith.constant 0 : i32
    %c0_i32_1 = arith.constant 0 : i32
    return %c0_i32, %c0_i32_0 : i32, i32
  }
  func.func @transform_2(%arg0: i32) -> (i32, i32, i32) {
    %c0_i32 = arith.constant 0 : i32
    %c0_i32_0 = arith.constant 0 : i32
    %c0_i32_1 = arith.constant 0 : i32
    return %c0_i32, %c0_i32_0, %arg0 : i32, i32, i32
  }
  func.func @transform_3(%arg0: i32) -> (i32, i32) {
    %c0_i32 = arith.constant 0 : i32
    %c0_i32_0 = arith.constant 0 : i32
    return %c0_i32, %arg0 : i32, i32
  }
}

module attributes {stable_mosaic.version = 11 : i64} {
  func.func @_fc_fused_kernel(%arg0: i32, %arg1: memref<2x4096xbf16, #tpu.memory_space<vmem>>, %arg2: memref<4096x256xbf16, #tpu.memory_space<vmem>>, %arg3: memref<1x256xf32, #tpu.memory_space<vmem>>, %arg4: memref<256x10xf32, #tpu.memory_space<vmem>>, %arg5: memref<1x10xf32, #tpu.memory_space<vmem>>, %arg6: memref<2x10xf32, #tpu.memory_space<vmem>>, %arg7: memref<2x256xf32, #tpu.memory_space<vmem>>) attributes {dimension_semantics = [#tpu.dimension_semantics<arbitrary>], iteration_bounds = array<i64: 2>, scalar_prefetch = 0 : i64, scratch_operands = 1 : i64, tpu.core_type = #tpu.core_type<tc>, window_params = [{transform_indices = @transform_0, window_bounds = array<i64: 2, 4096>}, {transform_indices = @transform_1, window_bounds = array<i64: 4096, 256>}, {pipeline_mode = #tpu.pipeline_mode<synchronous>, transform_indices = @transform_2, window_bounds = array<i64: 1, 256>}, {pipeline_mode = #tpu.pipeline_mode<synchronous>, transform_indices = @transform_3, window_bounds = array<i64: 256, 10>}, {pipeline_mode = #tpu.pipeline_mode<synchronous>, transform_indices = @transform_4, window_bounds = array<i64: 1, 10>}, {pipeline_mode = #tpu.pipeline_mode<synchronous>, transform_indices = @transform_5, window_bounds = array<i64: 2, 10>}]} {
    %c0_i32 = arith.constant 0 : i32
    %0 = arith.cmpi eq, %arg0, %c0_i32 : i32
    %1 = arith.extui %0 : i1 to i32
    %c0_i32_0 = arith.constant 0 : i32
    %2 = arith.cmpi ne, %1, %c0_i32_0 : i32
    scf.if %2 {
      %cst_9 = arith.constant 0.000000e+00 : f32
      %12 = vector.broadcast %cst_9 : f32 to vector<2x256xf32>
      %c0_10 = arith.constant 0 : index
      %c0_11 = arith.constant 0 : index
      %13 = vector.load %arg7[%c0_10, %c0_11] : memref<2x256xf32, #tpu.memory_space<vmem>>, vector<2x256xf32>
      tpu.vector_store %arg7[%c0_10, %c0_11], %12 {strides = array<i32>} : memref<2x256xf32, #tpu.memory_space<vmem>>, vector<2x256xf32>,
    } else {
    }
    %c0 = arith.constant 0 : index
    %c0_1 = arith.constant 0 : index
    %3 = vector.load %arg7[%c0, %c0_1] : memref<2x256xf32, #tpu.memory_space<vmem>>, vector<2x256xf32>
    %c0_2 = arith.constant 0 : index
    %c0_3 = arith.constant 0 : index
    %4 = vector.load %arg1[%c0_2, %c0_3] : memref<2x4096xbf16, #tpu.memory_space<vmem>>, vector<2x4096xbf16>
    %c0_4 = arith.constant 0 : index
    %c0_5 = arith.constant 0 : index
    %5 = vector.load %arg2[%c0_4, %c0_5] : memref<4096x256xbf16, #tpu.memory_space<vmem>>, vector<4096x256xbf16>
    %cst = arith.constant dense<0.000000e+00> : vector<2x256xf32>
    %6 = tpu.matmul %4, %5, %cst {dimension_numbers = #tpu.dot_dimension_numbers<[1], [0], [0], [1], [0, 0, 1, 1], [], []>} : vector<2x4096xbf16>, vector<4096x256xbf16>, vector<2x256xf32> -> vector<2x256xf32>
    %7 = arith.addf %3, %6 : vector<2x256xf32>
    %c0_6 = arith.constant 0 : index
    %c0_7 = arith.constant 0 : index
    %8 = vector.load %arg7[%c0_6, %c0_7] : memref<2x256xf32, #tpu.memory_space<vmem>>, vector<2x256xf32>
    tpu.vector_store %arg7[%c0_6, %c0_7], %7 {strides = array<i32>} : memref<2x256xf32, #tpu.memory_space<vmem>>, vector<2x256xf32>,
    %c1_i32 = arith.constant 1 : i32
    %9 = arith.cmpi eq, %arg0, %c1_i32 : i32
    %10 = arith.extui %9 : i1 to i32
    %c0_i32_8 = arith.constant 0 : i32
    %11 = arith.cmpi ne, %10, %c0_i32_8 : i32
    scf.if %11 {
      %c0_9 = arith.constant 0 : index
      %c0_10 = arith.constant 0 : index
      %12 = vector.load %arg7[%c0_9, %c0_10] : memref<2x256xf32, #tpu.memory_space<vmem>>, vector<2x256xf32>
      %c0_11 = arith.constant 0 : index
      %c0_12 = arith.constant 0 : index
      %13 = vector.load %arg3[%c0_11, %c0_12] : memref<1x256xf32, #tpu.memory_space<vmem>>, vector<1x256xf32>
      %14 = vector.broadcast %13 : vector<1x256xf32> to vector<2x256xf32>
      %15 = arith.addf %12, %14 : vector<2x256xf32>
      %cst_13 = arith.constant 0.000000e+00 : f32
      %16 = vector.broadcast %cst_13 : f32 to vector<2x256xf32>
      %17 = arith.maximumf %15, %16 : vector<2x256xf32>
      %c0_14 = arith.constant 0 : index
      %c0_15 = arith.constant 0 : index
      %18 = vector.load %arg4[%c0_14, %c0_15] : memref<256x10xf32, #tpu.memory_space<vmem>>, vector<256x10xf32>
      %cst_16 = arith.constant dense<0.000000e+00> : vector<2x10xf32>
      %19 = tpu.matmul %17, %18, %cst_16 {dimension_numbers = #tpu.dot_dimension_numbers<[1], [0], [0], [1], [0, 0, 1, 1], [], []>} : vector<2x256xf32>, vector<256x10xf32>, vector<2x10xf32> -> vector<2x10xf32>
      %c0_17 = arith.constant 0 : index
      %c0_18 = arith.constant 0 : index
      %20 = vector.load %arg5[%c0_17, %c0_18] : memref<1x10xf32, #tpu.memory_space<vmem>>, vector<1x10xf32>
      %21 = vector.broadcast %20 : vector<1x10xf32> to vector<2x10xf32>
      %22 = arith.addf %19, %21 : vector<2x10xf32>
      %c0_19 = arith.constant 0 : index
      %c0_20 = arith.constant 0 : index
      %23 = vector.load %arg6[%c0_19, %c0_20] : memref<2x10xf32, #tpu.memory_space<vmem>>, vector<2x10xf32>
      tpu.vector_store %arg6[%c0_19, %c0_20], %22 {strides = array<i32>} : memref<2x10xf32, #tpu.memory_space<vmem>>, vector<2x10xf32>,
    } else {
    }
    return
  }
  func.func @transform_0(%arg0: i32) -> (i32, i32) {
    %c0_i32 = arith.constant 0 : i32
    %c0_i32_0 = arith.constant 0 : i32
    return %c0_i32, %arg0 : i32, i32
  }
  func.func @transform_1(%arg0: i32) -> (i32, i32) {
    %c0_i32 = arith.constant 0 : i32
    %c0_i32_0 = arith.constant 0 : i32
    return %arg0, %c0_i32 : i32, i32
  }
  func.func @transform_2(%arg0: i32) -> (i32, i32) {
    %c0_i32 = arith.constant 0 : i32
    %c0_i32_0 = arith.constant 0 : i32
    %c0_i32_1 = arith.constant 0 : i32
    return %c0_i32, %c0_i32_0 : i32, i32
  }
  func.func @transform_3(%arg0: i32) -> (i32, i32) {
    %c0_i32 = arith.constant 0 : i32
    %c0_i32_0 = arith.constant 0 : i32
    %c0_i32_1 = arith.constant 0 : i32
    return %c0_i32, %c0_i32_0 : i32, i32
  }
  func.func @transform_4(%arg0: i32) -> (i32, i32) {
    %c0_i32 = arith.constant 0 : i32
    %c0_i32_0 = arith.constant 0 : i32
    %c0_i32_1 = arith.constant 0 : i32
    return %c0_i32, %c0_i32_0 : i32, i32
  }
  func.func @transform_5(%arg0: i32) -> (i32, i32) {
    %c0_i32 = arith.constant 0 : i32
    %c0_i32_0 = arith.constant 0 : i32
    %c0_i32_1 = arith.constant 0 : i32
    return %c0_i32, %c0_i32_0 : i32, i32
  }
}

</mosaic_0001>

<llo_original>
// kernel: forward.3
$region0: #{forward.3}
  #allocation0 [shape = 'u32[]', space=smem, size = 0x4, offset = 0x4, fixed_abs, tag = 'smem constant byte address 0x4 - core index']
  #allocation1 [shape = 'u32[144,128]{1,0:T(1,128)}', space=vmem, size = 0x12000, scoped, tag = 'internal scratch']
  %s0 = inlined_call_operand.vmem [shape: bf16[16,9], index: 0, kind: input, shape index: {}]
  %s1 = inlined_call_operand.vmem [shape: f32[16,1], index: 1, kind: input, shape index: {}]
  %s2 = inlined_call_operand.vmem [shape: bf16[4,9,4096], index: 2, kind: input, shape index: {}]
  %s3 = inlined_call_operand.vmem [shape: bf16[16,4096], index: 3, kind: output, shape index: {}]
  %s4 = sld [smem:[#allocation0]]
  $region87: #{forward.3} parent=0
    _
  %s6 = ssub.s32 1, %s4
  %s7 = scalar_select 0, %s6, %s4
  $region1: #{forward.3} parent=0
    #allocation2 [shape = 'u8[524288]{0}', space=vmem, size = 0x80000, scoped, tag = 'input window, operand 2']
    #allocation3 [shape = 'u8[131072]{0}', space=vmem, size = 0x20000, scoped, tag = 'output window, operand 0']
    loop: start=0, step=1, limit=4
    $region2: #{forward.3} parent=1 // loop_pre_header
      _
    $region3: #{forward.3} parent=1 // loop_header
      %s9 = sphi 0, %s13
      %p10 = scmp.ge.s32.totalorder %s9, 4
      %s17 = sphi 0, %s17
      %s19 = sphi 0, %s17
      %s20 = sphi 0, %s19
      %s34 = sphi 0, %s20
      %s38 = sphi 0, %s38
      %s40 = sphi 0, %s38
      %s41 = sphi 0, %s40
      %s55 = sphi 0, %s41
      %s61 = sphi 0, %s63
      %s64 = sphi 0, %s61
      %s65 = sphi 0, %s64
      %s81 = sphi 0, %s65
      %s87 = sphi 0, %s89
      %s90 = sphi 0, %s87
      %s91 = sphi 0, %s90
      %s107 = sphi 0, %s91
    $region4: #{forward.3} parent=1 // loop_header_branch
      %12 = sbr.rel (%p10) target = $region8
    $region5: #{forward.3} parent=1 // loop_body
      %s14 = ssub.s32 %s9, 1
      %s15 = ssub.s32 %s9, 2
      %s16 = sadd.s32 %s9, 1
      %s18 = sadd.s32 %s17, 1
      %p21 = scmp.eq.s32.totalorder %s9, 1
      %p22 = scmp.ne.s32.totalorder %s17, %s19
      %p23 = scmp.eq.s32.totalorder %s9, 0
      %p24 = por %p22, %p23
      %p25 = scmp.ne.s32.totalorder %s17, %s19
      %p26 = scmp.eq.s32.totalorder %s14, 1
      %p27 = por %p25, %p26
      %p28 = scmp.ne.s32.totalorder %s19, %s20
      %p29 = scmp.eq.s32.totalorder %s14, 0
      %p30 = por %p28, %p29
      %p31 = scmp.ne.s32.totalorder %s19, %s20
      %p32 = scmp.eq.s32.totalorder %s15, 1
      %p33 = por %p31, %p32
      %p35 = scmp.ne.s32.totalorder %s20, %s34
      %p36 = scmp.eq.s32.totalorder %s15, 0
      %p37 = por %p35, %p36
      %s39 = sadd.s32 %s38, 1
      %p42 = scmp.eq.s32.totalorder %s9, 1
      %p43 = scmp.ne.s32.totalorder %s38, %s40
      %p44 = scmp.eq.s32.totalorder %s9, 0
      %p45 = por %p43, %p44
      %p46 = scmp.ne.s32.totalorder %s38, %s40
      %p47 = scmp.eq.s32.totalorder %s14, 1
      %p48 = por %p46, %p47
      %p49 = scmp.ne.s32.totalorder %s40, %s41
      %p50 = scmp.eq.s32.totalorder %s14, 0
      %p51 = por %p49, %p50
      %p52 = scmp.ne.s32.totalorder %s40, %s41
      %p53 = scmp.eq.s32.totalorder %s15, 1
      %p54 = por %p52, %p53
      %p56 = scmp.ne.s32.totalorder %s41, %s55
      %p57 = scmp.eq.s32.totalorder %s15, 0
      %p58 = por %p56, %p57
      %s59 = ssub.s32 %s9, %s16
      %p60 = scmp.eq.s32.totalorder %s59, 0
      %s62 = sadd.s32 %s61, 1
      %s63 = scalar_select %p60, %s61, %s62
      %p66 = pneg %p60
      %p67 = scmp.eq.s32.totalorder %s9, 1
      %p68 = por %p66, %p67
      %p69 = scmp.ne.s32.totalorder %s61, %s64
      %p70 = scmp.eq.s32.totalorder %s9, 0
      %p71 = por %p69, %p70
      %p72 = scmp.ne.s32.totalorder %s61, %s64
      %p73 = scmp.eq.s32.totalorder %s14, 1
      %p74 = por %p72, %p73
      %p75 = scmp.ne.s32.totalorder %s64, %s65
      %p76 = scmp.eq.s32.totalorder %s14, 0
      %p77 = por %p75, %p76
      %p78 = scmp.ne.s32.totalorder %s64, %s65
      %p79 = scmp.eq.s32.totalorder %s15, 1
      %p80 = por %p78, %p79
      %p82 = scmp.ne.s32.totalorder %s65, %s81
      %p83 = scmp.eq.s32.totalorder %s15, 0
      %p84 = por %p82, %p83
      %s85 = ssub.s32 %s9, %s16
      %p86 = scmp.eq.s32.totalorder %s85, 0
      %s88 = sadd.s32 %s87, 1
      %s89 = scalar_select %p86, %s87, %s88
      %p92 = pneg %p86
      %p93 = scmp.eq.s32.totalorder %s9, 1
      %p94 = por %p92, %p93
      %p95 = scmp.ne.s32.totalorder %s87, %s90
      %p96 = scmp.eq.s32.totalorder %s9, 0
      %p97 = por %p95, %p96
      %p98 = scmp.ne.s32.totalorder %s87, %s90
      %p99 = scmp.eq.s32.totalorder %s14, 1
      %p100 = por %p98, %p99
      %p101 = scmp.ne.s32.totalorder %s90, %s91
      %p102 = scmp.eq.s32.totalorder %s14, 0
      %p103 = por %p101, %p102
      %p104 = scmp.ne.s32.totalorder %s90, %s91
      %p105 = scmp.eq.s32.totalorder %s15, 1
      %p106 = por %p104, %p105
      %p108 = scmp.ne.s32.totalorder %s91, %s107
      %p109 = scmp.eq.s32.totalorder %s15, 0
      %p110 = por %p108, %p109
      %p111 = scmp.le.s32.totalorder 1, %s9
      %p112 = scmp.lt.s32.totalorder %s9, 3
      %p113 = pnand %p111, %p112
      %p114 = pneg %p113
      // Predicated region
      $region9: #{forward.3} parent=5 // pred_check
        _
      $region10: #{forward.3} parent=5 // pred_check_branch
        %116 = sbr.rel (%p113) target = $region12
      $region11: #{forward.3} parent=5 // pred_region
        %s117 = ssub.s32 %s9, 1
        // Predicated region
        $region13: #{forward.3} parent=11 // pred_check
          %p118 = pneg %p30
        $region14: #{forward.3} parent=11 // pred_check_branch
          %120 = sbr.rel (%p118) target = $region16
        $region15: #{forward.3} parent=11 // pred_region
          _
        $region16: #{forward.3} parent=11 // pred_fallthru
          _
        // Predicated region
        $region17: #{forward.3} parent=11 // pred_check
          %p121 = pneg %p51
        $region18: #{forward.3} parent=11 // pred_check_branch
          %123 = sbr.rel (%p121) target = $region20
        $region19: #{forward.3} parent=11 // pred_region
          _
        $region20: #{forward.3} parent=11 // pred_fallthru
          _
      $region12: #{forward.3} parent=5 // pred_fallthru
        _
      %p124 = scmp.lt.s32.totalorder %s9, 2
      // Predicated region
      $region21: #{forward.3} parent=5 // pred_check
        %p125 = pneg %p124
      $region22: #{forward.3} parent=5 // pred_check_branch
        %127 = sbr.rel (%p125) target = $region24
      $region23: #{forward.3} parent=5 // pred_region
        // Predicated region
        $region25: #{forward.3} parent=23 // pred_check
          %p128 = pneg %p71
        $region26: #{forward.3} parent=23 // pred_check_branch
          %130 = sbr.rel (%p128) target = $region28
        $region27: #{forward.3} parent=23 // pred_region
          %s131 = sand.u32 %s61, 1
          %s132 = sand.u32 %s61, 1
          %s133 = smul.addr %s132, 512
          %s134 = scalar_lea.vmem [#allocation2], %s133
          %s135 = smul.u32 16, %s9
          %s136 = smul.addr %s135, 4
          %s137 = scalar_lea.vmem %s2, %s136
          // Predicated region
          $region29: #{forward.3} parent=27 // pred_check
            _
          $region30: #{forward.3} parent=27 // pred_check_branch
            %139 = sbr.rel (0) target = $region32
          $region31: #{forward.3} parent=27 // pred_region
            // Predicated region
            $region33: #{forward.3} parent=31 // pred_check
              _
            $region34: #{forward.3} parent=31 // pred_check_branch
              %141 = sbr.rel (0) target = $region36
            $region35: #{forward.3} parent=31 // pred_region
              loop: start=0, step=1, limit=1
              $region37: #{forward.3} parent=35 // loop_pre_header
                _
              $region38: #{forward.3} parent=35 // loop_header
                %s143 = sphi 0, %s147
                %p144 = scmp.ge.s32.totalorder %s143, 1
                %s148 = sphi %s137, %s137
                %s149 = sphi %s134, %s134
              $region39: #{forward.3} parent=35 // loop_header_branch
                %146 = sbr.rel (%p144) target = $region43
              $region40: #{forward.3} parent=35 // loop_body
                %v150 = vld [vmem:[%s148] sm:$0xff]
                %151 = vst [vmem:[%s149] sm:$0xff] %v150
                %v152 = vld [vmem:[%s148 + $0x8] sm:$0xff]
                %153 = vst [vmem:[%s149 + $0x8] sm:$0xff] %v152
                %v154 = vld [vmem:[%s148 + $0x10] sm:$0xff]
                %155 = vst [vmem:[%s149 + $0x10] sm:$0xff] %v154
                %v156 = vld [vmem:[%s148 + $0x18] sm:$0xff]
                %157 = vst [vmem:[%s149 + $0x18] sm:$0xff] %v156
                %v158 = vld [vmem:[%s148 + $0x20] sm:$0xff]
                %159 = vst [vmem:[%s149 + $0x20] sm:$0xff] %v158
                %v160 = vld [vmem:[%s148 + $0x28] sm:$0xff]
                %161 = vst [vmem:[%s149 + $0x28] sm:$0xff] %v160
                %v162 = vld [vmem:[%s148 + $0x30] sm:$0xff]
                %163 = vst [vmem:[%s149 + $0x30] sm:$0xff] %v162
                %v164 = vld [vmem:[%s148 + $0x38] sm:$0xff]
                %165 = vst [vmem:[%s149 + $0x38] sm:$0xff] %v164
                %v166 = vld [vmem:[%s148 + $0x80] sm:$0xff]
                %167 = vst [vmem:[%s149 + $0x40] sm:$0xff] %v166
                %v168 = vld [vmem:[%s148 + $0x88] sm:$0xff]
                %169 = vst [vmem:[%s149 + $0x48] sm:$0xff] %v168
                %v170 = vld [vmem:[%s148 + $0x90] sm:$0xff]
                %171 = vst [vmem:[%s149 + $0x50] sm:$0xff] %v170
                %v172 = vld [vmem:[%s148 + $0x98] sm:$0xff]
                %173 = vst [vmem:[%s149 + $0x58] sm:$0xff] %v172
                %v174 = vld [vmem:[%s148 + $0xa0] sm:$0xff]
                %175 = vst [vmem:[%s149 + $0x60] sm:$0xff] %v174
                %v176 = vld [vmem:[%s148 + $0xa8] sm:$0xff]
                %177 = vst [vmem:[%s149 + $0x68] sm:$0xff] %v176
                %v178 = vld [vmem:[%s148 + $0xb0] sm:$0xff]
                %179 = vst [vmem:[%s149 + $0x70] sm:$0xff] %v178
                %v180 = vld [vmem:[%s148 + $0xb8] sm:$0xff]
                %181 = vst [vmem:[%s149 + $0x78] sm:$0xff] %v180
                %v182 = vld [vmem:[%s148 + $0x100] sm:$0xff]
                %183 = vst [vmem:[%s149 + $0x80] sm:$0xff] %v182
                %v184 = vld [vmem:[%s148 + $0x108] sm:$0xff]
                %185 = vst [vmem:[%s149 + $0x88] sm:$0xff] %v184
                %v186 = vld [vmem:[%s148 + $0x110] sm:$0xff]
                %187 = vst [vmem:[%s149 + $0x90] sm:$0xff] %v186
                %v188 = vld [vmem:[%s148 + $0x118] sm:$0xff]
                %189 = vst [vmem:[%s149 + $0x98] sm:$0xff] %v188
                %v190 = vld [vmem:[%s148 + $0x120] sm:$0xff]
                %191 = vst [vmem:[%s149 + $0xa0] sm:$0xff] %v190
                %v192 = vld [vmem:[%s148 + $0x128] sm:$0xff]
                %193 = vst [vmem:[%s149 + $0xa8] sm:$0xff] %v192
                %v194 = vld [vmem:[%s148 + $0x130] sm:$0xff]
                %195 = vst [vmem:[%s149 + $0xb0] sm:$0xff] %v194
                %v196 = vld [vmem:[%s148 + $0x138] sm:$0xff]
                %197 = vst [vmem:[%s149 + $0xb8] sm:$0xff] %v196
                %v198 = vld [vmem:[%s148 + $0x180] sm:$0xff]
                %199 = vst [vmem:[%s149 + $0xc0] sm:$0xff] %v198
                %v200 = vld [vmem:[%s148 + $0x188] sm:$0xff]
                %201 = vst [vmem:[%s149 + $0xc8] sm:$0xff] %v200
                %v202 = vld [vmem:[%s148 + $0x190] sm:$0xff]
                %203 = vst [vmem:[%s149 + $0xd0] sm:$0xff] %v202
                %v204 = vld [vmem:[%s148 + $0x198] sm:$0xff]
                %205 = vst [vmem:[%s149 + $0xd8] sm:$0xff] %v204
                %v206 = vld [vmem:[%s148 + $0x1a0] sm:$0xff]
                %207 = vst [vmem:[%s149 + $0xe0] sm:$0xff] %v206
                %v208 = vld [vmem:[%s148 + $0x1a8] sm:$0xff]
                %209 = vst [vmem:[%s149 + $0xe8] sm:$0xff] %v208
                %v210 = vld [vmem:[%s148 + $0x1b0] sm:$0xff]
                %211 = vst [vmem:[%s149 + $0xf0] sm:$0xff] %v210
                %v212 = vld [vmem:[%s148 + $0x1b8] sm:$0xff]
                %213 = vst [vmem:[%s149 + $0xf8] sm:$0xff] %v212
                %v214 = vld [vmem:[%s148 + $0x200] sm:$0xff]
                %215 = vst [vmem:[%s149 + $0x100] sm:$0xff] %v214
                %v216 = vld [vmem:[%s148 + $0x208] sm:$0xff]
                %217 = vst [vmem:[%s149 + $0x108] sm:$0xff] %v216
                %v218 = vld [vmem:[%s148 + $0x210] sm:$0xff]
                %219 = vst [vmem:[%s149 + $0x110] sm:$0xff] %v218
                %v220 = vld [vmem:[%s148 + $0x218] sm:$0xff]
                %221 = vst [vmem:[%s149 + $0x118] sm:$0xff] %v220
                %v222 = vld [vmem:[%s148 + $0x220] sm:$0xff]
                %223 = vst [vmem:[%s149 + $0x120] sm:$0xff] %v222
                %v224 = vld [vmem:[%s148 + $0x228] sm:$0xff]
                %225 = vst [vmem:[%s149 + $0x128] sm:$0xff] %v224
                %v226 = vld [vmem:[%s148 + $0x230] sm:$0xff]
                %227 = vst [vmem:[%s149 + $0x130] sm:$0xff] %v226
                %v228 = vld [vmem:[%s148 + $0x238] sm:$0xff]
                %229 = vst [vmem:[%s149 + $0x138] sm:$0xff] %v228
                %v230 = vld [vmem:[%s148 + $0x280] sm:$0xff]
                %231 = vst [vmem:[%s149 + $0x140] sm:$0xff] %v230
                %v232 = vld [vmem:[%s148 + $0x288] sm:$0xff]
                %233 = vst [vmem:[%s149 + $0x148] sm:$0xff] %v232
                %v234 = vld [vmem:[%s148 + $0x290] sm:$0xff]
                %235 = vst [vmem:[%s149 + $0x150] sm:$0xff] %v234
                %v236 = vld [vmem:[%s148 + $0x298] sm:$0xff]
                %237 = vst [vmem:[%s149 + $0x158] sm:$0xff] %v236
                %v238 = vld [vmem:[%s148 + $0x2a0] sm:$0xff]
                %239 = vst [vmem:[%s149 + $0x160] sm:$0xff] %v238
                %v240 = vld [vmem:[%s148 + $0x2a8] sm:$0xff]
                %241 = vst [vmem:[%s149 + $0x168] sm:$0xff] %v240
                %v242 = vld [vmem:[%s148 + $0x2b0] sm:$0xff]
                %243 = vst [vmem:[%s149 + $0x170] sm:$0xff] %v242
                %v244 = vld [vmem:[%s148 + $0x2b8] sm:$0xff]
                %245 = vst [vmem:[%s149 + $0x178] sm:$0xff] %v244
                %v246 = vld [vmem:[%s148 + $0x300] sm:$0xff]
                %247 = vst [vmem:[%s149 + $0x180] sm:$0xff] %v246
                %v248 = vld [vmem:[%s148 + $0x308] sm:$0xff]
                %249 = vst [vmem:[%s149 + $0x188] sm:$0xff] %v248
                %v250 = vld [vmem:[%s148 + $0x310] sm:$0xff]
                %251 = vst [vmem:[%s149 + $0x190] sm:$0xff] %v250
                %v252 = vld [vmem:[%s148 + $0x318] sm:$0xff]
                %253 = vst [vmem:[%s149 + $0x198] sm:$0xff] %v252
                %v254 = vld [vmem:[%s148 + $0x320] sm:$0xff]
                %255 = vst [vmem:[%s149 + $0x1a0] sm:$0xff] %v254
                %v256 = vld [vmem:[%s148 + $0x328] sm:$0xff]
                %257 = vst [vmem:[%s149 + $0x1a8] sm:$0xff] %v256
                %v258 = vld [vmem:[%s148 + $0x330] sm:$0xff]
                %259 = vst [vmem:[%s149 + $0x1b0] sm:$0xff] %v258
                %v260 = vld [vmem:[%s148 + $0x338] sm:$0xff]
                %261 = vst [vmem:[%s149 + $0x1b8] sm:$0xff] %v260
                %v262 = vld [vmem:[%s148 + $0x380] sm:$0xff]
                %263 = vst [vmem:[%s149 + $0x1c0] sm:$0xff] %v262
                %v264 = vld [vmem:[%s148 + $0x388] sm:$0xff]
                %265 = vst [vmem:[%s149 + $0x1c8] sm:$0xff] %v264
                %v266 = vld [vmem:[%s148 + $0x390] sm:$0xff]
                %267 = vst [vmem:[%s149 + $0x1d0] sm:$0xff] %v266
                %v268 = vld [vmem:[%s148 + $0x398] sm:$0xff]
                %269 = vst [vmem:[%s149 + $0x1d8] sm:$0xff] %v268
                %v270 = vld [vmem:[%s148 + $0x3a0] sm:$0xff]
                %271 = vst [vmem:[%s149 + $0x1e0] sm:$0xff] %v270
                %v272 = vld [vmem:[%s148 + $0x3a8] sm:$0xff]
                %273 = vst [vmem:[%s149 + $0x1e8] sm:$0xff] %v272
                %v274 = vld [vmem:[%s148 + $0x3b0] sm:$0xff]
                %275 = vst [vmem:[%s149 + $0x1f0] sm:$0xff] %v274
                %v276 = vld [vmem:[%s148 + $0x3b8] sm:$0xff]
                %277 = vst [vmem:[%s149 + $0x1f8] sm:$0xff] %v276
              $region41: #{forward.3} parent=35 // loop_footer
                %s147 = sadd.s32 1, %s143
              $region42: #{forward.3} parent=35 // loop_footer_branch
                %142 = sbr.rel target = $region38
              $region43: #{forward.3} parent=35 // loop_exit
                _
            $region36: #{forward.3} parent=31 // pred_fallthru
              _
            // Predicated region
            $region44: #{forward.3} parent=31 // pred_check
              _
            $region45: #{forward.3} parent=31 // pred_check_branch
              %279 = sbr.rel target = $region47
            $region46: #{forward.3} parent=31 // pred_region
              _
            $region47: #{forward.3} parent=31 // pred_fallthru
              _
          $region32: #{forward.3} parent=27 // pred_fallthru
            _
          %280 = vnop
        $region28: #{forward.3} parent=23 // pred_fallthru
          _
      $region24: #{forward.3} parent=5 // pred_fallthru
        _
      %p281 = scmp.le.s32.totalorder 1, %s9
      %p282 = scmp.lt.s32.totalorder %s9, 3
      %p283 = pnand %p281, %p282
      %p284 = pneg %p283
      // Predicated region
      $region48: #{forward.3} parent=5 // pred_check
        _
      $region49: #{forward.3} parent=5 // pred_check_branch
        %286 = sbr.rel (%p283) target = $region51
      $region50: #{forward.3} parent=5 // pred_region
        %s287 = ssub.s32 %s9, 1
        %s288 = sand.u32 %s64, 1
        %s289 = sand.u32 %s64, 1
        %s290 = smul.addr %s289, 512
        %s291 = scalar_lea.vmem [#allocation2], %s290
        // Predicated region
        $region52: #{forward.3} parent=50 // pred_check
          %p292 = pneg %p77
        $region53: #{forward.3} parent=50 // pred_check_branch
          %294 = sbr.rel (%p292) target = $region55
        $region54: #{forward.3} parent=50 // pred_region
          _
        $region55: #{forward.3} parent=50 // pred_fallthru
          _
        %p295 = pneg %p30
        %p296 = pneg %p27
        %p297 = pneg %p51
        %p298 = pneg %p48
        %s299 = sand.u32 %s64, 1
        %s300 = sand.u32 %s64, 1
        %s301 = smul.addr %s300, 512
        %s302 = scalar_lea.vmem [#allocation2], %s301
        %p303 = pneg %p77
        %p304 = pneg %p74
        %p305 = pneg %p103
        %p306 = pneg %p100
        %s307 = sand.u32 %s90, 1
        %s308 = sand.u32 %s90, 1
        %s309 = smul.addr %s308, 128
        %s310 = scalar_lea.vmem [#allocation3], %s309
        %s311 = smul.u32 16, %s14
        %s312 = smul.u32 16, %s14
        %v314 = vld [vmem:[%s0] sm:$0xf]
        %v315 = vld [vmem:[%s0 + $0x4] sm:$0xf]
        %v316 = vld [vmem:[%s291] sm:$0xff]
        %v317 = vld [vmem:[%s291 + $0x8] sm:$0xff]
        %v318 = vld [vmem:[%s291 + $0x10] sm:$0xff]
        %v319 = vld [vmem:[%s291 + $0x18] sm:$0xff]
        %v320 = vld [vmem:[%s291 + $0x20] sm:$0xff]
        %v321 = vld [vmem:[%s291 + $0x28] sm:$0xff]
        %v322 = vld [vmem:[%s291 + $0x30] sm:$0xff]
        %v323 = vld [vmem:[%s291 + $0x38] sm:$0xff]
        %v324 = vld [vmem:[%s291 + $0x40] sm:$0x11]
        %v325 = vld [vmem:[%s291 + $0x48] sm:$0x11]
        %v326 = vld [vmem:[%s291 + $0x50] sm:$0x11]
        %v327 = vld [vmem:[%s291 + $0x58] sm:$0x11]
        %v328 = vld [vmem:[%s291 + $0x60] sm:$0x11]
        %v329 = vld [vmem:[%s291 + $0x68] sm:$0x11]
        %v330 = vld [vmem:[%s291 + $0x70] sm:$0x11]
        %v331 = vld [vmem:[%s291 + $0x78] sm:$0x11]
        %v334 = vunpack.c.l.b16 %v314
        %v335 = vunpack.c.l.b16 %v315
        %v336 = vpack.c.b16 %v335, %v334
        %v353 = vunpack.c.l.b16 %v316
        %v354 = vunpack.c.h.b16 %v316
        %v355 = vunpack.c.l.b16 %v317
        %v356 = vunpack.c.h.b16 %v317
        %v357 = vunpack.c.l.b16 %v318
        %v358 = vunpack.c.h.b16 %v318
        %v359 = vunpack.c.l.b16 %v319
        %v360 = vunpack.c.h.b16 %v319
        %v361 = vunpack.c.l.b16 %v320
        %v362 = vunpack.c.h.b16 %v320
        %v363 = vunpack.c.l.b16 %v321
        %v364 = vunpack.c.h.b16 %v321
        %v365 = vunpack.c.l.b16 %v322
        %v366 = vunpack.c.h.b16 %v322
        %v367 = vunpack.c.l.b16 %v323
        %v368 = vunpack.c.h.b16 %v323
        %v369 = vunpack.c.l.b16 %v324
        %v370 = vunpack.c.h.b16 %v324
        %v371 = vunpack.c.l.b16 %v325
        %v372 = vunpack.c.h.b16 %v325
        %v373 = vunpack.c.l.b16 %v326
        %v374 = vunpack.c.h.b16 %v326
        %v375 = vunpack.c.l.b16 %v327
        %v376 = vunpack.c.h.b16 %v327
        %v377 = vunpack.c.l.b16 %v328
        %v378 = vunpack.c.h.b16 %v328
        %v379 = vunpack.c.l.b16 %v329
        %v380 = vunpack.c.h.b16 %v329
        %v381 = vunpack.c.l.b16 %v330
        %v382 = vunpack.c.h.b16 %v330
        %v383 = vunpack.c.l.b16 %v331
        %v384 = vunpack.c.h.b16 %v331
        %v385 = vpack.c.b16 %v369, %v353
        %v386 = vpack.c.b16 %v370, %v354
        %v387 = vpack.c.b16 %v371, %v355
        %v388 = vpack.c.b16 %v372, %v356
        %v389 = vpack.c.b16 %v373, %v357
        %v390 = vpack.c.b16 %v374, %v358
        %v391 = vpack.c.b16 %v375, %v359
        %v392 = vpack.c.b16 %v376, %v360
        %v393 = vpack.c.b16 %v377, %v361
        %v394 = vpack.c.b16 %v378, %v362
        %v395 = vpack.c.b16 %v379, %v363
        %v396 = vpack.c.b16 %v380, %v364
        %v397 = vpack.c.b16 %v381, %v365
        %v398 = vpack.c.b16 %v382, %v366
        %v399 = vpack.c.b16 %v383, %v367
        %v400 = vpack.c.b16 %v384, %v368
        %vm401 = vcmask 72704
        %v403 = vsel %vm401, %v336, 0
        %vm405 = vcmask 1043456
        %vm406 = vcmask 1044480
        %v407 = vsel %vm405, 4294967295, 65535
        %v408 = vsel %vm406, %v407, 0
        %v410 = vand.u32 %v385, %v408
        %v413 = vand.u32 %v386, %v408
        %v416 = vand.u32 %v387, %v408
        %v419 = vand.u32 %v388, %v408
        %v422 = vand.u32 %v389, %v408
        %v425 = vand.u32 %v390, %v408
        %v428 = vand.u32 %v391, %v408
        %v431 = vand.u32 %v392, %v408
        %v434 = vand.u32 %v393, %v408
        %v437 = vand.u32 %v394, %v408
        %v440 = vand.u32 %v395, %v408
        %v443 = vand.u32 %v396, %v408
        %v446 = vand.u32 %v397, %v408
        %v449 = vand.u32 %v398, %v408
        %v452 = vand.u32 %v399, %v408
        %v455 = vand.u32 %v400, %v408
        %457 = vmatprep.subr.bf16.mxu0 0
        %458 = vmatpush1.bf16.msra.mxu0 0
        %459 = vmatprep.subr.bf16.mxu0 0
        %460 = vmatpush1.bf16.msra.mxu0 0
        %461 = vmatprep.subr.bf16.mxu0 0
        %462 = vmatpush1.bf16.msra.mxu0 0
        %463 = vmatprep.subr.bf16.mxu0 0
        %464 = vmatpush1.bf16.msra.mxu0 0
        %465 = vmatprep.subr.bf16.mxu0 0
        %466 = vmatpush1.bf16.msra.mxu0 0
        %467 = vmatprep.subr.bf16.mxu0 0
        %468 = vmatpush1.bf16.msra.mxu0 0
        %469 = vmatprep.subr.bf16.mxu0 0
        %470 = vmatpush1.bf16.msra.mxu0 0
        %471 = vmatprep.subr.bf16.mxu0 %v413
        %472 = vmatpush1.bf16.msra.mxu0 %v410
        %473 = vmatprep.subr.bf16.mxu0 0
        %474 = vmatpush2.bf16.msra.mxu0 0
        %475 = vmatprep.subr.bf16.mxu0 0
        %476 = vmatpush2.bf16.msra.mxu0 0
        %477 = vmatprep.subr.bf16.mxu0 0
        %478 = vmatpush2.bf16.msra.mxu0 0
        %479 = vmatprep.subr.bf16.mxu0 0
        %480 = vmatpush2.bf16.msra.mxu0 0
        %481 = vmatprep.subr.bf16.mxu0 0
        %482 = vmatpush2.bf16.msra.mxu0 0
        %483 = vmatprep.subr.bf16.mxu0 0
        %484 = vmatpush2.bf16.msra.mxu0 0
        %485 = vmatprep.subr.bf16.mxu0 0
        %486 = vmatpush2.bf16.msra.mxu0 0
        %487 = vmatprep.subr.bf16.mxu0 0
        %488 = vmatpush2.bf16.msra.mxu0 0
        %489 = vmatprep.mubr.bf16.mxu0 0
        %490 = vmatmul.mubr.bf16.gmra.mxu0 %v403
        %v491 = vpop.f32.mrf.mxu0
        %v492 = vadd.f32 0.0, %v491
        %v493 = vpop.f32.mrf.mxu0
        %v494 = vadd.f32 0.0, %v493
        %v495 = vpop.f32.mrf.mxu0
        %v496 = vadd.f32 0.0, %v495
        %v497 = vpop.f32.mrf.mxu0
        %v498 = vadd.f32 0.0, %v497
        %499 = vdwg.mxu0
        %500 = vmatprep.subr.bf16.mxu0 0
        %501 = vmatpush1.bf16.msra.mxu0 0
        %502 = vmatprep.subr.bf16.mxu0 0
        %503 = vmatpush1.bf16.msra.mxu0 0
        %504 = vmatprep.subr.bf16.mxu0 0
        %505 = vmatpush1.bf16.msra.mxu0 0
        %506 = vmatprep.subr.bf16.mxu0 0
        %507 = vmatpush1.bf16.msra.mxu0 0
        %508 = vmatprep.subr.bf16.mxu0 0
        %509 = vmatpush1.bf16.msra.mxu0 0
        %510 = vmatprep.subr.bf16.mxu0 0
        %511 = vmatpush1.bf16.msra.mxu0 0
        %512 = vmatprep.subr.bf16.mxu0 0
        %513 = vmatpush1.bf16.msra.mxu0 0
        %514 = vmatprep.subr.bf16.mxu0 %v419
        %515 = vmatpush1.bf16.msra.mxu0 %v416
        %516 = vmatprep.subr.bf16.mxu0 0
        %517 = vmatpush2.bf16.msra.mxu0 0
        %518 = vmatprep.subr.bf16.mxu0 0
        %519 = vmatpush2.bf16.msra.mxu0 0
        %520 = vmatprep.subr.bf16.mxu0 0
        %521 = vmatpush2.bf16.msra.mxu0 0
        %522 = vmatprep.subr.bf16.mxu0 0
        %523 = vmatpush2.bf16.msra.mxu0 0
        %524 = vmatprep.subr.bf16.mxu0 0
        %525 = vmatpush2.bf16.msra.mxu0 0
        %526 = vmatprep.subr.bf16.mxu0 0
        %527 = vmatpush2.bf16.msra.mxu0 0
        %528 = vmatprep.subr.bf16.mxu0 0
        %529 = vmatpush2.bf16.msra.mxu0 0
        %530 = vmatprep.subr.bf16.mxu0 0
        %531 = vmatpush2.bf16.msra.mxu0 0
        %532 = vmatprep.mubr.bf16.mxu0 0
        %533 = vmatmul.mubr.bf16.gmra.mxu0 %v403
        %v534 = vpop.f32.mrf.mxu0
        %v535 = vadd.f32 0.0, %v534
        %v536 = vpop.f32.mrf.mxu0
        %v537 = vadd.f32 0.0, %v536
        %v538 = vpop.f32.mrf.mxu0
        %v539 = vadd.f32 0.0, %v538
        %v540 = vpop.f32.mrf.mxu0
        %v541 = vadd.f32 0.0, %v540
        %542 = vdwg.mxu0
        %543 = vmatprep.subr.bf16.mxu0 0
        %544 = vmatpush1.bf16.msra.mxu0 0
        %545 = vmatprep.subr.bf16.mxu0 0
        %546 = vmatpush1.bf16.msra.mxu0 0
        %547 = vmatprep.subr.bf16.mxu0 0
        %548 = vmatpush1.bf16.msra.mxu0 0
        %549 = vmatprep.subr.bf16.mxu0 0
        %550 = vmatpush1.bf16.msra.mxu0 0
        %551 = vmatprep.subr.bf16.mxu0 0
        %552 = vmatpush1.bf16.msra.mxu0 0
        %553 = vmatprep.subr.bf16.mxu0 0
        %554 = vmatpush1.bf16.msra.mxu0 0
        %555 = vmatprep.subr.bf16.mxu0 0
        %556 = vmatpush1.bf16.msra.mxu0 0
        %557 = vmatprep.subr.bf16.mxu0 %v425
        %558 = vmatpush1.bf16.msra.mxu0 %v422
        %559 = vmatprep.subr.bf16.mxu0 0
        %560 = vmatpush2.bf16.msra.mxu0 0
        %561 = vmatprep.subr.bf16.mxu0 0
        %562 = vmatpush2.bf16.msra.mxu0 0
        %563 = vmatprep.subr.bf16.mxu0 0
        %564 = vmatpush2.bf16.msra.mxu0 0
        %565 = vmatprep.subr.bf16.mxu0 0
        %566 = vmatpush2.bf16.msra.mxu0 0
        %567 = vmatprep.subr.bf16.mxu0 0
        %568 = vmatpush2.bf16.msra.mxu0 0
        %569 = vmatprep.subr.bf16.mxu0 0
        %570 = vmatpush2.bf16.msra.mxu0 0
        %571 = vmatprep.subr.bf16.mxu0 0
        %572 = vmatpush2.bf16.msra.mxu0 0
        %573 = vmatprep.subr.bf16.mxu0 0
        %574 = vmatpush2.bf16.msra.mxu0 0
        %575 = vmatprep.mubr.bf16.mxu0 0
        %576 = vmatmul.mubr.bf16.gmra.mxu0 %v403
        %v577 = vpop.f32.mrf.mxu0
        %v578 = vadd.f32 0.0, %v577
        %v579 = vpop.f32.mrf.mxu0
        %v580 = vadd.f32 0.0, %v579
        %v581 = vpop.f32.mrf.mxu0
        %v582 = vadd.f32 0.0, %v581
        %v583 = vpop.f32.mrf.mxu0
        %v584 = vadd.f32 0.0, %v583
        %585 = vdwg.mxu0
        %586 = vmatprep.subr.bf16.mxu0 0
        %587 = vmatpush1.bf16.msra.mxu0 0
        %588 = vmatprep.subr.bf16.mxu0 0
        %589 = vmatpush1.bf16.msra.mxu0 0
        %590 = vmatprep.subr.bf16.mxu0 0
        %591 = vmatpush1.bf16.msra.mxu0 0
        %592 = vmatprep.subr.bf16.mxu0 0
        %593 = vmatpush1.bf16.msra.mxu0 0
        %594 = vmatprep.subr.bf16.mxu0 0
        %595 = vmatpush1.bf16.msra.mxu0 0
        %596 = vmatprep.subr.bf16.mxu0 0
        %597 = vmatpush1.bf16.msra.mxu0 0
        %598 = vmatprep.subr.bf16.mxu0 0
        %599 = vmatpush1.bf16.msra.mxu0 0
        %600 = vmatprep.subr.bf16.mxu0 %v431
        %601 = vmatpush1.bf16.msra.mxu0 %v428
        %602 = vmatprep.subr.bf16.mxu0 0
        %603 = vmatpush2.bf16.msra.mxu0 0
        %604 = vmatprep.subr.bf16.mxu0 0
        %605 = vmatpush2.bf16.msra.mxu0 0
        %606 = vmatprep.subr.bf16.mxu0 0
        %607 = vmatpush2.bf16.msra.mxu0 0
        %608 = vmatprep.subr.bf16.mxu0 0
        %609 = vmatpush2.bf16.msra.mxu0 0
        %610 = vmatprep.subr.bf16.mxu0 0
        %611 = vmatpush2.bf16.msra.mxu0 0
        %612 = vmatprep.subr.bf16.mxu0 0
        %613 = vmatpush2.bf16.msra.mxu0 0
        %614 = vmatprep.subr.bf16.mxu0 0
        %615 = vmatpush2.bf16.msra.mxu0 0
        %616 = vmatprep.subr.bf16.mxu0 0
        %617 = vmatpush2.bf16.msra.mxu0 0
        %618 = vmatprep.mubr.bf16.mxu0 0
        %619 = vmatmul.mubr.bf16.gmra.mxu0 %v403
        %v620 = vpop.f32.mrf.mxu0
        %v621 = vadd.f32 0.0, %v620
        %v622 = vpop.f32.mrf.mxu0
        %v623 = vadd.f32 0.0, %v622
        %v624 = vpop.f32.mrf.mxu0
        %v625 = vadd.f32 0.0, %v624
        %v626 = vpop.f32.mrf.mxu0
        %v627 = vadd.f32 0.0, %v626
        %628 = vdwg.mxu0
        %629 = vmatprep.subr.bf16.mxu0 0
        %630 = vmatpush1.bf16.msra.mxu0 0
        %631 = vmatprep.subr.bf16.mxu0 0
        %632 = vmatpush1.bf16.msra.mxu0 0
        %633 = vmatprep.subr.bf16.mxu0 0
        %634 = vmatpush1.bf16.msra.mxu0 0
        %635 = vmatprep.subr.bf16.mxu0 0
        %636 = vmatpush1.bf16.msra.mxu0 0
        %637 = vmatprep.subr.bf16.mxu0 0
        %638 = vmatpush1.bf16.msra.mxu0 0
        %639 = vmatprep.subr.bf16.mxu0 0
        %640 = vmatpush1.bf16.msra.mxu0 0
        %641 = vmatprep.subr.bf16.mxu0 0
        %642 = vmatpush1.bf16.msra.mxu0 0
        %643 = vmatprep.subr.bf16.mxu0 %v437
        %644 = vmatpush1.bf16.msra.mxu0 %v434
        %645 = vmatprep.subr.bf16.mxu0 0
        %646 = vmatpush2.bf16.msra.mxu0 0
        %647 = vmatprep.subr.bf16.mxu0 0
        %648 = vmatpush2.bf16.msra.mxu0 0
        %649 = vmatprep.subr.bf16.mxu0 0
        %650 = vmatpush2.bf16.msra.mxu0 0
        %651 = vmatprep.subr.bf16.mxu0 0
        %652 = vmatpush2.bf16.msra.mxu0 0
        %653 = vmatprep.subr.bf16.mxu0 0
        %654 = vmatpush2.bf16.msra.mxu0 0
        %655 = vmatprep.subr.bf16.mxu0 0
        %656 = vmatpush2.bf16.msra.mxu0 0
        %657 = vmatprep.subr.bf16.mxu0 0
        %658 = vmatpush2.bf16.msra.mxu0 0
        %659 = vmatprep.subr.bf16.mxu0 0
        %660 = vmatpush2.bf16.msra.mxu0 0
        %661 = vmatprep.mubr.bf16.mxu0 0
        %662 = vmatmul.mubr.bf16.gmra.mxu0 %v403
        %v663 = vpop.f32.mrf.mxu0
        %v664 = vadd.f32 0.0, %v663
        %v665 = vpop.f32.mrf.mxu0
        %v666 = vadd.f32 0.0, %v665
        %v667 = vpop.f32.mrf.mxu0
        %v668 = vadd.f32 0.0, %v667
        %v669 = vpop.f32.mrf.mxu0
        %v670 = vadd.f32 0.0, %v669
        %671 = vdwg.mxu0
        %672 = vmatprep.subr.bf16.mxu0 0
        %673 = vmatpush1.bf16.msra.mxu0 0
        %674 = vmatprep.subr.bf16.mxu0 0
        %675 = vmatpush1.bf16.msra.mxu0 0
        %676 = vmatprep.subr.bf16.mxu0 0
        %677 = vmatpush1.bf16.msra.mxu0 0
        %678 = vmatprep.subr.bf16.mxu0 0
        %679 = vmatpush1.bf16.msra.mxu0 0
        %680 = vmatprep.subr.bf16.mxu0 0
        %681 = vmatpush1.bf16.msra.mxu0 0
        %682 = vmatprep.subr.bf16.mxu0 0
        %683 = vmatpush1.bf16.msra.mxu0 0
        %684 = vmatprep.subr.bf16.mxu0 0
        %685 = vmatpush1.bf16.msra.mxu0 0
        %686 = vmatprep.subr.bf16.mxu0 %v443
        %687 = vmatpush1.bf16.msra.mxu0 %v440
        %688 = vmatprep.subr.bf16.mxu0 0
        %689 = vmatpush2.bf16.msra.mxu0 0
        %690 = vmatprep.subr.bf16.mxu0 0
        %691 = vmatpush2.bf16.msra.mxu0 0
        %692 = vmatprep.subr.bf16.mxu0 0
        %693 = vmatpush2.bf16.msra.mxu0 0
        %694 = vmatprep.subr.bf16.mxu0 0
        %695 = vmatpush2.bf16.msra.mxu0 0
        %696 = vmatprep.subr.bf16.mxu0 0
        %697 = vmatpush2.bf16.msra.mxu0 0
        %698 = vmatprep.subr.bf16.mxu0 0
        %699 = vmatpush2.bf16.msra.mxu0 0
        %700 = vmatprep.subr.bf16.mxu0 0
        %701 = vmatpush2.bf16.msra.mxu0 0
        %702 = vmatprep.subr.bf16.mxu0 0
        %703 = vmatpush2.bf16.msra.mxu0 0
        %704 = vmatprep.mubr.bf16.mxu0 0
        %705 = vmatmul.mubr.bf16.gmra.mxu0 %v403
        %v706 = vpop.f32.mrf.mxu0
        %v707 = vadd.f32 0.0, %v706
        %v708 = vpop.f32.mrf.mxu0
        %v709 = vadd.f32 0.0, %v708
        %v710 = vpop.f32.mrf.mxu0
        %v711 = vadd.f32 0.0, %v710
        %v712 = vpop.f32.mrf.mxu0
        %v713 = vadd.f32 0.0, %v712
        %714 = vdwg.mxu0
        %715 = vmatprep.subr.bf16.mxu0 0
        %716 = vmatpush1.bf16.msra.mxu0 0
        %717 = vmatprep.subr.bf16.mxu0 0
        %718 = vmatpush1.bf16.msra.mxu0 0
        %719 = vmatprep.subr.bf16.mxu0 0
        %720 = vmatpush1.bf16.msra.mxu0 0
        %721 = vmatprep.subr.bf16.mxu0 0
        %722 = vmatpush1.bf16.msra.mxu0 0
        %723 = vmatprep.subr.bf16.mxu0 0
        %724 = vmatpush1.bf16.msra.mxu0 0
        %725 = vmatprep.subr.bf16.mxu0 0
        %726 = vmatpush1.bf16.msra.mxu0 0
        %727 = vmatprep.subr.bf16.mxu0 0
        %728 = vmatpush1.bf16.msra.mxu0 0
        %729 = vmatprep.subr.bf16.mxu0 %v449
        %730 = vmatpush1.bf16.msra.mxu0 %v446
        %731 = vmatprep.subr.bf16.mxu0 0
        %732 = vmatpush2.bf16.msra.mxu0 0
        %733 = vmatprep.subr.bf16.mxu0 0
        %734 = vmatpush2.bf16.msra.mxu0 0
        %735 = vmatprep.subr.bf16.mxu0 0
        %736 = vmatpush2.bf16.msra.mxu0 0
        %737 = vmatprep.subr.bf16.mxu0 0
        %738 = vmatpush2.bf16.msra.mxu0 0
        %739 = vmatprep.subr.bf16.mxu0 0
        %740 = vmatpush2.bf16.msra.mxu0 0
        %741 = vmatprep.subr.bf16.mxu0 0
        %742 = vmatpush2.bf16.msra.mxu0 0
        %743 = vmatprep.subr.bf16.mxu0 0
        %744 = vmatpush2.bf16.msra.mxu0 0
        %745 = vmatprep.subr.bf16.mxu0 0
        %746 = vmatpush2.bf16.msra.mxu0 0
        %747 = vmatprep.mubr.bf16.mxu0 0
        %748 = vmatmul.mubr.bf16.gmra.mxu0 %v403
        %v749 = vpop.f32.mrf.mxu0
        %v750 = vadd.f32 0.0, %v749
        %v751 = vpop.f32.mrf.mxu0
        %v752 = vadd.f32 0.0, %v751
        %v753 = vpop.f32.mrf.mxu0
        %v754 = vadd.f32 0.0, %v753
        %v755 = vpop.f32.mrf.mxu0
        %v756 = vadd.f32 0.0, %v755
        %757 = vdwg.mxu0
        %758 = vmatprep.subr.bf16.mxu0 0
        %759 = vmatpush1.bf16.msra.mxu0 0
        %760 = vmatprep.subr.bf16.mxu0 0
        %761 = vmatpush1.bf16.msra.mxu0 0
        %762 = vmatprep.subr.bf16.mxu0 0
        %763 = vmatpush1.bf16.msra.mxu0 0
        %764 = vmatprep.subr.bf16.mxu0 0
        %765 = vmatpush1.bf16.msra.mxu0 0
        %766 = vmatprep.subr.bf16.mxu0 0
        %767 = vmatpush1.bf16.msra.mxu0 0
        %768 = vmatprep.subr.bf16.mxu0 0
        %769 = vmatpush1.bf16.msra.mxu0 0
        %770 = vmatprep.subr.bf16.mxu0 0
        %771 = vmatpush1.bf16.msra.mxu0 0
        %772 = vmatprep.subr.bf16.mxu0 %v455
        %773 = vmatpush1.bf16.msra.mxu0 %v452
        %774 = vmatprep.subr.bf16.mxu0 0
        %775 = vmatpush2.bf16.msra.mxu0 0
        %776 = vmatprep.subr.bf16.mxu0 0
        %777 = vmatpush2.bf16.msra.mxu0 0
        %778 = vmatprep.subr.bf16.mxu0 0
        %779 = vmatpush2.bf16.msra.mxu0 0
        %780 = vmatprep.subr.bf16.mxu0 0
        %781 = vmatpush2.bf16.msra.mxu0 0
        %782 = vmatprep.subr.bf16.mxu0 0
        %783 = vmatpush2.bf16.msra.mxu0 0
        %784 = vmatprep.subr.bf16.mxu0 0
        %785 = vmatpush2.bf16.msra.mxu0 0
        %786 = vmatprep.subr.bf16.mxu0 0
        %787 = vmatpush2.bf16.msra.mxu0 0
        %788 = vmatprep.subr.bf16.mxu0 0
        %789 = vmatpush2.bf16.msra.mxu0 0
        %790 = vmatprep.mubr.bf16.mxu0 0
        %791 = vmatmul.mubr.bf16.gmra.mxu0 %v403
        %v792 = vpop.f32.mrf.mxu0
        %v793 = vadd.f32 0.0, %v792
        %v794 = vpop.f32.mrf.mxu0
        %v795 = vadd.f32 0.0, %v794
        %v796 = vpop.f32.mrf.mxu0
        %v797 = vadd.f32 0.0, %v796
        %v798 = vpop.f32.mrf.mxu0
        %v799 = vadd.f32 0.0, %v798
        %800 = vdwg.mxu0
        %s801 = scalar_lea.vmem %s291, 128 [#allocation2]
        %v802 = vld [vmem:[%s801] sm:$0xff]
        %v803 = vld [vmem:[%s801 + $0x8] sm:$0xff]
        %v804 = vld [vmem:[%s801 + $0x10] sm:$0xff]
        %v805 = vld [vmem:[%s801 + $0x18] sm:$0xff]
        %v806 = vld [vmem:[%s801 + $0x20] sm:$0xff]
        %v807 = vld [vmem:[%s801 + $0x28] sm:$0xff]
        %v808 = vld [vmem:[%s801 + $0x30] sm:$0xff]
        %v809 = vld [vmem:[%s801 + $0x38] sm:$0xff]
        %v810 = vld [vmem:[%s801 + $0x40] sm:$0x11]
        %v811 = vld [vmem:[%s801 + $0x48] sm:$0x11]
        %v812 = vld [vmem:[%s801 + $0x50] sm:$0x11]
        %v813 = vld [vmem:[%s801 + $0x58] sm:$0x11]
        %v814 = vld [vmem:[%s801 + $0x60] sm:$0x11]
        %v815 = vld [vmem:[%s801 + $0x68] sm:$0x11]
        %v816 = vld [vmem:[%s801 + $0x70] sm:$0x11]
        %v817 = vld [vmem:[%s801 + $0x78] sm:$0x11]
        %v834 = vunpack.c.l.b16 %v802
        %v835 = vunpack.c.h.b16 %v802
        %v836 = vunpack.c.l.b16 %v803
        %v837 = vunpack.c.h.b16 %v803
        %v838 = vunpack.c.l.b16 %v804
        %v839 = vunpack.c.h.b16 %v804
        %v840 = vunpack.c.l.b16 %v805
        %v841 = vunpack.c.h.b16 %v805
        %v842 = vunpack.c.l.b16 %v806
        %v843 = vunpack.c.h.b16 %v806
        %v844 = vunpack.c.l.b16 %v807
        %v845 = vunpack.c.h.b16 %v807
        %v846 = vunpack.c.l.b16 %v808
        %v847 = vunpack.c.h.b16 %v808
        %v848 = vunpack.c.l.b16 %v809
        %v849 = vunpack.c.h.b16 %v809
        %v850 = vunpack.c.l.b16 %v810
        %v851 = vunpack.c.h.b16 %v810
        %v852 = vunpack.c.l.b16 %v811
        %v853 = vunpack.c.h.b16 %v811
        %v854 = vunpack.c.l.b16 %v812
        %v855 = vunpack.c.h.b16 %v812
        %v856 = vunpack.c.l.b16 %v813
        %v857 = vunpack.c.h.b16 %v813
        %v858 = vunpack.c.l.b16 %v814
        %v859 = vunpack.c.h.b16 %v814
        %v860 = vunpack.c.l.b16 %v815
        %v861 = vunpack.c.h.b16 %v815
        %v862 = vunpack.c.l.b16 %v816
        %v863 = vunpack.c.h.b16 %v816
        %v864 = vunpack.c.l.b16 %v817
        %v865 = vunpack.c.h.b16 %v817
        %v866 = vpack.c.b16 %v850, %v834
        %v867 = vpack.c.b16 %v851, %v835
        %v868 = vpack.c.b16 %v852, %v836
        %v869 = vpack.c.b16 %v853, %v837
        %v870 = vpack.c.b16 %v854, %v838
        %v871 = vpack.c.b16 %v855, %v839
        %v872 = vpack.c.b16 %v856, %v840
        %v873 = vpack.c.b16 %v857, %v841
        %v874 = vpack.c.b16 %v858, %v842
        %v875 = vpack.c.b16 %v859, %v843
        %v876 = vpack.c.b16 %v860, %v844
        %v877 = vpack.c.b16 %v861, %v845
        %v878 = vpack.c.b16 %v862, %v846
        %v879 = vpack.c.b16 %v863, %v847
        %v880 = vpack.c.b16 %v864, %v848
        %v881 = vpack.c.b16 %v865, %v849
        %v883 = vand.u32 %v866, %v408
        %v886 = vand.u32 %v867, %v408
        %v889 = vand.u32 %v868, %v408
        %v892 = vand.u32 %v869, %v408
        %v895 = vand.u32 %v870, %v408
        %v898 = vand.u32 %v871, %v408
        %v901 = vand.u32 %v872, %v408
        %v904 = vand.u32 %v873, %v408
        %v907 = vand.u32 %v874, %v408
        %v910 = vand.u32 %v875, %v408
        %v913 = vand.u32 %v876, %v408
        %v916 = vand.u32 %v877, %v408
        %v919 = vand.u32 %v878, %v408
        %v922 = vand.u32 %v879, %v408
        %v925 = vand.u32 %v880, %v408
        %v928 = vand.u32 %v881, %v408
        %930 = vmatprep.subr.bf16.mxu0 0
        %931 = vmatpush1.bf16.msra.mxu0 0
        %932 = vmatprep.subr.bf16.mxu0 0
        %933 = vmatpush1.bf16.msra.mxu0 0
        %934 = vmatprep.subr.bf16.mxu0 0
        %935 = vmatpush1.bf16.msra.mxu0 0
        %936 = vmatprep.subr.bf16.mxu0 0
        %937 = vmatpush1.bf16.msra.mxu0 0
        %938 = vmatprep.subr.bf16.mxu0 0
        %939 = vmatpush1.bf16.msra.mxu0 0
        %940 = vmatprep.subr.bf16.mxu0 0
        %941 = vmatpush1.bf16.msra.mxu0 0
        %942 = vmatprep.subr.bf16.mxu0 0
        %943 = vmatpush1.bf16.msra.mxu0 0
        %944 = vmatprep.subr.bf16.mxu0 %v886
        %945 = vmatpush1.bf16.msra.mxu0 %v883
        %946 = vmatprep.subr.bf16.mxu0 0
        %947 = vmatpush2.bf16.msra.mxu0 0
        %948 = vmatprep.subr.bf16.mxu0 0
        %949 = vmatpush2.bf16.msra.mxu0 0
        %950 = vmatprep.subr.bf16.mxu0 0
        %951 = vmatpush2.bf16.msra.mxu0 0
        %952 = vmatprep.subr.bf16.mxu0 0
        %953 = vmatpush2.bf16.msra.mxu0 0
        %954 = vmatprep.subr.bf16.mxu0 0
        %955 = vmatpush2.bf16.msra.mxu0 0
        %956 = vmatprep.subr.bf16.mxu0 0
        %957 = vmatpush2.bf16.msra.mxu0 0
        %958 = vmatprep.subr.bf16.mxu0 0
        %959 = vmatpush2.bf16.msra.mxu0 0
        %960 = vmatprep.subr.bf16.mxu0 0
        %961 = vmatpush2.bf16.msra.mxu0 0
        %962 = vmatprep.mubr.bf16.mxu0 0
        %963 = vmatmul.mubr.bf16.gmra.mxu0 %v403
        %v964 = vpop.f32.mrf.mxu0
        %v965 = vadd.f32 0.0, %v964
        %v966 = vpop.f32.mrf.mxu0
        %v967 = vadd.f32 0.0, %v966
        %v968 = vpop.f32.mrf.mxu0
        %v969 = vadd.f32 0.0, %v968
        %v970 = vpop.f32.mrf.mxu0
        %v971 = vadd.f32 0.0, %v970
        %972 = vdwg.mxu0
        %973 = vmatprep.subr.bf16.mxu0 0
        %974 = vmatpush1.bf16.msra.mxu0 0
        %975 = vmatprep.subr.bf16.mxu0 0
        %976 = vmatpush1.bf16.msra.mxu0 0
        %977 = vmatprep.subr.bf16.mxu0 0
        %978 = vmatpush1.bf16.msra.mxu0 0
        %979 = vmatprep.subr.bf16.mxu0 0
        %980 = vmatpush1.bf16.msra.mxu0 0
        %981 = vmatprep.subr.bf16.mxu0 0
        %982 = vmatpush1.bf16.msra.mxu0 0
        %983 = vmatprep.subr.bf16.mxu0 0
        %984 = vmatpush1.bf16.msra.mxu0 0
        %985 = vmatprep.subr.bf16.mxu0 0
        %986 = vmatpush1.bf16.msra.mxu0 0
        %987 = vmatprep.subr.bf16.mxu0 %v892
        %988 = vmatpush1.bf16.msra.mxu0 %v889
        %989 = vmatprep.subr.bf16.mxu0 0
        %990 = vmatpush2.bf16.msra.mxu0 0
        %991 = vmatprep.subr.bf16.mxu0 0
        %992 = vmatpush2.bf16.msra.mxu0 0
        %993 = vmatprep.subr.bf16.mxu0 0
        %994 = vmatpush2.bf16.msra.mxu0 0
        %995 = vmatprep.subr.bf16.mxu0 0
        %996 = vmatpush2.bf16.msra.mxu0 0
        %997 = vmatprep.subr.bf16.mxu0 0
        %998 = vmatpush2.bf16.msra.mxu0 0
        %999 = vmatprep.subr.bf16.mxu0 0
        %1000 = vmatpush2.bf16.msra.mxu0 0
        %1001 = vmatprep.subr.bf16.mxu0 0
        %1002 = vmatpush2.bf16.msra.mxu0 0
        %1003 = vmatprep.subr.bf16.mxu0 0
        %1004 = vmatpush2.bf16.msra.mxu0 0
        %1005 = vmatprep.mubr.bf16.mxu0 0
        %1006 = vmatmul.mubr.bf16.gmra.mxu0 %v403
        %v1007 = vpop.f32.mrf.mxu0
        %v1008 = vadd.f32 0.0, %v1007
        %v1009 = vpop.f32.mrf.mxu0
        %v1010 = vadd.f32 0.0, %v1009
        %v1011 = vpop.f32.mrf.mxu0
        %v1012 = vadd.f32 0.0, %v1011
        %v1013 = vpop.f32.mrf.mxu0
        %v1014 = vadd.f32 0.0, %v1013
        %1015 = vdwg.mxu0
        %1016 = vmatprep.subr.bf16.mxu0 0
        %1017 = vmatpush1.bf16.msra.mxu0 0
        %1018 = vmatprep.subr.bf16.mxu0 0
        %1019 = vmatpush1.bf16.msra.mxu0 0
        %1020 = vmatprep.subr.bf16.mxu0 0
        %1021 = vmatpush1.bf16.msra.mxu0 0
        %1022 = vmatprep.subr.bf16.mxu0 0
        %1023 = vmatpush1.bf16.msra.mxu0 0
        %1024 = vmatprep.subr.bf16.mxu0 0
        %1025 = vmatpush1.bf16.msra.mxu0 0
        %1026 = vmatprep.subr.bf16.mxu0 0
        %1027 = vmatpush1.bf16.msra.mxu0 0
        %1028 = vmatprep.subr.bf16.mxu0 0
        %1029 = vmatpush1.bf16.msra.mxu0 0
        %1030 = vmatprep.subr.bf16.mxu0 %v898
        %1031 = vmatpush1.bf16.msra.mxu0 %v895
        %1032 = vmatprep.subr.bf16.mxu0 0
        %1033 = vmatpush2.bf16.msra.mxu0 0
        %1034 = vmatprep.subr.bf16.mxu0 0
        %1035 = vmatpush2.bf16.msra.mxu0 0
        %1036 = vmatprep.subr.bf16.mxu0 0
        %1037 = vmatpush2.bf16.msra.mxu0 0
        %1038 = vmatprep.subr.bf16.mxu0 0
        %1039 = vmatpush2.bf16.msra.mxu0 0
        %1040 = vmatprep.subr.bf16.mxu0 0
        %1041 = vmatpush2.bf16.msra.mxu0 0
        %1042 = vmatprep.subr.bf16.mxu0 0
        %1043 = vmatpush2.bf16.msra.mxu0 0
        %1044 = vmatprep.subr.bf16.mxu0 0
        %1045 = vmatpush2.bf16.msra.mxu0 0
        %1046 = vmatprep.subr.bf16.mxu0 0
        %1047 = vmatpush2.bf16.msra.mxu0 0
        %1048 = vmatprep.mubr.bf16.mxu0 0
        %1049 = vmatmul.mubr.bf16.gmra.mxu0 %v403
        %v1050 = vpop.f32.mrf.mxu0
        %v1051 = vadd.f32 0.0, %v1050
        %v1052 = vpop.f32.mrf.mxu0
        %v1053 = vadd.f32 0.0, %v1052
        %v1054 = vpop.f32.mrf.mxu0
        %v1055 = vadd.f32 0.0, %v1054
        %v1056 = vpop.f32.mrf.mxu0
        %v1057 = vadd.f32 0.0, %v1056
        %1058 = vdwg.mxu0
        %1059 = vmatprep.subr.bf16.mxu0 0
        %1060 = vmatpush1.bf16.msra.mxu0 0
        %1061 = vmatprep.subr.bf16.mxu0 0
        %1062 = vmatpush1.bf16.msra.mxu0 0
        %1063 = vmatprep.subr.bf16.mxu0 0
        %1064 = vmatpush1.bf16.msra.mxu0 0
        %1065 = vmatprep.subr.bf16.mxu0 0
        %1066 = vmatpush1.bf16.msra.mxu0 0
        %1067 = vmatprep.subr.bf16.mxu0 0
        %1068 = vmatpush1.bf16.msra.mxu0 0
        %1069 = vmatprep.subr.bf16.mxu0 0
        %1070 = vmatpush1.bf16.msra.mxu0 0
        %1071 = vmatprep.subr.bf16.mxu0 0
        %1072 = vmatpush1.bf16.msra.mxu0 0
        %1073 = vmatprep.subr.bf16.mxu0 %v904
        %1074 = vmatpush1.bf16.msra.mxu0 %v901
        %1075 = vmatprep.subr.bf16.mxu0 0
        %1076 = vmatpush2.bf16.msra.mxu0 0
        %1077 = vmatprep.subr.bf16.mxu0 0
        %1078 = vmatpush2.bf16.msra.mxu0 0
        %1079 = vmatprep.subr.bf16.mxu0 0
        %1080 = vmatpush2.bf16.msra.mxu0 0
        %1081 = vmatprep.subr.bf16.mxu0 0
        %1082 = vmatpush2.bf16.msra.mxu0 0
        %1083 = vmatprep.subr.bf16.mxu0 0
        %1084 = vmatpush2.bf16.msra.mxu0 0
        %1085 = vmatprep.subr.bf16.mxu0 0
        %1086 = vmatpush2.bf16.msra.mxu0 0
        %1087 = vmatprep.subr.bf16.mxu0 0
        %1088 = vmatpush2.bf16.msra.mxu0 0
        %1089 = vmatprep.subr.bf16.mxu0 0
        %1090 = vmatpush2.bf16.msra.mxu0 0
        %1091 = vmatprep.mubr.bf16.mxu0 0
        %1092 = vmatmul.mubr.bf16.gmra.mxu0 %v403
        %v1093 = vpop.f32.mrf.mxu0
        %v1094 = vadd.f32 0.0, %v1093
        %v1095 = vpop.f32.mrf.mxu0
        %v1096 = vadd.f32 0.0, %v1095
        %v1097 = vpop.f32.mrf.mxu0
        %v1098 = vadd.f32 0.0, %v1097
        %v1099 = vpop.f32.mrf.mxu0
        %v1100 = vadd.f32 0.0, %v1099
        %1101 = vdwg.mxu0
        %1102 = vmatprep.subr.bf16.mxu0 0
        %1103 = vmatpush1.bf16.msra.mxu0 0
        %1104 = vmatprep.subr.bf16.mxu0 0
        %1105 = vmatpush1.bf16.msra.mxu0 0
        %1106 = vmatprep.subr.bf16.mxu0 0
        %1107 = vmatpush1.bf16.msra.mxu0 0
        %1108 = vmatprep.subr.bf16.mxu0 0
        %1109 = vmatpush1.bf16.msra.mxu0 0
        %1110 = vmatprep.subr.bf16.mxu0 0
        %1111 = vmatpush1.bf16.msra.mxu0 0
        %1112 = vmatprep.subr.bf16.mxu0 0
        %1113 = vmatpush1.bf16.msra.mxu0 0
        %1114 = vmatprep.subr.bf16.mxu0 0
        %1115 = vmatpush1.bf16.msra.mxu0 0
        %1116 = vmatprep.subr.bf16.mxu0 %v910
        %1117 = vmatpush1.bf16.msra.mxu0 %v907
        %1118 = vmatprep.subr.bf16.mxu0 0
        %1119 = vmatpush2.bf16.msra.mxu0 0
        %1120 = vmatprep.subr.bf16.mxu0 0
        %1121 = vmatpush2.bf16.msra.mxu0 0
        %1122 = vmatprep.subr.bf16.mxu0 0
        %1123 = vmatpush2.bf16.msra.mxu0 0
        %1124 = vmatprep.subr.bf16.mxu0 0
        %1125 = vmatpush2.bf16.msra.mxu0 0
        %1126 = vmatprep.subr.bf16.mxu0 0
        %1127 = vmatpush2.bf16.msra.mxu0 0
        %1128 = vmatprep.subr.bf16.mxu0 0
        %1129 = vmatpush2.bf16.msra.mxu0 0
        %1130 = vmatprep.subr.bf16.mxu0 0
        %1131 = vmatpush2.bf16.msra.mxu0 0
        %1132 = vmatprep.subr.bf16.mxu0 0
        %1133 = vmatpush2.bf16.msra.mxu0 0
        %1134 = vmatprep.mubr.bf16.mxu0 0
        %1135 = vmatmul.mubr.bf16.gmra.mxu0 %v403
        %v1136 = vpop.f32.mrf.mxu0
        %v1137 = vadd.f32 0.0, %v1136
        %v1138 = vpop.f32.mrf.mxu0
        %v1139 = vadd.f32 0.0, %v1138
        %v1140 = vpop.f32.mrf.mxu0
        %v1141 = vadd.f32 0.0, %v1140
        %v1142 = vpop.f32.mrf.mxu0
        %v1143 = vadd.f32 0.0, %v1142
        %1144 = vdwg.mxu0
        %1145 = vmatprep.subr.bf16.mxu0 0
        %1146 = vmatpush1.bf16.msra.mxu0 0
        %1147 = vmatprep.subr.bf16.mxu0 0
        %1148 = vmatpush1.bf16.msra.mxu0 0
        %1149 = vmatprep.subr.bf16.mxu0 0
        %1150 = vmatpush1.bf16.msra.mxu0 0
        %1151 = vmatprep.subr.bf16.mxu0 0
        %1152 = vmatpush1.bf16.msra.mxu0 0
        %1153 = vmatprep.subr.bf16.mxu0 0
        %1154 = vmatpush1.bf16.msra.mxu0 0
        %1155 = vmatprep.subr.bf16.mxu0 0
        %1156 = vmatpush1.bf16.msra.mxu0 0
        %1157 = vmatprep.subr.bf16.mxu0 0
        %1158 = vmatpush1.bf16.msra.mxu0 0
        %1159 = vmatprep.subr.bf16.mxu0 %v916
        %1160 = vmatpush1.bf16.msra.mxu0 %v913
        %1161 = vmatprep.subr.bf16.mxu0 0
        %1162 = vmatpush2.bf16.msra.mxu0 0
        %1163 = vmatprep.subr.bf16.mxu0 0
        %1164 = vmatpush2.bf16.msra.mxu0 0
        %1165 = vmatprep.subr.bf16.mxu0 0
        %1166 = vmatpush2.bf16.msra.mxu0 0
        %1167 = vmatprep.subr.bf16.mxu0 0
        %1168 = vmatpush2.bf16.msra.mxu0 0
        %1169 = vmatprep.subr.bf16.mxu0 0
        %1170 = vmatpush2.bf16.msra.mxu0 0
        %1171 = vmatprep.subr.bf16.mxu0 0
        %1172 = vmatpush2.bf16.msra.mxu0 0
        %1173 = vmatprep.subr.bf16.mxu0 0
        %1174 = vmatpush2.bf16.msra.mxu0 0
        %1175 = vmatprep.subr.bf16.mxu0 0
        %1176 = vmatpush2.bf16.msra.mxu0 0
        %1177 = vmatprep.mubr.bf16.mxu0 0
        %1178 = vmatmul.mubr.bf16.gmra.mxu0 %v403
        %v1179 = vpop.f32.mrf.mxu0
        %v1180 = vadd.f32 0.0, %v1179
        %v1181 = vpop.f32.mrf.mxu0
        %v1182 = vadd.f32 0.0, %v1181
        %v1183 = vpop.f32.mrf.mxu0
        %v1184 = vadd.f32 0.0, %v1183
        %v1185 = vpop.f32.mrf.mxu0
        %v1186 = vadd.f32 0.0, %v1185
        %1187 = vdwg.mxu0
        %1188 = vmatprep.subr.bf16.mxu0 0
        %1189 = vmatpush1.bf16.msra.mxu0 0
        %1190 = vmatprep.subr.bf16.mxu0 0
        %1191 = vmatpush1.bf16.msra.mxu0 0
        %1192 = vmatprep.subr.bf16.mxu0 0
        %1193 = vmatpush1.bf16.msra.mxu0 0
        %1194 = vmatprep.subr.bf16.mxu0 0
        %1195 = vmatpush1.bf16.msra.mxu0 0
        %1196 = vmatprep.subr.bf16.mxu0 0
        %1197 = vmatpush1.bf16.msra.mxu0 0
        %1198 = vmatprep.subr.bf16.mxu0 0
        %1199 = vmatpush1.bf16.msra.mxu0 0
        %1200 = vmatprep.subr.bf16.mxu0 0
        %1201 = vmatpush1.bf16.msra.mxu0 0
        %1202 = vmatprep.subr.bf16.mxu0 %v922
        %1203 = vmatpush1.bf16.msra.mxu0 %v919
        %1204 = vmatprep.subr.bf16.mxu0 0
        %1205 = vmatpush2.bf16.msra.mxu0 0
        %1206 = vmatprep.subr.bf16.mxu0 0
        %1207 = vmatpush2.bf16.msra.mxu0 0
        %1208 = vmatprep.subr.bf16.mxu0 0
        %1209 = vmatpush2.bf16.msra.mxu0 0
        %1210 = vmatprep.subr.bf16.mxu0 0
        %1211 = vmatpush2.bf16.msra.mxu0 0
        %1212 = vmatprep.subr.bf16.mxu0 0
        %1213 = vmatpush2.bf16.msra.mxu0 0
        %1214 = vmatprep.subr.bf16.mxu0 0
        %1215 = vmatpush2.bf16.msra.mxu0 0
        %1216 = vmatprep.subr.bf16.mxu0 0
        %1217 = vmatpush2.bf16.msra.mxu0 0
        %1218 = vmatprep.subr.bf16.mxu0 0
        %1219 = vmatpush2.bf16.msra.mxu0 0
        %1220 = vmatprep.mubr.bf16.mxu0 0
        %1221 = vmatmul.mubr.bf16.gmra.mxu0 %v403
        %v1222 = vpop.f32.mrf.mxu0
        %v1223 = vadd.f32 0.0, %v1222
        %v1224 = vpop.f32.mrf.mxu0
        %v1225 = vadd.f32 0.0, %v1224
        %v1226 = vpop.f32.mrf.mxu0
        %v1227 = vadd.f32 0.0, %v1226
        %v1228 = vpop.f32.mrf.mxu0
        %v1229 = vadd.f32 0.0, %v1228
        %1230 = vdwg.mxu0
        %1231 = vmatprep.subr.bf16.mxu0 0
        %1232 = vmatpush1.bf16.msra.mxu0 0
        %1233 = vmatprep.subr.bf16.mxu0 0
        %1234 = vmatpush1.bf16.msra.mxu0 0
        %1235 = vmatprep.subr.bf16.mxu0 0
        %1236 = vmatpush1.bf16.msra.mxu0 0
        %1237 = vmatprep.subr.bf16.mxu0 0
        %1238 = vmatpush1.bf16.msra.mxu0 0
        %1239 = vmatprep.subr.bf16.mxu0 0
        %1240 = vmatpush1.bf16.msra.mxu0 0
        %1241 = vmatprep.subr.bf16.mxu0 0
        %1242 = vmatpush1.bf16.msra.mxu0 0
        %1243 = vmatprep.subr.bf16.mxu0 0
        %1244 = vmatpush1.bf16.msra.mxu0 0
        %1245 = vmatprep.subr.bf16.mxu0 %v928
        %1246 = vmatpush1.bf16.msra.mxu0 %v925
        %1247 = vmatprep.subr.bf16.mxu0 0
        %1248 = vmatpush2.bf16.msra.mxu0 0
        %1249 = vmatprep.subr.bf16.mxu0 0
        %1250 = vmatpush2.bf16.msra.mxu0 0
        %1251 = vmatprep.subr.bf16.mxu0 0
        %1252 = vmatpush2.bf16.msra.mxu0 0
        %1253 = vmatprep.subr.bf16.mxu0 0
        %1254 = vmatpush2.bf16.msra.mxu0 0
        %1255 = vmatprep.subr.bf16.mxu0 0
        %1256 = vmatpush2.bf16.msra.mxu0 0
        %1257 = vmatprep.subr.bf16.mxu0 0
        %1258 = vmatpush2.bf16.msra.mxu0 0
        %1259 = vmatprep.subr.bf16.mxu0 0
        %1260 = vmatpush2.bf16.msra.mxu0 0
        %1261 = vmatprep.subr.bf16.mxu0 0
        %1262 = vmatpush2.bf16.msra.mxu0 0
        %1263 = vmatprep.mubr.bf16.mxu0 0
        %1264 = vmatmul.mubr.bf16.gmra.mxu0 %v403
        %v1265 = vpop.f32.mrf.mxu0
        %v1266 = vadd.f32 0.0, %v1265
        %v1267 = vpop.f32.mrf.mxu0
        %v1268 = vadd.f32 0.0, %v1267
        %v1269 = vpop.f32.mrf.mxu0
        %v1270 = vadd.f32 0.0, %v1269
        %v1271 = vpop.f32.mrf.mxu0
        %v1272 = vadd.f32 0.0, %v1271
        %1273 = vdwg.mxu0
        %v1274 = vmax.f32 %v492, %v965
        %v1275 = vmax.f32 %v494, %v967
        %v1276 = vmax.f32 %v535, %v1008
        %v1277 = vmax.f32 %v537, %v1010
        %v1278 = vmax.f32 %v578, %v1051
        %v1279 = vmax.f32 %v580, %v1053
        %v1280 = vmax.f32 %v621, %v1094
        %v1281 = vmax.f32 %v623, %v1096
        %v1282 = vmax.f32 %v664, %v1137
        %v1283 = vmax.f32 %v666, %v1139
        %v1284 = vmax.f32 %v707, %v1180
        %v1285 = vmax.f32 %v709, %v1182
        %v1286 = vmax.f32 %v750, %v1223
        %v1287 = vmax.f32 %v752, %v1225
        %v1288 = vmax.f32 %v793, %v1266
        %v1289 = vmax.f32 %v795, %v1268
        %v1290 = vmax.f32 %v496, %v969
        %v1291 = vmax.f32 %v498, %v971
        %v1292 = vmax.f32 %v539, %v1012
        %v1293 = vmax.f32 %v541, %v1014
        %v1294 = vmax.f32 %v582, %v1055
        %v1295 = vmax.f32 %v584, %v1057
        %v1296 = vmax.f32 %v625, %v1098
        %v1297 = vmax.f32 %v627, %v1100
        %v1298 = vmax.f32 %v668, %v1141
        %v1299 = vmax.f32 %v670, %v1143
        %v1300 = vmax.f32 %v711, %v1184
        %v1301 = vmax.f32 %v713, %v1186
        %v1302 = vmax.f32 %v754, %v1227
        %v1303 = vmax.f32 %v756, %v1229
        %v1304 = vmax.f32 %v797, %v1270
        %v1305 = vmax.f32 %v799, %v1272
        %s1306 = scalar_lea.vmem %s291, 256 [#allocation2]
        %v1307 = vld [vmem:[%s1306] sm:$0xff]
        %v1308 = vld [vmem:[%s1306 + $0x8] sm:$0xff]
        %v1309 = vld [vmem:[%s1306 + $0x10] sm:$0xff]
        %v1310 = vld [vmem:[%s1306 + $0x18] sm:$0xff]
        %v1311 = vld [vmem:[%s1306 + $0x20] sm:$0xff]
        %v1312 = vld [vmem:[%s1306 + $0x28] sm:$0xff]
        %v1313 = vld [vmem:[%s1306 + $0x30] sm:$0xff]
        %v1314 = vld [vmem:[%s1306 + $0x38] sm:$0xff]
        %v1315 = vld [vmem:[%s1306 + $0x40] sm:$0x11]
        %v1316 = vld [vmem:[%s1306 + $0x48] sm:$0x11]
        %v1317 = vld [vmem:[%s1306 + $0x50] sm:$0x11]
        %v1318 = vld [vmem:[%s1306 + $0x58] sm:$0x11]
        %v1319 = vld [vmem:[%s1306 + $0x60] sm:$0x11]
        %v1320 = vld [vmem:[%s1306 + $0x68] sm:$0x11]
        %v1321 = vld [vmem:[%s1306 + $0x70] sm:$0x11]
        %v1322 = vld [vmem:[%s1306 + $0x78] sm:$0x11]
        %v1339 = vunpack.c.l.b16 %v1307
        %v1340 = vunpack.c.h.b16 %v1307
        %v1341 = vunpack.c.l.b16 %v1308
        %v1342 = vunpack.c.h.b16 %v1308
        %v1343 = vunpack.c.l.b16 %v1309
        %v1344 = vunpack.c.h.b16 %v1309
        %v1345 = vunpack.c.l.b16 %v1310
        %v1346 = vunpack.c.h.b16 %v1310
        %v1347 = vunpack.c.l.b16 %v1311
        %v1348 = vunpack.c.h.b16 %v1311
        %v1349 = vunpack.c.l.b16 %v1312
        %v1350 = vunpack.c.h.b16 %v1312
        %v1351 = vunpack.c.l.b16 %v1313
        %v1352 = vunpack.c.h.b16 %v1313
        %v1353 = vunpack.c.l.b16 %v1314
        %v1354 = vunpack.c.h.b16 %v1314
        %v1355 = vunpack.c.l.b16 %v1315
        %v1356 = vunpack.c.h.b16 %v1315
        %v1357 = vunpack.c.l.b16 %v1316
        %v1358 = vunpack.c.h.b16 %v1316
        %v1359 = vunpack.c.l.b16 %v1317
        %v1360 = vunpack.c.h.b16 %v1317
        %v1361 = vunpack.c.l.b16 %v1318
        %v1362 = vunpack.c.h.b16 %v1318
        %v1363 = vunpack.c.l.b16 %v1319
        %v1364 = vunpack.c.h.b16 %v1319
        %v1365 = vunpack.c.l.b16 %v1320
        %v1366 = vunpack.c.h.b16 %v1320
        %v1367 = vunpack.c.l.b16 %v1321
        %v1368 = vunpack.c.h.b16 %v1321
        %v1369 = vunpack.c.l.b16 %v1322
        %v1370 = vunpack.c.h.b16 %v1322
        %v1371 = vpack.c.b16 %v1355, %v1339
        %v1372 = vpack.c.b16 %v1356, %v1340
        %v1373 = vpack.c.b16 %v1357, %v1341
        %v1374 = vpack.c.b16 %v1358, %v1342
        %v1375 = vpack.c.b16 %v1359, %v1343
        %v1376 = vpack.c.b16 %v1360, %v1344
        %v1377 = vpack.c.b16 %v1361, %v1345
        %v1378 = vpack.c.b16 %v1362, %v1346
        %v1379 = vpack.c.b16 %v1363, %v1347
        %v1380 = vpack.c.b16 %v1364, %v1348
        %v1381 = vpack.c.b16 %v1365, %v1349
        %v1382 = vpack.c.b16 %v1366, %v1350
        %v1383 = vpack.c.b16 %v1367, %v1351
        %v1384 = vpack.c.b16 %v1368, %v1352
        %v1385 = vpack.c.b16 %v1369, %v1353
        %v1386 = vpack.c.b16 %v1370, %v1354
        %v1388 = vand.u32 %v1371, %v408
        %v1391 = vand.u32 %v1372, %v408
        %v1394 = vand.u32 %v1373, %v408
        %v1397 = vand.u32 %v1374, %v408
        %v1400 = vand.u32 %v1375, %v408
        %v1403 = vand.u32 %v1376, %v408
        %v1406 = vand.u32 %v1377, %v408
        %v1409 = vand.u32 %v1378, %v408
        %v1412 = vand.u32 %v1379, %v408
        %v1415 = vand.u32 %v1380, %v408
        %v1418 = vand.u32 %v1381, %v408
        %v1421 = vand.u32 %v1382, %v408
        %v1424 = vand.u32 %v1383, %v408
        %v1427 = vand.u32 %v1384, %v408
        %v1430 = vand.u32 %v1385, %v408
        %v1433 = vand.u32 %v1386, %v408
        %1435 = vmatprep.subr.bf16.mxu0 0
        %1436 = vmatpush1.bf16.msra.mxu0 0
        %1437 = vmatprep.subr.bf16.mxu0 0
        %1438 = vmatpush1.bf16.msra.mxu0 0
        %1439 = vmatprep.subr.bf16.mxu0 0
        %1440 = vmatpush1.bf16.msra.mxu0 0
        %1441 = vmatprep.subr.bf16.mxu0 0
        %1442 = vmatpush1.bf16.msra.mxu0 0
        %1443 = vmatprep.subr.bf16.mxu0 0
        %1444 = vmatpush1.bf16.msra.mxu0 0
        %1445 = vmatprep.subr.bf16.mxu0 0
        %1446 = vmatpush1.bf16.msra.mxu0 0
        %1447 = vmatprep.subr.bf16.mxu0 0
        %1448 = vmatpush1.bf16.msra.mxu0 0
        %1449 = vmatprep.subr.bf16.mxu0 %v1391
        %1450 = vmatpush1.bf16.msra.mxu0 %v1388
        %1451 = vmatprep.subr.bf16.mxu0 0
        %1452 = vmatpush2.bf16.msra.mxu0 0
        %1453 = vmatprep.subr.bf16.mxu0 0
        %1454 = vmatpush2.bf16.msra.mxu0 0
        %1455 = vmatprep.subr.bf16.mxu0 0
        %1456 = vmatpush2.bf16.msra.mxu0 0
        %1457 = vmatprep.subr.bf16.mxu0 0
        %1458 = vmatpush2.bf16.msra.mxu0 0
        %1459 = vmatprep.subr.bf16.mxu0 0
        %1460 = vmatpush2.bf16.msra.mxu0 0
        %1461 = vmatprep.subr.bf16.mxu0 0
        %1462 = vmatpush2.bf16.msra.mxu0 0
        %1463 = vmatprep.subr.bf16.mxu0 0
        %1464 = vmatpush2.bf16.msra.mxu0 0
        %1465 = vmatprep.subr.bf16.mxu0 0
        %1466 = vmatpush2.bf16.msra.mxu0 0
        %1467 = vmatprep.mubr.bf16.mxu0 0
        %1468 = vmatmul.mubr.bf16.gmra.mxu0 %v403
        %v1469 = vpop.f32.mrf.mxu0
        %v1470 = vadd.f32 0.0, %v1469
        %v1471 = vpop.f32.mrf.mxu0
        %v1472 = vadd.f32 0.0, %v1471
        %v1473 = vpop.f32.mrf.mxu0
        %v1474 = vadd.f32 0.0, %v1473
        %v1475 = vpop.f32.mrf.mxu0
        %v1476 = vadd.f32 0.0, %v1475
        %1477 = vdwg.mxu0
        %1478 = vmatprep.subr.bf16.mxu0 0
        %1479 = vmatpush1.bf16.msra.mxu0 0
        %1480 = vmatprep.subr.bf16.mxu0 0
        %1481 = vmatpush1.bf16.msra.mxu0 0
        %1482 = vmatprep.subr.bf16.mxu0 0
        %1483 = vmatpush1.bf16.msra.mxu0 0
        %1484 = vmatprep.subr.bf16.mxu0 0
        %1485 = vmatpush1.bf16.msra.mxu0 0
        %1486 = vmatprep.subr.bf16.mxu0 0
        %1487 = vmatpush1.bf16.msra.mxu0 0
        %1488 = vmatprep.subr.bf16.mxu0 0
        %1489 = vmatpush1.bf16.msra.mxu0 0
        %1490 = vmatprep.subr.bf16.mxu0 0
        %1491 = vmatpush1.bf16.msra.mxu0 0
        %1492 = vmatprep.subr.bf16.mxu0 %v1397
        %1493 = vmatpush1.bf16.msra.mxu0 %v1394
        %1494 = vmatprep.subr.bf16.mxu0 0
        %1495 = vmatpush2.bf16.msra.mxu0 0
        %1496 = vmatprep.subr.bf16.mxu0 0
        %1497 = vmatpush2.bf16.msra.mxu0 0
        %1498 = vmatprep.subr.bf16.mxu0 0
        %1499 = vmatpush2.bf16.msra.mxu0 0
        %1500 = vmatprep.subr.bf16.mxu0 0
        %1501 = vmatpush2.bf16.msra.mxu0 0
        %1502 = vmatprep.subr.bf16.mxu0 0
        %1503 = vmatpush2.bf16.msra.mxu0 0
        %1504 = vmatprep.subr.bf16.mxu0 0
        %1505 = vmatpush2.bf16.msra.mxu0 0
        %1506 = vmatprep.subr.bf16.mxu0 0
        %1507 = vmatpush2.bf16.msra.mxu0 0
        %1508 = vmatprep.subr.bf16.mxu0 0
        %1509 = vmatpush2.bf16.msra.mxu0 0
        %1510 = vmatprep.mubr.bf16.mxu0 0
        %1511 = vmatmul.mubr.bf16.gmra.mxu0 %v403
        %v1512 = vpop.f32.mrf.mxu0
        %v1513 = vadd.f32 0.0, %v1512
        %v1514 = vpop.f32.mrf.mxu0
        %v1515 = vadd.f32 0.0, %v1514
        %v1516 = vpop.f32.mrf.mxu0
        %v1517 = vadd.f32 0.0, %v1516
        %v1518 = vpop.f32.mrf.mxu0
        %v1519 = vadd.f32 0.0, %v1518
        %1520 = vdwg.mxu0
        %1521 = vmatprep.subr.bf16.mxu0 0
        %1522 = vmatpush1.bf16.msra.mxu0 0
        %1523 = vmatprep.subr.bf16.mxu0 0
        %1524 = vmatpush1.bf16.msra.mxu0 0
        %1525 = vmatprep.subr.bf16.mxu0 0
        %1526 = vmatpush1.bf16.msra.mxu0 0
        %1527 = vmatprep.subr.bf16.mxu0 0
        %1528 = vmatpush1.bf16.msra.mxu0 0
        %1529 = vmatprep.subr.bf16.mxu0 0
        %1530 = vmatpush1.bf16.msra.mxu0 0
        %1531 = vmatprep.subr.bf16.mxu0 0
        %1532 = vmatpush1.bf16.msra.mxu0 0
        %1533 = vmatprep.subr.bf16.mxu0 0
        %1534 = vmatpush1.bf16.msra.mxu0 0
        %1535 = vmatprep.subr.bf16.mxu0 %v1403
        %1536 = vmatpush1.bf16.msra.mxu0 %v1400
        %1537 = vmatprep.subr.bf16.mxu0 0
        %1538 = vmatpush2.bf16.msra.mxu0 0
        %1539 = vmatprep.subr.bf16.mxu0 0
        %1540 = vmatpush2.bf16.msra.mxu0 0
        %1541 = vmatprep.subr.bf16.mxu0 0
        %1542 = vmatpush2.bf16.msra.mxu0 0
        %1543 = vmatprep.subr.bf16.mxu0 0
        %1544 = vmatpush2.bf16.msra.mxu0 0
        %1545 = vmatprep.subr.bf16.mxu0 0
        %1546 = vmatpush2.bf16.msra.mxu0 0
        %1547 = vmatprep.subr.bf16.mxu0 0
        %1548 = vmatpush2.bf16.msra.mxu0 0
        %1549 = vmatprep.subr.bf16.mxu0 0
        %1550 = vmatpush2.bf16.msra.mxu0 0
        %1551 = vmatprep.subr.bf16.mxu0 0
        %1552 = vmatpush2.bf16.msra.mxu0 0
        %1553 = vmatprep.mubr.bf16.mxu0 0
        %1554 = vmatmul.mubr.bf16.gmra.mxu0 %v403
        %v1555 = vpop.f32.mrf.mxu0
        %v1556 = vadd.f32 0.0, %v1555
        %v1557 = vpop.f32.mrf.mxu0
        %v1558 = vadd.f32 0.0, %v1557
        %v1559 = vpop.f32.mrf.mxu0
        %v1560 = vadd.f32 0.0, %v1559
        %v1561 = vpop.f32.mrf.mxu0
        %v1562 = vadd.f32 0.0, %v1561
        %1563 = vdwg.mxu0
        %1564 = vmatprep.subr.bf16.mxu0 0
        %1565 = vmatpush1.bf16.msra.mxu0 0
        %1566 = vmatprep.subr.bf16.mxu0 0
        %1567 = vmatpush1.bf16.msra.mxu0 0
        %1568 = vmatprep.subr.bf16.mxu0 0
        %1569 = vmatpush1.bf16.msra.mxu0 0
        %1570 = vmatprep.subr.bf16.mxu0 0
        %1571 = vmatpush1.bf16.msra.mxu0 0
        %1572 = vmatprep.subr.bf16.mxu0 0
        %1573 = vmatpush1.bf16.msra.mxu0 0
        %1574 = vmatprep.subr.bf16.mxu0 0
        %1575 = vmatpush1.bf16.msra.mxu0 0
        %1576 = vmatprep.subr.bf16.mxu0 0
        %1577 = vmatpush1.bf16.msra.mxu0 0
        %1578 = vmatprep.subr.bf16.mxu0 %v1409
        %1579 = vmatpush1.bf16.msra.mxu0 %v1406
        %1580 = vmatprep.subr.bf16.mxu0 0
        %1581 = vmatpush2.bf16.msra.mxu0 0
        %1582 = vmatprep.subr.bf16.mxu0 0
        %1583 = vmatpush2.bf16.msra.mxu0 0
        %1584 = vmatprep.subr.bf16.mxu0 0
        %1585 = vmatpush2.bf16.msra.mxu0 0
        %1586 = vmatprep.subr.bf16.mxu0 0
        %1587 = vmatpush2.bf16.msra.mxu0 0
        %1588 = vmatprep.subr.bf16.mxu0 0
        %1589 = vmatpush2.bf16.msra.mxu0 0
        %1590 = vmatprep.subr.bf16.mxu0 0
        %1591 = vmatpush2.bf16.msra.mxu0 0
        %1592 = vmatprep.subr.bf16.mxu0 0
        %1593 = vmatpush2.bf16.msra.mxu0 0
        %1594 = vmatprep.subr.bf16.mxu0 0
        %1595 = vmatpush2.bf16.msra.mxu0 0
        %1596 = vmatprep.mubr.bf16.mxu0 0
        %1597 = vmatmul.mubr.bf16.gmra.mxu0 %v403
        %v1598 = vpop.f32.mrf.mxu0
        %v1599 = vadd.f32 0.0, %v1598
        %v1600 = vpop.f32.mrf.mxu0
        %v1601 = vadd.f32 0.0, %v1600
        %v1602 = vpop.f32.mrf.mxu0
        %v1603 = vadd.f32 0.0, %v1602
        %v1604 = vpop.f32.mrf.mxu0
        %v1605 = vadd.f32 0.0, %v1604
        %1606 = vdwg.mxu0
        %1607 = vmatprep.subr.bf16.mxu0 0
        %1608 = vmatpush1.bf16.msra.mxu0 0
        %1609 = vmatprep.subr.bf16.mxu0 0
        %1610 = vmatpush1.bf16.msra.mxu0 0
        %1611 = vmatprep.subr.bf16.mxu0 0
        %1612 = vmatpush1.bf16.msra.mxu0 0
        %1613 = vmatprep.subr.bf16.mxu0 0
        %1614 = vmatpush1.bf16.msra.mxu0 0
        %1615 = vmatprep.subr.bf16.mxu0 0
        %1616 = vmatpush1.bf16.msra.mxu0 0
        %1617 = vmatprep.subr.bf16.mxu0 0
        %1618 = vmatpush1.bf16.msra.mxu0 0
        %1619 = vmatprep.subr.bf16.mxu0 0
        %1620 = vmatpush1.bf16.msra.mxu0 0
        %1621 = vmatprep.subr.bf16.mxu0 %v1415
        %1622 = vmatpush1.bf16.msra.mxu0 %v1412
        %1623 = vmatprep.subr.bf16.mxu0 0
        %1624 = vmatpush2.bf16.msra.mxu0 0
        %1625 = vmatprep.subr.bf16.mxu0 0
        %1626 = vmatpush2.bf16.msra.mxu0 0
        %1627 = vmatprep.subr.bf16.mxu0 0
        %1628 = vmatpush2.bf16.msra.mxu0 0
        %1629 = vmatprep.subr.bf16.mxu0 0
        %1630 = vmatpush2.bf16.msra.mxu0 0
        %1631 = vmatprep.subr.bf16.mxu0 0
        %1632 = vmatpush2.bf16.msra.mxu0 0
        %1633 = vmatprep.subr.bf16.mxu0 0
        %1634 = vmatpush2.bf16.msra.mxu0 0
        %1635 = vmatprep.subr.bf16.mxu0 0
        %1636 = vmatpush2.bf16.msra.mxu0 0
        %1637 = vmatprep.subr.bf16.mxu0 0
        %1638 = vmatpush2.bf16.msra.mxu0 0
        %1639 = vmatprep.mubr.bf16.mxu0 0
        %1640 = vmatmul.mubr.bf16.gmra.mxu0 %v403
        %v1641 = vpop.f32.mrf.mxu0
        %v1642 = vadd.f32 0.0, %v1641
        %v1643 = vpop.f32.mrf.mxu0
        %v1644 = vadd.f32 0.0, %v1643
        %v1645 = vpop.f32.mrf.mxu0
        %v1646 = vadd.f32 0.0, %v1645
        %v1647 = vpop.f32.mrf.mxu0
        %v1648 = vadd.f32 0.0, %v1647
        %1649 = vdwg.mxu0
        %1650 = vmatprep.subr.bf16.mxu0 0
        %1651 = vmatpush1.bf16.msra.mxu0 0
        %1652 = vmatprep.subr.bf16.mxu0 0
        %1653 = vmatpush1.bf16.msra.mxu0 0
        %1654 = vmatprep.subr.bf16.mxu0 0
        %1655 = vmatpush1.bf16.msra.mxu0 0
        %1656 = vmatprep.subr.bf16.mxu0 0
        %1657 = vmatpush1.bf16.msra.mxu0 0
        %1658 = vmatprep.subr.bf16.mxu0 0
        %1659 = vmatpush1.bf16.msra.mxu0 0
        %1660 = vmatprep.subr.bf16.mxu0 0
        %1661 = vmatpush1.bf16.msra.mxu0 0
        %1662 = vmatprep.subr.bf16.mxu0 0
        %1663 = vmatpush1.bf16.msra.mxu0 0
        %1664 = vmatprep.subr.bf16.mxu0 %v1421
        %1665 = vmatpush1.bf16.msra.mxu0 %v1418
        %1666 = vmatprep.subr.bf16.mxu0 0
        %1667 = vmatpush2.bf16.msra.mxu0 0
        %1668 = vmatprep.subr.bf16.mxu0 0
        %1669 = vmatpush2.bf16.msra.mxu0 0
        %1670 = vmatprep.subr.bf16.mxu0 0
        %1671 = vmatpush2.bf16.msra.mxu0 0
        %1672 = vmatprep.subr.bf16.mxu0 0
        %1673 = vmatpush2.bf16.msra.mxu0 0
        %1674 = vmatprep.subr.bf16.mxu0 0
        %1675 = vmatpush2.bf16.msra.mxu0 0
        %1676 = vmatprep.subr.bf16.mxu0 0
        %1677 = vmatpush2.bf16.msra.mxu0 0
        %1678 = vmatprep.subr.bf16.mxu0 0
        %1679 = vmatpush2.bf16.msra.mxu0 0
        %1680 = vmatprep.subr.bf16.mxu0 0
        %1681 = vmatpush2.bf16.msra.mxu0 0
        %1682 = vmatprep.mubr.bf16.mxu0 0
        %1683 = vmatmul.mubr.bf16.gmra.mxu0 %v403
        %v1684 = vpop.f32.mrf.mxu0
        %v1685 = vadd.f32 0.0, %v1684
        %v1686 = vpop.f32.mrf.mxu0
        %v1687 = vadd.f32 0.0, %v1686
        %v1688 = vpop.f32.mrf.mxu0
        %v1689 = vadd.f32 0.0, %v1688
        %v1690 = vpop.f32.mrf.mxu0
        %v1691 = vadd.f32 0.0, %v1690
        %1692 = vdwg.mxu0
        %1693 = vmatprep.subr.bf16.mxu0 0
        %1694 = vmatpush1.bf16.msra.mxu0 0
        %1695 = vmatprep.subr.bf16.mxu0 0
        %1696 = vmatpush1.bf16.msra.mxu0 0
        %1697 = vmatprep.subr.bf16.mxu0 0
        %1698 = vmatpush1.bf16.msra.mxu0 0
        %1699 = vmatprep.subr.bf16.mxu0 0
        %1700 = vmatpush1.bf16.msra.mxu0 0
        %1701 = vmatprep.subr.bf16.mxu0 0
        %1702 = vmatpush1.bf16.msra.mxu0 0
        %1703 = vmatprep.subr.bf16.mxu0 0
        %1704 = vmatpush1.bf16.msra.mxu0 0
        %1705 = vmatprep.subr.bf16.mxu0 0
        %1706 = vmatpush1.bf16.msra.mxu0 0
        %1707 = vmatprep.subr.bf16.mxu0 %v1427
        %1708 = vmatpush1.bf16.msra.mxu0 %v1424
        %1709 = vmatprep.subr.bf16.mxu0 0
        %1710 = vmatpush2.bf16.msra.mxu0 0
        %1711 = vmatprep.subr.bf16.mxu0 0
        %1712 = vmatpush2.bf16.msra.mxu0 0
        %1713 = vmatprep.subr.bf16.mxu0 0
        %1714 = vmatpush2.bf16.msra.mxu0 0
        %1715 = vmatprep.subr.bf16.mxu0 0
        %1716 = vmatpush2.bf16.msra.mxu0 0
        %1717 = vmatprep.subr.bf16.mxu0 0
        %1718 = vmatpush2.bf16.msra.mxu0 0
        %1719 = vmatprep.subr.bf16.mxu0 0
        %1720 = vmatpush2.bf16.msra.mxu0 0
        %1721 = vmatprep.subr.bf16.mxu0 0
        %1722 = vmatpush2.bf16.msra.mxu0 0
        %1723 = vmatprep.subr.bf16.mxu0 0
        %1724 = vmatpush2.bf16.msra.mxu0 0
        %1725 = vmatprep.mubr.bf16.mxu0 0
        %1726 = vmatmul.mubr.bf16.gmra.mxu0 %v403
        %v1727 = vpop.f32.mrf.mxu0
        %v1728 = vadd.f32 0.0, %v1727
        %v1729 = vpop.f32.mrf.mxu0
        %v1730 = vadd.f32 0.0, %v1729
        %v1731 = vpop.f32.mrf.mxu0
        %v1732 = vadd.f32 0.0, %v1731
        %v1733 = vpop.f32.mrf.mxu0
        %v1734 = vadd.f32 0.0, %v1733
        %1735 = vdwg.mxu0
        %1736 = vmatprep.subr.bf16.mxu0 0
        %1737 = vmatpush1.bf16.msra.mxu0 0
        %1738 = vmatprep.subr.bf16.mxu0 0
        %1739 = vmatpush1.bf16.msra.mxu0 0
        %1740 = vmatprep.subr.bf16.mxu0 0
        %1741 = vmatpush1.bf16.msra.mxu0 0
        %1742 = vmatprep.subr.bf16.mxu0 0
        %1743 = vmatpush1.bf16.msra.mxu0 0
        %1744 = vmatprep.subr.bf16.mxu0 0
        %1745 = vmatpush1.bf16.msra.mxu0 0
        %1746 = vmatprep.subr.bf16.mxu0 0
        %1747 = vmatpush1.bf16.msra.mxu0 0
        %1748 = vmatprep.subr.bf16.mxu0 0
        %1749 = vmatpush1.bf16.msra.mxu0 0
        %1750 = vmatprep.subr.bf16.mxu0 %v1433
        %1751 = vmatpush1.bf16.msra.mxu0 %v1430
        %1752 = vmatprep.subr.bf16.mxu0 0
        %1753 = vmatpush2.bf16.msra.mxu0 0
        %1754 = vmatprep.subr.bf16.mxu0 0
        %1755 = vmatpush2.bf16.msra.mxu0 0
        %1756 = vmatprep.subr.bf16.mxu0 0
        %1757 = vmatpush2.bf16.msra.mxu0 0
        %1758 = vmatprep.subr.bf16.mxu0 0
        %1759 = vmatpush2.bf16.msra.mxu0 0
        %1760 = vmatprep.subr.bf16.mxu0 0
        %1761 = vmatpush2.bf16.msra.mxu0 0
        %1762 = vmatprep.subr.bf16.mxu0 0
        %1763 = vmatpush2.bf16.msra.mxu0 0
        %1764 = vmatprep.subr.bf16.mxu0 0
        %1765 = vmatpush2.bf16.msra.mxu0 0
        %1766 = vmatprep.subr.bf16.mxu0 0
        %1767 = vmatpush2.bf16.msra.mxu0 0
        %1768 = vmatprep.mubr.bf16.mxu0 0
        %1769 = vmatmul.mubr.bf16.gmra.mxu0 %v403
        %v1770 = vpop.f32.mrf.mxu0
        %v1771 = vadd.f32 0.0, %v1770
        %v1772 = vpop.f32.mrf.mxu0
        %v1773 = vadd.f32 0.0, %v1772
        %v1774 = vpop.f32.mrf.mxu0
        %v1775 = vadd.f32 0.0, %v1774
        %v1776 = vpop.f32.mrf.mxu0
        %v1777 = vadd.f32 0.0, %v1776
        %1778 = vdwg.mxu0
        %v1779 = vmax.f32 %v1274, %v1470
        %v1780 = vmax.f32 %v1275, %v1472
        %v1781 = vmax.f32 %v1276, %v1513
        %v1782 = vmax.f32 %v1277, %v1515
        %v1783 = vmax.f32 %v1278, %v1556
        %v1784 = vmax.f32 %v1279, %v1558
        %v1785 = vmax.f32 %v1280, %v1599
        %v1786 = vmax.f32 %v1281, %v1601
        %v1787 = vmax.f32 %v1282, %v1642
        %v1788 = vmax.f32 %v1283, %v1644
        %v1789 = vmax.f32 %v1284, %v1685
        %v1790 = vmax.f32 %v1285, %v1687
        %v1791 = vmax.f32 %v1286, %v1728
        %v1792 = vmax.f32 %v1287, %v1730
        %v1793 = vmax.f32 %v1288, %v1771
        %v1794 = vmax.f32 %v1289, %v1773
        %v1795 = vmax.f32 %v1290, %v1474
        %v1796 = vmax.f32 %v1291, %v1476
        %v1797 = vmax.f32 %v1292, %v1517
        %v1798 = vmax.f32 %v1293, %v1519
        %v1799 = vmax.f32 %v1294, %v1560
        %v1800 = vmax.f32 %v1295, %v1562
        %v1801 = vmax.f32 %v1296, %v1603
        %v1802 = vmax.f32 %v1297, %v1605
        %v1803 = vmax.f32 %v1298, %v1646
        %v1804 = vmax.f32 %v1299, %v1648
        %v1805 = vmax.f32 %v1300, %v1689
        %v1806 = vmax.f32 %v1301, %v1691
        %v1807 = vmax.f32 %v1302, %v1732
        %v1808 = vmax.f32 %v1303, %v1734
        %v1809 = vmax.f32 %v1304, %v1775
        %v1810 = vmax.f32 %v1305, %v1777
        %s1811 = scalar_lea.vmem %s291, 384 [#allocation2]
        %v1812 = vld [vmem:[%s1811] sm:$0xff]
        %v1813 = vld [vmem:[%s1811 + $0x8] sm:$0xff]
        %v1814 = vld [vmem:[%s1811 + $0x10] sm:$0xff]
        %v1815 = vld [vmem:[%s1811 + $0x18] sm:$0xff]
        %v1816 = vld [vmem:[%s1811 + $0x20] sm:$0xff]
        %v1817 = vld [vmem:[%s1811 + $0x28] sm:$0xff]
        %v1818 = vld [vmem:[%s1811 + $0x30] sm:$0xff]
        %v1819 = vld [vmem:[%s1811 + $0x38] sm:$0xff]
        %v1820 = vld [vmem:[%s1811 + $0x40] sm:$0x11]
        %v1821 = vld [vmem:[%s1811 + $0x48] sm:$0x11]
        %v1822 = vld [vmem:[%s1811 + $0x50] sm:$0x11]
        %v1823 = vld [vmem:[%s1811 + $0x58] sm:$0x11]
        %v1824 = vld [vmem:[%s1811 + $0x60] sm:$0x11]
        %v1825 = vld [vmem:[%s1811 + $0x68] sm:$0x11]
        %v1826 = vld [vmem:[%s1811 + $0x70] sm:$0x11]
        %v1827 = vld [vmem:[%s1811 + $0x78] sm:$0x11]
        %v1844 = vunpack.c.l.b16 %v1812
        %v1845 = vunpack.c.h.b16 %v1812
        %v1846 = vunpack.c.l.b16 %v1813
        %v1847 = vunpack.c.h.b16 %v1813
        %v1848 = vunpack.c.l.b16 %v1814
        %v1849 = vunpack.c.h.b16 %v1814
        %v1850 = vunpack.c.l.b16 %v1815
        %v1851 = vunpack.c.h.b16 %v1815
        %v1852 = vunpack.c.l.b16 %v1816
        %v1853 = vunpack.c.h.b16 %v1816
        %v1854 = vunpack.c.l.b16 %v1817
        %v1855 = vunpack.c.h.b16 %v1817
        %v1856 = vunpack.c.l.b16 %v1818
        %v1857 = vunpack.c.h.b16 %v1818
        %v1858 = vunpack.c.l.b16 %v1819
        %v1859 = vunpack.c.h.b16 %v1819
        %v1860 = vunpack.c.l.b16 %v1820
        %v1861 = vunpack.c.h.b16 %v1820
        %v1862 = vunpack.c.l.b16 %v1821
        %v1863 = vunpack.c.h.b16 %v1821
        %v1864 = vunpack.c.l.b16 %v1822
        %v1865 = vunpack.c.h.b16 %v1822
        %v1866 = vunpack.c.l.b16 %v1823
        %v1867 = vunpack.c.h.b16 %v1823
        %v1868 = vunpack.c.l.b16 %v1824
        %v1869 = vunpack.c.h.b16 %v1824
        %v1870 = vunpack.c.l.b16 %v1825
        %v1871 = vunpack.c.h.b16 %v1825
        %v1872 = vunpack.c.l.b16 %v1826
        %v1873 = vunpack.c.h.b16 %v1826
        %v1874 = vunpack.c.l.b16 %v1827
        %v1875 = vunpack.c.h.b16 %v1827
        %v1876 = vpack.c.b16 %v1860, %v1844
        %v1877 = vpack.c.b16 %v1861, %v1845
        %v1878 = vpack.c.b16 %v1862, %v1846
        %v1879 = vpack.c.b16 %v1863, %v1847
        %v1880 = vpack.c.b16 %v1864, %v1848
        %v1881 = vpack.c.b16 %v1865, %v1849
        %v1882 = vpack.c.b16 %v1866, %v1850
        %v1883 = vpack.c.b16 %v1867, %v1851
        %v1884 = vpack.c.b16 %v1868, %v1852
        %v1885 = vpack.c.b16 %v1869, %v1853
        %v1886 = vpack.c.b16 %v1870, %v1854
        %v1887 = vpack.c.b16 %v1871, %v1855
        %v1888 = vpack.c.b16 %v1872, %v1856
        %v1889 = vpack.c.b16 %v1873, %v1857
        %v1890 = vpack.c.b16 %v1874, %v1858
        %v1891 = vpack.c.b16 %v1875, %v1859
        %v1893 = vand.u32 %v1876, %v408
        %v1896 = vand.u32 %v1877, %v408
        %v1899 = vand.u32 %v1878, %v408
        %v1902 = vand.u32 %v1879, %v408
        %v1905 = vand.u32 %v1880, %v408
        %v1908 = vand.u32 %v1881, %v408
        %v1911 = vand.u32 %v1882, %v408
        %v1914 = vand.u32 %v1883, %v408
        %v1917 = vand.u32 %v1884, %v408
        %v1920 = vand.u32 %v1885, %v408
        %v1923 = vand.u32 %v1886, %v408
        %v1926 = vand.u32 %v1887, %v408
        %v1929 = vand.u32 %v1888, %v408
        %v1932 = vand.u32 %v1889, %v408
        %v1935 = vand.u32 %v1890, %v408
        %v1938 = vand.u32 %v1891, %v408
        %1940 = vmatprep.subr.bf16.mxu0 0
        %1941 = vmatpush1.bf16.msra.mxu0 0
        %1942 = vmatprep.subr.bf16.mxu0 0
        %1943 = vmatpush1.bf16.msra.mxu0 0
        %1944 = vmatprep.subr.bf16.mxu0 0
        %1945 = vmatpush1.bf16.msra.mxu0 0
        %1946 = vmatprep.subr.bf16.mxu0 0
        %1947 = vmatpush1.bf16.msra.mxu0 0
        %1948 = vmatprep.subr.bf16.mxu0 0
        %1949 = vmatpush1.bf16.msra.mxu0 0
        %1950 = vmatprep.subr.bf16.mxu0 0
        %1951 = vmatpush1.bf16.msra.mxu0 0
        %1952 = vmatprep.subr.bf16.mxu0 0
        %1953 = vmatpush1.bf16.msra.mxu0 0
        %1954 = vmatprep.subr.bf16.mxu0 %v1896
        %1955 = vmatpush1.bf16.msra.mxu0 %v1893
        %1956 = vmatprep.subr.bf16.mxu0 0
        %1957 = vmatpush2.bf16.msra.mxu0 0
        %1958 = vmatprep.subr.bf16.mxu0 0
        %1959 = vmatpush2.bf16.msra.mxu0 0
        %1960 = vmatprep.subr.bf16.mxu0 0
        %1961 = vmatpush2.bf16.msra.mxu0 0
        %1962 = vmatprep.subr.bf16.mxu0 0
        %1963 = vmatpush2.bf16.msra.mxu0 0
        %1964 = vmatprep.subr.bf16.mxu0 0
        %1965 = vmatpush2.bf16.msra.mxu0 0
        %1966 = vmatprep.subr.bf16.mxu0 0
        %1967 = vmatpush2.bf16.msra.mxu0 0
        %1968 = vmatprep.subr.bf16.mxu0 0
        %1969 = vmatpush2.bf16.msra.mxu0 0
        %1970 = vmatprep.subr.bf16.mxu0 0
        %1971 = vmatpush2.bf16.msra.mxu0 0
        %1972 = vmatprep.mubr.bf16.mxu0 0
        %1973 = vmatmul.mubr.bf16.gmra.mxu0 %v403
        %v1974 = vpop.f32.mrf.mxu0
        %v1975 = vadd.f32 0.0, %v1974
        %v1976 = vpop.f32.mrf.mxu0
        %v1977 = vadd.f32 0.0, %v1976
        %v1978 = vpop.f32.mrf.mxu0
        %v1979 = vadd.f32 0.0, %v1978
        %v1980 = vpop.f32.mrf.mxu0
        %v1981 = vadd.f32 0.0, %v1980
        %1982 = vdwg.mxu0
        %1983 = vmatprep.subr.bf16.mxu0 0
        %1984 = vmatpush1.bf16.msra.mxu0 0
        %1985 = vmatprep.subr.bf16.mxu0 0
        %1986 = vmatpush1.bf16.msra.mxu0 0
        %1987 = vmatprep.subr.bf16.mxu0 0
        %1988 = vmatpush1.bf16.msra.mxu0 0
        %1989 = vmatprep.subr.bf16.mxu0 0
        %1990 = vmatpush1.bf16.msra.mxu0 0
        %1991 = vmatprep.subr.bf16.mxu0 0
        %1992 = vmatpush1.bf16.msra.mxu0 0
        %1993 = vmatprep.subr.bf16.mxu0 0
        %1994 = vmatpush1.bf16.msra.mxu0 0
        %1995 = vmatprep.subr.bf16.mxu0 0
        %1996 = vmatpush1.bf16.msra.mxu0 0
        %1997 = vmatprep.subr.bf16.mxu0 %v1902
        %1998 = vmatpush1.bf16.msra.mxu0 %v1899
        %1999 = vmatprep.subr.bf16.mxu0 0
        %2000 = vmatpush2.bf16.msra.mxu0 0
        %2001 = vmatprep.subr.bf16.mxu0 0
        %2002 = vmatpush2.bf16.msra.mxu0 0
        %2003 = vmatprep.subr.bf16.mxu0 0
        %2004 = vmatpush2.bf16.msra.mxu0 0
        %2005 = vmatprep.subr.bf16.mxu0 0
        %2006 = vmatpush2.bf16.msra.mxu0 0
        %2007 = vmatprep.subr.bf16.mxu0 0
        %2008 = vmatpush2.bf16.msra.mxu0 0
        %2009 = vmatprep.subr.bf16.mxu0 0
        %2010 = vmatpush2.bf16.msra.mxu0 0
        %2011 = vmatprep.subr.bf16.mxu0 0
        %2012 = vmatpush2.bf16.msra.mxu0 0
        %2013 = vmatprep.subr.bf16.mxu0 0
        %2014 = vmatpush2.bf16.msra.mxu0 0
        %2015 = vmatprep.mubr.bf16.mxu0 0
        %2016 = vmatmul.mubr.bf16.gmra.mxu0 %v403
        %v2017 = vpop.f32.mrf.mxu0
        %v2018 = vadd.f32 0.0, %v2017
        %v2019 = vpop.f32.mrf.mxu0
        %v2020 = vadd.f32 0.0, %v2019
        %v2021 = vpop.f32.mrf.mxu0
        %v2022 = vadd.f32 0.0, %v2021
        %v2023 = vpop.f32.mrf.mxu0
        %v2024 = vadd.f32 0.0, %v2023
        %2025 = vdwg.mxu0
        %2026 = vmatprep.subr.bf16.mxu0 0
        %2027 = vmatpush1.bf16.msra.mxu0 0
        %2028 = vmatprep.subr.bf16.mxu0 0
        %2029 = vmatpush1.bf16.msra.mxu0 0
        %2030 = vmatprep.subr.bf16.mxu0 0
        %2031 = vmatpush1.bf16.msra.mxu0 0
        %2032 = vmatprep.subr.bf16.mxu0 0
        %2033 = vmatpush1.bf16.msra.mxu0 0
        %2034 = vmatprep.subr.bf16.mxu0 0
        %2035 = vmatpush1.bf16.msra.mxu0 0
        %2036 = vmatprep.subr.bf16.mxu0 0
        %2037 = vmatpush1.bf16.msra.mxu0 0
        %2038 = vmatprep.subr.bf16.mxu0 0
        %2039 = vmatpush1.bf16.msra.mxu0 0
        %2040 = vmatprep.subr.bf16.mxu0 %v1908
        %2041 = vmatpush1.bf16.msra.mxu0 %v1905
        %2042 = vmatprep.subr.bf16.mxu0 0
        %2043 = vmatpush2.bf16.msra.mxu0 0
        %2044 = vmatprep.subr.bf16.mxu0 0
        %2045 = vmatpush2.bf16.msra.mxu0 0
        %2046 = vmatprep.subr.bf16.mxu0 0
        %2047 = vmatpush2.bf16.msra.mxu0 0
        %2048 = vmatprep.subr.bf16.mxu0 0
        %2049 = vmatpush2.bf16.msra.mxu0 0
        %2050 = vmatprep.subr.bf16.mxu0 0
        %2051 = vmatpush2.bf16.msra.mxu0 0
        %2052 = vmatprep.subr.bf16.mxu0 0
        %2053 = vmatpush2.bf16.msra.mxu0 0
        %2054 = vmatprep.subr.bf16.mxu0 0
        %2055 = vmatpush2.bf16.msra.mxu0 0
        %2056 = vmatprep.subr.bf16.mxu0 0
        %2057 = vmatpush2.bf16.msra.mxu0 0
        %2058 = vmatprep.mubr.bf16.mxu0 0
        %2059 = vmatmul.mubr.bf16.gmra.mxu0 %v403
        %v2060 = vpop.f32.mrf.mxu0
        %v2061 = vadd.f32 0.0, %v2060
        %v2062 = vpop.f32.mrf.mxu0
        %v2063 = vadd.f32 0.0, %v2062
        %v2064 = vpop.f32.mrf.mxu0
        %v2065 = vadd.f32 0.0, %v2064
        %v2066 = vpop.f32.mrf.mxu0
        %v2067 = vadd.f32 0.0, %v2066
        %2068 = vdwg.mxu0
        %2069 = vmatprep.subr.bf16.mxu0 0
        %2070 = vmatpush1.bf16.msra.mxu0 0
        %2071 = vmatprep.subr.bf16.mxu0 0
        %2072 = vmatpush1.bf16.msra.mxu0 0
        %2073 = vmatprep.subr.bf16.mxu0 0
        %2074 = vmatpush1.bf16.msra.mxu0 0
        %2075 = vmatprep.subr.bf16.mxu0 0
        %2076 = vmatpush1.bf16.msra.mxu0 0
        %2077 = vmatprep.subr.bf16.mxu0 0
        %2078 = vmatpush1.bf16.msra.mxu0 0
        %2079 = vmatprep.subr.bf16.mxu0 0
        %2080 = vmatpush1.bf16.msra.mxu0 0
        %2081 = vmatprep.subr.bf16.mxu0 0
        %2082 = vmatpush1.bf16.msra.mxu0 0
        %2083 = vmatprep.subr.bf16.mxu0 %v1914
        %2084 = vmatpush1.bf16.msra.mxu0 %v1911
        %2085 = vmatprep.subr.bf16.mxu0 0
        %2086 = vmatpush2.bf16.msra.mxu0 0
        %2087 = vmatprep.subr.bf16.mxu0 0
        %2088 = vmatpush2.bf16.msra.mxu0 0
        %2089 = vmatprep.subr.bf16.mxu0 0
        %2090 = vmatpush2.bf16.msra.mxu0 0
        %2091 = vmatprep.subr.bf16.mxu0 0
        %2092 = vmatpush2.bf16.msra.mxu0 0
        %2093 = vmatprep.subr.bf16.mxu0 0
        %2094 = vmatpush2.bf16.msra.mxu0 0
        %2095 = vmatprep.subr.bf16.mxu0 0
        %2096 = vmatpush2.bf16.msra.mxu0 0
        %2097 = vmatprep.subr.bf16.mxu0 0
        %2098 = vmatpush2.bf16.msra.mxu0 0
        %2099 = vmatprep.subr.bf16.mxu0 0
        %2100 = vmatpush2.bf16.msra.mxu0 0
        %2101 = vmatprep.mubr.bf16.mxu0 0
        %2102 = vmatmul.mubr.bf16.gmra.mxu0 %v403
        %v2103 = vpop.f32.mrf.mxu0
        %v2104 = vadd.f32 0.0, %v2103
        %v2105 = vpop.f32.mrf.mxu0
        %v2106 = vadd.f32 0.0, %v2105
        %v2107 = vpop.f32.mrf.mxu0
        %v2108 = vadd.f32 0.0, %v2107
        %v2109 = vpop.f32.mrf.mxu0
        %v2110 = vadd.f32 0.0, %v2109
        %2111 = vdwg.mxu0
        %2112 = vmatprep.subr.bf16.mxu0 0
        %2113 = vmatpush1.bf16.msra.mxu0 0
        %2114 = vmatprep.subr.bf16.mxu0 0
        %2115 = vmatpush1.bf16.msra.mxu0 0
        %2116 = vmatprep.subr.bf16.mxu0 0
        %2117 = vmatpush1.bf16.msra.mxu0 0
        %2118 = vmatprep.subr.bf16.mxu0 0
        %2119 = vmatpush1.bf16.msra.mxu0 0
        %2120 = vmatprep.subr.bf16.mxu0 0
        %2121 = vmatpush1.bf16.msra.mxu0 0
        %2122 = vmatprep.subr.bf16.mxu0 0
        %2123 = vmatpush1.bf16.msra.mxu0 0
        %2124 = vmatprep.subr.bf16.mxu0 0
        %2125 = vmatpush1.bf16.msra.mxu0 0
        %2126 = vmatprep.subr.bf16.mxu0 %v1920
        %2127 = vmatpush1.bf16.msra.mxu0 %v1917
        %2128 = vmatprep.subr.bf16.mxu0 0
        %2129 = vmatpush2.bf16.msra.mxu0 0
        %2130 = vmatprep.subr.bf16.mxu0 0
        %2131 = vmatpush2.bf16.msra.mxu0 0
        %2132 = vmatprep.subr.bf16.mxu0 0
        %2133 = vmatpush2.bf16.msra.mxu0 0
        %2134 = vmatprep.subr.bf16.mxu0 0
        %2135 = vmatpush2.bf16.msra.mxu0 0
        %2136 = vmatprep.subr.bf16.mxu0 0
        %2137 = vmatpush2.bf16.msra.mxu0 0
        %2138 = vmatprep.subr.bf16.mxu0 0
        %2139 = vmatpush2.bf16.msra.mxu0 0
        %2140 = vmatprep.subr.bf16.mxu0 0
        %2141 = vmatpush2.bf16.msra.mxu0 0
        %2142 = vmatprep.subr.bf16.mxu0 0
        %2143 = vmatpush2.bf16.msra.mxu0 0
        %2144 = vmatprep.mubr.bf16.mxu0 0
        %2145 = vmatmul.mubr.bf16.gmra.mxu0 %v403
        %v2146 = vpop.f32.mrf.mxu0
        %v2147 = vadd.f32 0.0, %v2146
        %v2148 = vpop.f32.mrf.mxu0
        %v2149 = vadd.f32 0.0, %v2148
        %v2150 = vpop.f32.mrf.mxu0
        %v2151 = vadd.f32 0.0, %v2150
        %v2152 = vpop.f32.mrf.mxu0
        %v2153 = vadd.f32 0.0, %v2152
        %2154 = vdwg.mxu0
        %2155 = vmatprep.subr.bf16.mxu0 0
        %2156 = vmatpush1.bf16.msra.mxu0 0
        %2157 = vmatprep.subr.bf16.mxu0 0
        %2158 = vmatpush1.bf16.msra.mxu0 0
        %2159 = vmatprep.subr.bf16.mxu0 0
        %2160 = vmatpush1.bf16.msra.mxu0 0
        %2161 = vmatprep.subr.bf16.mxu0 0
        %2162 = vmatpush1.bf16.msra.mxu0 0
        %2163 = vmatprep.subr.bf16.mxu0 0
        %2164 = vmatpush1.bf16.msra.mxu0 0
        %2165 = vmatprep.subr.bf16.mxu0 0
        %2166 = vmatpush1.bf16.msra.mxu0 0
        %2167 = vmatprep.subr.bf16.mxu0 0
        %2168 = vmatpush1.bf16.msra.mxu0 0
        %2169 = vmatprep.subr.bf16.mxu0 %v1926
        %2170 = vmatpush1.bf16.msra.mxu0 %v1923
        %2171 = vmatprep.subr.bf16.mxu0 0
        %2172 = vmatpush2.bf16.msra.mxu0 0
        %2173 = vmatprep.subr.bf16.mxu0 0
        %2174 = vmatpush2.bf16.msra.mxu0 0
        %2175 = vmatprep.subr.bf16.mxu0 0
        %2176 = vmatpush2.bf16.msra.mxu0 0
        %2177 = vmatprep.subr.bf16.mxu0 0
        %2178 = vmatpush2.bf16.msra.mxu0 0
        %2179 = vmatprep.subr.bf16.mxu0 0
        %2180 = vmatpush2.bf16.msra.mxu0 0
        %2181 = vmatprep.subr.bf16.mxu0 0
        %2182 = vmatpush2.bf16.msra.mxu0 0
        %2183 = vmatprep.subr.bf16.mxu0 0
        %2184 = vmatpush2.bf16.msra.mxu0 0
        %2185 = vmatprep.subr.bf16.mxu0 0
        %2186 = vmatpush2.bf16.msra.mxu0 0
        %2187 = vmatprep.mubr.bf16.mxu0 0
        %2188 = vmatmul.mubr.bf16.gmra.mxu0 %v403
        %v2189 = vpop.f32.mrf.mxu0
        %v2190 = vadd.f32 0.0, %v2189
        %v2191 = vpop.f32.mrf.mxu0
        %v2192 = vadd.f32 0.0, %v2191
        %v2193 = vpop.f32.mrf.mxu0
        %v2194 = vadd.f32 0.0, %v2193
        %v2195 = vpop.f32.mrf.mxu0
        %v2196 = vadd.f32 0.0, %v2195
        %2197 = vdwg.mxu0
        %2198 = vmatprep.subr.bf16.mxu0 0
        %2199 = vmatpush1.bf16.msra.mxu0 0
        %2200 = vmatprep.subr.bf16.mxu0 0
        %2201 = vmatpush1.bf16.msra.mxu0 0
        %2202 = vmatprep.subr.bf16.mxu0 0
        %2203 = vmatpush1.bf16.msra.mxu0 0
        %2204 = vmatprep.subr.bf16.mxu0 0
        %2205 = vmatpush1.bf16.msra.mxu0 0
        %2206 = vmatprep.subr.bf16.mxu0 0
        %2207 = vmatpush1.bf16.msra.mxu0 0
        %2208 = vmatprep.subr.bf16.mxu0 0
        %2209 = vmatpush1.bf16.msra.mxu0 0
        %2210 = vmatprep.subr.bf16.mxu0 0
        %2211 = vmatpush1.bf16.msra.mxu0 0
        %2212 = vmatprep.subr.bf16.mxu0 %v1932
        %2213 = vmatpush1.bf16.msra.mxu0 %v1929
        %2214 = vmatprep.subr.bf16.mxu0 0
        %2215 = vmatpush2.bf16.msra.mxu0 0
        %2216 = vmatprep.subr.bf16.mxu0 0
        %2217 = vmatpush2.bf16.msra.mxu0 0
        %2218 = vmatprep.subr.bf16.mxu0 0
        %2219 = vmatpush2.bf16.msra.mxu0 0
        %2220 = vmatprep.subr.bf16.mxu0 0
        %2221 = vmatpush2.bf16.msra.mxu0 0
        %2222 = vmatprep.subr.bf16.mxu0 0
        %2223 = vmatpush2.bf16.msra.mxu0 0
        %2224 = vmatprep.subr.bf16.mxu0 0
        %2225 = vmatpush2.bf16.msra.mxu0 0
        %2226 = vmatprep.subr.bf16.mxu0 0
        %2227 = vmatpush2.bf16.msra.mxu0 0
        %2228 = vmatprep.subr.bf16.mxu0 0
        %2229 = vmatpush2.bf16.msra.mxu0 0
        %2230 = vmatprep.mubr.bf16.mxu0 0
        %2231 = vmatmul.mubr.bf16.gmra.mxu0 %v403
        %v2232 = vpop.f32.mrf.mxu0
        %v2233 = vadd.f32 0.0, %v2232
        %v2234 = vpop.f32.mrf.mxu0
        %v2235 = vadd.f32 0.0, %v2234
        %v2236 = vpop.f32.mrf.mxu0
        %v2237 = vadd.f32 0.0, %v2236
        %v2238 = vpop.f32.mrf.mxu0
        %v2239 = vadd.f32 0.0, %v2238
        %2240 = vdwg.mxu0
        %2241 = vmatprep.subr.bf16.mxu0 0
        %2242 = vmatpush1.bf16.msra.mxu0 0
        %2243 = vmatprep.subr.bf16.mxu0 0
        %2244 = vmatpush1.bf16.msra.mxu0 0
        %2245 = vmatprep.subr.bf16.mxu0 0
        %2246 = vmatpush1.bf16.msra.mxu0 0
        %2247 = vmatprep.subr.bf16.mxu0 0
        %2248 = vmatpush1.bf16.msra.mxu0 0
        %2249 = vmatprep.subr.bf16.mxu0 0
        %2250 = vmatpush1.bf16.msra.mxu0 0
        %2251 = vmatprep.subr.bf16.mxu0 0
        %2252 = vmatpush1.bf16.msra.mxu0 0
        %2253 = vmatprep.subr.bf16.mxu0 0
        %2254 = vmatpush1.bf16.msra.mxu0 0
        %2255 = vmatprep.subr.bf16.mxu0 %v1938
        %2256 = vmatpush1.bf16.msra.mxu0 %v1935
        %2257 = vmatprep.subr.bf16.mxu0 0
        %2258 = vmatpush2.bf16.msra.mxu0 0
        %2259 = vmatprep.subr.bf16.mxu0 0
        %2260 = vmatpush2.bf16.msra.mxu0 0
        %2261 = vmatprep.subr.bf16.mxu0 0
        %2262 = vmatpush2.bf16.msra.mxu0 0
        %2263 = vmatprep.subr.bf16.mxu0 0
        %2264 = vmatpush2.bf16.msra.mxu0 0
        %2265 = vmatprep.subr.bf16.mxu0 0
        %2266 = vmatpush2.bf16.msra.mxu0 0
        %2267 = vmatprep.subr.bf16.mxu0 0
        %2268 = vmatpush2.bf16.msra.mxu0 0
        %2269 = vmatprep.subr.bf16.mxu0 0
        %2270 = vmatpush2.bf16.msra.mxu0 0
        %2271 = vmatprep.subr.bf16.mxu0 0
        %2272 = vmatpush2.bf16.msra.mxu0 0
        %2273 = vmatprep.mubr.bf16.mxu0 0
        %2274 = vmatmul.mubr.bf16.gmra.mxu0 %v403
        %v2275 = vpop.f32.mrf.mxu0
        %v2276 = vadd.f32 0.0, %v2275
        %v2277 = vpop.f32.mrf.mxu0
        %v2278 = vadd.f32 0.0, %v2277
        %v2279 = vpop.f32.mrf.mxu0
        %v2280 = vadd.f32 0.0, %v2279
        %v2281 = vpop.f32.mrf.mxu0
        %v2282 = vadd.f32 0.0, %v2281
        %2283 = vdwg.mxu0
        %v2284 = vmax.f32 %v1779, %v1975
        %v2285 = vmax.f32 %v1780, %v1977
        %v2286 = vmax.f32 %v1781, %v2018
        %v2287 = vmax.f32 %v1782, %v2020
        %v2288 = vmax.f32 %v1783, %v2061
        %v2289 = vmax.f32 %v1784, %v2063
        %v2290 = vmax.f32 %v1785, %v2104
        %v2291 = vmax.f32 %v1786, %v2106
        %v2292 = vmax.f32 %v1787, %v2147
        %v2293 = vmax.f32 %v1788, %v2149
        %v2294 = vmax.f32 %v1789, %v2190
        %v2295 = vmax.f32 %v1790, %v2192
        %v2296 = vmax.f32 %v1791, %v2233
        %v2297 = vmax.f32 %v1792, %v2235
        %v2298 = vmax.f32 %v1793, %v2276
        %v2299 = vmax.f32 %v1794, %v2278
        %v2300 = vmax.f32 %v1795, %v1979
        %v2301 = vmax.f32 %v1796, %v1981
        %v2302 = vmax.f32 %v1797, %v2022
        %v2303 = vmax.f32 %v1798, %v2024
        %v2304 = vmax.f32 %v1799, %v2065
        %v2305 = vmax.f32 %v1800, %v2067
        %v2306 = vmax.f32 %v1801, %v2108
        %v2307 = vmax.f32 %v1802, %v2110
        %v2308 = vmax.f32 %v1803, %v2151
        %v2309 = vmax.f32 %v1804, %v2153
        %v2310 = vmax.f32 %v1805, %v2194
        %v2311 = vmax.f32 %v1806, %v2196
        %v2312 = vmax.f32 %v1807, %v2237
        %v2313 = vmax.f32 %v1808, %v2239
        %v2314 = vmax.f32 %v1809, %v2280
        %v2315 = vmax.f32 %v1810, %v2282
        %v2316 = vld [vmem:[%s1] sm:$0xff]
        %v2317 = vld [vmem:[%s1 + $0x8] sm:$0xff]
        %2319 = vset.pattern.permute.xlu0 0
        %2320 = vperm.xlu0 %2319, %v2316
        %v2321 = vpop.permute.xlu0 %2320
        %2324 = vset.pattern.permute.xlu0 0
        %2325 = vperm.xlu0 %2324, %v2317
        %v2326 = vpop.permute.xlu0 %2325
        %v2328 = vadd.f32 %v2284, %v2321
        %v2329 = vadd.f32 %v2285, %v2321
        %v2330 = vadd.f32 %v2286, %v2321
        %v2331 = vadd.f32 %v2287, %v2321
        %v2332 = vadd.f32 %v2288, %v2321
        %v2333 = vadd.f32 %v2289, %v2321
        %v2334 = vadd.f32 %v2290, %v2321
        %v2335 = vadd.f32 %v2291, %v2321
        %v2336 = vadd.f32 %v2292, %v2321
        %v2337 = vadd.f32 %v2293, %v2321
        %v2338 = vadd.f32 %v2294, %v2321
        %v2339 = vadd.f32 %v2295, %v2321
        %v2340 = vadd.f32 %v2296, %v2321
        %v2341 = vadd.f32 %v2297, %v2321
        %v2342 = vadd.f32 %v2298, %v2321
        %v2343 = vadd.f32 %v2299, %v2321
        %v2344 = vadd.f32 %v2300, %v2326
        %v2345 = vadd.f32 %v2301, %v2326
        %v2346 = vadd.f32 %v2302, %v2326
        %v2347 = vadd.f32 %v2303, %v2326
        %v2348 = vadd.f32 %v2304, %v2326
        %v2349 = vadd.f32 %v2305, %v2326
        %v2350 = vadd.f32 %v2306, %v2326
        %v2351 = vadd.f32 %v2307, %v2326
        %v2352 = vadd.f32 %v2308, %v2326
        %v2353 = vadd.f32 %v2309, %v2326
        %v2354 = vadd.f32 %v2310, %v2326
        %v2355 = vadd.f32 %v2311, %v2326
        %v2356 = vadd.f32 %v2312, %v2326
        %v2357 = vadd.f32 %v2313, %v2326
        %v2358 = vadd.f32 %v2314, %v2326
        %v2359 = vadd.f32 %v2315, %v2326
        %v2360 = vmax.f32 %v2328, 0.0
        %v2361 = vmax.f32 %v2329, 0.0
        %v2362 = vmax.f32 %v2330, 0.0
        %v2363 = vmax.f32 %v2331, 0.0
        %v2364 = vmax.f32 %v2332, 0.0
        %v2365 = vmax.f32 %v2333, 0.0
        %v2366 = vmax.f32 %v2334, 0.0
        %v2367 = vmax.f32 %v2335, 0.0
        %v2368 = vmax.f32 %v2336, 0.0
        %v2369 = vmax.f32 %v2337, 0.0
        %v2370 = vmax.f32 %v2338, 0.0
        %v2371 = vmax.f32 %v2339, 0.0
        %v2372 = vmax.f32 %v2340, 0.0
        %v2373 = vmax.f32 %v2341, 0.0
        %v2374 = vmax.f32 %v2342, 0.0
        %v2375 = vmax.f32 %v2343, 0.0
        %v2376 = vmax.f32 %v2344, 0.0
        %v2377 = vmax.f32 %v2345, 0.0
        %v2378 = vmax.f32 %v2346, 0.0
        %v2379 = vmax.f32 %v2347, 0.0
        %v2380 = vmax.f32 %v2348, 0.0
        %v2381 = vmax.f32 %v2349, 0.0
        %v2382 = vmax.f32 %v2350, 0.0
        %v2383 = vmax.f32 %v2351, 0.0
        %v2384 = vmax.f32 %v2352, 0.0
        %v2385 = vmax.f32 %v2353, 0.0
        %v2386 = vmax.f32 %v2354, 0.0
        %v2387 = vmax.f32 %v2355, 0.0
        %v2388 = vmax.f32 %v2356, 0.0
        %v2389 = vmax.f32 %v2357, 0.0
        %v2390 = vmax.f32 %v2358, 0.0
        %v2391 = vmax.f32 %v2359, 0.0
        %v2392 = vpack.c.bf16 %v2376, %v2360
        %v2393 = vpack.c.bf16 %v2377, %v2361
        %v2394 = vpack.c.bf16 %v2378, %v2362
        %v2395 = vpack.c.bf16 %v2379, %v2363
        %v2396 = vpack.c.bf16 %v2380, %v2364
        %v2397 = vpack.c.bf16 %v2381, %v2365
        %v2398 = vpack.c.bf16 %v2382, %v2366
        %v2399 = vpack.c.bf16 %v2383, %v2367
        %v2400 = vpack.c.bf16 %v2384, %v2368
        %v2401 = vpack.c.bf16 %v2385, %v2369
        %v2402 = vpack.c.bf16 %v2386, %v2370
        %v2403 = vpack.c.bf16 %v2387, %v2371
        %v2404 = vpack.c.bf16 %v2388, %v2372
        %v2405 = vpack.c.bf16 %v2389, %v2373
        %v2406 = vpack.c.bf16 %v2390, %v2374
        %v2407 = vpack.c.bf16 %v2391, %v2375
        %v2424 = vunpack.c.l.b16 %v2392
        %v2425 = vunpack.c.l.b16 %v2393
        %v2426 = vunpack.c.l.b16 %v2394
        %v2427 = vunpack.c.l.b16 %v2395
        %v2428 = vunpack.c.l.b16 %v2396
        %v2429 = vunpack.c.l.b16 %v2397
        %v2430 = vunpack.c.l.b16 %v2398
        %v2431 = vunpack.c.l.b16 %v2399
        %v2432 = vunpack.c.l.b16 %v2400
        %v2433 = vunpack.c.l.b16 %v2401
        %v2434 = vunpack.c.l.b16 %v2402
        %v2435 = vunpack.c.l.b16 %v2403
        %v2436 = vunpack.c.l.b16 %v2404
        %v2437 = vunpack.c.l.b16 %v2405
        %v2438 = vunpack.c.l.b16 %v2406
        %v2439 = vunpack.c.l.b16 %v2407
        %v2440 = vunpack.c.h.b16 %v2392
        %v2441 = vunpack.c.h.b16 %v2393
        %v2442 = vunpack.c.h.b16 %v2394
        %v2443 = vunpack.c.h.b16 %v2395
        %v2444 = vunpack.c.h.b16 %v2396
        %v2445 = vunpack.c.h.b16 %v2397
        %v2446 = vunpack.c.h.b16 %v2398
        %v2447 = vunpack.c.h.b16 %v2399
        %v2448 = vunpack.c.h.b16 %v2400
        %v2449 = vunpack.c.h.b16 %v2401
        %v2450 = vunpack.c.h.b16 %v2402
        %v2451 = vunpack.c.h.b16 %v2403
        %v2452 = vunpack.c.h.b16 %v2404
        %v2453 = vunpack.c.h.b16 %v2405
        %v2454 = vunpack.c.h.b16 %v2406
        %v2455 = vunpack.c.h.b16 %v2407
        %v2456 = vpack.c.b16 %v2425, %v2424
        %v2457 = vpack.c.b16 %v2427, %v2426
        %v2458 = vpack.c.b16 %v2429, %v2428
        %v2459 = vpack.c.b16 %v2431, %v2430
        %v2460 = vpack.c.b16 %v2433, %v2432
        %v2461 = vpack.c.b16 %v2435, %v2434
        %v2462 = vpack.c.b16 %v2437, %v2436
        %v2463 = vpack.c.b16 %v2439, %v2438
        %v2464 = vpack.c.b16 %v2441, %v2440
        %v2465 = vpack.c.b16 %v2443, %v2442
        %v2466 = vpack.c.b16 %v2445, %v2444
        %v2467 = vpack.c.b16 %v2447, %v2446
        %v2468 = vpack.c.b16 %v2449, %v2448
        %v2469 = vpack.c.b16 %v2451, %v2450
        %v2470 = vpack.c.b16 %v2453, %v2452
        %v2471 = vpack.c.b16 %v2455, %v2454
        %2488 = vst [vmem:[%s310] sm:$0xff] %v2456
        %2489 = vst [vmem:[%s310 + $0x8] sm:$0xff] %v2457
        %2490 = vst [vmem:[%s310 + $0x10] sm:$0xff] %v2458
        %2491 = vst [vmem:[%s310 + $0x18] sm:$0xff] %v2459
        %2492 = vst [vmem:[%s310 + $0x20] sm:$0xff] %v2460
        %2493 = vst [vmem:[%s310 + $0x28] sm:$0xff] %v2461
        %2494 = vst [vmem:[%s310 + $0x30] sm:$0xff] %v2462
        %2495 = vst [vmem:[%s310 + $0x38] sm:$0xff] %v2463
        %2496 = vst [vmem:[%s310 + $0x40] sm:$0xff] %v2464
        %2497 = vst [vmem:[%s310 + $0x48] sm:$0xff] %v2465
        %2498 = vst [vmem:[%s310 + $0x50] sm:$0xff] %v2466
        %2499 = vst [vmem:[%s310 + $0x58] sm:$0xff] %v2467
        %2500 = vst [vmem:[%s310 + $0x60] sm:$0xff] %v2468
        %2501 = vst [vmem:[%s310 + $0x68] sm:$0xff] %v2469
        %2502 = vst [vmem:[%s310 + $0x70] sm:$0xff] %v2470
        %2503 = vst [vmem:[%s310 + $0x78] sm:$0xff] %v2471
        %s2504 = sand.u32 %s90, 1
        %s2505 = sand.u32 %s90, 1
        %s2506 = smul.addr %s2505, 128
        %s2507 = scalar_lea.vmem [#allocation3], %s2506
        // Predicated region
        $region56: #{forward.3} parent=50 // pred_check
          %p2508 = pneg %p100
        $region57: #{forward.3} parent=50 // pred_check_branch
          %2510 = sbr.rel (%p2508) target = $region59
        $region58: #{forward.3} parent=50 // pred_region
          %s2511 = smul.u32 16, %s14
          %s2512 = smul.addr %s2511, 4
          %s2513 = scalar_lea.vmem %s3, %s2512
          // Predicated region
          $region60: #{forward.3} parent=58 // pred_check
            _
          $region61: #{forward.3} parent=58 // pred_check_branch
            %2515 = sbr.rel (0) target = $region63
          $region62: #{forward.3} parent=58 // pred_region
            // Predicated region
            $region64: #{forward.3} parent=62 // pred_check
              _
            $region65: #{forward.3} parent=62 // pred_check_branch
              %2517 = sbr.rel (0) target = $region67
            $region66: #{forward.3} parent=62 // pred_region
              loop: start=0, step=1, limit=1
              $region68: #{forward.3} parent=66 // loop_pre_header
                _
              $region69: #{forward.3} parent=66 // loop_header
                %s2519 = sphi 0, %s2523
                %p2520 = scmp.ge.s32.totalorder %s2519, 1
                %s2524 = sphi %s2507, %s2507
                %s2525 = sphi %s2513, %s2513
              $region70: #{forward.3} parent=66 // loop_header_branch
                %2522 = sbr.rel (%p2520) target = $region74
              $region71: #{forward.3} parent=66 // loop_body
                %v2526 = vld [vmem:[%s2524] sm:$0xff]
                %2527 = vst [vmem:[%s2525] sm:$0xff] %v2526
                %v2528 = vld [vmem:[%s2524 + $0x8] sm:$0xff]
                %2529 = vst [vmem:[%s2525 + $0x8] sm:$0xff] %v2528
                %v2530 = vld [vmem:[%s2524 + $0x10] sm:$0xff]
                %2531 = vst [vmem:[%s2525 + $0x10] sm:$0xff] %v2530
                %v2532 = vld [vmem:[%s2524 + $0x18] sm:$0xff]
                %2533 = vst [vmem:[%s2525 + $0x18] sm:$0xff] %v2532
                %v2534 = vld [vmem:[%s2524 + $0x20] sm:$0xff]
                %2535 = vst [vmem:[%s2525 + $0x20] sm:$0xff] %v2534
                %v2536 = vld [vmem:[%s2524 + $0x28] sm:$0xff]
                %2537 = vst [vmem:[%s2525 + $0x28] sm:$0xff] %v2536
                %v2538 = vld [vmem:[%s2524 + $0x30] sm:$0xff]
                %2539 = vst [vmem:[%s2525 + $0x30] sm:$0xff] %v2538
                %v2540 = vld [vmem:[%s2524 + $0x38] sm:$0xff]
                %2541 = vst [vmem:[%s2525 + $0x38] sm:$0xff] %v2540
                %v2542 = vld [vmem:[%s2524 + $0x40] sm:$0xff]
                %2543 = vst [vmem:[%s2525 + $0x80] sm:$0xff] %v2542
                %v2544 = vld [vmem:[%s2524 + $0x48] sm:$0xff]
                %2545 = vst [vmem:[%s2525 + $0x88] sm:$0xff] %v2544
                %v2546 = vld [vmem:[%s2524 + $0x50] sm:$0xff]
                %2547 = vst [vmem:[%s2525 + $0x90] sm:$0xff] %v2546
                %v2548 = vld [vmem:[%s2524 + $0x58] sm:$0xff]
                %2549 = vst [vmem:[%s2525 + $0x98] sm:$0xff] %v2548
                %v2550 = vld [vmem:[%s2524 + $0x60] sm:$0xff]
                %2551 = vst [vmem:[%s2525 + $0xa0] sm:$0xff] %v2550
                %v2552 = vld [vmem:[%s2524 + $0x68] sm:$0xff]
                %2553 = vst [vmem:[%s2525 + $0xa8] sm:$0xff] %v2552
                %v2554 = vld [vmem:[%s2524 + $0x70] sm:$0xff]
                %2555 = vst [vmem:[%s2525 + $0xb0] sm:$0xff] %v2554
                %v2556 = vld [vmem:[%s2524 + $0x78] sm:$0xff]
                %2557 = vst [vmem:[%s2525 + $0xb8] sm:$0xff] %v2556
              $region72: #{forward.3} parent=66 // loop_footer
                %s2523 = sadd.s32 1, %s2519
              $region73: #{forward.3} parent=66 // loop_footer_branch
                %2518 = sbr.rel target = $region69
              $region74: #{forward.3} parent=66 // loop_exit
                _
            $region67: #{forward.3} parent=62 // pred_fallthru
              _
            // Predicated region
            $region75: #{forward.3} parent=62 // pred_check
              _
            $region76: #{forward.3} parent=62 // pred_check_branch
              %2559 = sbr.rel target = $region78
            $region77: #{forward.3} parent=62 // pred_region
              _
            $region78: #{forward.3} parent=62 // pred_fallthru
              _
          $region63: #{forward.3} parent=58 // pred_fallthru
            _
          %2560 = vnop
        $region59: #{forward.3} parent=50 // pred_fallthru
          _
      $region51: #{forward.3} parent=5 // pred_fallthru
        _
      %p2561 = scmp.le.s32.totalorder 2, %s9
      // Predicated region
      $region79: #{forward.3} parent=5 // pred_check
        %p2562 = pneg %p2561
      $region80: #{forward.3} parent=5 // pred_check_branch
        %2564 = sbr.rel (%p2562) target = $region82
      $region81: #{forward.3} parent=5 // pred_region
        %s2565 = ssub.s32 %s9, 2
        // Predicated region
        $region83: #{forward.3} parent=81 // pred_check
          %p2566 = pneg %p106
        $region84: #{forward.3} parent=81 // pred_check_branch
          %2568 = sbr.rel (%p2566) target = $region86
        $region85: #{forward.3} parent=81 // pred_region
          %s2569 = sand.u32 %s91, 1
          %s2570 = sand.u32 %s91, 1
          %s2571 = smul.addr %s2570, 128
          %s2572 = scalar_lea.vmem [#allocation3], %s2571
        $region86: #{forward.3} parent=81 // pred_fallthru
          _
      $region82: #{forward.3} parent=5 // pred_fallthru
        _
    $region6: #{forward.3} parent=1 // loop_footer
      %s13 = sadd.s32 1, %s9
    $region7: #{forward.3} parent=1 // loop_footer_branch
      %8 = sbr.rel target = $region3
    $region8: #{forward.3} parent=1 // loop_exit
      _

// kernel: forward.4
$region0: #{forward.4}
  #allocation0 [shape = 'u32[]', space=smem, size = 0x4, offset = 0x4, fixed_abs, tag = 'smem constant byte address 0x4 - core index']
  #allocation1 [shape = 'u32[144,128]{1,0:T(1,128)}', space=vmem, size = 0x12000, scoped, tag = 'internal scratch']
  %s0 = inlined_call_operand.vmem [shape: bf16[16,144], index: 0, kind: input, shape index: {}]
  %s1 = inlined_call_operand.vmem [shape: f32[16,1], index: 1, kind: input, shape index: {}]
  %s2 = inlined_call_operand.vmem [shape: bf16[4,144,1024], index: 2, kind: input, shape index: {}]
  %s3 = inlined_call_operand.vmem [shape: bf16[16,1024], index: 3, kind: output, shape index: {}]
  %s4 = sld [smem:[#allocation0]]
  $region22: #{forward.4} parent=0
    _
  %s6 = ssub.s32 1, %s4
  %s7 = scalar_select 0, %s6, %s4
  // Predicated region
  $region2: #{forward.4} parent=0 // pred_check
    _
  $region3: #{forward.4} parent=0 // pred_check_branch
    %9 = sbr.rel (0) target = $region5
  $region4: #{forward.4} parent=0 // pred_region
    _
  $region5: #{forward.4} parent=0 // pred_fallthru
    _
  // Predicated region
  $region6: #{forward.4} parent=0 // pred_check
    _
  $region7: #{forward.4} parent=0 // pred_check_branch
    %11 = sbr.rel (0) target = $region9
  $region8: #{forward.4} parent=0 // pred_region
    _
  $region9: #{forward.4} parent=0 // pred_fallthru
    _
  // Predicated region
  $region10: #{forward.4} parent=0 // pred_check
    _
  $region11: #{forward.4} parent=0 // pred_check_branch
    %13 = sbr.rel (0) target = $region13
  $region12: #{forward.4} parent=0 // pred_region
    _
  $region13: #{forward.4} parent=0 // pred_fallthru
    _
  %v15 = vld [vmem:[%s0] sm:$0xff]
  %v16 = vld [vmem:[%s0 + $0x8] sm:$0xff]
  %v17 = vld [vmem:[%s2] sm:$0xff]
  %v18 = vld [vmem:[%s2 + $0x8] sm:$0xff]
  %v19 = vld [vmem:[%s2 + $0x10] sm:$0xff]
  %v20 = vld [vmem:[%s2 + $0x18] sm:$0xff]
  %v21 = vld [vmem:[%s2 + $0x20] sm:$0xff]
  %v22 = vld [vmem:[%s2 + $0x28] sm:$0xff]
  %v23 = vld [vmem:[%s2 + $0x30] sm:$0xff]
  %v24 = vld [vmem:[%s2 + $0x38] sm:$0xff]
  %v25 = vld [vmem:[%s2 + $0x40] sm:$0xff]
  %v26 = vld [vmem:[%s2 + $0x48] sm:$0xff]
  %v27 = vld [vmem:[%s2 + $0x50] sm:$0xff]
  %v28 = vld [vmem:[%s2 + $0x58] sm:$0xff]
  %v29 = vld [vmem:[%s2 + $0x60] sm:$0xff]
  %v30 = vld [vmem:[%s2 + $0x68] sm:$0xff]
  %v31 = vld [vmem:[%s2 + $0x70] sm:$0xff]
  %v32 = vld [vmem:[%s2 + $0x78] sm:$0xff]
  %v33 = vld [vmem:[%s2 + $0x80] sm:$0xff]
  %v34 = vld [vmem:[%s2 + $0x88] sm:$0xff]
  %v35 = vld [vmem:[%s2 + $0x90] sm:$0xff]
  %v36 = vld [vmem:[%s2 + $0x98] sm:$0xff]
  %v37 = vld [vmem:[%s2 + $0xa0] sm:$0xff]
  %v38 = vld [vmem:[%s2 + $0xa8] sm:$0xff]
  %v39 = vld [vmem:[%s2 + $0xb0] sm:$0xff]
  %v40 = vld [vmem:[%s2 + $0xb8] sm:$0xff]
  %v41 = vld [vmem:[%s2 + $0xc0] sm:$0xff]
  %v42 = vld [vmem:[%s2 + $0xc8] sm:$0xff]
  %v43 = vld [vmem:[%s2 + $0xd0] sm:$0xff]
  %v44 = vld [vmem:[%s2 + $0xd8] sm:$0xff]
  %v45 = vld [vmem:[%s2 + $0xe0] sm:$0xff]
  %v46 = vld [vmem:[%s2 + $0xe8] sm:$0xff]
  %v47 = vld [vmem:[%s2 + $0xf0] sm:$0xff]
  %v48 = vld [vmem:[%s2 + $0xf8] sm:$0xff]
  %v49 = vld [vmem:[%s2 + $0x100] sm:$0xff]
  %v50 = vld [vmem:[%s2 + $0x108] sm:$0xff]
  %v51 = vld [vmem:[%s2 + $0x110] sm:$0xff]
  %v52 = vld [vmem:[%s2 + $0x118] sm:$0xff]
  %v53 = vld [vmem:[%s2 + $0x120] sm:$0xff]
  %v54 = vld [vmem:[%s2 + $0x128] sm:$0xff]
  %v55 = vld [vmem:[%s2 + $0x130] sm:$0xff]
  %v56 = vld [vmem:[%s2 + $0x138] sm:$0xff]
  %v57 = vld [vmem:[%s2 + $0x140] sm:$0xff]
  %v58 = vld [vmem:[%s2 + $0x148] sm:$0xff]
  %v59 = vld [vmem:[%s2 + $0x150] sm:$0xff]
  %v60 = vld [vmem:[%s2 + $0x158] sm:$0xff]
  %v61 = vld [vmem:[%s2 + $0x160] sm:$0xff]
  %v62 = vld [vmem:[%s2 + $0x168] sm:$0xff]
  %v63 = vld [vmem:[%s2 + $0x170] sm:$0xff]
  %v64 = vld [vmem:[%s2 + $0x178] sm:$0xff]
  %v65 = vld [vmem:[%s2 + $0x180] sm:$0xff]
  %v66 = vld [vmem:[%s2 + $0x188] sm:$0xff]
  %v67 = vld [vmem:[%s2 + $0x190] sm:$0xff]
  %v68 = vld [vmem:[%s2 + $0x198] sm:$0xff]
  %v69 = vld [vmem:[%s2 + $0x1a0] sm:$0xff]
  %v70 = vld [vmem:[%s2 + $0x1a8] sm:$0xff]
  %v71 = vld [vmem:[%s2 + $0x1b0] sm:$0xff]
  %v72 = vld [vmem:[%s2 + $0x1b8] sm:$0xff]
  %v73 = vld [vmem:[%s2 + $0x1c0] sm:$0xff]
  %v74 = vld [vmem:[%s2 + $0x1c8] sm:$0xff]
  %v75 = vld [vmem:[%s2 + $0x1d0] sm:$0xff]
  %v76 = vld [vmem:[%s2 + $0x1d8] sm:$0xff]
  %v77 = vld [vmem:[%s2 + $0x1e0] sm:$0xff]
  %v78 = vld [vmem:[%s2 + $0x1e8] sm:$0xff]
  %v79 = vld [vmem:[%s2 + $0x1f0] sm:$0xff]
  %v80 = vld [vmem:[%s2 + $0x1f8] sm:$0xff]
  %v81 = vld [vmem:[%s2 + $0x200] sm:$0xff]
  %v82 = vld [vmem:[%s2 + $0x208] sm:$0xff]
  %v83 = vld [vmem:[%s2 + $0x210] sm:$0xff]
  %v84 = vld [vmem:[%s2 + $0x218] sm:$0xff]
  %v85 = vld [vmem:[%s2 + $0x220] sm:$0xff]
  %v86 = vld [vmem:[%s2 + $0x228] sm:$0xff]
  %v87 = vld [vmem:[%s2 + $0x230] sm:$0xff]
  %v88 = vld [vmem:[%s2 + $0x238] sm:$0xff]
  %v91 = vunpack.c.l.b16 %v15
  %v92 = vunpack.c.h.b16 %v15
  %v93 = vunpack.c.l.b16 %v16
  %v94 = vunpack.c.h.b16 %v16
  %v95 = vpack.c.b16 %v93, %v91
  %v96 = vpack.c.b16 %v94, %v92
  %v170 = vunpack.c.l.b16 %v17
  %v171 = vunpack.c.h.b16 %v17
  %v172 = vunpack.c.l.b16 %v18
  %v173 = vunpack.c.h.b16 %v18
  %v174 = vunpack.c.l.b16 %v19
  %v175 = vunpack.c.h.b16 %v19
  %v176 = vunpack.c.l.b16 %v20
  %v177 = vunpack.c.h.b16 %v20
  %v178 = vunpack.c.l.b16 %v21
  %v179 = vunpack.c.h.b16 %v21
  %v180 = vunpack.c.l.b16 %v22
  %v181 = vunpack.c.h.b16 %v22
  %v182 = vunpack.c.l.b16 %v23
  %v183 = vunpack.c.h.b16 %v23
  %v184 = vunpack.c.l.b16 %v24
  %v185 = vunpack.c.h.b16 %v24
  %v186 = vunpack.c.l.b16 %v25
  %v187 = vunpack.c.h.b16 %v25
  %v188 = vunpack.c.l.b16 %v26
  %v189 = vunpack.c.h.b16 %v26
  %v190 = vunpack.c.l.b16 %v27
  %v191 = vunpack.c.h.b16 %v27
  %v192 = vunpack.c.l.b16 %v28
  %v193 = vunpack.c.h.b16 %v28
  %v194 = vunpack.c.l.b16 %v29
  %v195 = vunpack.c.h.b16 %v29
  %v196 = vunpack.c.l.b16 %v30
  %v197 = vunpack.c.h.b16 %v30
  %v198 = vunpack.c.l.b16 %v31
  %v199 = vunpack.c.h.b16 %v31
  %v200 = vunpack.c.l.b16 %v32
  %v201 = vunpack.c.h.b16 %v32
  %v202 = vunpack.c.l.b16 %v33
  %v203 = vunpack.c.h.b16 %v33
  %v204 = vunpack.c.l.b16 %v34
  %v205 = vunpack.c.h.b16 %v34
  %v206 = vunpack.c.l.b16 %v35
  %v207 = vunpack.c.h.b16 %v35
  %v208 = vunpack.c.l.b16 %v36
  %v209 = vunpack.c.h.b16 %v36
  %v210 = vunpack.c.l.b16 %v37
  %v211 = vunpack.c.h.b16 %v37
  %v212 = vunpack.c.l.b16 %v38
  %v213 = vunpack.c.h.b16 %v38
  %v214 = vunpack.c.l.b16 %v39
  %v215 = vunpack.c.h.b16 %v39
  %v216 = vunpack.c.l.b16 %v40
  %v217 = vunpack.c.h.b16 %v40
  %v218 = vunpack.c.l.b16 %v41
  %v219 = vunpack.c.h.b16 %v41
  %v220 = vunpack.c.l.b16 %v42
  %v221 = vunpack.c.h.b16 %v42
  %v222 = vunpack.c.l.b16 %v43
  %v223 = vunpack.c.h.b16 %v43
  %v224 = vunpack.c.l.b16 %v44
  %v225 = vunpack.c.h.b16 %v44
  %v226 = vunpack.c.l.b16 %v45
  %v227 = vunpack.c.h.b16 %v45
  %v228 = vunpack.c.l.b16 %v46
  %v229 = vunpack.c.h.b16 %v46
  %v230 = vunpack.c.l.b16 %v47
  %v231 = vunpack.c.h.b16 %v47
  %v232 = vunpack.c.l.b16 %v48
  %v233 = vunpack.c.h.b16 %v48
  %v234 = vunpack.c.l.b16 %v49
  %v235 = vunpack.c.h.b16 %v49
  %v236 = vunpack.c.l.b16 %v50
  %v237 = vunpack.c.h.b16 %v50
  %v238 = vunpack.c.l.b16 %v51
  %v239 = vunpack.c.h.b16 %v51
  %v240 = vunpack.c.l.b16 %v52
  %v241 = vunpack.c.h.b16 %v52
  %v242 = vunpack.c.l.b16 %v53
  %v243 = vunpack.c.h.b16 %v53
  %v244 = vunpack.c.l.b16 %v54
  %v245 = vunpack.c.h.b16 %v54
  %v246 = vunpack.c.l.b16 %v55
  %v247 = vunpack.c.h.b16 %v55
  %v248 = vunpack.c.l.b16 %v56
  %v249 = vunpack.c.h.b16 %v56
  %v250 = vunpack.c.l.b16 %v57
  %v251 = vunpack.c.h.b16 %v57
  %v252 = vunpack.c.l.b16 %v58
  %v253 = vunpack.c.h.b16 %v58
  %v254 = vunpack.c.l.b16 %v59
  %v255 = vunpack.c.h.b16 %v59
  %v256 = vunpack.c.l.b16 %v60
  %v257 = vunpack.c.h.b16 %v60
  %v258 = vunpack.c.l.b16 %v61
  %v259 = vunpack.c.h.b16 %v61
  %v260 = vunpack.c.l.b16 %v62
  %v261 = vunpack.c.h.b16 %v62
  %v262 = vunpack.c.l.b16 %v63
  %v263 = vunpack.c.h.b16 %v63
  %v264 = vunpack.c.l.b16 %v64
  %v265 = vunpack.c.h.b16 %v64
  %v266 = vunpack.c.l.b16 %v65
  %v267 = vunpack.c.h.b16 %v65
  %v268 = vunpack.c.l.b16 %v66
  %v269 = vunpack.c.h.b16 %v66
  %v270 = vunpack.c.l.b16 %v67
  %v271 = vunpack.c.h.b16 %v67
  %v272 = vunpack.c.l.b16 %v68
  %v273 = vunpack.c.h.b16 %v68
  %v274 = vunpack.c.l.b16 %v69
  %v275 = vunpack.c.h.b16 %v69
  %v276 = vunpack.c.l.b16 %v70
  %v277 = vunpack.c.h.b16 %v70
  %v278 = vunpack.c.l.b16 %v71
  %v279 = vunpack.c.h.b16 %v71
  %v280 = vunpack.c.l.b16 %v72
  %v281 = vunpack.c.h.b16 %v72
  %v282 = vunpack.c.l.b16 %v73
  %v283 = vunpack.c.h.b16 %v73
  %v284 = vunpack.c.l.b16 %v74
  %v285 = vunpack.c.h.b16 %v74
  %v286 = vunpack.c.l.b16 %v75
  %v287 = vunpack.c.h.b16 %v75
  %v288 = vunpack.c.l.b16 %v76
  %v289 = vunpack.c.h.b16 %v76
  %v290 = vunpack.c.l.b16 %v77
  %v291 = vunpack.c.h.b16 %v77
  %v292 = vunpack.c.l.b16 %v78
  %v293 = vunpack.c.h.b16 %v78
  %v294 = vunpack.c.l.b16 %v79
  %v295 = vunpack.c.h.b16 %v79
  %v296 = vunpack.c.l.b16 %v80
  %v297 = vunpack.c.h.b16 %v80
  %v298 = vunpack.c.l.b16 %v81
  %v299 = vunpack.c.h.b16 %v81
  %v300 = vunpack.c.l.b16 %v82
  %v301 = vunpack.c.h.b16 %v82
  %v302 = vunpack.c.l.b16 %v83
  %v303 = vunpack.c.h.b16 %v83
  %v304 = vunpack.c.l.b16 %v84
  %v305 = vunpack.c.h.b16 %v84
  %v306 = vunpack.c.l.b16 %v85
  %v307 = vunpack.c.h.b16 %v85
  %v308 = vunpack.c.l.b16 %v86
  %v309 = vunpack.c.h.b16 %v86
  %v310 = vunpack.c.l.b16 %v87
  %v311 = vunpack.c.h.b16 %v87
  %v312 = vunpack.c.l.b16 %v88
  %v313 = vunpack.c.h.b16 %v88
  %v314 = vpack.c.b16 %v178, %v170
  %v315 = vpack.c.b16 %v179, %v171
  %v316 = vpack.c.b16 %v180, %v172
  %v317 = vpack.c.b16 %v181, %v173
  %v318 = vpack.c.b16 %v182, %v174
  %v319 = vpack.c.b16 %v183, %v175
  %v320 = vpack.c.b16 %v184, %v176
  %v321 = vpack.c.b16 %v185, %v177
  %v322 = vpack.c.b16 %v194, %v186
  %v323 = vpack.c.b16 %v195, %v187
  %v324 = vpack.c.b16 %v196, %v188
  %v325 = vpack.c.b16 %v197, %v189
  %v326 = vpack.c.b16 %v198, %v190
  %v327 = vpack.c.b16 %v199, %v191
  %v328 = vpack.c.b16 %v200, %v192
  %v329 = vpack.c.b16 %v201, %v193
  %v330 = vpack.c.b16 %v210, %v202
  %v331 = vpack.c.b16 %v211, %v203
  %v332 = vpack.c.b16 %v212, %v204
  %v333 = vpack.c.b16 %v213, %v205
  %v334 = vpack.c.b16 %v214, %v206
  %v335 = vpack.c.b16 %v215, %v207
  %v336 = vpack.c.b16 %v216, %v208
  %v337 = vpack.c.b16 %v217, %v209
  %v338 = vpack.c.b16 %v226, %v218
  %v339 = vpack.c.b16 %v227, %v219
  %v340 = vpack.c.b16 %v228, %v220
  %v341 = vpack.c.b16 %v229, %v221
  %v342 = vpack.c.b16 %v230, %v222
  %v343 = vpack.c.b16 %v231, %v223
  %v344 = vpack.c.b16 %v232, %v224
  %v345 = vpack.c.b16 %v233, %v225
  %v346 = vpack.c.b16 %v242, %v234
  %v347 = vpack.c.b16 %v243, %v235
  %v348 = vpack.c.b16 %v244, %v236
  %v349 = vpack.c.b16 %v245, %v237
  %v350 = vpack.c.b16 %v246, %v238
  %v351 = vpack.c.b16 %v247, %v239
  %v352 = vpack.c.b16 %v248, %v240
  %v353 = vpack.c.b16 %v249, %v241
  %v354 = vpack.c.b16 %v258, %v250
  %v355 = vpack.c.b16 %v259, %v251
  %v356 = vpack.c.b16 %v260, %v252
  %v357 = vpack.c.b16 %v261, %v253
  %v358 = vpack.c.b16 %v262, %v254
  %v359 = vpack.c.b16 %v263, %v255
  %v360 = vpack.c.b16 %v264, %v256
  %v361 = vpack.c.b16 %v265, %v257
  %v362 = vpack.c.b16 %v274, %v266
  %v363 = vpack.c.b16 %v275, %v267
  %v364 = vpack.c.b16 %v276, %v268
  %v365 = vpack.c.b16 %v277, %v269
  %v366 = vpack.c.b16 %v278, %v270
  %v367 = vpack.c.b16 %v279, %v271
  %v368 = vpack.c.b16 %v280, %v272
  %v369 = vpack.c.b16 %v281, %v273
  %v370 = vpack.c.b16 %v290, %v282
  %v371 = vpack.c.b16 %v291, %v283
  %v372 = vpack.c.b16 %v292, %v284
  %v373 = vpack.c.b16 %v293, %v285
  %v374 = vpack.c.b16 %v294, %v286
  %v375 = vpack.c.b16 %v295, %v287
  %v376 = vpack.c.b16 %v296, %v288
  %v377 = vpack.c.b16 %v297, %v289
  %v378 = vpack.c.b16 %v306, %v298
  %v379 = vpack.c.b16 %v307, %v299
  %v380 = vpack.c.b16 %v308, %v300
  %v381 = vpack.c.b16 %v309, %v301
  %v382 = vpack.c.b16 %v310, %v302
  %v383 = vpack.c.b16 %v311, %v303
  %v384 = vpack.c.b16 %v312, %v304
  %v385 = vpack.c.b16 %v313, %v305
  %vm458 = vcmask 130048
  %v460 = vsel %vm458, %v96, 0
  %462 = vmatprep.subr.bf16.mxu0 %v371
  %463 = vmatpush1.bf16.msra.mxu0 %v370
  %464 = vmatprep.subr.bf16.mxu0 %v363
  %465 = vmatpush1.bf16.msra.mxu0 %v362
  %466 = vmatprep.subr.bf16.mxu0 %v355
  %467 = vmatpush1.bf16.msra.mxu0 %v354
  %468 = vmatprep.subr.bf16.mxu0 %v347
  %469 = vmatpush1.bf16.msra.mxu0 %v346
  %470 = vmatprep.subr.bf16.mxu0 %v339
  %471 = vmatpush1.bf16.msra.mxu0 %v338
  %472 = vmatprep.subr.bf16.mxu0 %v331
  %473 = vmatpush1.bf16.msra.mxu0 %v330
  %474 = vmatprep.subr.bf16.mxu0 %v323
  %475 = vmatpush1.bf16.msra.mxu0 %v322
  %476 = vmatprep.subr.bf16.mxu0 %v315
  %477 = vmatpush1.bf16.msra.mxu0 %v314
  %478 = vmatprep.subr.bf16.mxu0 0
  %479 = vmatpush2.bf16.msra.mxu0 0
  %480 = vmatprep.subr.bf16.mxu0 0
  %481 = vmatpush2.bf16.msra.mxu0 0
  %482 = vmatprep.subr.bf16.mxu0 0
  %483 = vmatpush2.bf16.msra.mxu0 0
  %484 = vmatprep.subr.bf16.mxu0 0
  %485 = vmatpush2.bf16.msra.mxu0 0
  %486 = vmatprep.subr.bf16.mxu0 0
  %487 = vmatpush2.bf16.msra.mxu0 0
  %488 = vmatprep.subr.bf16.mxu0 0
  %489 = vmatpush2.bf16.msra.mxu0 0
  %490 = vmatprep.subr.bf16.mxu0 0
  %491 = vmatpush2.bf16.msra.mxu0 0
  %492 = vmatprep.subr.bf16.mxu0 %v379
  %493 = vmatpush2.bf16.msra.mxu0 %v378
  %494 = vmatprep.mubr.bf16.mxu0 %v460
  %495 = vmatmul.mubr.bf16.gmra.mxu0 %v95
  %v496 = vpop.f32.mrf.mxu0
  %v497 = vadd.f32 0.0, %v496
  %v498 = vpop.f32.mrf.mxu0
  %v499 = vadd.f32 0.0, %v498
  %v500 = vpop.f32.mrf.mxu0
  %v501 = vadd.f32 0.0, %v500
  %v502 = vpop.f32.mrf.mxu0
  %v503 = vadd.f32 0.0, %v502
  %504 = vdwg.mxu0
  %505 = vmatprep.subr.bf16.mxu0 %v373
  %506 = vmatpush1.bf16.msra.mxu0 %v372
  %507 = vmatprep.subr.bf16.mxu0 %v365
  %508 = vmatpush1.bf16.msra.mxu0 %v364
  %509 = vmatprep.subr.bf16.mxu0 %v357
  %510 = vmatpush1.bf16.msra.mxu0 %v356
  %511 = vmatprep.subr.bf16.mxu0 %v349
  %512 = vmatpush1.bf16.msra.mxu0 %v348
  %513 = vmatprep.subr.bf16.mxu0 %v341
  %514 = vmatpush1.bf16.msra.mxu0 %v340
  %515 = vmatprep.subr.bf16.mxu0 %v333
  %516 = vmatpush1.bf16.msra.mxu0 %v332
  %517 = vmatprep.subr.bf16.mxu0 %v325
  %518 = vmatpush1.bf16.msra.mxu0 %v324
  %519 = vmatprep.subr.bf16.mxu0 %v317
  %520 = vmatpush1.bf16.msra.mxu0 %v316
  %521 = vmatprep.subr.bf16.mxu0 0
  %522 = vmatpush2.bf16.msra.mxu0 0
  %523 = vmatprep.subr.bf16.mxu0 0
  %524 = vmatpush2.bf16.msra.mxu0 0
  %525 = vmatprep.subr.bf16.mxu0 0
  %526 = vmatpush2.bf16.msra.mxu0 0
  %527 = vmatprep.subr.bf16.mxu0 0
  %528 = vmatpush2.bf16.msra.mxu0 0
  %529 = vmatprep.subr.bf16.mxu0 0
  %530 = vmatpush2.bf16.msra.mxu0 0
  %531 = vmatprep.subr.bf16.mxu0 0
  %532 = vmatpush2.bf16.msra.mxu0 0
  %533 = vmatprep.subr.bf16.mxu0 0
  %534 = vmatpush2.bf16.msra.mxu0 0
  %535 = vmatprep.subr.bf16.mxu0 %v381
  %536 = vmatpush2.bf16.msra.mxu0 %v380
  %537 = vmatprep.mubr.bf16.mxu0 %v460
  %538 = vmatmul.mubr.bf16.gmra.mxu0 %v95
  %v539 = vpop.f32.mrf.mxu0
  %v540 = vadd.f32 0.0, %v539
  %v541 = vpop.f32.mrf.mxu0
  %v542 = vadd.f32 0.0, %v541
  %v543 = vpop.f32.mrf.mxu0
  %v544 = vadd.f32 0.0, %v543
  %v545 = vpop.f32.mrf.mxu0
  %v546 = vadd.f32 0.0, %v545
  %547 = vdwg.mxu0
  %548 = vmatprep.subr.bf16.mxu0 %v375
  %549 = vmatpush1.bf16.msra.mxu0 %v374
  %550 = vmatprep.subr.bf16.mxu0 %v367
  %551 = vmatpush1.bf16.msra.mxu0 %v366
  %552 = vmatprep.subr.bf16.mxu0 %v359
  %553 = vmatpush1.bf16.msra.mxu0 %v358
  %554 = vmatprep.subr.bf16.mxu0 %v351
  %555 = vmatpush1.bf16.msra.mxu0 %v350
  %556 = vmatprep.subr.bf16.mxu0 %v343
  %557 = vmatpush1.bf16.msra.mxu0 %v342
  %558 = vmatprep.subr.bf16.mxu0 %v335
  %559 = vmatpush1.bf16.msra.mxu0 %v334
  %560 = vmatprep.subr.bf16.mxu0 %v327
  %561 = vmatpush1.bf16.msra.mxu0 %v326
  %562 = vmatprep.subr.bf16.mxu0 %v319
  %563 = vmatpush1.bf16.msra.mxu0 %v318
  %564 = vmatprep.subr.bf16.mxu0 0
  %565 = vmatpush2.bf16.msra.mxu0 0
  %566 = vmatprep.subr.bf16.mxu0 0
  %567 = vmatpush2.bf16.msra.mxu0 0
  %568 = vmatprep.subr.bf16.mxu0 0
  %569 = vmatpush2.bf16.msra.mxu0 0
  %570 = vmatprep.subr.bf16.mxu0 0
  %571 = vmatpush2.bf16.msra.mxu0 0
  %572 = vmatprep.subr.bf16.mxu0 0
  %573 = vmatpush2.bf16.msra.mxu0 0
  %574 = vmatprep.subr.bf16.mxu0 0
  %575 = vmatpush2.bf16.msra.mxu0 0
  %576 = vmatprep.subr.bf16.mxu0 0
  %577 = vmatpush2.bf16.msra.mxu0 0
  %578 = vmatprep.subr.bf16.mxu0 %v383
  %579 = vmatpush2.bf16.msra.mxu0 %v382
  %580 = vmatprep.mubr.bf16.mxu0 %v460
  %581 = vmatmul.mubr.bf16.gmra.mxu0 %v95
  %v582 = vpop.f32.mrf.mxu0
  %v583 = vadd.f32 0.0, %v582
  %v584 = vpop.f32.mrf.mxu0
  %v585 = vadd.f32 0.0, %v584
  %v586 = vpop.f32.mrf.mxu0
  %v587 = vadd.f32 0.0, %v586
  %v588 = vpop.f32.mrf.mxu0
  %v589 = vadd.f32 0.0, %v588
  %590 = vdwg.mxu0
  %591 = vmatprep.subr.bf16.mxu0 %v377
  %592 = vmatpush1.bf16.msra.mxu0 %v376
  %593 = vmatprep.subr.bf16.mxu0 %v369
  %594 = vmatpush1.bf16.msra.mxu0 %v368
  %595 = vmatprep.subr.bf16.mxu0 %v361
  %596 = vmatpush1.bf16.msra.mxu0 %v360
  %597 = vmatprep.subr.bf16.mxu0 %v353
  %598 = vmatpush1.bf16.msra.mxu0 %v352
  %599 = vmatprep.subr.bf16.mxu0 %v345
  %600 = vmatpush1.bf16.msra.mxu0 %v344
  %601 = vmatprep.subr.bf16.mxu0 %v337
  %602 = vmatpush1.bf16.msra.mxu0 %v336
  %603 = vmatprep.subr.bf16.mxu0 %v329
  %604 = vmatpush1.bf16.msra.mxu0 %v328
  %605 = vmatprep.subr.bf16.mxu0 %v321
  %606 = vmatpush1.bf16.msra.mxu0 %v320
  %607 = vmatprep.subr.bf16.mxu0 0
  %608 = vmatpush2.bf16.msra.mxu0 0
  %609 = vmatprep.subr.bf16.mxu0 0
  %610 = vmatpush2.bf16.msra.mxu0 0
  %611 = vmatprep.subr.bf16.mxu0 0
  %612 = vmatpush2.bf16.msra.mxu0 0
  %613 = vmatprep.subr.bf16.mxu0 0
  %614 = vmatpush2.bf16.msra.mxu0 0
  %615 = vmatprep.subr.bf16.mxu0 0
  %616 = vmatpush2.bf16.msra.mxu0 0
  %617 = vmatprep.subr.bf16.mxu0 0
  %618 = vmatpush2.bf16.msra.mxu0 0
  %619 = vmatprep.subr.bf16.mxu0 0
  %620 = vmatpush2.bf16.msra.mxu0 0
  %621 = vmatprep.subr.bf16.mxu0 %v385
  %622 = vmatpush2.bf16.msra.mxu0 %v384
  %623 = vmatprep.mubr.bf16.mxu0 %v460
  %624 = vmatmul.mubr.bf16.gmra.mxu0 %v95
  %v625 = vpop.f32.mrf.mxu0
  %v626 = vadd.f32 0.0, %v625
  %v627 = vpop.f32.mrf.mxu0
  %v628 = vadd.f32 0.0, %v627
  %v629 = vpop.f32.mrf.mxu0
  %v630 = vadd.f32 0.0, %v629
  %v631 = vpop.f32.mrf.mxu0
  %v632 = vadd.f32 0.0, %v631
  %633 = vdwg.mxu0
  %s634 = scalar_lea.vmem %s2, 576
  %v635 = vld [vmem:[%s634] sm:$0xff]
  %v636 = vld [vmem:[%s634 + $0x8] sm:$0xff]
  %v637 = vld [vmem:[%s634 + $0x10] sm:$0xff]
  %v638 = vld [vmem:[%s634 + $0x18] sm:$0xff]
  %v639 = vld [vmem:[%s634 + $0x20] sm:$0xff]
  %v640 = vld [vmem:[%s634 + $0x28] sm:$0xff]
  %v641 = vld [vmem:[%s634 + $0x30] sm:$0xff]
  %v642 = vld [vmem:[%s634 + $0x38] sm:$0xff]
  %v643 = vld [vmem:[%s634 + $0x40] sm:$0xff]
  %v644 = vld [vmem:[%s634 + $0x48] sm:$0xff]
  %v645 = vld [vmem:[%s634 + $0x50] sm:$0xff]
  %v646 = vld [vmem:[%s634 + $0x58] sm:$0xff]
  %v647 = vld [vmem:[%s634 + $0x60] sm:$0xff]
  %v648 = vld [vmem:[%s634 + $0x68] sm:$0xff]
  %v649 = vld [vmem:[%s634 + $0x70] sm:$0xff]
  %v650 = vld [vmem:[%s634 + $0x78] sm:$0xff]
  %v651 = vld [vmem:[%s634 + $0x80] sm:$0xff]
  %v652 = vld [vmem:[%s634 + $0x88] sm:$0xff]
  %v653 = vld [vmem:[%s634 + $0x90] sm:$0xff]
  %v654 = vld [vmem:[%s634 + $0x98] sm:$0xff]
  %v655 = vld [vmem:[%s634 + $0xa0] sm:$0xff]
  %v656 = vld [vmem:[%s634 + $0xa8] sm:$0xff]
  %v657 = vld [vmem:[%s634 + $0xb0] sm:$0xff]
  %v658 = vld [vmem:[%s634 + $0xb8] sm:$0xff]
  %v659 = vld [vmem:[%s634 + $0xc0] sm:$0xff]
  %v660 = vld [vmem:[%s634 + $0xc8] sm:$0xff]
  %v661 = vld [vmem:[%s634 + $0xd0] sm:$0xff]
  %v662 = vld [vmem:[%s634 + $0xd8] sm:$0xff]
  %v663 = vld [vmem:[%s634 + $0xe0] sm:$0xff]
  %v664 = vld [vmem:[%s634 + $0xe8] sm:$0xff]
  %v665 = vld [vmem:[%s634 + $0xf0] sm:$0xff]
  %v666 = vld [vmem:[%s634 + $0xf8] sm:$0xff]
  %v667 = vld [vmem:[%s634 + $0x100] sm:$0xff]
  %v668 = vld [vmem:[%s634 + $0x108] sm:$0xff]
  %v669 = vld [vmem:[%s634 + $0x110] sm:$0xff]
  %v670 = vld [vmem:[%s634 + $0x118] sm:$0xff]
  %v671 = vld [vmem:[%s634 + $0x120] sm:$0xff]
  %v672 = vld [vmem:[%s634 + $0x128] sm:$0xff]
  %v673 = vld [vmem:[%s634 + $0x130] sm:$0xff]
  %v674 = vld [vmem:[%s634 + $0x138] sm:$0xff]
  %v675 = vld [vmem:[%s634 + $0x140] sm:$0xff]
  %v676 = vld [vmem:[%s634 + $0x148] sm:$0xff]
  %v677 = vld [vmem:[%s634 + $0x150] sm:$0xff]
  %v678 = vld [vmem:[%s634 + $0x158] sm:$0xff]
  %v679 = vld [vmem:[%s634 + $0x160] sm:$0xff]
  %v680 = vld [vmem:[%s634 + $0x168] sm:$0xff]
  %v681 = vld [vmem:[%s634 + $0x170] sm:$0xff]
  %v682 = vld [vmem:[%s634 + $0x178] sm:$0xff]
  %v683 = vld [vmem:[%s634 + $0x180] sm:$0xff]
  %v684 = vld [vmem:[%s634 + $0x188] sm:$0xff]
  %v685 = vld [vmem:[%s634 + $0x190] sm:$0xff]
  %v686 = vld [vmem:[%s634 + $0x198] sm:$0xff]
  %v687 = vld [vmem:[%s634 + $0x1a0] sm:$0xff]
  %v688 = vld [vmem:[%s634 + $0x1a8] sm:$0xff]
  %v689 = vld [vmem:[%s634 + $0x1b0] sm:$0xff]
  %v690 = vld [vmem:[%s634 + $0x1b8] sm:$0xff]
  %v691 = vld [vmem:[%s634 + $0x1c0] sm:$0xff]
  %v692 = vld [vmem:[%s634 + $0x1c8] sm:$0xff]
  %v693 = vld [vmem:[%s634 + $0x1d0] sm:$0xff]
  %v694 = vld [vmem:[%s634 + $0x1d8] sm:$0xff]
  %v695 = vld [vmem:[%s634 + $0x1e0] sm:$0xff]
  %v696 = vld [vmem:[%s634 + $0x1e8] sm:$0xff]
  %v697 = vld [vmem:[%s634 + $0x1f0] sm:$0xff]
  %v698 = vld [vmem:[%s634 + $0x1f8] sm:$0xff]
  %v699 = vld [vmem:[%s634 + $0x200] sm:$0xff]
  %v700 = vld [vmem:[%s634 + $0x208] sm:$0xff]
  %v701 = vld [vmem:[%s634 + $0x210] sm:$0xff]
  %v702 = vld [vmem:[%s634 + $0x218] sm:$0xff]
  %v703 = vld [vmem:[%s634 + $0x220] sm:$0xff]
  %v704 = vld [vmem:[%s634 + $0x228] sm:$0xff]
  %v705 = vld [vmem:[%s634 + $0x230] sm:$0xff]
  %v706 = vld [vmem:[%s634 + $0x238] sm:$0xff]
  %v779 = vunpack.c.l.b16 %v635
  %v780 = vunpack.c.h.b16 %v635
  %v781 = vunpack.c.l.b16 %v636
  %v782 = vunpack.c.h.b16 %v636
  %v783 = vunpack.c.l.b16 %v637
  %v784 = vunpack.c.h.b16 %v637
  %v785 = vunpack.c.l.b16 %v638
  %v786 = vunpack.c.h.b16 %v638
  %v787 = vunpack.c.l.b16 %v639
  %v788 = vunpack.c.h.b16 %v639
  %v789 = vunpack.c.l.b16 %v640
  %v790 = vunpack.c.h.b16 %v640
  %v791 = vunpack.c.l.b16 %v641
  %v792 = vunpack.c.h.b16 %v641
  %v793 = vunpack.c.l.b16 %v642
  %v794 = vunpack.c.h.b16 %v642
  %v795 = vunpack.c.l.b16 %v643
  %v796 = vunpack.c.h.b16 %v643
  %v797 = vunpack.c.l.b16 %v644
  %v798 = vunpack.c.h.b16 %v644
  %v799 = vunpack.c.l.b16 %v645
  %v800 = vunpack.c.h.b16 %v645
  %v801 = vunpack.c.l.b16 %v646
  %v802 = vunpack.c.h.b16 %v646
  %v803 = vunpack.c.l.b16 %v647
  %v804 = vunpack.c.h.b16 %v647
  %v805 = vunpack.c.l.b16 %v648
  %v806 = vunpack.c.h.b16 %v648
  %v807 = vunpack.c.l.b16 %v649
  %v808 = vunpack.c.h.b16 %v649
  %v809 = vunpack.c.l.b16 %v650
  %v810 = vunpack.c.h.b16 %v650
  %v811 = vunpack.c.l.b16 %v651
  %v812 = vunpack.c.h.b16 %v651
  %v813 = vunpack.c.l.b16 %v652
  %v814 = vunpack.c.h.b16 %v652
  %v815 = vunpack.c.l.b16 %v653
  %v816 = vunpack.c.h.b16 %v653
  %v817 = vunpack.c.l.b16 %v654
  %v818 = vunpack.c.h.b16 %v654
  %v819 = vunpack.c.l.b16 %v655
  %v820 = vunpack.c.h.b16 %v655
  %v821 = vunpack.c.l.b16 %v656
  %v822 = vunpack.c.h.b16 %v656
  %v823 = vunpack.c.l.b16 %v657
  %v824 = vunpack.c.h.b16 %v657
  %v825 = vunpack.c.l.b16 %v658
  %v826 = vunpack.c.h.b16 %v658
  %v827 = vunpack.c.l.b16 %v659
  %v828 = vunpack.c.h.b16 %v659
  %v829 = vunpack.c.l.b16 %v660
  %v830 = vunpack.c.h.b16 %v660
  %v831 = vunpack.c.l.b16 %v661
  %v832 = vunpack.c.h.b16 %v661
  %v833 = vunpack.c.l.b16 %v662
  %v834 = vunpack.c.h.b16 %v662
  %v835 = vunpack.c.l.b16 %v663
  %v836 = vunpack.c.h.b16 %v663
  %v837 = vunpack.c.l.b16 %v664
  %v838 = vunpack.c.h.b16 %v664
  %v839 = vunpack.c.l.b16 %v665
  %v840 = vunpack.c.h.b16 %v665
  %v841 = vunpack.c.l.b16 %v666
  %v842 = vunpack.c.h.b16 %v666
  %v843 = vunpack.c.l.b16 %v667
  %v844 = vunpack.c.h.b16 %v667
  %v845 = vunpack.c.l.b16 %v668
  %v846 = vunpack.c.h.b16 %v668
  %v847 = vunpack.c.l.b16 %v669
  %v848 = vunpack.c.h.b16 %v669
  %v849 = vunpack.c.l.b16 %v670
  %v850 = vunpack.c.h.b16 %v670
  %v851 = vunpack.c.l.b16 %v671
  %v852 = vunpack.c.h.b16 %v671
  %v853 = vunpack.c.l.b16 %v672
  %v854 = vunpack.c.h.b16 %v672
  %v855 = vunpack.c.l.b16 %v673
  %v856 = vunpack.c.h.b16 %v673
  %v857 = vunpack.c.l.b16 %v674
  %v858 = vunpack.c.h.b16 %v674
  %v859 = vunpack.c.l.b16 %v675
  %v860 = vunpack.c.h.b16 %v675
  %v861 = vunpack.c.l.b16 %v676
  %v862 = vunpack.c.h.b16 %v676
  %v863 = vunpack.c.l.b16 %v677
  %v864 = vunpack.c.h.b16 %v677
  %v865 = vunpack.c.l.b16 %v678
  %v866 = vunpack.c.h.b16 %v678
  %v867 = vunpack.c.l.b16 %v679
  %v868 = vunpack.c.h.b16 %v679
  %v869 = vunpack.c.l.b16 %v680
  %v870 = vunpack.c.h.b16 %v680
  %v871 = vunpack.c.l.b16 %v681
  %v872 = vunpack.c.h.b16 %v681
  %v873 = vunpack.c.l.b16 %v682
  %v874 = vunpack.c.h.b16 %v682
  %v875 = vunpack.c.l.b16 %v683
  %v876 = vunpack.c.h.b16 %v683
  %v877 = vunpack.c.l.b16 %v684
  %v878 = vunpack.c.h.b16 %v684
  %v879 = vunpack.c.l.b16 %v685
  %v880 = vunpack.c.h.b16 %v685
  %v881 = vunpack.c.l.b16 %v686
  %v882 = vunpack.c.h.b16 %v686
  %v883 = vunpack.c.l.b16 %v687
  %v884 = vunpack.c.h.b16 %v687
  %v885 = vunpack.c.l.b16 %v688
  %v886 = vunpack.c.h.b16 %v688
  %v887 = vunpack.c.l.b16 %v689
  %v888 = vunpack.c.h.b16 %v689
  %v889 = vunpack.c.l.b16 %v690
  %v890 = vunpack.c.h.b16 %v690
  %v891 = vunpack.c.l.b16 %v691
  %v892 = vunpack.c.h.b16 %v691
  %v893 = vunpack.c.l.b16 %v692
  %v894 = vunpack.c.h.b16 %v692
  %v895 = vunpack.c.l.b16 %v693
  %v896 = vunpack.c.h.b16 %v693
  %v897 = vunpack.c.l.b16 %v694
  %v898 = vunpack.c.h.b16 %v694
  %v899 = vunpack.c.l.b16 %v695
  %v900 = vunpack.c.h.b16 %v695
  %v901 = vunpack.c.l.b16 %v696
  %v902 = vunpack.c.h.b16 %v696
  %v903 = vunpack.c.l.b16 %v697
  %v904 = vunpack.c.h.b16 %v697
  %v905 = vunpack.c.l.b16 %v698
  %v906 = vunpack.c.h.b16 %v698
  %v907 = vunpack.c.l.b16 %v699
  %v908 = vunpack.c.h.b16 %v699
  %v909 = vunpack.c.l.b16 %v700
  %v910 = vunpack.c.h.b16 %v700
  %v911 = vunpack.c.l.b16 %v701
  %v912 = vunpack.c.h.b16 %v701
  %v913 = vunpack.c.l.b16 %v702
  %v914 = vunpack.c.h.b16 %v702
  %v915 = vunpack.c.l.b16 %v703
  %v916 = vunpack.c.h.b16 %v703
  %v917 = vunpack.c.l.b16 %v704
  %v918 = vunpack.c.h.b16 %v704
  %v919 = vunpack.c.l.b16 %v705
  %v920 = vunpack.c.h.b16 %v705
  %v921 = vunpack.c.l.b16 %v706
  %v922 = vunpack.c.h.b16 %v706
  %v923 = vpack.c.b16 %v787, %v779
  %v924 = vpack.c.b16 %v788, %v780
  %v925 = vpack.c.b16 %v789, %v781
  %v926 = vpack.c.b16 %v790, %v782
  %v927 = vpack.c.b16 %v791, %v783
  %v928 = vpack.c.b16 %v792, %v784
  %v929 = vpack.c.b16 %v793, %v785
  %v930 = vpack.c.b16 %v794, %v786
  %v931 = vpack.c.b16 %v803, %v795
  %v932 = vpack.c.b16 %v804, %v796
  %v933 = vpack.c.b16 %v805, %v797
  %v934 = vpack.c.b16 %v806, %v798
  %v935 = vpack.c.b16 %v807, %v799
  %v936 = vpack.c.b16 %v808, %v800
  %v937 = vpack.c.b16 %v809, %v801
  %v938 = vpack.c.b16 %v810, %v802
  %v939 = vpack.c.b16 %v819, %v811
  %v940 = vpack.c.b16 %v820, %v812
  %v941 = vpack.c.b16 %v821, %v813
  %v942 = vpack.c.b16 %v822, %v814
  %v943 = vpack.c.b16 %v823, %v815
  %v944 = vpack.c.b16 %v824, %v816
  %v945 = vpack.c.b16 %v825, %v817
  %v946 = vpack.c.b16 %v826, %v818
  %v947 = vpack.c.b16 %v835, %v827
  %v948 = vpack.c.b16 %v836, %v828
  %v949 = vpack.c.b16 %v837, %v829
  %v950 = vpack.c.b16 %v838, %v830
  %v951 = vpack.c.b16 %v839, %v831
  %v952 = vpack.c.b16 %v840, %v832
  %v953 = vpack.c.b16 %v841, %v833
  %v954 = vpack.c.b16 %v842, %v834
  %v955 = vpack.c.b16 %v851, %v843
  %v956 = vpack.c.b16 %v852, %v844
  %v957 = vpack.c.b16 %v853, %v845
  %v958 = vpack.c.b16 %v854, %v846
  %v959 = vpack.c.b16 %v855, %v847
  %v960 = vpack.c.b16 %v856, %v848
  %v961 = vpack.c.b16 %v857, %v849
  %v962 = vpack.c.b16 %v858, %v850
  %v963 = vpack.c.b16 %v867, %v859
  %v964 = vpack.c.b16 %v868, %v860
  %v965 = vpack.c.b16 %v869, %v861
  %v966 = vpack.c.b16 %v870, %v862
  %v967 = vpack.c.b16 %v871, %v863
  %v968 = vpack.c.b16 %v872, %v864
  %v969 = vpack.c.b16 %v873, %v865
  %v970 = vpack.c.b16 %v874, %v866
  %v971 = vpack.c.b16 %v883, %v875
  %v972 = vpack.c.b16 %v884, %v876
  %v973 = vpack.c.b16 %v885, %v877
  %v974 = vpack.c.b16 %v886, %v878
  %v975 = vpack.c.b16 %v887, %v879
  %v976 = vpack.c.b16 %v888, %v880
  %v977 = vpack.c.b16 %v889, %v881
  %v978 = vpack.c.b16 %v890, %v882
  %v979 = vpack.c.b16 %v899, %v891
  %v980 = vpack.c.b16 %v900, %v892
  %v981 = vpack.c.b16 %v901, %v893
  %v982 = vpack.c.b16 %v902, %v894
  %v983 = vpack.c.b16 %v903, %v895
  %v984 = vpack.c.b16 %v904, %v896
  %v985 = vpack.c.b16 %v905, %v897
  %v986 = vpack.c.b16 %v906, %v898
  %v987 = vpack.c.b16 %v915, %v907
  %v988 = vpack.c.b16 %v916, %v908
  %v989 = vpack.c.b16 %v917, %v909
  %v990 = vpack.c.b16 %v918, %v910
  %v991 = vpack.c.b16 %v919, %v911
  %v992 = vpack.c.b16 %v920, %v912
  %v993 = vpack.c.b16 %v921, %v913
  %v994 = vpack.c.b16 %v922, %v914
  %1067 = vmatprep.subr.bf16.mxu0 %v980
  %1068 = vmatpush1.bf16.msra.mxu0 %v979
  %1069 = vmatprep.subr.bf16.mxu0 %v972
  %1070 = vmatpush1.bf16.msra.mxu0 %v971
  %1071 = vmatprep.subr.bf16.mxu0 %v964
  %1072 = vmatpush1.bf16.msra.mxu0 %v963
  %1073 = vmatprep.subr.bf16.mxu0 %v956
  %1074 = vmatpush1.bf16.msra.mxu0 %v955
  %1075 = vmatprep.subr.bf16.mxu0 %v948
  %1076 = vmatpush1.bf16.msra.mxu0 %v947
  %1077 = vmatprep.subr.bf16.mxu0 %v940
  %1078 = vmatpush1.bf16.msra.mxu0 %v939
  %1079 = vmatprep.subr.bf16.mxu0 %v932
  %1080 = vmatpush1.bf16.msra.mxu0 %v931
  %1081 = vmatprep.subr.bf16.mxu0 %v924
  %1082 = vmatpush1.bf16.msra.mxu0 %v923
  %1083 = vmatprep.subr.bf16.mxu0 0
  %1084 = vmatpush2.bf16.msra.mxu0 0
  %1085 = vmatprep.subr.bf16.mxu0 0
  %1086 = vmatpush2.bf16.msra.mxu0 0
  %1087 = vmatprep.subr.bf16.mxu0 0
  %1088 = vmatpush2.bf16.msra.mxu0 0
  %1089 = vmatprep.subr.bf16.mxu0 0
  %1090 = vmatpush2.bf16.msra.mxu0 0
  %1091 = vmatprep.subr.bf16.mxu0 0
  %1092 = vmatpush2.bf16.msra.mxu0 0
  %1093 = vmatprep.subr.bf16.mxu0 0
  %1094 = vmatpush2.bf16.msra.mxu0 0
  %1095 = vmatprep.subr.bf16.mxu0 0
  %1096 = vmatpush2.bf16.msra.mxu0 0
  %1097 = vmatprep.subr.bf16.mxu0 %v988
  %1098 = vmatpush2.bf16.msra.mxu0 %v987
  %1099 = vmatprep.mubr.bf16.mxu0 %v460
  %1100 = vmatmul.mubr.bf16.gmra.mxu0 %v95
  %v1101 = vpop.f32.mrf.mxu0
  %v1102 = vadd.f32 0.0, %v1101
  %v1103 = vpop.f32.mrf.mxu0
  %v1104 = vadd.f32 0.0, %v1103
  %v1105 = vpop.f32.mrf.mxu0
  %v1106 = vadd.f32 0.0, %v1105
  %v1107 = vpop.f32.mrf.mxu0
  %v1108 = vadd.f32 0.0, %v1107
  %1109 = vdwg.mxu0
  %1110 = vmatprep.subr.bf16.mxu0 %v982
  %1111 = vmatpush1.bf16.msra.mxu0 %v981
  %1112 = vmatprep.subr.bf16.mxu0 %v974
  %1113 = vmatpush1.bf16.msra.mxu0 %v973
  %1114 = vmatprep.subr.bf16.mxu0 %v966
  %1115 = vmatpush1.bf16.msra.mxu0 %v965
  %1116 = vmatprep.subr.bf16.mxu0 %v958
  %1117 = vmatpush1.bf16.msra.mxu0 %v957
  %1118 = vmatprep.subr.bf16.mxu0 %v950
  %1119 = vmatpush1.bf16.msra.mxu0 %v949
  %1120 = vmatprep.subr.bf16.mxu0 %v942
  %1121 = vmatpush1.bf16.msra.mxu0 %v941
  %1122 = vmatprep.subr.bf16.mxu0 %v934
  %1123 = vmatpush1.bf16.msra.mxu0 %v933
  %1124 = vmatprep.subr.bf16.mxu0 %v926
  %1125 = vmatpush1.bf16.msra.mxu0 %v925
  %1126 = vmatprep.subr.bf16.mxu0 0
  %1127 = vmatpush2.bf16.msra.mxu0 0
  %1128 = vmatprep.subr.bf16.mxu0 0
  %1129 = vmatpush2.bf16.msra.mxu0 0
  %1130 = vmatprep.subr.bf16.mxu0 0
  %1131 = vmatpush2.bf16.msra.mxu0 0
  %1132 = vmatprep.subr.bf16.mxu0 0
  %1133 = vmatpush2.bf16.msra.mxu0 0
  %1134 = vmatprep.subr.bf16.mxu0 0
  %1135 = vmatpush2.bf16.msra.mxu0 0
  %1136 = vmatprep.subr.bf16.mxu0 0
  %1137 = vmatpush2.bf16.msra.mxu0 0
  %1138 = vmatprep.subr.bf16.mxu0 0
  %1139 = vmatpush2.bf16.msra.mxu0 0
  %1140 = vmatprep.subr.bf16.mxu0 %v990
  %1141 = vmatpush2.bf16.msra.mxu0 %v989
  %1142 = vmatprep.mubr.bf16.mxu0 %v460
  %1143 = vmatmul.mubr.bf16.gmra.mxu0 %v95
  %v1144 = vpop.f32.mrf.mxu0
  %v1145 = vadd.f32 0.0, %v1144
  %v1146 = vpop.f32.mrf.mxu0
  %v1147 = vadd.f32 0.0, %v1146
  %v1148 = vpop.f32.mrf.mxu0
  %v1149 = vadd.f32 0.0, %v1148
  %v1150 = vpop.f32.mrf.mxu0
  %v1151 = vadd.f32 0.0, %v1150
  %1152 = vdwg.mxu0
  %1153 = vmatprep.subr.bf16.mxu0 %v984
  %1154 = vmatpush1.bf16.msra.mxu0 %v983
  %1155 = vmatprep.subr.bf16.mxu0 %v976
  %1156 = vmatpush1.bf16.msra.mxu0 %v975
  %1157 = vmatprep.subr.bf16.mxu0 %v968
  %1158 = vmatpush1.bf16.msra.mxu0 %v967
  %1159 = vmatprep.subr.bf16.mxu0 %v960
  %1160 = vmatpush1.bf16.msra.mxu0 %v959
  %1161 = vmatprep.subr.bf16.mxu0 %v952
  %1162 = vmatpush1.bf16.msra.mxu0 %v951
  %1163 = vmatprep.subr.bf16.mxu0 %v944
  %1164 = vmatpush1.bf16.msra.mxu0 %v943
  %1165 = vmatprep.subr.bf16.mxu0 %v936
  %1166 = vmatpush1.bf16.msra.mxu0 %v935
  %1167 = vmatprep.subr.bf16.mxu0 %v928
  %1168 = vmatpush1.bf16.msra.mxu0 %v927
  %1169 = vmatprep.subr.bf16.mxu0 0
  %1170 = vmatpush2.bf16.msra.mxu0 0
  %1171 = vmatprep.subr.bf16.mxu0 0
  %1172 = vmatpush2.bf16.msra.mxu0 0
  %1173 = vmatprep.subr.bf16.mxu0 0
  %1174 = vmatpush2.bf16.msra.mxu0 0
  %1175 = vmatprep.subr.bf16.mxu0 0
  %1176 = vmatpush2.bf16.msra.mxu0 0
  %1177 = vmatprep.subr.bf16.mxu0 0
  %1178 = vmatpush2.bf16.msra.mxu0 0
  %1179 = vmatprep.subr.bf16.mxu0 0
  %1180 = vmatpush2.bf16.msra.mxu0 0
  %1181 = vmatprep.subr.bf16.mxu0 0
  %1182 = vmatpush2.bf16.msra.mxu0 0
  %1183 = vmatprep.subr.bf16.mxu0 %v992
  %1184 = vmatpush2.bf16.msra.mxu0 %v991
  %1185 = vmatprep.mubr.bf16.mxu0 %v460
  %1186 = vmatmul.mubr.bf16.gmra.mxu0 %v95
  %v1187 = vpop.f32.mrf.mxu0
  %v1188 = vadd.f32 0.0, %v1187
  %v1189 = vpop.f32.mrf.mxu0
  %v1190 = vadd.f32 0.0, %v1189
  %v1191 = vpop.f32.mrf.mxu0
  %v1192 = vadd.f32 0.0, %v1191
  %v1193 = vpop.f32.mrf.mxu0
  %v1194 = vadd.f32 0.0, %v1193
  %1195 = vdwg.mxu0
  %1196 = vmatprep.subr.bf16.mxu0 %v986
  %1197 = vmatpush1.bf16.msra.mxu0 %v985
  %1198 = vmatprep.subr.bf16.mxu0 %v978
  %1199 = vmatpush1.bf16.msra.mxu0 %v977
  %1200 = vmatprep.subr.bf16.mxu0 %v970
  %1201 = vmatpush1.bf16.msra.mxu0 %v969
  %1202 = vmatprep.subr.bf16.mxu0 %v962
  %1203 = vmatpush1.bf16.msra.mxu0 %v961
  %1204 = vmatprep.subr.bf16.mxu0 %v954
  %1205 = vmatpush1.bf16.msra.mxu0 %v953
  %1206 = vmatprep.subr.bf16.mxu0 %v946
  %1207 = vmatpush1.bf16.msra.mxu0 %v945
  %1208 = vmatprep.subr.bf16.mxu0 %v938
  %1209 = vmatpush1.bf16.msra.mxu0 %v937
  %1210 = vmatprep.subr.bf16.mxu0 %v930
  %1211 = vmatpush1.bf16.msra.mxu0 %v929
  %1212 = vmatprep.subr.bf16.mxu0 0
  %1213 = vmatpush2.bf16.msra.mxu0 0
  %1214 = vmatprep.subr.bf16.mxu0 0
  %1215 = vmatpush2.bf16.msra.mxu0 0
  %1216 = vmatprep.subr.bf16.mxu0 0
  %1217 = vmatpush2.bf16.msra.mxu0 0
  %1218 = vmatprep.subr.bf16.mxu0 0
  %1219 = vmatpush2.bf16.msra.mxu0 0
  %1220 = vmatprep.subr.bf16.mxu0 0
  %1221 = vmatpush2.bf16.msra.mxu0 0
  %1222 = vmatprep.subr.bf16.mxu0 0
  %1223 = vmatpush2.bf16.msra.mxu0 0
  %1224 = vmatprep.subr.bf16.mxu0 0
  %1225 = vmatpush2.bf16.msra.mxu0 0
  %1226 = vmatprep.subr.bf16.mxu0 %v994
  %1227 = vmatpush2.bf16.msra.mxu0 %v993
  %1228 = vmatprep.mubr.bf16.mxu0 %v460
  %1229 = vmatmul.mubr.bf16.gmra.mxu0 %v95
  %v1230 = vpop.f32.mrf.mxu0
  %v1231 = vadd.f32 0.0, %v1230
  %v1232 = vpop.f32.mrf.mxu0
  %v1233 = vadd.f32 0.0, %v1232
  %v1234 = vpop.f32.mrf.mxu0
  %v1235 = vadd.f32 0.0, %v1234
  %v1236 = vpop.f32.mrf.mxu0
  %v1237 = vadd.f32 0.0, %v1236
  %1238 = vdwg.mxu0
  %v1239 = vmax.f32 %v497, %v1102
  %v1240 = vmax.f32 %v499, %v1104
  %v1241 = vmax.f32 %v540, %v1145
  %v1242 = vmax.f32 %v542, %v1147
  %v1243 = vmax.f32 %v583, %v1188
  %v1244 = vmax.f32 %v585, %v1190
  %v1245 = vmax.f32 %v626, %v1231
  %v1246 = vmax.f32 %v628, %v1233
  %v1247 = vmax.f32 %v501, %v1106
  %v1248 = vmax.f32 %v503, %v1108
  %v1249 = vmax.f32 %v544, %v1149
  %v1250 = vmax.f32 %v546, %v1151
  %v1251 = vmax.f32 %v587, %v1192
  %v1252 = vmax.f32 %v589, %v1194
  %v1253 = vmax.f32 %v630, %v1235
  %v1254 = vmax.f32 %v632, %v1237
  %s1255 = scalar_lea.vmem %s2, 1152
  %v1256 = vld [vmem:[%s1255] sm:$0xff]
  %v1257 = vld [vmem:[%s1255 + $0x8] sm:$0xff]
  %v1258 = vld [vmem:[%s1255 + $0x10] sm:$0xff]
  %v1259 = vld [vmem:[%s1255 + $0x18] sm:$0xff]
  %v1260 = vld [vmem:[%s1255 + $0x20] sm:$0xff]
  %v1261 = vld [vmem:[%s1255 + $0x28] sm:$0xff]
  %v1262 = vld [vmem:[%s1255 + $0x30] sm:$0xff]
  %v1263 = vld [vmem:[%s1255 + $0x38] sm:$0xff]
  %v1264 = vld [vmem:[%s1255 + $0x40] sm:$0xff]
  %v1265 = vld [vmem:[%s1255 + $0x48] sm:$0xff]
  %v1266 = vld [vmem:[%s1255 + $0x50] sm:$0xff]
  %v1267 = vld [vmem:[%s1255 + $0x58] sm:$0xff]
  %v1268 = vld [vmem:[%s1255 + $0x60] sm:$0xff]
  %v1269 = vld [vmem:[%s1255 + $0x68] sm:$0xff]
  %v1270 = vld [vmem:[%s1255 + $0x70] sm:$0xff]
  %v1271 = vld [vmem:[%s1255 + $0x78] sm:$0xff]
  %v1272 = vld [vmem:[%s1255 + $0x80] sm:$0xff]
  %v1273 = vld [vmem:[%s1255 + $0x88] sm:$0xff]
  %v1274 = vld [vmem:[%s1255 + $0x90] sm:$0xff]
  %v1275 = vld [vmem:[%s1255 + $0x98] sm:$0xff]
  %v1276 = vld [vmem:[%s1255 + $0xa0] sm:$0xff]
  %v1277 = vld [vmem:[%s1255 + $0xa8] sm:$0xff]
  %v1278 = vld [vmem:[%s1255 + $0xb0] sm:$0xff]
  %v1279 = vld [vmem:[%s1255 + $0xb8] sm:$0xff]
  %v1280 = vld [vmem:[%s1255 + $0xc0] sm:$0xff]
  %v1281 = vld [vmem:[%s1255 + $0xc8] sm:$0xff]
  %v1282 = vld [vmem:[%s1255 + $0xd0] sm:$0xff]
  %v1283 = vld [vmem:[%s1255 + $0xd8] sm:$0xff]
  %v1284 = vld [vmem:[%s1255 + $0xe0] sm:$0xff]
  %v1285 = vld [vmem:[%s1255 + $0xe8] sm:$0xff]
  %v1286 = vld [vmem:[%s1255 + $0xf0] sm:$0xff]
  %v1287 = vld [vmem:[%s1255 + $0xf8] sm:$0xff]
  %v1288 = vld [vmem:[%s1255 + $0x100] sm:$0xff]
  %v1289 = vld [vmem:[%s1255 + $0x108] sm:$0xff]
  %v1290 = vld [vmem:[%s1255 + $0x110] sm:$0xff]
  %v1291 = vld [vmem:[%s1255 + $0x118] sm:$0xff]
  %v1292 = vld [vmem:[%s1255 + $0x120] sm:$0xff]
  %v1293 = vld [vmem:[%s1255 + $0x128] sm:$0xff]
  %v1294 = vld [vmem:[%s1255 + $0x130] sm:$0xff]
  %v1295 = vld [vmem:[%s1255 + $0x138] sm:$0xff]
  %v1296 = vld [vmem:[%s1255 + $0x140] sm:$0xff]
  %v1297 = vld [vmem:[%s1255 + $0x148] sm:$0xff]
  %v1298 = vld [vmem:[%s1255 + $0x150] sm:$0xff]
  %v1299 = vld [vmem:[%s1255 + $0x158] sm:$0xff]
  %v1300 = vld [vmem:[%s1255 + $0x160] sm:$0xff]
  %v1301 = vld [vmem:[%s1255 + $0x168] sm:$0xff]
  %v1302 = vld [vmem:[%s1255 + $0x170] sm:$0xff]
  %v1303 = vld [vmem:[%s1255 + $0x178] sm:$0xff]
  %v1304 = vld [vmem:[%s1255 + $0x180] sm:$0xff]
  %v1305 = vld [vmem:[%s1255 + $0x188] sm:$0xff]
  %v1306 = vld [vmem:[%s1255 + $0x190] sm:$0xff]
  %v1307 = vld [vmem:[%s1255 + $0x198] sm:$0xff]
  %v1308 = vld [vmem:[%s1255 + $0x1a0] sm:$0xff]
  %v1309 = vld [vmem:[%s1255 + $0x1a8] sm:$0xff]
  %v1310 = vld [vmem:[%s1255 + $0x1b0] sm:$0xff]
  %v1311 = vld [vmem:[%s1255 + $0x1b8] sm:$0xff]
  %v1312 = vld [vmem:[%s1255 + $0x1c0] sm:$0xff]
  %v1313 = vld [vmem:[%s1255 + $0x1c8] sm:$0xff]
  %v1314 = vld [vmem:[%s1255 + $0x1d0] sm:$0xff]
  %v1315 = vld [vmem:[%s1255 + $0x1d8] sm:$0xff]
  %v1316 = vld [vmem:[%s1255 + $0x1e0] sm:$0xff]
  %v1317 = vld [vmem:[%s1255 + $0x1e8] sm:$0xff]
  %v1318 = vld [vmem:[%s1255 + $0x1f0] sm:$0xff]
  %v1319 = vld [vmem:[%s1255 + $0x1f8] sm:$0xff]
  %v1320 = vld [vmem:[%s1255 + $0x200] sm:$0xff]
  %v1321 = vld [vmem:[%s1255 + $0x208] sm:$0xff]
  %v1322 = vld [vmem:[%s1255 + $0x210] sm:$0xff]
  %v1323 = vld [vmem:[%s1255 + $0x218] sm:$0xff]
  %v1324 = vld [vmem:[%s1255 + $0x220] sm:$0xff]
  %v1325 = vld [vmem:[%s1255 + $0x228] sm:$0xff]
  %v1326 = vld [vmem:[%s1255 + $0x230] sm:$0xff]
  %v1327 = vld [vmem:[%s1255 + $0x238] sm:$0xff]
  %v1400 = vunpack.c.l.b16 %v1256
  %v1401 = vunpack.c.h.b16 %v1256
  %v1402 = vunpack.c.l.b16 %v1257
  %v1403 = vunpack.c.h.b16 %v1257
  %v1404 = vunpack.c.l.b16 %v1258
  %v1405 = vunpack.c.h.b16 %v1258
  %v1406 = vunpack.c.l.b16 %v1259
  %v1407 = vunpack.c.h.b16 %v1259
  %v1408 = vunpack.c.l.b16 %v1260
  %v1409 = vunpack.c.h.b16 %v1260
  %v1410 = vunpack.c.l.b16 %v1261
  %v1411 = vunpack.c.h.b16 %v1261
  %v1412 = vunpack.c.l.b16 %v1262
  %v1413 = vunpack.c.h.b16 %v1262
  %v1414 = vunpack.c.l.b16 %v1263
  %v1415 = vunpack.c.h.b16 %v1263
  %v1416 = vunpack.c.l.b16 %v1264
  %v1417 = vunpack.c.h.b16 %v1264
  %v1418 = vunpack.c.l.b16 %v1265
  %v1419 = vunpack.c.h.b16 %v1265
  %v1420 = vunpack.c.l.b16 %v1266
  %v1421 = vunpack.c.h.b16 %v1266
  %v1422 = vunpack.c.l.b16 %v1267
  %v1423 = vunpack.c.h.b16 %v1267
  %v1424 = vunpack.c.l.b16 %v1268
  %v1425 = vunpack.c.h.b16 %v1268
  %v1426 = vunpack.c.l.b16 %v1269
  %v1427 = vunpack.c.h.b16 %v1269
  %v1428 = vunpack.c.l.b16 %v1270
  %v1429 = vunpack.c.h.b16 %v1270
  %v1430 = vunpack.c.l.b16 %v1271
  %v1431 = vunpack.c.h.b16 %v1271
  %v1432 = vunpack.c.l.b16 %v1272
  %v1433 = vunpack.c.h.b16 %v1272
  %v1434 = vunpack.c.l.b16 %v1273
  %v1435 = vunpack.c.h.b16 %v1273
  %v1436 = vunpack.c.l.b16 %v1274
  %v1437 = vunpack.c.h.b16 %v1274
  %v1438 = vunpack.c.l.b16 %v1275
  %v1439 = vunpack.c.h.b16 %v1275
  %v1440 = vunpack.c.l.b16 %v1276
  %v1441 = vunpack.c.h.b16 %v1276
  %v1442 = vunpack.c.l.b16 %v1277
  %v1443 = vunpack.c.h.b16 %v1277
  %v1444 = vunpack.c.l.b16 %v1278
  %v1445 = vunpack.c.h.b16 %v1278
  %v1446 = vunpack.c.l.b16 %v1279
  %v1447 = vunpack.c.h.b16 %v1279
  %v1448 = vunpack.c.l.b16 %v1280
  %v1449 = vunpack.c.h.b16 %v1280
  %v1450 = vunpack.c.l.b16 %v1281
  %v1451 = vunpack.c.h.b16 %v1281
  %v1452 = vunpack.c.l.b16 %v1282
  %v1453 = vunpack.c.h.b16 %v1282
  %v1454 = vunpack.c.l.b16 %v1283
  %v1455 = vunpack.c.h.b16 %v1283
  %v1456 = vunpack.c.l.b16 %v1284
  %v1457 = vunpack.c.h.b16 %v1284
  %v1458 = vunpack.c.l.b16 %v1285
  %v1459 = vunpack.c.h.b16 %v1285
  %v1460 = vunpack.c.l.b16 %v1286
  %v1461 = vunpack.c.h.b16 %v1286
  %v1462 = vunpack.c.l.b16 %v1287
  %v1463 = vunpack.c.h.b16 %v1287
  %v1464 = vunpack.c.l.b16 %v1288
  %v1465 = vunpack.c.h.b16 %v1288
  %v1466 = vunpack.c.l.b16 %v1289
  %v1467 = vunpack.c.h.b16 %v1289
  %v1468 = vunpack.c.l.b16 %v1290
  %v1469 = vunpack.c.h.b16 %v1290
  %v1470 = vunpack.c.l.b16 %v1291
  %v1471 = vunpack.c.h.b16 %v1291
  %v1472 = vunpack.c.l.b16 %v1292
  %v1473 = vunpack.c.h.b16 %v1292
  %v1474 = vunpack.c.l.b16 %v1293
  %v1475 = vunpack.c.h.b16 %v1293
  %v1476 = vunpack.c.l.b16 %v1294
  %v1477 = vunpack.c.h.b16 %v1294
  %v1478 = vunpack.c.l.b16 %v1295
  %v1479 = vunpack.c.h.b16 %v1295
  %v1480 = vunpack.c.l.b16 %v1296
  %v1481 = vunpack.c.h.b16 %v1296
  %v1482 = vunpack.c.l.b16 %v1297
  %v1483 = vunpack.c.h.b16 %v1297
  %v1484 = vunpack.c.l.b16 %v1298
  %v1485 = vunpack.c.h.b16 %v1298
  %v1486 = vunpack.c.l.b16 %v1299
  %v1487 = vunpack.c.h.b16 %v1299
  %v1488 = vunpack.c.l.b16 %v1300
  %v1489 = vunpack.c.h.b16 %v1300
  %v1490 = vunpack.c.l.b16 %v1301
  %v1491 = vunpack.c.h.b16 %v1301
  %v1492 = vunpack.c.l.b16 %v1302
  %v1493 = vunpack.c.h.b16 %v1302
  %v1494 = vunpack.c.l.b16 %v1303
  %v1495 = vunpack.c.h.b16 %v1303
  %v1496 = vunpack.c.l.b16 %v1304
  %v1497 = vunpack.c.h.b16 %v1304
  %v1498 = vunpack.c.l.b16 %v1305
  %v1499 = vunpack.c.h.b16 %v1305
  %v1500 = vunpack.c.l.b16 %v1306
  %v1501 = vunpack.c.h.b16 %v1306
  %v1502 = vunpack.c.l.b16 %v1307
  %v1503 = vunpack.c.h.b16 %v1307
  %v1504 = vunpack.c.l.b16 %v1308
  %v1505 = vunpack.c.h.b16 %v1308
  %v1506 = vunpack.c.l.b16 %v1309
  %v1507 = vunpack.c.h.b16 %v1309
  %v1508 = vunpack.c.l.b16 %v1310
  %v1509 = vunpack.c.h.b16 %v1310
  %v1510 = vunpack.c.l.b16 %v1311
  %v1511 = vunpack.c.h.b16 %v1311
  %v1512 = vunpack.c.l.b16 %v1312
  %v1513 = vunpack.c.h.b16 %v1312
  %v1514 = vunpack.c.l.b16 %v1313
  %v1515 = vunpack.c.h.b16 %v1313
  %v1516 = vunpack.c.l.b16 %v1314
  %v1517 = vunpack.c.h.b16 %v1314
  %v1518 = vunpack.c.l.b16 %v1315
  %v1519 = vunpack.c.h.b16 %v1315
  %v1520 = vunpack.c.l.b16 %v1316
  %v1521 = vunpack.c.h.b16 %v1316
  %v1522 = vunpack.c.l.b16 %v1317
  %v1523 = vunpack.c.h.b16 %v1317
  %v1524 = vunpack.c.l.b16 %v1318
  %v1525 = vunpack.c.h.b16 %v1318
  %v1526 = vunpack.c.l.b16 %v1319
  %v1527 = vunpack.c.h.b16 %v1319
  %v1528 = vunpack.c.l.b16 %v1320
  %v1529 = vunpack.c.h.b16 %v1320
  %v1530 = vunpack.c.l.b16 %v1321
  %v1531 = vunpack.c.h.b16 %v1321
  %v1532 = vunpack.c.l.b16 %v1322
  %v1533 = vunpack.c.h.b16 %v1322
  %v1534 = vunpack.c.l.b16 %v1323
  %v1535 = vunpack.c.h.b16 %v1323
  %v1536 = vunpack.c.l.b16 %v1324
  %v1537 = vunpack.c.h.b16 %v1324
  %v1538 = vunpack.c.l.b16 %v1325
  %v1539 = vunpack.c.h.b16 %v1325
  %v1540 = vunpack.c.l.b16 %v1326
  %v1541 = vunpack.c.h.b16 %v1326
  %v1542 = vunpack.c.l.b16 %v1327
  %v1543 = vunpack.c.h.b16 %v1327
  %v1544 = vpack.c.b16 %v1408, %v1400
  %v1545 = vpack.c.b16 %v1409, %v1401
  %v1546 = vpack.c.b16 %v1410, %v1402
  %v1547 = vpack.c.b16 %v1411, %v1403
  %v1548 = vpack.c.b16 %v1412, %v1404
  %v1549 = vpack.c.b16 %v1413, %v1405
  %v1550 = vpack.c.b16 %v1414, %v1406
  %v1551 = vpack.c.b16 %v1415, %v1407
  %v1552 = vpack.c.b16 %v1424, %v1416
  %v1553 = vpack.c.b16 %v1425, %v1417
  %v1554 = vpack.c.b16 %v1426, %v1418
  %v1555 = vpack.c.b16 %v1427, %v1419
  %v1556 = vpack.c.b16 %v1428, %v1420
  %v1557 = vpack.c.b16 %v1429, %v1421
  %v1558 = vpack.c.b16 %v1430, %v1422
  %v1559 = vpack.c.b16 %v1431, %v1423
  %v1560 = vpack.c.b16 %v1440, %v1432
  %v1561 = vpack.c.b16 %v1441, %v1433
  %v1562 = vpack.c.b16 %v1442, %v1434
  %v1563 = vpack.c.b16 %v1443, %v1435
  %v1564 = vpack.c.b16 %v1444, %v1436
  %v1565 = vpack.c.b16 %v1445, %v1437
  %v1566 = vpack.c.b16 %v1446, %v1438
  %v1567 = vpack.c.b16 %v1447, %v1439
  %v1568 = vpack.c.b16 %v1456, %v1448
  %v1569 = vpack.c.b16 %v1457, %v1449
  %v1570 = vpack.c.b16 %v1458, %v1450
  %v1571 = vpack.c.b16 %v1459, %v1451
  %v1572 = vpack.c.b16 %v1460, %v1452
  %v1573 = vpack.c.b16 %v1461, %v1453
  %v1574 = vpack.c.b16 %v1462, %v1454
  %v1575 = vpack.c.b16 %v1463, %v1455
  %v1576 = vpack.c.b16 %v1472, %v1464
  %v1577 = vpack.c.b16 %v1473, %v1465
  %v1578 = vpack.c.b16 %v1474, %v1466
  %v1579 = vpack.c.b16 %v1475, %v1467
  %v1580 = vpack.c.b16 %v1476, %v1468
  %v1581 = vpack.c.b16 %v1477, %v1469
  %v1582 = vpack.c.b16 %v1478, %v1470
  %v1583 = vpack.c.b16 %v1479, %v1471
  %v1584 = vpack.c.b16 %v1488, %v1480
  %v1585 = vpack.c.b16 %v1489, %v1481
  %v1586 = vpack.c.b16 %v1490, %v1482
  %v1587 = vpack.c.b16 %v1491, %v1483
  %v1588 = vpack.c.b16 %v1492, %v1484
  %v1589 = vpack.c.b16 %v1493, %v1485
  %v1590 = vpack.c.b16 %v1494, %v1486
  %v1591 = vpack.c.b16 %v1495, %v1487
  %v1592 = vpack.c.b16 %v1504, %v1496
  %v1593 = vpack.c.b16 %v1505, %v1497
  %v1594 = vpack.c.b16 %v1506, %v1498
  %v1595 = vpack.c.b16 %v1507, %v1499
  %v1596 = vpack.c.b16 %v1508, %v1500
  %v1597 = vpack.c.b16 %v1509, %v1501
  %v1598 = vpack.c.b16 %v1510, %v1502
  %v1599 = vpack.c.b16 %v1511, %v1503
  %v1600 = vpack.c.b16 %v1520, %v1512
  %v1601 = vpack.c.b16 %v1521, %v1513
  %v1602 = vpack.c.b16 %v1522, %v1514
  %v1603 = vpack.c.b16 %v1523, %v1515
  %v1604 = vpack.c.b16 %v1524, %v1516
  %v1605 = vpack.c.b16 %v1525, %v1517
  %v1606 = vpack.c.b16 %v1526, %v1518
  %v1607 = vpack.c.b16 %v1527, %v1519
  %v1608 = vpack.c.b16 %v1536, %v1528
  %v1609 = vpack.c.b16 %v1537, %v1529
  %v1610 = vpack.c.b16 %v1538, %v1530
  %v1611 = vpack.c.b16 %v1539, %v1531
  %v1612 = vpack.c.b16 %v1540, %v1532
  %v1613 = vpack.c.b16 %v1541, %v1533
  %v1614 = vpack.c.b16 %v1542, %v1534
  %v1615 = vpack.c.b16 %v1543, %v1535
  %1688 = vmatprep.subr.bf16.mxu0 %v1601
  %1689 = vmatpush1.bf16.msra.mxu0 %v1600
  %1690 = vmatprep.subr.bf16.mxu0 %v1593
  %1691 = vmatpush1.bf16.msra.mxu0 %v1592
  %1692 = vmatprep.subr.bf16.mxu0 %v1585
  %1693 = vmatpush1.bf16.msra.mxu0 %v1584
  %1694 = vmatprep.subr.bf16.mxu0 %v1577
  %1695 = vmatpush1.bf16.msra.mxu0 %v1576
  %1696 = vmatprep.subr.bf16.mxu0 %v1569
  %1697 = vmatpush1.bf16.msra.mxu0 %v1568
  %1698 = vmatprep.subr.bf16.mxu0 %v1561
  %1699 = vmatpush1.bf16.msra.mxu0 %v1560
  %1700 = vmatprep.subr.bf16.mxu0 %v1553
  %1701 = vmatpush1.bf16.msra.mxu0 %v1552
  %1702 = vmatprep.subr.bf16.mxu0 %v1545
  %1703 = vmatpush1.bf16.msra.mxu0 %v1544
  %1704 = vmatprep.subr.bf16.mxu0 0
  %1705 = vmatpush2.bf16.msra.mxu0 0
  %1706 = vmatprep.subr.bf16.mxu0 0
  %1707 = vmatpush2.bf16.msra.mxu0 0
  %1708 = vmatprep.subr.bf16.mxu0 0
  %1709 = vmatpush2.bf16.msra.mxu0 0
  %1710 = vmatprep.subr.bf16.mxu0 0
  %1711 = vmatpush2.bf16.msra.mxu0 0
  %1712 = vmatprep.subr.bf16.mxu0 0
  %1713 = vmatpush2.bf16.msra.mxu0 0
  %1714 = vmatprep.subr.bf16.mxu0 0
  %1715 = vmatpush2.bf16.msra.mxu0 0
  %1716 = vmatprep.subr.bf16.mxu0 0
  %1717 = vmatpush2.bf16.msra.mxu0 0
  %1718 = vmatprep.subr.bf16.mxu0 %v1609
  %1719 = vmatpush2.bf16.msra.mxu0 %v1608
  %1720 = vmatprep.mubr.bf16.mxu0 %v460
  %1721 = vmatmul.mubr.bf16.gmra.mxu0 %v95
  %v1722 = vpop.f32.mrf.mxu0
  %v1723 = vadd.f32 0.0, %v1722
  %v1724 = vpop.f32.mrf.mxu0
  %v1725 = vadd.f32 0.0, %v1724
  %v1726 = vpop.f32.mrf.mxu0
  %v1727 = vadd.f32 0.0, %v1726
  %v1728 = vpop.f32.mrf.mxu0
  %v1729 = vadd.f32 0.0, %v1728
  %1730 = vdwg.mxu0
  %1731 = vmatprep.subr.bf16.mxu0 %v1603
  %1732 = vmatpush1.bf16.msra.mxu0 %v1602
  %1733 = vmatprep.subr.bf16.mxu0 %v1595
  %1734 = vmatpush1.bf16.msra.mxu0 %v1594
  %1735 = vmatprep.subr.bf16.mxu0 %v1587
  %1736 = vmatpush1.bf16.msra.mxu0 %v1586
  %1737 = vmatprep.subr.bf16.mxu0 %v1579
  %1738 = vmatpush1.bf16.msra.mxu0 %v1578
  %1739 = vmatprep.subr.bf16.mxu0 %v1571
  %1740 = vmatpush1.bf16.msra.mxu0 %v1570
  %1741 = vmatprep.subr.bf16.mxu0 %v1563
  %1742 = vmatpush1.bf16.msra.mxu0 %v1562
  %1743 = vmatprep.subr.bf16.mxu0 %v1555
  %1744 = vmatpush1.bf16.msra.mxu0 %v1554
  %1745 = vmatprep.subr.bf16.mxu0 %v1547
  %1746 = vmatpush1.bf16.msra.mxu0 %v1546
  %1747 = vmatprep.subr.bf16.mxu0 0
  %1748 = vmatpush2.bf16.msra.mxu0 0
  %1749 = vmatprep.subr.bf16.mxu0 0
  %1750 = vmatpush2.bf16.msra.mxu0 0
  %1751 = vmatprep.subr.bf16.mxu0 0
  %1752 = vmatpush2.bf16.msra.mxu0 0
  %1753 = vmatprep.subr.bf16.mxu0 0
  %1754 = vmatpush2.bf16.msra.mxu0 0
  %1755 = vmatprep.subr.bf16.mxu0 0
  %1756 = vmatpush2.bf16.msra.mxu0 0
  %1757 = vmatprep.subr.bf16.mxu0 0
  %1758 = vmatpush2.bf16.msra.mxu0 0
  %1759 = vmatprep.subr.bf16.mxu0 0
  %1760 = vmatpush2.bf16.msra.mxu0 0
  %1761 = vmatprep.subr.bf16.mxu0 %v1611
  %1762 = vmatpush2.bf16.msra.mxu0 %v1610
  %1763 = vmatprep.mubr.bf16.mxu0 %v460
  %1764 = vmatmul.mubr.bf16.gmra.mxu0 %v95
  %v1765 = vpop.f32.mrf.mxu0
  %v1766 = vadd.f32 0.0, %v1765
  %v1767 = vpop.f32.mrf.mxu0
  %v1768 = vadd.f32 0.0, %v1767
  %v1769 = vpop.f32.mrf.mxu0
  %v1770 = vadd.f32 0.0, %v1769
  %v1771 = vpop.f32.mrf.mxu0
  %v1772 = vadd.f32 0.0, %v1771
  %1773 = vdwg.mxu0
  %1774 = vmatprep.subr.bf16.mxu0 %v1605
  %1775 = vmatpush1.bf16.msra.mxu0 %v1604
  %1776 = vmatprep.subr.bf16.mxu0 %v1597
  %1777 = vmatpush1.bf16.msra.mxu0 %v1596
  %1778 = vmatprep.subr.bf16.mxu0 %v1589
  %1779 = vmatpush1.bf16.msra.mxu0 %v1588
  %1780 = vmatprep.subr.bf16.mxu0 %v1581
  %1781 = vmatpush1.bf16.msra.mxu0 %v1580
  %1782 = vmatprep.subr.bf16.mxu0 %v1573
  %1783 = vmatpush1.bf16.msra.mxu0 %v1572
  %1784 = vmatprep.subr.bf16.mxu0 %v1565
  %1785 = vmatpush1.bf16.msra.mxu0 %v1564
  %1786 = vmatprep.subr.bf16.mxu0 %v1557
  %1787 = vmatpush1.bf16.msra.mxu0 %v1556
  %1788 = vmatprep.subr.bf16.mxu0 %v1549
  %1789 = vmatpush1.bf16.msra.mxu0 %v1548
  %1790 = vmatprep.subr.bf16.mxu0 0
  %1791 = vmatpush2.bf16.msra.mxu0 0
  %1792 = vmatprep.subr.bf16.mxu0 0
  %1793 = vmatpush2.bf16.msra.mxu0 0
  %1794 = vmatprep.subr.bf16.mxu0 0
  %1795 = vmatpush2.bf16.msra.mxu0 0
  %1796 = vmatprep.subr.bf16.mxu0 0
  %1797 = vmatpush2.bf16.msra.mxu0 0
  %1798 = vmatprep.subr.bf16.mxu0 0
  %1799 = vmatpush2.bf16.msra.mxu0 0
  %1800 = vmatprep.subr.bf16.mxu0 0
  %1801 = vmatpush2.bf16.msra.mxu0 0
  %1802 = vmatprep.subr.bf16.mxu0 0
  %1803 = vmatpush2.bf16.msra.mxu0 0
  %1804 = vmatprep.subr.bf16.mxu0 %v1613
  %1805 = vmatpush2.bf16.msra.mxu0 %v1612
  %1806 = vmatprep.mubr.bf16.mxu0 %v460
  %1807 = vmatmul.mubr.bf16.gmra.mxu0 %v95
  %v1808 = vpop.f32.mrf.mxu0
  %v1809 = vadd.f32 0.0, %v1808
  %v1810 = vpop.f32.mrf.mxu0
  %v1811 = vadd.f32 0.0, %v1810
  %v1812 = vpop.f32.mrf.mxu0
  %v1813 = vadd.f32 0.0, %v1812
  %v1814 = vpop.f32.mrf.mxu0
  %v1815 = vadd.f32 0.0, %v1814
  %1816 = vdwg.mxu0
  %1817 = vmatprep.subr.bf16.mxu0 %v1607
  %1818 = vmatpush1.bf16.msra.mxu0 %v1606
  %1819 = vmatprep.subr.bf16.mxu0 %v1599
  %1820 = vmatpush1.bf16.msra.mxu0 %v1598
  %1821 = vmatprep.subr.bf16.mxu0 %v1591
  %1822 = vmatpush1.bf16.msra.mxu0 %v1590
  %1823 = vmatprep.subr.bf16.mxu0 %v1583
  %1824 = vmatpush1.bf16.msra.mxu0 %v1582
  %1825 = vmatprep.subr.bf16.mxu0 %v1575
  %1826 = vmatpush1.bf16.msra.mxu0 %v1574
  %1827 = vmatprep.subr.bf16.mxu0 %v1567
  %1828 = vmatpush1.bf16.msra.mxu0 %v1566
  %1829 = vmatprep.subr.bf16.mxu0 %v1559
  %1830 = vmatpush1.bf16.msra.mxu0 %v1558
  %1831 = vmatprep.subr.bf16.mxu0 %v1551
  %1832 = vmatpush1.bf16.msra.mxu0 %v1550
  %1833 = vmatprep.subr.bf16.mxu0 0
  %1834 = vmatpush2.bf16.msra.mxu0 0
  %1835 = vmatprep.subr.bf16.mxu0 0
  %1836 = vmatpush2.bf16.msra.mxu0 0
  %1837 = vmatprep.subr.bf16.mxu0 0
  %1838 = vmatpush2.bf16.msra.mxu0 0
  %1839 = vmatprep.subr.bf16.mxu0 0
  %1840 = vmatpush2.bf16.msra.mxu0 0
  %1841 = vmatprep.subr.bf16.mxu0 0
  %1842 = vmatpush2.bf16.msra.mxu0 0
  %1843 = vmatprep.subr.bf16.mxu0 0
  %1844 = vmatpush2.bf16.msra.mxu0 0
  %1845 = vmatprep.subr.bf16.mxu0 0
  %1846 = vmatpush2.bf16.msra.mxu0 0
  %1847 = vmatprep.subr.bf16.mxu0 %v1615
  %1848 = vmatpush2.bf16.msra.mxu0 %v1614
  %1849 = vmatprep.mubr.bf16.mxu0 %v460
  %1850 = vmatmul.mubr.bf16.gmra.mxu0 %v95
  %v1851 = vpop.f32.mrf.mxu0
  %v1852 = vadd.f32 0.0, %v1851
  %v1853 = vpop.f32.mrf.mxu0
  %v1854 = vadd.f32 0.0, %v1853
  %v1855 = vpop.f32.mrf.mxu0
  %v1856 = vadd.f32 0.0, %v1855
  %v1857 = vpop.f32.mrf.mxu0
  %v1858 = vadd.f32 0.0, %v1857
  %1859 = vdwg.mxu0
  %v1860 = vmax.f32 %v1239, %v1723
  %v1861 = vmax.f32 %v1240, %v1725
  %v1862 = vmax.f32 %v1241, %v1766
  %v1863 = vmax.f32 %v1242, %v1768
  %v1864 = vmax.f32 %v1243, %v1809
  %v1865 = vmax.f32 %v1244, %v1811
  %v1866 = vmax.f32 %v1245, %v1852
  %v1867 = vmax.f32 %v1246, %v1854
  %v1868 = vmax.f32 %v1247, %v1727
  %v1869 = vmax.f32 %v1248, %v1729
  %v1870 = vmax.f32 %v1249, %v1770
  %v1871 = vmax.f32 %v1250, %v1772
  %v1872 = vmax.f32 %v1251, %v1813
  %v1873 = vmax.f32 %v1252, %v1815
  %v1874 = vmax.f32 %v1253, %v1856
  %v1875 = vmax.f32 %v1254, %v1858
  %s1876 = scalar_lea.vmem %s2, 1728
  %v1877 = vld [vmem:[%s1876] sm:$0xff]
  %v1878 = vld [vmem:[%s1876 + $0x8] sm:$0xff]
  %v1879 = vld [vmem:[%s1876 + $0x10] sm:$0xff]
  %v1880 = vld [vmem:[%s1876 + $0x18] sm:$0xff]
  %v1881 = vld [vmem:[%s1876 + $0x20] sm:$0xff]
  %v1882 = vld [vmem:[%s1876 + $0x28] sm:$0xff]
  %v1883 = vld [vmem:[%s1876 + $0x30] sm:$0xff]
  %v1884 = vld [vmem:[%s1876 + $0x38] sm:$0xff]
  %v1885 = vld [vmem:[%s1876 + $0x40] sm:$0xff]
  %v1886 = vld [vmem:[%s1876 + $0x48] sm:$0xff]
  %v1887 = vld [vmem:[%s1876 + $0x50] sm:$0xff]
  %v1888 = vld [vmem:[%s1876 + $0x58] sm:$0xff]
  %v1889 = vld [vmem:[%s1876 + $0x60] sm:$0xff]
  %v1890 = vld [vmem:[%s1876 + $0x68] sm:$0xff]
  %v1891 = vld [vmem:[%s1876 + $0x70] sm:$0xff]
  %v1892 = vld [vmem:[%s1876 + $0x78] sm:$0xff]
  %v1893 = vld [vmem:[%s1876 + $0x80] sm:$0xff]
  %v1894 = vld [vmem:[%s1876 + $0x88] sm:$0xff]
  %v1895 = vld [vmem:[%s1876 + $0x90] sm:$0xff]
  %v1896 = vld [vmem:[%s1876 + $0x98] sm:$0xff]
  %v1897 = vld [vmem:[%s1876 + $0xa0] sm:$0xff]
  %v1898 = vld [vmem:[%s1876 + $0xa8] sm:$0xff]
  %v1899 = vld [vmem:[%s1876 + $0xb0] sm:$0xff]
  %v1900 = vld [vmem:[%s1876 + $0xb8] sm:$0xff]
  %v1901 = vld [vmem:[%s1876 + $0xc0] sm:$0xff]
  %v1902 = vld [vmem:[%s1876 + $0xc8] sm:$0xff]
  %v1903 = vld [vmem:[%s1876 + $0xd0] sm:$0xff]
  %v1904 = vld [vmem:[%s1876 + $0xd8] sm:$0xff]
  %v1905 = vld [vmem:[%s1876 + $0xe0] sm:$0xff]
  %v1906 = vld [vmem:[%s1876 + $0xe8] sm:$0xff]
  %v1907 = vld [vmem:[%s1876 + $0xf0] sm:$0xff]
  %v1908 = vld [vmem:[%s1876 + $0xf8] sm:$0xff]
  %v1909 = vld [vmem:[%s1876 + $0x100] sm:$0xff]
  %v1910 = vld [vmem:[%s1876 + $0x108] sm:$0xff]
  %v1911 = vld [vmem:[%s1876 + $0x110] sm:$0xff]
  %v1912 = vld [vmem:[%s1876 + $0x118] sm:$0xff]
  %v1913 = vld [vmem:[%s1876 + $0x120] sm:$0xff]
  %v1914 = vld [vmem:[%s1876 + $0x128] sm:$0xff]
  %v1915 = vld [vmem:[%s1876 + $0x130] sm:$0xff]
  %v1916 = vld [vmem:[%s1876 + $0x138] sm:$0xff]
  %v1917 = vld [vmem:[%s1876 + $0x140] sm:$0xff]
  %v1918 = vld [vmem:[%s1876 + $0x148] sm:$0xff]
  %v1919 = vld [vmem:[%s1876 + $0x150] sm:$0xff]
  %v1920 = vld [vmem:[%s1876 + $0x158] sm:$0xff]
  %v1921 = vld [vmem:[%s1876 + $0x160] sm:$0xff]
  %v1922 = vld [vmem:[%s1876 + $0x168] sm:$0xff]
  %v1923 = vld [vmem:[%s1876 + $0x170] sm:$0xff]
  %v1924 = vld [vmem:[%s1876 + $0x178] sm:$0xff]
  %v1925 = vld [vmem:[%s1876 + $0x180] sm:$0xff]
  %v1926 = vld [vmem:[%s1876 + $0x188] sm:$0xff]
  %v1927 = vld [vmem:[%s1876 + $0x190] sm:$0xff]
  %v1928 = vld [vmem:[%s1876 + $0x198] sm:$0xff]
  %v1929 = vld [vmem:[%s1876 + $0x1a0] sm:$0xff]
  %v1930 = vld [vmem:[%s1876 + $0x1a8] sm:$0xff]
  %v1931 = vld [vmem:[%s1876 + $0x1b0] sm:$0xff]
  %v1932 = vld [vmem:[%s1876 + $0x1b8] sm:$0xff]
  %v1933 = vld [vmem:[%s1876 + $0x1c0] sm:$0xff]
  %v1934 = vld [vmem:[%s1876 + $0x1c8] sm:$0xff]
  %v1935 = vld [vmem:[%s1876 + $0x1d0] sm:$0xff]
  %v1936 = vld [vmem:[%s1876 + $0x1d8] sm:$0xff]
  %v1937 = vld [vmem:[%s1876 + $0x1e0] sm:$0xff]
  %v1938 = vld [vmem:[%s1876 + $0x1e8] sm:$0xff]
  %v1939 = vld [vmem:[%s1876 + $0x1f0] sm:$0xff]
  %v1940 = vld [vmem:[%s1876 + $0x1f8] sm:$0xff]
  %v1941 = vld [vmem:[%s1876 + $0x200] sm:$0xff]
  %v1942 = vld [vmem:[%s1876 + $0x208] sm:$0xff]
  %v1943 = vld [vmem:[%s1876 + $0x210] sm:$0xff]
  %v1944 = vld [vmem:[%s1876 + $0x218] sm:$0xff]
  %v1945 = vld [vmem:[%s1876 + $0x220] sm:$0xff]
  %v1946 = vld [vmem:[%s1876 + $0x228] sm:$0xff]
  %v1947 = vld [vmem:[%s1876 + $0x230] sm:$0xff]
  %v1948 = vld [vmem:[%s1876 + $0x238] sm:$0xff]
  %v2021 = vunpack.c.l.b16 %v1877
  %v2022 = vunpack.c.h.b16 %v1877
  %v2023 = vunpack.c.l.b16 %v1878
  %v2024 = vunpack.c.h.b16 %v1878
  %v2025 = vunpack.c.l.b16 %v1879
  %v2026 = vunpack.c.h.b16 %v1879
  %v2027 = vunpack.c.l.b16 %v1880
  %v2028 = vunpack.c.h.b16 %v1880
  %v2029 = vunpack.c.l.b16 %v1881
  %v2030 = vunpack.c.h.b16 %v1881
  %v2031 = vunpack.c.l.b16 %v1882
  %v2032 = vunpack.c.h.b16 %v1882
  %v2033 = vunpack.c.l.b16 %v1883
  %v2034 = vunpack.c.h.b16 %v1883
  %v2035 = vunpack.c.l.b16 %v1884
  %v2036 = vunpack.c.h.b16 %v1884
  %v2037 = vunpack.c.l.b16 %v1885
  %v2038 = vunpack.c.h.b16 %v1885
  %v2039 = vunpack.c.l.b16 %v1886
  %v2040 = vunpack.c.h.b16 %v1886
  %v2041 = vunpack.c.l.b16 %v1887
  %v2042 = vunpack.c.h.b16 %v1887
  %v2043 = vunpack.c.l.b16 %v1888
  %v2044 = vunpack.c.h.b16 %v1888
  %v2045 = vunpack.c.l.b16 %v1889
  %v2046 = vunpack.c.h.b16 %v1889
  %v2047 = vunpack.c.l.b16 %v1890
  %v2048 = vunpack.c.h.b16 %v1890
  %v2049 = vunpack.c.l.b16 %v1891
  %v2050 = vunpack.c.h.b16 %v1891
  %v2051 = vunpack.c.l.b16 %v1892
  %v2052 = vunpack.c.h.b16 %v1892
  %v2053 = vunpack.c.l.b16 %v1893
  %v2054 = vunpack.c.h.b16 %v1893
  %v2055 = vunpack.c.l.b16 %v1894
  %v2056 = vunpack.c.h.b16 %v1894
  %v2057 = vunpack.c.l.b16 %v1895
  %v2058 = vunpack.c.h.b16 %v1895
  %v2059 = vunpack.c.l.b16 %v1896
  %v2060 = vunpack.c.h.b16 %v1896
  %v2061 = vunpack.c.l.b16 %v1897
  %v2062 = vunpack.c.h.b16 %v1897
  %v2063 = vunpack.c.l.b16 %v1898
  %v2064 = vunpack.c.h.b16 %v1898
  %v2065 = vunpack.c.l.b16 %v1899
  %v2066 = vunpack.c.h.b16 %v1899
  %v2067 = vunpack.c.l.b16 %v1900
  %v2068 = vunpack.c.h.b16 %v1900
  %v2069 = vunpack.c.l.b16 %v1901
  %v2070 = vunpack.c.h.b16 %v1901
  %v2071 = vunpack.c.l.b16 %v1902
  %v2072 = vunpack.c.h.b16 %v1902
  %v2073 = vunpack.c.l.b16 %v1903
  %v2074 = vunpack.c.h.b16 %v1903
  %v2075 = vunpack.c.l.b16 %v1904
  %v2076 = vunpack.c.h.b16 %v1904
  %v2077 = vunpack.c.l.b16 %v1905
  %v2078 = vunpack.c.h.b16 %v1905
  %v2079 = vunpack.c.l.b16 %v1906
  %v2080 = vunpack.c.h.b16 %v1906
  %v2081 = vunpack.c.l.b16 %v1907
  %v2082 = vunpack.c.h.b16 %v1907
  %v2083 = vunpack.c.l.b16 %v1908
  %v2084 = vunpack.c.h.b16 %v1908
  %v2085 = vunpack.c.l.b16 %v1909
  %v2086 = vunpack.c.h.b16 %v1909
  %v2087 = vunpack.c.l.b16 %v1910
  %v2088 = vunpack.c.h.b16 %v1910
  %v2089 = vunpack.c.l.b16 %v1911
  %v2090 = vunpack.c.h.b16 %v1911
  %v2091 = vunpack.c.l.b16 %v1912
  %v2092 = vunpack.c.h.b16 %v1912
  %v2093 = vunpack.c.l.b16 %v1913
  %v2094 = vunpack.c.h.b16 %v1913
  %v2095 = vunpack.c.l.b16 %v1914
  %v2096 = vunpack.c.h.b16 %v1914
  %v2097 = vunpack.c.l.b16 %v1915
  %v2098 = vunpack.c.h.b16 %v1915
  %v2099 = vunpack.c.l.b16 %v1916
  %v2100 = vunpack.c.h.b16 %v1916
  %v2101 = vunpack.c.l.b16 %v1917
  %v2102 = vunpack.c.h.b16 %v1917
  %v2103 = vunpack.c.l.b16 %v1918
  %v2104 = vunpack.c.h.b16 %v1918
  %v2105 = vunpack.c.l.b16 %v1919
  %v2106 = vunpack.c.h.b16 %v1919
  %v2107 = vunpack.c.l.b16 %v1920
  %v2108 = vunpack.c.h.b16 %v1920
  %v2109 = vunpack.c.l.b16 %v1921
  %v2110 = vunpack.c.h.b16 %v1921
  %v2111 = vunpack.c.l.b16 %v1922
  %v2112 = vunpack.c.h.b16 %v1922
  %v2113 = vunpack.c.l.b16 %v1923
  %v2114 = vunpack.c.h.b16 %v1923
  %v2115 = vunpack.c.l.b16 %v1924
  %v2116 = vunpack.c.h.b16 %v1924
  %v2117 = vunpack.c.l.b16 %v1925
  %v2118 = vunpack.c.h.b16 %v1925
  %v2119 = vunpack.c.l.b16 %v1926
  %v2120 = vunpack.c.h.b16 %v1926
  %v2121 = vunpack.c.l.b16 %v1927
  %v2122 = vunpack.c.h.b16 %v1927
  %v2123 = vunpack.c.l.b16 %v1928
  %v2124 = vunpack.c.h.b16 %v1928
  %v2125 = vunpack.c.l.b16 %v1929
  %v2126 = vunpack.c.h.b16 %v1929
  %v2127 = vunpack.c.l.b16 %v1930
  %v2128 = vunpack.c.h.b16 %v1930
  %v2129 = vunpack.c.l.b16 %v1931
  %v2130 = vunpack.c.h.b16 %v1931
  %v2131 = vunpack.c.l.b16 %v1932
  %v2132 = vunpack.c.h.b16 %v1932
  %v2133 = vunpack.c.l.b16 %v1933
  %v2134 = vunpack.c.h.b16 %v1933
  %v2135 = vunpack.c.l.b16 %v1934
  %v2136 = vunpack.c.h.b16 %v1934
  %v2137 = vunpack.c.l.b16 %v1935
  %v2138 = vunpack.c.h.b16 %v1935
  %v2139 = vunpack.c.l.b16 %v1936
  %v2140 = vunpack.c.h.b16 %v1936
  %v2141 = vunpack.c.l.b16 %v1937
  %v2142 = vunpack.c.h.b16 %v1937
  %v2143 = vunpack.c.l.b16 %v1938
  %v2144 = vunpack.c.h.b16 %v1938
  %v2145 = vunpack.c.l.b16 %v1939
  %v2146 = vunpack.c.h.b16 %v1939
  %v2147 = vunpack.c.l.b16 %v1940
  %v2148 = vunpack.c.h.b16 %v1940
  %v2149 = vunpack.c.l.b16 %v1941
  %v2150 = vunpack.c.h.b16 %v1941
  %v2151 = vunpack.c.l.b16 %v1942
  %v2152 = vunpack.c.h.b16 %v1942
  %v2153 = vunpack.c.l.b16 %v1943
  %v2154 = vunpack.c.h.b16 %v1943
  %v2155 = vunpack.c.l.b16 %v1944
  %v2156 = vunpack.c.h.b16 %v1944
  %v2157 = vunpack.c.l.b16 %v1945
  %v2158 = vunpack.c.h.b16 %v1945
  %v2159 = vunpack.c.l.b16 %v1946
  %v2160 = vunpack.c.h.b16 %v1946
  %v2161 = vunpack.c.l.b16 %v1947
  %v2162 = vunpack.c.h.b16 %v1947
  %v2163 = vunpack.c.l.b16 %v1948
  %v2164 = vunpack.c.h.b16 %v1948
  %v2165 = vpack.c.b16 %v2029, %v2021
  %v2166 = vpack.c.b16 %v2030, %v2022
  %v2167 = vpack.c.b16 %v2031, %v2023
  %v2168 = vpack.c.b16 %v2032, %v2024
  %v2169 = vpack.c.b16 %v2033, %v2025
  %v2170 = vpack.c.b16 %v2034, %v2026
  %v2171 = vpack.c.b16 %v2035, %v2027
  %v2172 = vpack.c.b16 %v2036, %v2028
  %v2173 = vpack.c.b16 %v2045, %v2037
  %v2174 = vpack.c.b16 %v2046, %v2038
  %v2175 = vpack.c.b16 %v2047, %v2039
  %v2176 = vpack.c.b16 %v2048, %v2040
  %v2177 = vpack.c.b16 %v2049, %v2041
  %v2178 = vpack.c.b16 %v2050, %v2042
  %v2179 = vpack.c.b16 %v2051, %v2043
  %v2180 = vpack.c.b16 %v2052, %v2044
  %v2181 = vpack.c.b16 %v2061, %v2053
  %v2182 = vpack.c.b16 %v2062, %v2054
  %v2183 = vpack.c.b16 %v2063, %v2055
  %v2184 = vpack.c.b16 %v2064, %v2056
  %v2185 = vpack.c.b16 %v2065, %v2057
  %v2186 = vpack.c.b16 %v2066, %v2058
  %v2187 = vpack.c.b16 %v2067, %v2059
  %v2188 = vpack.c.b16 %v2068, %v2060
  %v2189 = vpack.c.b16 %v2077, %v2069
  %v2190 = vpack.c.b16 %v2078, %v2070
  %v2191 = vpack.c.b16 %v2079, %v2071
  %v2192 = vpack.c.b16 %v2080, %v2072
  %v2193 = vpack.c.b16 %v2081, %v2073
  %v2194 = vpack.c.b16 %v2082, %v2074
  %v2195 = vpack.c.b16 %v2083, %v2075
  %v2196 = vpack.c.b16 %v2084, %v2076
  %v2197 = vpack.c.b16 %v2093, %v2085
  %v2198 = vpack.c.b16 %v2094, %v2086
  %v2199 = vpack.c.b16 %v2095, %v2087
  %v2200 = vpack.c.b16 %v2096, %v2088
  %v2201 = vpack.c.b16 %v2097, %v2089
  %v2202 = vpack.c.b16 %v2098, %v2090
  %v2203 = vpack.c.b16 %v2099, %v2091
  %v2204 = vpack.c.b16 %v2100, %v2092
  %v2205 = vpack.c.b16 %v2109, %v2101
  %v2206 = vpack.c.b16 %v2110, %v2102
  %v2207 = vpack.c.b16 %v2111, %v2103
  %v2208 = vpack.c.b16 %v2112, %v2104
  %v2209 = vpack.c.b16 %v2113, %v2105
  %v2210 = vpack.c.b16 %v2114, %v2106
  %v2211 = vpack.c.b16 %v2115, %v2107
  %v2212 = vpack.c.b16 %v2116, %v2108
  %v2213 = vpack.c.b16 %v2125, %v2117
  %v2214 = vpack.c.b16 %v2126, %v2118
  %v2215 = vpack.c.b16 %v2127, %v2119
  %v2216 = vpack.c.b16 %v2128, %v2120
  %v2217 = vpack.c.b16 %v2129, %v2121
  %v2218 = vpack.c.b16 %v2130, %v2122
  %v2219 = vpack.c.b16 %v2131, %v2123
  %v2220 = vpack.c.b16 %v2132, %v2124
  %v2221 = vpack.c.b16 %v2141, %v2133
  %v2222 = vpack.c.b16 %v2142, %v2134
  %v2223 = vpack.c.b16 %v2143, %v2135
  %v2224 = vpack.c.b16 %v2144, %v2136
  %v2225 = vpack.c.b16 %v2145, %v2137
  %v2226 = vpack.c.b16 %v2146, %v2138
  %v2227 = vpack.c.b16 %v2147, %v2139
  %v2228 = vpack.c.b16 %v2148, %v2140
  %v2229 = vpack.c.b16 %v2157, %v2149
  %v2230 = vpack.c.b16 %v2158, %v2150
  %v2231 = vpack.c.b16 %v2159, %v2151
  %v2232 = vpack.c.b16 %v2160, %v2152
  %v2233 = vpack.c.b16 %v2161, %v2153
  %v2234 = vpack.c.b16 %v2162, %v2154
  %v2235 = vpack.c.b16 %v2163, %v2155
  %v2236 = vpack.c.b16 %v2164, %v2156
  %2309 = vmatprep.subr.bf16.mxu0 %v2222
  %2310 = vmatpush1.bf16.msra.mxu0 %v2221
  %2311 = vmatprep.subr.bf16.mxu0 %v2214
  %2312 = vmatpush1.bf16.msra.mxu0 %v2213
  %2313 = vmatprep.subr.bf16.mxu0 %v2206
  %2314 = vmatpush1.bf16.msra.mxu0 %v2205
  %2315 = vmatprep.subr.bf16.mxu0 %v2198
  %2316 = vmatpush1.bf16.msra.mxu0 %v2197
  %2317 = vmatprep.subr.bf16.mxu0 %v2190
  %2318 = vmatpush1.bf16.msra.mxu0 %v2189
  %2319 = vmatprep.subr.bf16.mxu0 %v2182
  %2320 = vmatpush1.bf16.msra.mxu0 %v2181
  %2321 = vmatprep.subr.bf16.mxu0 %v2174
  %2322 = vmatpush1.bf16.msra.mxu0 %v2173
  %2323 = vmatprep.subr.bf16.mxu0 %v2166
  %2324 = vmatpush1.bf16.msra.mxu0 %v2165
  %2325 = vmatprep.subr.bf16.mxu0 0
  %2326 = vmatpush2.bf16.msra.mxu0 0
  %2327 = vmatprep.subr.bf16.mxu0 0
  %2328 = vmatpush2.bf16.msra.mxu0 0
  %2329 = vmatprep.subr.bf16.mxu0 0
  %2330 = vmatpush2.bf16.msra.mxu0 0
  %2331 = vmatprep.subr.bf16.mxu0 0
  %2332 = vmatpush2.bf16.msra.mxu0 0
  %2333 = vmatprep.subr.bf16.mxu0 0
  %2334 = vmatpush2.bf16.msra.mxu0 0
  %2335 = vmatprep.subr.bf16.mxu0 0
  %2336 = vmatpush2.bf16.msra.mxu0 0
  %2337 = vmatprep.subr.bf16.mxu0 0
  %2338 = vmatpush2.bf16.msra.mxu0 0
  %2339 = vmatprep.subr.bf16.mxu0 %v2230
  %2340 = vmatpush2.bf16.msra.mxu0 %v2229
  %2341 = vmatprep.mubr.bf16.mxu0 %v460
  %2342 = vmatmul.mubr.bf16.gmra.mxu0 %v95
  %v2343 = vpop.f32.mrf.mxu0
  %v2344 = vadd.f32 0.0, %v2343
  %v2345 = vpop.f32.mrf.mxu0
  %v2346 = vadd.f32 0.0, %v2345
  %v2347 = vpop.f32.mrf.mxu0
  %v2348 = vadd.f32 0.0, %v2347
  %v2349 = vpop.f32.mrf.mxu0
  %v2350 = vadd.f32 0.0, %v2349
  %2351 = vdwg.mxu0
  %2352 = vmatprep.subr.bf16.mxu0 %v2224
  %2353 = vmatpush1.bf16.msra.mxu0 %v2223
  %2354 = vmatprep.subr.bf16.mxu0 %v2216
  %2355 = vmatpush1.bf16.msra.mxu0 %v2215
  %2356 = vmatprep.subr.bf16.mxu0 %v2208
  %2357 = vmatpush1.bf16.msra.mxu0 %v2207
  %2358 = vmatprep.subr.bf16.mxu0 %v2200
  %2359 = vmatpush1.bf16.msra.mxu0 %v2199
  %2360 = vmatprep.subr.bf16.mxu0 %v2192
  %2361 = vmatpush1.bf16.msra.mxu0 %v2191
  %2362 = vmatprep.subr.bf16.mxu0 %v2184
  %2363 = vmatpush1.bf16.msra.mxu0 %v2183
  %2364 = vmatprep.subr.bf16.mxu0 %v2176
  %2365 = vmatpush1.bf16.msra.mxu0 %v2175
  %2366 = vmatprep.subr.bf16.mxu0 %v2168
  %2367 = vmatpush1.bf16.msra.mxu0 %v2167
  %2368 = vmatprep.subr.bf16.mxu0 0
  %2369 = vmatpush2.bf16.msra.mxu0 0
  %2370 = vmatprep.subr.bf16.mxu0 0
  %2371 = vmatpush2.bf16.msra.mxu0 0
  %2372 = vmatprep.subr.bf16.mxu0 0
  %2373 = vmatpush2.bf16.msra.mxu0 0
  %2374 = vmatprep.subr.bf16.mxu0 0
  %2375 = vmatpush2.bf16.msra.mxu0 0
  %2376 = vmatprep.subr.bf16.mxu0 0
  %2377 = vmatpush2.bf16.msra.mxu0 0
  %2378 = vmatprep.subr.bf16.mxu0 0
  %2379 = vmatpush2.bf16.msra.mxu0 0
  %2380 = vmatprep.subr.bf16.mxu0 0
  %2381 = vmatpush2.bf16.msra.mxu0 0
  %2382 = vmatprep.subr.bf16.mxu0 %v2232
  %2383 = vmatpush2.bf16.msra.mxu0 %v2231
  %2384 = vmatprep.mubr.bf16.mxu0 %v460
  %2385 = vmatmul.mubr.bf16.gmra.mxu0 %v95
  %v2386 = vpop.f32.mrf.mxu0
  %v2387 = vadd.f32 0.0, %v2386
  %v2388 = vpop.f32.mrf.mxu0
  %v2389 = vadd.f32 0.0, %v2388
  %v2390 = vpop.f32.mrf.mxu0
  %v2391 = vadd.f32 0.0, %v2390
  %v2392 = vpop.f32.mrf.mxu0
  %v2393 = vadd.f32 0.0, %v2392
  %2394 = vdwg.mxu0
  %2395 = vmatprep.subr.bf16.mxu0 %v2226
  %2396 = vmatpush1.bf16.msra.mxu0 %v2225
  %2397 = vmatprep.subr.bf16.mxu0 %v2218
  %2398 = vmatpush1.bf16.msra.mxu0 %v2217
  %2399 = vmatprep.subr.bf16.mxu0 %v2210
  %2400 = vmatpush1.bf16.msra.mxu0 %v2209
  %2401 = vmatprep.subr.bf16.mxu0 %v2202
  %2402 = vmatpush1.bf16.msra.mxu0 %v2201
  %2403 = vmatprep.subr.bf16.mxu0 %v2194
  %2404 = vmatpush1.bf16.msra.mxu0 %v2193
  %2405 = vmatprep.subr.bf16.mxu0 %v2186
  %2406 = vmatpush1.bf16.msra.mxu0 %v2185
  %2407 = vmatprep.subr.bf16.mxu0 %v2178
  %2408 = vmatpush1.bf16.msra.mxu0 %v2177
  %2409 = vmatprep.subr.bf16.mxu0 %v2170
  %2410 = vmatpush1.bf16.msra.mxu0 %v2169
  %2411 = vmatprep.subr.bf16.mxu0 0
  %2412 = vmatpush2.bf16.msra.mxu0 0
  %2413 = vmatprep.subr.bf16.mxu0 0
  %2414 = vmatpush2.bf16.msra.mxu0 0
  %2415 = vmatprep.subr.bf16.mxu0 0
  %2416 = vmatpush2.bf16.msra.mxu0 0
  %2417 = vmatprep.subr.bf16.mxu0 0
  %2418 = vmatpush2.bf16.msra.mxu0 0
  %2419 = vmatprep.subr.bf16.mxu0 0
  %2420 = vmatpush2.bf16.msra.mxu0 0
  %2421 = vmatprep.subr.bf16.mxu0 0
  %2422 = vmatpush2.bf16.msra.mxu0 0
  %2423 = vmatprep.subr.bf16.mxu0 0
  %2424 = vmatpush2.bf16.msra.mxu0 0
  %2425 = vmatprep.subr.bf16.mxu0 %v2234
  %2426 = vmatpush2.bf16.msra.mxu0 %v2233
  %2427 = vmatprep.mubr.bf16.mxu0 %v460
  %2428 = vmatmul.mubr.bf16.gmra.mxu0 %v95
  %v2429 = vpop.f32.mrf.mxu0
  %v2430 = vadd.f32 0.0, %v2429
  %v2431 = vpop.f32.mrf.mxu0
  %v2432 = vadd.f32 0.0, %v2431
  %v2433 = vpop.f32.mrf.mxu0
  %v2434 = vadd.f32 0.0, %v2433
  %v2435 = vpop.f32.mrf.mxu0
  %v2436 = vadd.f32 0.0, %v2435
  %2437 = vdwg.mxu0
  %2438 = vmatprep.subr.bf16.mxu0 %v2228
  %2439 = vmatpush1.bf16.msra.mxu0 %v2227
  %2440 = vmatprep.subr.bf16.mxu0 %v2220
  %2441 = vmatpush1.bf16.msra.mxu0 %v2219
  %2442 = vmatprep.subr.bf16.mxu0 %v2212
  %2443 = vmatpush1.bf16.msra.mxu0 %v2211
  %2444 = vmatprep.subr.bf16.mxu0 %v2204
  %2445 = vmatpush1.bf16.msra.mxu0 %v2203
  %2446 = vmatprep.subr.bf16.mxu0 %v2196
  %2447 = vmatpush1.bf16.msra.mxu0 %v2195
  %2448 = vmatprep.subr.bf16.mxu0 %v2188
  %2449 = vmatpush1.bf16.msra.mxu0 %v2187
  %2450 = vmatprep.subr.bf16.mxu0 %v2180
  %2451 = vmatpush1.bf16.msra.mxu0 %v2179
  %2452 = vmatprep.subr.bf16.mxu0 %v2172
  %2453 = vmatpush1.bf16.msra.mxu0 %v2171
  %2454 = vmatprep.subr.bf16.mxu0 0
  %2455 = vmatpush2.bf16.msra.mxu0 0
  %2456 = vmatprep.subr.bf16.mxu0 0
  %2457 = vmatpush2.bf16.msra.mxu0 0
  %2458 = vmatprep.subr.bf16.mxu0 0
  %2459 = vmatpush2.bf16.msra.mxu0 0
  %2460 = vmatprep.subr.bf16.mxu0 0
  %2461 = vmatpush2.bf16.msra.mxu0 0
  %2462 = vmatprep.subr.bf16.mxu0 0
  %2463 = vmatpush2.bf16.msra.mxu0 0
  %2464 = vmatprep.subr.bf16.mxu0 0
  %2465 = vmatpush2.bf16.msra.mxu0 0
  %2466 = vmatprep.subr.bf16.mxu0 0
  %2467 = vmatpush2.bf16.msra.mxu0 0
  %2468 = vmatprep.subr.bf16.mxu0 %v2236
  %2469 = vmatpush2.bf16.msra.mxu0 %v2235
  %2470 = vmatprep.mubr.bf16.mxu0 %v460
  %2471 = vmatmul.mubr.bf16.gmra.mxu0 %v95
  %v2472 = vpop.f32.mrf.mxu0
  %v2473 = vadd.f32 0.0, %v2472
  %v2474 = vpop.f32.mrf.mxu0
  %v2475 = vadd.f32 0.0, %v2474
  %v2476 = vpop.f32.mrf.mxu0
  %v2477 = vadd.f32 0.0, %v2476
  %v2478 = vpop.f32.mrf.mxu0
  %v2479 = vadd.f32 0.0, %v2478
  %2480 = vdwg.mxu0
  %v2481 = vmax.f32 %v1860, %v2344
  %v2482 = vmax.f32 %v1861, %v2346
  %v2483 = vmax.f32 %v1862, %v2387
  %v2484 = vmax.f32 %v1863, %v2389
  %v2485 = vmax.f32 %v1864, %v2430
  %v2486 = vmax.f32 %v1865, %v2432
  %v2487 = vmax.f32 %v1866, %v2473
  %v2488 = vmax.f32 %v1867, %v2475
  %v2489 = vmax.f32 %v1868, %v2348
  %v2490 = vmax.f32 %v1869, %v2350
  %v2491 = vmax.f32 %v1870, %v2391
  %v2492 = vmax.f32 %v1871, %v2393
  %v2493 = vmax.f32 %v1872, %v2434
  %v2494 = vmax.f32 %v1873, %v2436
  %v2495 = vmax.f32 %v1874, %v2477
  %v2496 = vmax.f32 %v1875, %v2479
  %v2497 = vld [vmem:[%s1] sm:$0xff]
  %v2498 = vld [vmem:[%s1 + $0x8] sm:$0xff]
  %2500 = vset.pattern.permute.xlu0 0
  %2501 = vperm.xlu0 %2500, %v2497
  %v2502 = vpop.permute.xlu0 %2501
  %2505 = vset.pattern.permute.xlu0 0
  %2506 = vperm.xlu0 %2505, %v2498
  %v2507 = vpop.permute.xlu0 %2506
  %v2509 = vadd.f32 %v2481, %v2502
  %v2510 = vadd.f32 %v2482, %v2502
  %v2511 = vadd.f32 %v2483, %v2502
  %v2512 = vadd.f32 %v2484, %v2502
  %v2513 = vadd.f32 %v2485, %v2502
  %v2514 = vadd.f32 %v2486, %v2502
  %v2515 = vadd.f32 %v2487, %v2502
  %v2516 = vadd.f32 %v2488, %v2502
  %v2517 = vadd.f32 %v2489, %v2507
  %v2518 = vadd.f32 %v2490, %v2507
  %v2519 = vadd.f32 %v2491, %v2507
  %v2520 = vadd.f32 %v2492, %v2507
  %v2521 = vadd.f32 %v2493, %v2507
  %v2522 = vadd.f32 %v2494, %v2507
  %v2523 = vadd.f32 %v2495, %v2507
  %v2524 = vadd.f32 %v2496, %v2507
  %v2525 = vmax.f32 %v2509, 0.0
  %v2526 = vmax.f32 %v2510, 0.0
  %v2527 = vmax.f32 %v2511, 0.0
  %v2528 = vmax.f32 %v2512, 0.0
  %v2529 = vmax.f32 %v2513, 0.0
  %v2530 = vmax.f32 %v2514, 0.0
  %v2531 = vmax.f32 %v2515, 0.0
  %v2532 = vmax.f32 %v2516, 0.0
  %v2533 = vmax.f32 %v2517, 0.0
  %v2534 = vmax.f32 %v2518, 0.0
  %v2535 = vmax.f32 %v2519, 0.0
  %v2536 = vmax.f32 %v2520, 0.0
  %v2537 = vmax.f32 %v2521, 0.0
  %v2538 = vmax.f32 %v2522, 0.0
  %v2539 = vmax.f32 %v2523, 0.0
  %v2540 = vmax.f32 %v2524, 0.0
  %v2541 = vpack.c.bf16 %v2533, %v2525
  %v2542 = vpack.c.bf16 %v2534, %v2526
  %v2543 = vpack.c.bf16 %v2535, %v2527
  %v2544 = vpack.c.bf16 %v2536, %v2528
  %v2545 = vpack.c.bf16 %v2537, %v2529
  %v2546 = vpack.c.bf16 %v2538, %v2530
  %v2547 = vpack.c.bf16 %v2539, %v2531
  %v2548 = vpack.c.bf16 %v2540, %v2532
  %v2557 = vunpack.c.l.b16 %v2541
  %v2558 = vunpack.c.l.b16 %v2542
  %v2559 = vunpack.c.l.b16 %v2543
  %v2560 = vunpack.c.l.b16 %v2544
  %v2561 = vunpack.c.l.b16 %v2545
  %v2562 = vunpack.c.l.b16 %v2546
  %v2563 = vunpack.c.l.b16 %v2547
  %v2564 = vunpack.c.l.b16 %v2548
  %v2565 = vunpack.c.h.b16 %v2541
  %v2566 = vunpack.c.h.b16 %v2542
  %v2567 = vunpack.c.h.b16 %v2543
  %v2568 = vunpack.c.h.b16 %v2544
  %v2569 = vunpack.c.h.b16 %v2545
  %v2570 = vunpack.c.h.b16 %v2546
  %v2571 = vunpack.c.h.b16 %v2547
  %v2572 = vunpack.c.h.b16 %v2548
  %v2573 = vpack.c.b16 %v2558, %v2557
  %v2574 = vpack.c.b16 %v2560, %v2559
  %v2575 = vpack.c.b16 %v2562, %v2561
  %v2576 = vpack.c.b16 %v2564, %v2563
  %v2577 = vpack.c.b16 %v2566, %v2565
  %v2578 = vpack.c.b16 %v2568, %v2567
  %v2579 = vpack.c.b16 %v2570, %v2569
  %v2580 = vpack.c.b16 %v2572, %v2571
  %2589 = vst [vmem:[%s3] sm:$0xff] %v2573
  %2590 = vst [vmem:[%s3 + $0x8] sm:$0xff] %v2574
  %2591 = vst [vmem:[%s3 + $0x10] sm:$0xff] %v2575
  %2592 = vst [vmem:[%s3 + $0x18] sm:$0xff] %v2576
  %2593 = vst [vmem:[%s3 + $0x20] sm:$0xff] %v2577
  %2594 = vst [vmem:[%s3 + $0x28] sm:$0xff] %v2578
  %2595 = vst [vmem:[%s3 + $0x30] sm:$0xff] %v2579
  %2596 = vst [vmem:[%s3 + $0x38] sm:$0xff] %v2580
  // Predicated region
  $region14: #{forward.4} parent=0 // pred_check
    _
  $region15: #{forward.4} parent=0 // pred_check_branch
    %2598 = sbr.rel (0) target = $region17
  $region16: #{forward.4} parent=0 // pred_region
    _
  $region17: #{forward.4} parent=0 // pred_fallthru
    _
  // Predicated region
  $region18: #{forward.4} parent=0 // pred_check
    _
  $region19: #{forward.4} parent=0 // pred_check_branch
    %2600 = sbr.rel (0) target = $region21
  $region20: #{forward.4} parent=0 // pred_region
    _
  $region21: #{forward.4} parent=0 // pred_fallthru
    _

// kernel: forward.5
$region0: #{forward.5}
  #allocation0 [shape = 'u32[]', space=smem, size = 0x4, offset = 0x4, fixed_abs, tag = 'smem constant byte address 0x4 - core index']
  #allocation1 [shape = 'u32[144,128]{1,0:T(1,128)}', space=vmem, size = 0x12000, scoped, tag = 'internal scratch']
  #allocation2 [shape = 'f32[2,256]{1,0:T(2,128)}', space=vmem, size = 0x800, scoped, tag = 'scratch operand']
  %s0 = inlined_call_operand.vmem [shape: bf16[2,8192], index: 0, kind: input, shape index: {}]
  %s1 = inlined_call_operand.vmem [shape: bf16[8192,256], index: 1, kind: input, shape index: {}]
  %s2 = inlined_call_operand.vmem [shape: f32[1,256], index: 2, kind: input, shape index: {}]
  %s3 = inlined_call_operand.vmem [shape: f32[256,10], index: 3, kind: input, shape index: {}]
  %s4 = inlined_call_operand.vmem [shape: f32[1,10], index: 4, kind: input, shape index: {}]
  %s5 = inlined_call_operand.hbm [shape: f32[2,10], index: 5, kind: output, shape index: {}]
  %s6 = sld [smem:[#allocation0]]
  $region61: #{forward.5} parent=0
    _
  %s8 = ssub.s32 1, %s6
  %s9 = scalar_select 0, %s8, %s6
  $region1: #{forward.5} parent=0
    #allocation3 [shape = 'u8[1024]{0}', space=vmem, size = 0x400, scoped, tag = 'output window, operand 0, single buffered']
    #allocation4 [shape = 's32[2]{0}', space=sflag, size = 0x8, scoped, tag = 'scoped memory for forward.5']
    %10 = vsyncpa [#allocation4], 0
    loop: start=0, step=1, limit=4
    $region2: #{forward.5} parent=1 // loop_pre_header
      _
    $region3: #{forward.5} parent=1 // loop_header
      %s12 = sphi 0, %s16
      %p13 = scmp.ge.s32.totalorder %s12, 4
      %s22 = sphi 0, %s24
      %s25 = sphi 0, %s22
      %s26 = sphi 0, %s25
      %s42 = sphi 0, %s26
      %s48 = sphi 0, %s50
      %s51 = sphi 0, %s48
      %s52 = sphi 0, %s51
      %s68 = sphi 0, %s52
      %s72 = sphi 0, %s72
      %s74 = sphi 0, %s72
      %s75 = sphi 0, %s74
      %s89 = sphi 0, %s75
      %s93 = sphi 0, %s93
      %s95 = sphi 0, %s93
      %s96 = sphi 0, %s95
      %s110 = sphi 0, %s96
      %s114 = sphi 0, %s114
      %s116 = sphi 0, %s114
      %s117 = sphi 0, %s116
      %s131 = sphi 0, %s117
      %s135 = sphi 0, %s135
      %s137 = sphi 0, %s135
      %s138 = sphi 0, %s137
      %s152 = sphi 0, %s138
    $region4: #{forward.5} parent=1 // loop_header_branch
      %15 = sbr.rel (%p13) target = $region8
    $region5: #{forward.5} parent=1 // loop_body
      %s17 = ssub.s32 %s12, 1
      %s18 = ssub.s32 %s12, 2
      %s19 = sadd.s32 %s12, 1
      %s20 = ssub.s32 %s12, %s19
      %p21 = scmp.eq.s32.totalorder %s20, 0
      %s23 = sadd.s32 %s22, 1
      %s24 = scalar_select %p21, %s22, %s23
      %p27 = pneg %p21
      %p28 = scmp.eq.s32.totalorder %s12, 1
      %p29 = por %p27, %p28
      %p30 = scmp.ne.s32.totalorder %s22, %s25
      %p31 = scmp.eq.s32.totalorder %s12, 0
      %p32 = por %p30, %p31
      %p33 = scmp.ne.s32.totalorder %s22, %s25
      %p34 = scmp.eq.s32.totalorder %s17, 1
      %p35 = por %p33, %p34
      %p36 = scmp.ne.s32.totalorder %s25, %s26
      %p37 = scmp.eq.s32.totalorder %s17, 0
      %p38 = por %p36, %p37
      %p39 = scmp.ne.s32.totalorder %s25, %s26
      %p40 = scmp.eq.s32.totalorder %s18, 1
      %p41 = por %p39, %p40
      %p43 = scmp.ne.s32.totalorder %s26, %s42
      %p44 = scmp.eq.s32.totalorder %s18, 0
      %p45 = por %p43, %p44
      %s46 = ssub.s32 %s12, %s19
      %p47 = scmp.eq.s32.totalorder %s46, 0
      %s49 = sadd.s32 %s48, 1
      %s50 = scalar_select %p47, %s48, %s49
      %p53 = pneg %p47
      %p54 = scmp.eq.s32.totalorder %s12, 1
      %p55 = por %p53, %p54
      %p56 = scmp.ne.s32.totalorder %s48, %s51
      %p57 = scmp.eq.s32.totalorder %s12, 0
      %p58 = por %p56, %p57
      %p59 = scmp.ne.s32.totalorder %s48, %s51
      %p60 = scmp.eq.s32.totalorder %s17, 1
      %p61 = por %p59, %p60
      %p62 = scmp.ne.s32.totalorder %s51, %s52
      %p63 = scmp.eq.s32.totalorder %s17, 0
      %p64 = por %p62, %p63
      %p65 = scmp.ne.s32.totalorder %s51, %s52
      %p66 = scmp.eq.s32.totalorder %s18, 1
      %p67 = por %p65, %p66
      %p69 = scmp.ne.s32.totalorder %s52, %s68
      %p70 = scmp.eq.s32.totalorder %s18, 0
      %p71 = por %p69, %p70
      %s73 = sadd.s32 %s72, 1
      %p76 = scmp.eq.s32.totalorder %s12, 1
      %p77 = scmp.ne.s32.totalorder %s72, %s74
      %p78 = scmp.eq.s32.totalorder %s12, 0
      %p79 = por %p77, %p78
      %p80 = scmp.ne.s32.totalorder %s72, %s74
      %p81 = scmp.eq.s32.totalorder %s17, 1
      %p82 = por %p80, %p81
      %p83 = scmp.ne.s32.totalorder %s74, %s75
      %p84 = scmp.eq.s32.totalorder %s17, 0
      %p85 = por %p83, %p84
      %p86 = scmp.ne.s32.totalorder %s74, %s75
      %p87 = scmp.eq.s32.totalorder %s18, 1
      %p88 = por %p86, %p87
      %p90 = scmp.ne.s32.totalorder %s75, %s89
      %p91 = scmp.eq.s32.totalorder %s18, 0
      %p92 = por %p90, %p91
      %s94 = sadd.s32 %s93, 1
      %p97 = scmp.eq.s32.totalorder %s12, 1
      %p98 = scmp.ne.s32.totalorder %s93, %s95
      %p99 = scmp.eq.s32.totalorder %s12, 0
      %p100 = por %p98, %p99
      %p101 = scmp.ne.s32.totalorder %s93, %s95
      %p102 = scmp.eq.s32.totalorder %s17, 1
      %p103 = por %p101, %p102
      %p104 = scmp.ne.s32.totalorder %s95, %s96
      %p105 = scmp.eq.s32.totalorder %s17, 0
      %p106 = por %p104, %p105
      %p107 = scmp.ne.s32.totalorder %s95, %s96
      %p108 = scmp.eq.s32.totalorder %s18, 1
      %p109 = por %p107, %p108
      %p111 = scmp.ne.s32.totalorder %s96, %s110
      %p112 = scmp.eq.s32.totalorder %s18, 0
      %p113 = por %p111, %p112
      %s115 = sadd.s32 %s114, 1
      %p118 = scmp.eq.s32.totalorder %s12, 1
      %p119 = scmp.ne.s32.totalorder %s114, %s116
      %p120 = scmp.eq.s32.totalorder %s12, 0
      %p121 = por %p119, %p120
      %p122 = scmp.ne.s32.totalorder %s114, %s116
      %p123 = scmp.eq.s32.totalorder %s17, 1
      %p124 = por %p122, %p123
      %p125 = scmp.ne.s32.totalorder %s116, %s117
      %p126 = scmp.eq.s32.totalorder %s17, 0
      %p127 = por %p125, %p126
      %p128 = scmp.ne.s32.totalorder %s116, %s117
      %p129 = scmp.eq.s32.totalorder %s18, 1
      %p130 = por %p128, %p129
      %p132 = scmp.ne.s32.totalorder %s117, %s131
      %p133 = scmp.eq.s32.totalorder %s18, 0
      %p134 = por %p132, %p133
      %s136 = sadd.s32 %s135, 1
      %p139 = scmp.eq.s32.totalorder %s12, 1
      %p140 = scmp.ne.s32.totalorder %s135, %s137
      %p141 = scmp.eq.s32.totalorder %s12, 0
      %p142 = por %p140, %p141
      %p143 = scmp.ne.s32.totalorder %s135, %s137
      %p144 = scmp.eq.s32.totalorder %s17, 1
      %p145 = por %p143, %p144
      %p146 = scmp.ne.s32.totalorder %s137, %s138
      %p147 = scmp.eq.s32.totalorder %s17, 0
      %p148 = por %p146, %p147
      %p149 = scmp.ne.s32.totalorder %s137, %s138
      %p150 = scmp.eq.s32.totalorder %s18, 1
      %p151 = por %p149, %p150
      %p153 = scmp.ne.s32.totalorder %s138, %s152
      %p154 = scmp.eq.s32.totalorder %s18, 0
      %p155 = por %p153, %p154
      %p156 = scmp.le.s32.totalorder 1, %s12
      %p157 = scmp.lt.s32.totalorder %s12, 3
      %p158 = pnand %p156, %p157
      %p159 = pneg %p158
      // Predicated region
      $region9: #{forward.5} parent=5 // pred_check
        _
      $region10: #{forward.5} parent=5 // pred_check_branch
        %161 = sbr.rel (%p158) target = $region12
      $region11: #{forward.5} parent=5 // pred_region
        %s162 = ssub.s32 %s12, 1
        // Predicated region
        $region13: #{forward.5} parent=11 // pred_check
          %p163 = pneg %p85
        $region14: #{forward.5} parent=11 // pred_check_branch
          %165 = sbr.rel (%p163) target = $region16
        $region15: #{forward.5} parent=11 // pred_region
          _
        $region16: #{forward.5} parent=11 // pred_fallthru
          _
        // Predicated region
        $region17: #{forward.5} parent=11 // pred_check
          %p166 = pneg %p106
        $region18: #{forward.5} parent=11 // pred_check_branch
          %168 = sbr.rel (%p166) target = $region20
        $region19: #{forward.5} parent=11 // pred_region
          _
        $region20: #{forward.5} parent=11 // pred_fallthru
          _
        // Predicated region
        $region21: #{forward.5} parent=11 // pred_check
          %p169 = pneg %p127
        $region22: #{forward.5} parent=11 // pred_check_branch
          %171 = sbr.rel (%p169) target = $region24
        $region23: #{forward.5} parent=11 // pred_region
          _
        $region24: #{forward.5} parent=11 // pred_fallthru
          _
      $region12: #{forward.5} parent=5 // pred_fallthru
        _
      %p172 = scmp.lt.s32.totalorder %s12, 2
      // Predicated region
      $region25: #{forward.5} parent=5 // pred_check
        %p173 = pneg %p172
      $region26: #{forward.5} parent=5 // pred_check_branch
        %175 = sbr.rel (%p173) target = $region28
      $region27: #{forward.5} parent=5 // pred_region
        // Predicated region
        $region29: #{forward.5} parent=27 // pred_check
          %p176 = pneg %p32
        $region30: #{forward.5} parent=27 // pred_check_branch
          %178 = sbr.rel (%p176) target = $region32
        $region31: #{forward.5} parent=27 // pred_region
          %s179 = smul.u32 32, %s12
          %p180 = scmp.lt.s32.totalorder %s179, 63
          %s181 = scalar_select %p180, %s179, 63
          %s182 = scalar_lea.vmem %s0, %s181
          %s183 = smul.u32 32, %s12
        $region32: #{forward.5} parent=27 // pred_fallthru
          _
        // Predicated region
        $region33: #{forward.5} parent=27 // pred_check
          %p184 = pneg %p58
        $region34: #{forward.5} parent=27 // pred_check_branch
          %186 = sbr.rel (%p184) target = $region36
        $region35: #{forward.5} parent=27 // pred_region
          %s187 = smul.u32 512, %s12
          %p188 = scmp.lt.s32.totalorder %s187, 1023
          %s189 = scalar_select %p188, %s187, 1023
          %s190 = smul.addr %s189, 2
          %s191 = smul.addr %s190, 4
          %s192 = scalar_lea.vmem %s1, %s191
          %s193 = smul.u32 512, %s12
        $region36: #{forward.5} parent=27 // pred_fallthru
          _
      $region28: #{forward.5} parent=5 // pred_fallthru
        _
      %p194 = scmp.le.s32.totalorder 1, %s12
      %p195 = scmp.lt.s32.totalorder %s12, 3
      %p196 = pnand %p194, %p195
      %p197 = pneg %p196
      // Predicated region
      $region37: #{forward.5} parent=5 // pred_check
        _
      $region38: #{forward.5} parent=5 // pred_check_branch
        %199 = sbr.rel (%p196) target = $region40
      $region39: #{forward.5} parent=5 // pred_region
        %s200 = ssub.s32 %s12, 1
        %s201 = smul.u32 32, %s17
        %p202 = scmp.lt.s32.totalorder %s201, 63
        %s203 = scalar_select %p202, %s201, 63
        %s204 = scalar_lea.vmem %s0, %s203
        %p205 = pneg %p38
        %p206 = pneg %p35
        %s207 = smul.u32 512, %s17
        %p208 = scmp.lt.s32.totalorder %s207, 1023
        %s209 = scalar_select %p208, %s207, 1023
        %s210 = smul.addr %s209, 2
        %s211 = smul.addr %s210, 4
        %s212 = scalar_lea.vmem %s1, %s211
        %p213 = pneg %p64
        %p214 = pneg %p61
        %p215 = pneg %p85
        %p216 = pneg %p82
        %p217 = pneg %p106
        %p218 = pneg %p103
        %p219 = pneg %p127
        %p220 = pneg %p124
        %p221 = pneg %p148
        %p222 = pneg %p145
        %s223 = smul.u32 32, %s17
        %p224 = scmp.lt.s32.totalorder %s223, 63
        %s225 = scalar_select %p224, %s223, 63
        %s226 = scalar_lea.vmem %s0, %s225
        %s227 = smul.u32 32, %s17
        %s228 = smul.u32 512, %s17
        %p229 = scmp.lt.s32.totalorder %s228, 1023
        %s230 = scalar_select %p229, %s228, 1023
        %s231 = smul.addr %s230, 2
        %s232 = smul.addr %s231, 4
        %s233 = scalar_lea.vmem %s1, %s232
        %s234 = smul.u32 512, %s17
        %p235 = scmp.eq.s32.totalorder %s17, 0
        // Predicated region
        $region41: #{forward.5} parent=39 // pred_check
          %p236 = pneg %p235
        $region42: #{forward.5} parent=39 // pred_check_branch
          %238 = sbr.rel (%p236) target = $region44
        $region43: #{forward.5} parent=39 // pred_region
          %239 = vst [vmem:[#allocation2] sm:$0xf] 0.0
        $region44: #{forward.5} parent=39 // pred_fallthru
          _
        %v240 = vld [vmem:[#allocation2] sm:$0xf]
        %v241 = vld [vmem:[%s226] sm:$0xff]
        %v242 = vld [vmem:[%s226 + $0x8] sm:$0xff]
        %v243 = vld [vmem:[%s226 + $0x10] sm:$0xff]
        %v244 = vld [vmem:[%s226 + $0x18] sm:$0xff]
        %v245 = vld [vmem:[%s233] sm:$0xff]
        %v246 = vld [vmem:[%s233 + $0x8] sm:$0xff]
        %v247 = vld [vmem:[%s233 + $0x10] sm:$0xff]
        %v248 = vld [vmem:[%s233 + $0x18] sm:$0xff]
        %v249 = vld [vmem:[%s233 + $0x20] sm:$0xff]
        %v250 = vld [vmem:[%s233 + $0x28] sm:$0xff]
        %v251 = vld [vmem:[%s233 + $0x30] sm:$0xff]
        %v252 = vld [vmem:[%s233 + $0x38] sm:$0xff]
        %v253 = vld [vmem:[%s233 + $0x40] sm:$0xff]
        %v254 = vld [vmem:[%s233 + $0x48] sm:$0xff]
        %v255 = vld [vmem:[%s233 + $0x50] sm:$0xff]
        %v256 = vld [vmem:[%s233 + $0x58] sm:$0xff]
        %v257 = vld [vmem:[%s233 + $0x60] sm:$0xff]
        %v258 = vld [vmem:[%s233 + $0x68] sm:$0xff]
        %v259 = vld [vmem:[%s233 + $0x70] sm:$0xff]
        %v260 = vld [vmem:[%s233 + $0x78] sm:$0xff]
        %v261 = vld [vmem:[%s233 + $0x80] sm:$0xff]
        %v262 = vld [vmem:[%s233 + $0x88] sm:$0xff]
        %v263 = vld [vmem:[%s233 + $0x90] sm:$0xff]
        %v264 = vld [vmem:[%s233 + $0x98] sm:$0xff]
        %v265 = vld [vmem:[%s233 + $0xa0] sm:$0xff]
        %v266 = vld [vmem:[%s233 + $0xa8] sm:$0xff]
        %v267 = vld [vmem:[%s233 + $0xb0] sm:$0xff]
        %v268 = vld [vmem:[%s233 + $0xb8] sm:$0xff]
        %v269 = vld [vmem:[%s233 + $0xc0] sm:$0xff]
        %v270 = vld [vmem:[%s233 + $0xc8] sm:$0xff]
        %v271 = vld [vmem:[%s233 + $0xd0] sm:$0xff]
        %v272 = vld [vmem:[%s233 + $0xd8] sm:$0xff]
        %v273 = vld [vmem:[%s233 + $0xe0] sm:$0xff]
        %v274 = vld [vmem:[%s233 + $0xe8] sm:$0xff]
        %v275 = vld [vmem:[%s233 + $0xf0] sm:$0xff]
        %v276 = vld [vmem:[%s233 + $0xf8] sm:$0xff]
        %v277 = vld [vmem:[%s233 + $0x100] sm:$0xff]
        %v278 = vld [vmem:[%s233 + $0x108] sm:$0xff]
        %v279 = vld [vmem:[%s233 + $0x110] sm:$0xff]
        %v280 = vld [vmem:[%s233 + $0x118] sm:$0xff]
        %v281 = vld [vmem:[%s233 + $0x120] sm:$0xff]
        %v282 = vld [vmem:[%s233 + $0x128] sm:$0xff]
        %v283 = vld [vmem:[%s233 + $0x130] sm:$0xff]
        %v284 = vld [vmem:[%s233 + $0x138] sm:$0xff]
        %v285 = vld [vmem:[%s233 + $0x140] sm:$0xff]
        %v286 = vld [vmem:[%s233 + $0x148] sm:$0xff]
        %v287 = vld [vmem:[%s233 + $0x150] sm:$0xff]
        %v288 = vld [vmem:[%s233 + $0x158] sm:$0xff]
        %v289 = vld [vmem:[%s233 + $0x160] sm:$0xff]
        %v290 = vld [vmem:[%s233 + $0x168] sm:$0xff]
        %v291 = vld [vmem:[%s233 + $0x170] sm:$0xff]
        %v292 = vld [vmem:[%s233 + $0x178] sm:$0xff]
        %v293 = vld [vmem:[%s233 + $0x180] sm:$0xff]
        %v294 = vld [vmem:[%s233 + $0x188] sm:$0xff]
        %v295 = vld [vmem:[%s233 + $0x190] sm:$0xff]
        %v296 = vld [vmem:[%s233 + $0x198] sm:$0xff]
        %v297 = vld [vmem:[%s233 + $0x1a0] sm:$0xff]
        %v298 = vld [vmem:[%s233 + $0x1a8] sm:$0xff]
        %v299 = vld [vmem:[%s233 + $0x1b0] sm:$0xff]
        %v300 = vld [vmem:[%s233 + $0x1b8] sm:$0xff]
        %v301 = vld [vmem:[%s233 + $0x1c0] sm:$0xff]
        %v302 = vld [vmem:[%s233 + $0x1c8] sm:$0xff]
        %v303 = vld [vmem:[%s233 + $0x1d0] sm:$0xff]
        %v304 = vld [vmem:[%s233 + $0x1d8] sm:$0xff]
        %v305 = vld [vmem:[%s233 + $0x1e0] sm:$0xff]
        %v306 = vld [vmem:[%s233 + $0x1e8] sm:$0xff]
        %v307 = vld [vmem:[%s233 + $0x1f0] sm:$0xff]
        %v308 = vld [vmem:[%s233 + $0x1f8] sm:$0xff]
        %v309 = vld [vmem:[%s233 + $0x200] sm:$0xff]
        %v310 = vld [vmem:[%s233 + $0x208] sm:$0xff]
        %v311 = vld [vmem:[%s233 + $0x210] sm:$0xff]
        %v312 = vld [vmem:[%s233 + $0x218] sm:$0xff]
        %v313 = vld [vmem:[%s233 + $0x220] sm:$0xff]
        %v314 = vld [vmem:[%s233 + $0x228] sm:$0xff]
        %v315 = vld [vmem:[%s233 + $0x230] sm:$0xff]
        %v316 = vld [vmem:[%s233 + $0x238] sm:$0xff]
        %v317 = vld [vmem:[%s233 + $0x240] sm:$0xff]
        %v318 = vld [vmem:[%s233 + $0x248] sm:$0xff]
        %v319 = vld [vmem:[%s233 + $0x250] sm:$0xff]
        %v320 = vld [vmem:[%s233 + $0x258] sm:$0xff]
        %v321 = vld [vmem:[%s233 + $0x260] sm:$0xff]
        %v322 = vld [vmem:[%s233 + $0x268] sm:$0xff]
        %v323 = vld [vmem:[%s233 + $0x270] sm:$0xff]
        %v324 = vld [vmem:[%s233 + $0x278] sm:$0xff]
        %v325 = vld [vmem:[%s233 + $0x280] sm:$0xff]
        %v326 = vld [vmem:[%s233 + $0x288] sm:$0xff]
        %v327 = vld [vmem:[%s233 + $0x290] sm:$0xff]
        %v328 = vld [vmem:[%s233 + $0x298] sm:$0xff]
        %v329 = vld [vmem:[%s233 + $0x2a0] sm:$0xff]
        %v330 = vld [vmem:[%s233 + $0x2a8] sm:$0xff]
        %v331 = vld [vmem:[%s233 + $0x2b0] sm:$0xff]
        %v332 = vld [vmem:[%s233 + $0x2b8] sm:$0xff]
        %v333 = vld [vmem:[%s233 + $0x2c0] sm:$0xff]
        %v334 = vld [vmem:[%s233 + $0x2c8] sm:$0xff]
        %v335 = vld [vmem:[%s233 + $0x2d0] sm:$0xff]
        %v336 = vld [vmem:[%s233 + $0x2d8] sm:$0xff]
        %v337 = vld [vmem:[%s233 + $0x2e0] sm:$0xff]
        %v338 = vld [vmem:[%s233 + $0x2e8] sm:$0xff]
        %v339 = vld [vmem:[%s233 + $0x2f0] sm:$0xff]
        %v340 = vld [vmem:[%s233 + $0x2f8] sm:$0xff]
        %v341 = vld [vmem:[%s233 + $0x300] sm:$0xff]
        %v342 = vld [vmem:[%s233 + $0x308] sm:$0xff]
        %v343 = vld [vmem:[%s233 + $0x310] sm:$0xff]
        %v344 = vld [vmem:[%s233 + $0x318] sm:$0xff]
        %v345 = vld [vmem:[%s233 + $0x320] sm:$0xff]
        %v346 = vld [vmem:[%s233 + $0x328] sm:$0xff]
        %v347 = vld [vmem:[%s233 + $0x330] sm:$0xff]
        %v348 = vld [vmem:[%s233 + $0x338] sm:$0xff]
        %v349 = vld [vmem:[%s233 + $0x340] sm:$0xff]
        %v350 = vld [vmem:[%s233 + $0x348] sm:$0xff]
        %v351 = vld [vmem:[%s233 + $0x350] sm:$0xff]
        %v352 = vld [vmem:[%s233 + $0x358] sm:$0xff]
        %v353 = vld [vmem:[%s233 + $0x360] sm:$0xff]
        %v354 = vld [vmem:[%s233 + $0x368] sm:$0xff]
        %v355 = vld [vmem:[%s233 + $0x370] sm:$0xff]
        %v356 = vld [vmem:[%s233 + $0x378] sm:$0xff]
        %v357 = vld [vmem:[%s233 + $0x380] sm:$0xff]
        %v358 = vld [vmem:[%s233 + $0x388] sm:$0xff]
        %v359 = vld [vmem:[%s233 + $0x390] sm:$0xff]
        %v360 = vld [vmem:[%s233 + $0x398] sm:$0xff]
        %v361 = vld [vmem:[%s233 + $0x3a0] sm:$0xff]
        %v362 = vld [vmem:[%s233 + $0x3a8] sm:$0xff]
        %v363 = vld [vmem:[%s233 + $0x3b0] sm:$0xff]
        %v364 = vld [vmem:[%s233 + $0x3b8] sm:$0xff]
        %v365 = vld [vmem:[%s233 + $0x3c0] sm:$0xff]
        %v366 = vld [vmem:[%s233 + $0x3c8] sm:$0xff]
        %v367 = vld [vmem:[%s233 + $0x3d0] sm:$0xff]
        %v368 = vld [vmem:[%s233 + $0x3d8] sm:$0xff]
        %v369 = vld [vmem:[%s233 + $0x3e0] sm:$0xff]
        %v370 = vld [vmem:[%s233 + $0x3e8] sm:$0xff]
        %v371 = vld [vmem:[%s233 + $0x3f0] sm:$0xff]
        %v372 = vld [vmem:[%s233 + $0x3f8] sm:$0xff]
        %v373 = vld [vmem:[%s233 + $0x400] sm:$0xff]
        %v374 = vld [vmem:[%s233 + $0x408] sm:$0xff]
        %v375 = vld [vmem:[%s233 + $0x410] sm:$0xff]
        %v376 = vld [vmem:[%s233 + $0x418] sm:$0xff]
        %v377 = vld [vmem:[%s233 + $0x420] sm:$0xff]
        %v378 = vld [vmem:[%s233 + $0x428] sm:$0xff]
        %v379 = vld [vmem:[%s233 + $0x430] sm:$0xff]
        %v380 = vld [vmem:[%s233 + $0x438] sm:$0xff]
        %v381 = vld [vmem:[%s233 + $0x440] sm:$0xff]
        %v382 = vld [vmem:[%s233 + $0x448] sm:$0xff]
        %v383 = vld [vmem:[%s233 + $0x450] sm:$0xff]
        %v384 = vld [vmem:[%s233 + $0x458] sm:$0xff]
        %v385 = vld [vmem:[%s233 + $0x460] sm:$0xff]
        %v386 = vld [vmem:[%s233 + $0x468] sm:$0xff]
        %v387 = vld [vmem:[%s233 + $0x470] sm:$0xff]
        %v388 = vld [vmem:[%s233 + $0x478] sm:$0xff]
        %v389 = vld [vmem:[%s233 + $0x480] sm:$0xff]
        %v390 = vld [vmem:[%s233 + $0x488] sm:$0xff]
        %v391 = vld [vmem:[%s233 + $0x490] sm:$0xff]
        %v392 = vld [vmem:[%s233 + $0x498] sm:$0xff]
        %v393 = vld [vmem:[%s233 + $0x4a0] sm:$0xff]
        %v394 = vld [vmem:[%s233 + $0x4a8] sm:$0xff]
        %v395 = vld [vmem:[%s233 + $0x4b0] sm:$0xff]
        %v396 = vld [vmem:[%s233 + $0x4b8] sm:$0xff]
        %v397 = vld [vmem:[%s233 + $0x4c0] sm:$0xff]
        %v398 = vld [vmem:[%s233 + $0x4c8] sm:$0xff]
        %v399 = vld [vmem:[%s233 + $0x4d0] sm:$0xff]
        %v400 = vld [vmem:[%s233 + $0x4d8] sm:$0xff]
        %v401 = vld [vmem:[%s233 + $0x4e0] sm:$0xff]
        %v402 = vld [vmem:[%s233 + $0x4e8] sm:$0xff]
        %v403 = vld [vmem:[%s233 + $0x4f0] sm:$0xff]
        %v404 = vld [vmem:[%s233 + $0x4f8] sm:$0xff]
        %v405 = vld [vmem:[%s233 + $0x500] sm:$0xff]
        %v406 = vld [vmem:[%s233 + $0x508] sm:$0xff]
        %v407 = vld [vmem:[%s233 + $0x510] sm:$0xff]
        %v408 = vld [vmem:[%s233 + $0x518] sm:$0xff]
        %v409 = vld [vmem:[%s233 + $0x520] sm:$0xff]
        %v410 = vld [vmem:[%s233 + $0x528] sm:$0xff]
        %v411 = vld [vmem:[%s233 + $0x530] sm:$0xff]
        %v412 = vld [vmem:[%s233 + $0x538] sm:$0xff]
        %v413 = vld [vmem:[%s233 + $0x540] sm:$0xff]
        %v414 = vld [vmem:[%s233 + $0x548] sm:$0xff]
        %v415 = vld [vmem:[%s233 + $0x550] sm:$0xff]
        %v416 = vld [vmem:[%s233 + $0x558] sm:$0xff]
        %v417 = vld [vmem:[%s233 + $0x560] sm:$0xff]
        %v418 = vld [vmem:[%s233 + $0x568] sm:$0xff]
        %v419 = vld [vmem:[%s233 + $0x570] sm:$0xff]
        %v420 = vld [vmem:[%s233 + $0x578] sm:$0xff]
        %v421 = vld [vmem:[%s233 + $0x580] sm:$0xff]
        %v422 = vld [vmem:[%s233 + $0x588] sm:$0xff]
        %v423 = vld [vmem:[%s233 + $0x590] sm:$0xff]
        %v424 = vld [vmem:[%s233 + $0x598] sm:$0xff]
        %v425 = vld [vmem:[%s233 + $0x5a0] sm:$0xff]
        %v426 = vld [vmem:[%s233 + $0x5a8] sm:$0xff]
        %v427 = vld [vmem:[%s233 + $0x5b0] sm:$0xff]
        %v428 = vld [vmem:[%s233 + $0x5b8] sm:$0xff]
        %v429 = vld [vmem:[%s233 + $0x5c0] sm:$0xff]
        %v430 = vld [vmem:[%s233 + $0x5c8] sm:$0xff]
        %v431 = vld [vmem:[%s233 + $0x5d0] sm:$0xff]
        %v432 = vld [vmem:[%s233 + $0x5d8] sm:$0xff]
        %v433 = vld [vmem:[%s233 + $0x5e0] sm:$0xff]
        %v434 = vld [vmem:[%s233 + $0x5e8] sm:$0xff]
        %v435 = vld [vmem:[%s233 + $0x5f0] sm:$0xff]
        %v436 = vld [vmem:[%s233 + $0x5f8] sm:$0xff]
        %v437 = vld [vmem:[%s233 + $0x600] sm:$0xff]
        %v438 = vld [vmem:[%s233 + $0x608] sm:$0xff]
        %v439 = vld [vmem:[%s233 + $0x610] sm:$0xff]
        %v440 = vld [vmem:[%s233 + $0x618] sm:$0xff]
        %v441 = vld [vmem:[%s233 + $0x620] sm:$0xff]
        %v442 = vld [vmem:[%s233 + $0x628] sm:$0xff]
        %v443 = vld [vmem:[%s233 + $0x630] sm:$0xff]
        %v444 = vld [vmem:[%s233 + $0x638] sm:$0xff]
        %v445 = vld [vmem:[%s233 + $0x640] sm:$0xff]
        %v446 = vld [vmem:[%s233 + $0x648] sm:$0xff]
        %v447 = vld [vmem:[%s233 + $0x650] sm:$0xff]
        %v448 = vld [vmem:[%s233 + $0x658] sm:$0xff]
        %v449 = vld [vmem:[%s233 + $0x660] sm:$0xff]
        %v450 = vld [vmem:[%s233 + $0x668] sm:$0xff]
        %v451 = vld [vmem:[%s233 + $0x670] sm:$0xff]
        %v452 = vld [vmem:[%s233 + $0x678] sm:$0xff]
        %v453 = vld [vmem:[%s233 + $0x680] sm:$0xff]
        %v454 = vld [vmem:[%s233 + $0x688] sm:$0xff]
        %v455 = vld [vmem:[%s233 + $0x690] sm:$0xff]
        %v456 = vld [vmem:[%s233 + $0x698] sm:$0xff]
        %v457 = vld [vmem:[%s233 + $0x6a0] sm:$0xff]
        %v458 = vld [vmem:[%s233 + $0x6a8] sm:$0xff]
        %v459 = vld [vmem:[%s233 + $0x6b0] sm:$0xff]
        %v460 = vld [vmem:[%s233 + $0x6b8] sm:$0xff]
        %v461 = vld [vmem:[%s233 + $0x6c0] sm:$0xff]
        %v462 = vld [vmem:[%s233 + $0x6c8] sm:$0xff]
        %v463 = vld [vmem:[%s233 + $0x6d0] sm:$0xff]
        %v464 = vld [vmem:[%s233 + $0x6d8] sm:$0xff]
        %v465 = vld [vmem:[%s233 + $0x6e0] sm:$0xff]
        %v466 = vld [vmem:[%s233 + $0x6e8] sm:$0xff]
        %v467 = vld [vmem:[%s233 + $0x6f0] sm:$0xff]
        %v468 = vld [vmem:[%s233 + $0x6f8] sm:$0xff]
        %v469 = vld [vmem:[%s233 + $0x700] sm:$0xff]
        %v470 = vld [vmem:[%s233 + $0x708] sm:$0xff]
        %v471 = vld [vmem:[%s233 + $0x710] sm:$0xff]
        %v472 = vld [vmem:[%s233 + $0x718] sm:$0xff]
        %v473 = vld [vmem:[%s233 + $0x720] sm:$0xff]
        %v474 = vld [vmem:[%s233 + $0x728] sm:$0xff]
        %v475 = vld [vmem:[%s233 + $0x730] sm:$0xff]
        %v476 = vld [vmem:[%s233 + $0x738] sm:$0xff]
        %v477 = vld [vmem:[%s233 + $0x740] sm:$0xff]
        %v478 = vld [vmem:[%s233 + $0x748] sm:$0xff]
        %v479 = vld [vmem:[%s233 + $0x750] sm:$0xff]
        %v480 = vld [vmem:[%s233 + $0x758] sm:$0xff]
        %v481 = vld [vmem:[%s233 + $0x760] sm:$0xff]
        %v482 = vld [vmem:[%s233 + $0x768] sm:$0xff]
        %v483 = vld [vmem:[%s233 + $0x770] sm:$0xff]
        %v484 = vld [vmem:[%s233 + $0x778] sm:$0xff]
        %v485 = vld [vmem:[%s233 + $0x780] sm:$0xff]
        %v486 = vld [vmem:[%s233 + $0x788] sm:$0xff]
        %v487 = vld [vmem:[%s233 + $0x790] sm:$0xff]
        %v488 = vld [vmem:[%s233 + $0x798] sm:$0xff]
        %v489 = vld [vmem:[%s233 + $0x7a0] sm:$0xff]
        %v490 = vld [vmem:[%s233 + $0x7a8] sm:$0xff]
        %v491 = vld [vmem:[%s233 + $0x7b0] sm:$0xff]
        %v492 = vld [vmem:[%s233 + $0x7b8] sm:$0xff]
        %v493 = vld [vmem:[%s233 + $0x7c0] sm:$0xff]
        %v494 = vld [vmem:[%s233 + $0x7c8] sm:$0xff]
        %v495 = vld [vmem:[%s233 + $0x7d0] sm:$0xff]
        %v496 = vld [vmem:[%s233 + $0x7d8] sm:$0xff]
        %v497 = vld [vmem:[%s233 + $0x7e0] sm:$0xff]
        %v498 = vld [vmem:[%s233 + $0x7e8] sm:$0xff]
        %v499 = vld [vmem:[%s233 + $0x7f0] sm:$0xff]
        %v500 = vld [vmem:[%s233 + $0x7f8] sm:$0xff]
        %v501 = vld [vmem:[%s233 + $0x800] sm:$0xff]
        %v502 = vld [vmem:[%s233 + $0x808] sm:$0xff]
        %v503 = vld [vmem:[%s233 + $0x810] sm:$0xff]
        %v504 = vld [vmem:[%s233 + $0x818] sm:$0xff]
        %v505 = vld [vmem:[%s233 + $0x820] sm:$0xff]
        %v506 = vld [vmem:[%s233 + $0x828] sm:$0xff]
        %v507 = vld [vmem:[%s233 + $0x830] sm:$0xff]
        %v508 = vld [vmem:[%s233 + $0x838] sm:$0xff]
        %v509 = vld [vmem:[%s233 + $0x840] sm:$0xff]
        %v510 = vld [vmem:[%s233 + $0x848] sm:$0xff]
        %v511 = vld [vmem:[%s233 + $0x850] sm:$0xff]
        %v512 = vld [vmem:[%s233 + $0x858] sm:$0xff]
        %v513 = vld [vmem:[%s233 + $0x860] sm:$0xff]
        %v514 = vld [vmem:[%s233 + $0x868] sm:$0xff]
        %v515 = vld [vmem:[%s233 + $0x870] sm:$0xff]
        %v516 = vld [vmem:[%s233 + $0x878] sm:$0xff]
        %v517 = vld [vmem:[%s233 + $0x880] sm:$0xff]
        %v518 = vld [vmem:[%s233 + $0x888] sm:$0xff]
        %v519 = vld [vmem:[%s233 + $0x890] sm:$0xff]
        %v520 = vld [vmem:[%s233 + $0x898] sm:$0xff]
        %v521 = vld [vmem:[%s233 + $0x8a0] sm:$0xff]
        %v522 = vld [vmem:[%s233 + $0x8a8] sm:$0xff]
        %v523 = vld [vmem:[%s233 + $0x8b0] sm:$0xff]
        %v524 = vld [vmem:[%s233 + $0x8b8] sm:$0xff]
        %v525 = vld [vmem:[%s233 + $0x8c0] sm:$0xff]
        %v526 = vld [vmem:[%s233 + $0x8c8] sm:$0xff]
        %v527 = vld [vmem:[%s233 + $0x8d0] sm:$0xff]
        %v528 = vld [vmem:[%s233 + $0x8d8] sm:$0xff]
        %v529 = vld [vmem:[%s233 + $0x8e0] sm:$0xff]
        %v530 = vld [vmem:[%s233 + $0x8e8] sm:$0xff]
        %v531 = vld [vmem:[%s233 + $0x8f0] sm:$0xff]
        %v532 = vld [vmem:[%s233 + $0x8f8] sm:$0xff]
        %v533 = vld [vmem:[%s233 + $0x900] sm:$0xff]
        %v534 = vld [vmem:[%s233 + $0x908] sm:$0xff]
        %v535 = vld [vmem:[%s233 + $0x910] sm:$0xff]
        %v536 = vld [vmem:[%s233 + $0x918] sm:$0xff]
        %v537 = vld [vmem:[%s233 + $0x920] sm:$0xff]
        %v538 = vld [vmem:[%s233 + $0x928] sm:$0xff]
        %v539 = vld [vmem:[%s233 + $0x930] sm:$0xff]
        %v540 = vld [vmem:[%s233 + $0x938] sm:$0xff]
        %v541 = vld [vmem:[%s233 + $0x940] sm:$0xff]
        %v542 = vld [vmem:[%s233 + $0x948] sm:$0xff]
        %v543 = vld [vmem:[%s233 + $0x950] sm:$0xff]
        %v544 = vld [vmem:[%s233 + $0x958] sm:$0xff]
        %v545 = vld [vmem:[%s233 + $0x960] sm:$0xff]
        %v546 = vld [vmem:[%s233 + $0x968] sm:$0xff]
        %v547 = vld [vmem:[%s233 + $0x970] sm:$0xff]
        %v548 = vld [vmem:[%s233 + $0x978] sm:$0xff]
        %v549 = vld [vmem:[%s233 + $0x980] sm:$0xff]
        %v550 = vld [vmem:[%s233 + $0x988] sm:$0xff]
        %v551 = vld [vmem:[%s233 + $0x990] sm:$0xff]
        %v552 = vld [vmem:[%s233 + $0x998] sm:$0xff]
        %v553 = vld [vmem:[%s233 + $0x9a0] sm:$0xff]
        %v554 = vld [vmem:[%s233 + $0x9a8] sm:$0xff]
        %v555 = vld [vmem:[%s233 + $0x9b0] sm:$0xff]
        %v556 = vld [vmem:[%s233 + $0x9b8] sm:$0xff]
        %v557 = vld [vmem:[%s233 + $0x9c0] sm:$0xff]
        %v558 = vld [vmem:[%s233 + $0x9c8] sm:$0xff]
        %v559 = vld [vmem:[%s233 + $0x9d0] sm:$0xff]
        %v560 = vld [vmem:[%s233 + $0x9d8] sm:$0xff]
        %v561 = vld [vmem:[%s233 + $0x9e0] sm:$0xff]
        %v562 = vld [vmem:[%s233 + $0x9e8] sm:$0xff]
        %v563 = vld [vmem:[%s233 + $0x9f0] sm:$0xff]
        %v564 = vld [vmem:[%s233 + $0x9f8] sm:$0xff]
        %v565 = vld [vmem:[%s233 + $0xa00] sm:$0xff]
        %v566 = vld [vmem:[%s233 + $0xa08] sm:$0xff]
        %v567 = vld [vmem:[%s233 + $0xa10] sm:$0xff]
        %v568 = vld [vmem:[%s233 + $0xa18] sm:$0xff]
        %v569 = vld [vmem:[%s233 + $0xa20] sm:$0xff]
        %v570 = vld [vmem:[%s233 + $0xa28] sm:$0xff]
        %v571 = vld [vmem:[%s233 + $0xa30] sm:$0xff]
        %v572 = vld [vmem:[%s233 + $0xa38] sm:$0xff]
        %v573 = vld [vmem:[%s233 + $0xa40] sm:$0xff]
        %v574 = vld [vmem:[%s233 + $0xa48] sm:$0xff]
        %v575 = vld [vmem:[%s233 + $0xa50] sm:$0xff]
        %v576 = vld [vmem:[%s233 + $0xa58] sm:$0xff]
        %v577 = vld [vmem:[%s233 + $0xa60] sm:$0xff]
        %v578 = vld [vmem:[%s233 + $0xa68] sm:$0xff]
        %v579 = vld [vmem:[%s233 + $0xa70] sm:$0xff]
        %v580 = vld [vmem:[%s233 + $0xa78] sm:$0xff]
        %v581 = vld [vmem:[%s233 + $0xa80] sm:$0xff]
        %v582 = vld [vmem:[%s233 + $0xa88] sm:$0xff]
        %v583 = vld [vmem:[%s233 + $0xa90] sm:$0xff]
        %v584 = vld [vmem:[%s233 + $0xa98] sm:$0xff]
        %v585 = vld [vmem:[%s233 + $0xaa0] sm:$0xff]
        %v586 = vld [vmem:[%s233 + $0xaa8] sm:$0xff]
        %v587 = vld [vmem:[%s233 + $0xab0] sm:$0xff]
        %v588 = vld [vmem:[%s233 + $0xab8] sm:$0xff]
        %v589 = vld [vmem:[%s233 + $0xac0] sm:$0xff]
        %v590 = vld [vmem:[%s233 + $0xac8] sm:$0xff]
        %v591 = vld [vmem:[%s233 + $0xad0] sm:$0xff]
        %v592 = vld [vmem:[%s233 + $0xad8] sm:$0xff]
        %v593 = vld [vmem:[%s233 + $0xae0] sm:$0xff]
        %v594 = vld [vmem:[%s233 + $0xae8] sm:$0xff]
        %v595 = vld [vmem:[%s233 + $0xaf0] sm:$0xff]
        %v596 = vld [vmem:[%s233 + $0xaf8] sm:$0xff]
        %v597 = vld [vmem:[%s233 + $0xb00] sm:$0xff]
        %v598 = vld [vmem:[%s233 + $0xb08] sm:$0xff]
        %v599 = vld [vmem:[%s233 + $0xb10] sm:$0xff]
        %v600 = vld [vmem:[%s233 + $0xb18] sm:$0xff]
        %v601 = vld [vmem:[%s233 + $0xb20] sm:$0xff]
        %v602 = vld [vmem:[%s233 + $0xb28] sm:$0xff]
        %v603 = vld [vmem:[%s233 + $0xb30] sm:$0xff]
        %v604 = vld [vmem:[%s233 + $0xb38] sm:$0xff]
        %v605 = vld [vmem:[%s233 + $0xb40] sm:$0xff]
        %v606 = vld [vmem:[%s233 + $0xb48] sm:$0xff]
        %v607 = vld [vmem:[%s233 + $0xb50] sm:$0xff]
        %v608 = vld [vmem:[%s233 + $0xb58] sm:$0xff]
        %v609 = vld [vmem:[%s233 + $0xb60] sm:$0xff]
        %v610 = vld [vmem:[%s233 + $0xb68] sm:$0xff]
        %v611 = vld [vmem:[%s233 + $0xb70] sm:$0xff]
        %v612 = vld [vmem:[%s233 + $0xb78] sm:$0xff]
        %v613 = vld [vmem:[%s233 + $0xb80] sm:$0xff]
        %v614 = vld [vmem:[%s233 + $0xb88] sm:$0xff]
        %v615 = vld [vmem:[%s233 + $0xb90] sm:$0xff]
        %v616 = vld [vmem:[%s233 + $0xb98] sm:$0xff]
        %v617 = vld [vmem:[%s233 + $0xba0] sm:$0xff]
        %v618 = vld [vmem:[%s233 + $0xba8] sm:$0xff]
        %v619 = vld [vmem:[%s233 + $0xbb0] sm:$0xff]
        %v620 = vld [vmem:[%s233 + $0xbb8] sm:$0xff]
        %v621 = vld [vmem:[%s233 + $0xbc0] sm:$0xff]
        %v622 = vld [vmem:[%s233 + $0xbc8] sm:$0xff]
        %v623 = vld [vmem:[%s233 + $0xbd0] sm:$0xff]
        %v624 = vld [vmem:[%s233 + $0xbd8] sm:$0xff]
        %v625 = vld [vmem:[%s233 + $0xbe0] sm:$0xff]
        %v626 = vld [vmem:[%s233 + $0xbe8] sm:$0xff]
        %v627 = vld [vmem:[%s233 + $0xbf0] sm:$0xff]
        %v628 = vld [vmem:[%s233 + $0xbf8] sm:$0xff]
        %v629 = vld [vmem:[%s233 + $0xc00] sm:$0xff]
        %v630 = vld [vmem:[%s233 + $0xc08] sm:$0xff]
        %v631 = vld [vmem:[%s233 + $0xc10] sm:$0xff]
        %v632 = vld [vmem:[%s233 + $0xc18] sm:$0xff]
        %v633 = vld [vmem:[%s233 + $0xc20] sm:$0xff]
        %v634 = vld [vmem:[%s233 + $0xc28] sm:$0xff]
        %v635 = vld [vmem:[%s233 + $0xc30] sm:$0xff]
        %v636 = vld [vmem:[%s233 + $0xc38] sm:$0xff]
        %v637 = vld [vmem:[%s233 + $0xc40] sm:$0xff]
        %v638 = vld [vmem:[%s233 + $0xc48] sm:$0xff]
        %v639 = vld [vmem:[%s233 + $0xc50] sm:$0xff]
        %v640 = vld [vmem:[%s233 + $0xc58] sm:$0xff]
        %v641 = vld [vmem:[%s233 + $0xc60] sm:$0xff]
        %v642 = vld [vmem:[%s233 + $0xc68] sm:$0xff]
        %v643 = vld [vmem:[%s233 + $0xc70] sm:$0xff]
        %v644 = vld [vmem:[%s233 + $0xc78] sm:$0xff]
        %v645 = vld [vmem:[%s233 + $0xc80] sm:$0xff]
        %v646 = vld [vmem:[%s233 + $0xc88] sm:$0xff]
        %v647 = vld [vmem:[%s233 + $0xc90] sm:$0xff]
        %v648 = vld [vmem:[%s233 + $0xc98] sm:$0xff]
        %v649 = vld [vmem:[%s233 + $0xca0] sm:$0xff]
        %v650 = vld [vmem:[%s233 + $0xca8] sm:$0xff]
        %v651 = vld [vmem:[%s233 + $0xcb0] sm:$0xff]
        %v652 = vld [vmem:[%s233 + $0xcb8] sm:$0xff]
        %v653 = vld [vmem:[%s233 + $0xcc0] sm:$0xff]
        %v654 = vld [vmem:[%s233 + $0xcc8] sm:$0xff]
        %v655 = vld [vmem:[%s233 + $0xcd0] sm:$0xff]
        %v656 = vld [vmem:[%s233 + $0xcd8] sm:$0xff]
        %v657 = vld [vmem:[%s233 + $0xce0] sm:$0xff]
        %v658 = vld [vmem:[%s233 + $0xce8] sm:$0xff]
        %v659 = vld [vmem:[%s233 + $0xcf0] sm:$0xff]
        %v660 = vld [vmem:[%s233 + $0xcf8] sm:$0xff]
        %v661 = vld [vmem:[%s233 + $0xd00] sm:$0xff]
        %v662 = vld [vmem:[%s233 + $0xd08] sm:$0xff]
        %v663 = vld [vmem:[%s233 + $0xd10] sm:$0xff]
        %v664 = vld [vmem:[%s233 + $0xd18] sm:$0xff]
        %v665 = vld [vmem:[%s233 + $0xd20] sm:$0xff]
        %v666 = vld [vmem:[%s233 + $0xd28] sm:$0xff]
        %v667 = vld [vmem:[%s233 + $0xd30] sm:$0xff]
        %v668 = vld [vmem:[%s233 + $0xd38] sm:$0xff]
        %v669 = vld [vmem:[%s233 + $0xd40] sm:$0xff]
        %v670 = vld [vmem:[%s233 + $0xd48] sm:$0xff]
        %v671 = vld [vmem:[%s233 + $0xd50] sm:$0xff]
        %v672 = vld [vmem:[%s233 + $0xd58] sm:$0xff]
        %v673 = vld [vmem:[%s233 + $0xd60] sm:$0xff]
        %v674 = vld [vmem:[%s233 + $0xd68] sm:$0xff]
        %v675 = vld [vmem:[%s233 + $0xd70] sm:$0xff]
        %v676 = vld [vmem:[%s233 + $0xd78] sm:$0xff]
        %v677 = vld [vmem:[%s233 + $0xd80] sm:$0xff]
        %v678 = vld [vmem:[%s233 + $0xd88] sm:$0xff]
        %v679 = vld [vmem:[%s233 + $0xd90] sm:$0xff]
        %v680 = vld [vmem:[%s233 + $0xd98] sm:$0xff]
        %v681 = vld [vmem:[%s233 + $0xda0] sm:$0xff]
        %v682 = vld [vmem:[%s233 + $0xda8] sm:$0xff]
        %v683 = vld [vmem:[%s233 + $0xdb0] sm:$0xff]
        %v684 = vld [vmem:[%s233 + $0xdb8] sm:$0xff]
        %v685 = vld [vmem:[%s233 + $0xdc0] sm:$0xff]
        %v686 = vld [vmem:[%s233 + $0xdc8] sm:$0xff]
        %v687 = vld [vmem:[%s233 + $0xdd0] sm:$0xff]
        %v688 = vld [vmem:[%s233 + $0xdd8] sm:$0xff]
        %v689 = vld [vmem:[%s233 + $0xde0] sm:$0xff]
        %v690 = vld [vmem:[%s233 + $0xde8] sm:$0xff]
        %v691 = vld [vmem:[%s233 + $0xdf0] sm:$0xff]
        %v692 = vld [vmem:[%s233 + $0xdf8] sm:$0xff]
        %v693 = vld [vmem:[%s233 + $0xe00] sm:$0xff]
        %v694 = vld [vmem:[%s233 + $0xe08] sm:$0xff]
        %v695 = vld [vmem:[%s233 + $0xe10] sm:$0xff]
        %v696 = vld [vmem:[%s233 + $0xe18] sm:$0xff]
        %v697 = vld [vmem:[%s233 + $0xe20] sm:$0xff]
        %v698 = vld [vmem:[%s233 + $0xe28] sm:$0xff]
        %v699 = vld [vmem:[%s233 + $0xe30] sm:$0xff]
        %v700 = vld [vmem:[%s233 + $0xe38] sm:$0xff]
        %v701 = vld [vmem:[%s233 + $0xe40] sm:$0xff]
        %v702 = vld [vmem:[%s233 + $0xe48] sm:$0xff]
        %v703 = vld [vmem:[%s233 + $0xe50] sm:$0xff]
        %v704 = vld [vmem:[%s233 + $0xe58] sm:$0xff]
        %v705 = vld [vmem:[%s233 + $0xe60] sm:$0xff]
        %v706 = vld [vmem:[%s233 + $0xe68] sm:$0xff]
        %v707 = vld [vmem:[%s233 + $0xe70] sm:$0xff]
        %v708 = vld [vmem:[%s233 + $0xe78] sm:$0xff]
        %v709 = vld [vmem:[%s233 + $0xe80] sm:$0xff]
        %v710 = vld [vmem:[%s233 + $0xe88] sm:$0xff]
        %v711 = vld [vmem:[%s233 + $0xe90] sm:$0xff]
        %v712 = vld [vmem:[%s233 + $0xe98] sm:$0xff]
        %v713 = vld [vmem:[%s233 + $0xea0] sm:$0xff]
        %v714 = vld [vmem:[%s233 + $0xea8] sm:$0xff]
        %v715 = vld [vmem:[%s233 + $0xeb0] sm:$0xff]
        %v716 = vld [vmem:[%s233 + $0xeb8] sm:$0xff]
        %v717 = vld [vmem:[%s233 + $0xec0] sm:$0xff]
        %v718 = vld [vmem:[%s233 + $0xec8] sm:$0xff]
        %v719 = vld [vmem:[%s233 + $0xed0] sm:$0xff]
        %v720 = vld [vmem:[%s233 + $0xed8] sm:$0xff]
        %v721 = vld [vmem:[%s233 + $0xee0] sm:$0xff]
        %v722 = vld [vmem:[%s233 + $0xee8] sm:$0xff]
        %v723 = vld [vmem:[%s233 + $0xef0] sm:$0xff]
        %v724 = vld [vmem:[%s233 + $0xef8] sm:$0xff]
        %v725 = vld [vmem:[%s233 + $0xf00] sm:$0xff]
        %v726 = vld [vmem:[%s233 + $0xf08] sm:$0xff]
        %v727 = vld [vmem:[%s233 + $0xf10] sm:$0xff]
        %v728 = vld [vmem:[%s233 + $0xf18] sm:$0xff]
        %v729 = vld [vmem:[%s233 + $0xf20] sm:$0xff]
        %v730 = vld [vmem:[%s233 + $0xf28] sm:$0xff]
        %v731 = vld [vmem:[%s233 + $0xf30] sm:$0xff]
        %v732 = vld [vmem:[%s233 + $0xf38] sm:$0xff]
        %v733 = vld [vmem:[%s233 + $0xf40] sm:$0xff]
        %v734 = vld [vmem:[%s233 + $0xf48] sm:$0xff]
        %v735 = vld [vmem:[%s233 + $0xf50] sm:$0xff]
        %v736 = vld [vmem:[%s233 + $0xf58] sm:$0xff]
        %v737 = vld [vmem:[%s233 + $0xf60] sm:$0xff]
        %v738 = vld [vmem:[%s233 + $0xf68] sm:$0xff]
        %v739 = vld [vmem:[%s233 + $0xf70] sm:$0xff]
        %v740 = vld [vmem:[%s233 + $0xf78] sm:$0xff]
        %v741 = vld [vmem:[%s233 + $0xf80] sm:$0xff]
        %v742 = vld [vmem:[%s233 + $0xf88] sm:$0xff]
        %v743 = vld [vmem:[%s233 + $0xf90] sm:$0xff]
        %v744 = vld [vmem:[%s233 + $0xf98] sm:$0xff]
        %v745 = vld [vmem:[%s233 + $0xfa0] sm:$0xff]
        %v746 = vld [vmem:[%s233 + $0xfa8] sm:$0xff]
        %v747 = vld [vmem:[%s233 + $0xfb0] sm:$0xff]
        %v748 = vld [vmem:[%s233 + $0xfb8] sm:$0xff]
        %v749 = vld [vmem:[%s233 + $0xfc0] sm:$0xff]
        %v750 = vld [vmem:[%s233 + $0xfc8] sm:$0xff]
        %v751 = vld [vmem:[%s233 + $0xfd0] sm:$0xff]
        %v752 = vld [vmem:[%s233 + $0xfd8] sm:$0xff]
        %v753 = vld [vmem:[%s233 + $0xfe0] sm:$0xff]
        %v754 = vld [vmem:[%s233 + $0xfe8] sm:$0xff]
        %v755 = vld [vmem:[%s233 + $0xff0] sm:$0xff]
        %v756 = vld [vmem:[%s233 + $0xff8] sm:$0xff]
        %v761 = vcombine.high %v241, %v241
        %v763 = vunpack.c.l.s4 1966171168
        %v764 = vunpack.c.0.s8 %v763
        %v765 = vlaneseq
        %v766 = vshrl.u32 %v765, 7
        %v767 = vsub.s32 %v764, %v766
        %v768 = vrot.slane %v241, %v767
        %v770 = vunpack.c.l.s4 1966171168
        %v771 = vunpack.c.0.s8 %v770
        %v772 = vlaneseq
        %v773 = vshrl.u32 %v772, 7
        %v774 = vsub.s32 %v771, %v773
        %v775 = vrot.slane %v761, %v774
        %v776 = vcombine.high %v768, %v768
        %v777 = vcombine.high %v775, %v775
        %v779 = vunpack.c.l.s4 1966171168
        %v780 = vunpack.c.0.s8 %v779
        %v781 = vlaneseq
        %v782 = vshrl.u32 %v781, 7
        %v783 = vsub.s32 %v780, %v782
        %v784 = vrot.slane %v768, %v783
        %v786 = vunpack.c.l.s4 1966171168
        %v787 = vunpack.c.0.s8 %v786
        %v788 = vlaneseq
        %v789 = vshrl.u32 %v788, 7
        %v790 = vsub.s32 %v787, %v789
        %v791 = vrot.slane %v775, %v790
        %v793 = vunpack.c.l.s4 1966171168
        %v794 = vunpack.c.0.s8 %v793
        %v795 = vlaneseq
        %v796 = vshrl.u32 %v795, 7
        %v797 = vsub.s32 %v794, %v796
        %v798 = vrot.slane %v776, %v797
        %v800 = vunpack.c.l.s4 1966171168
        %v801 = vunpack.c.0.s8 %v800
        %v802 = vlaneseq
        %v803 = vshrl.u32 %v802, 7
        %v804 = vsub.s32 %v801, %v803
        %v805 = vrot.slane %v777, %v804
        %v806 = vcombine.high %v784, %v784
        %v807 = vcombine.high %v791, %v791
        %v808 = vcombine.high %v798, %v798
        %v809 = vcombine.high %v805, %v805
        %v810 = vcombine.high %v242, %v242
        %v812 = vunpack.c.l.s4 1966171168
        %v813 = vunpack.c.0.s8 %v812
        %v814 = vlaneseq
        %v815 = vshrl.u32 %v814, 7
        %v816 = vsub.s32 %v813, %v815
        %v817 = vrot.slane %v242, %v816
        %v819 = vunpack.c.l.s4 1966171168
        %v820 = vunpack.c.0.s8 %v819
        %v821 = vlaneseq
        %v822 = vshrl.u32 %v821, 7
        %v823 = vsub.s32 %v820, %v822
        %v824 = vrot.slane %v810, %v823
        %v825 = vcombine.high %v817, %v817
        %v826 = vcombine.high %v824, %v824
        %v828 = vunpack.c.l.s4 1966171168
        %v829 = vunpack.c.0.s8 %v828
        %v830 = vlaneseq
        %v831 = vshrl.u32 %v830, 7
        %v832 = vsub.s32 %v829, %v831
        %v833 = vrot.slane %v817, %v832
        %v835 = vunpack.c.l.s4 1966171168
        %v836 = vunpack.c.0.s8 %v835
        %v837 = vlaneseq
        %v838 = vshrl.u32 %v837, 7
        %v839 = vsub.s32 %v836, %v838
        %v840 = vrot.slane %v824, %v839
        %v842 = vunpack.c.l.s4 1966171168
        %v843 = vunpack.c.0.s8 %v842
        %v844 = vlaneseq
        %v845 = vshrl.u32 %v844, 7
        %v846 = vsub.s32 %v843, %v845
        %v847 = vrot.slane %v825, %v846
        %v849 = vunpack.c.l.s4 1966171168
        %v850 = vunpack.c.0.s8 %v849
        %v851 = vlaneseq
        %v852 = vshrl.u32 %v851, 7
        %v853 = vsub.s32 %v850, %v852
        %v854 = vrot.slane %v826, %v853
        %v855 = vcombine.high %v833, %v833
        %v856 = vcombine.high %v840, %v840
        %v857 = vcombine.high %v847, %v847
        %v858 = vcombine.high %v854, %v854
        %v859 = vcombine.high %v243, %v243
        %v861 = vunpack.c.l.s4 1966171168
        %v862 = vunpack.c.0.s8 %v861
        %v863 = vlaneseq
        %v864 = vshrl.u32 %v863, 7
        %v865 = vsub.s32 %v862, %v864
        %v866 = vrot.slane %v243, %v865
        %v868 = vunpack.c.l.s4 1966171168
        %v869 = vunpack.c.0.s8 %v868
        %v870 = vlaneseq
        %v871 = vshrl.u32 %v870, 7
        %v872 = vsub.s32 %v869, %v871
        %v873 = vrot.slane %v859, %v872
        %v874 = vcombine.high %v866, %v866
        %v875 = vcombine.high %v873, %v873
        %v877 = vunpack.c.l.s4 1966171168
        %v878 = vunpack.c.0.s8 %v877
        %v879 = vlaneseq
        %v880 = vshrl.u32 %v879, 7
        %v881 = vsub.s32 %v878, %v880
        %v882 = vrot.slane %v866, %v881
        %v884 = vunpack.c.l.s4 1966171168
        %v885 = vunpack.c.0.s8 %v884
        %v886 = vlaneseq
        %v887 = vshrl.u32 %v886, 7
        %v888 = vsub.s32 %v885, %v887
        %v889 = vrot.slane %v873, %v888
        %v891 = vunpack.c.l.s4 1966171168
        %v892 = vunpack.c.0.s8 %v891
        %v893 = vlaneseq
        %v894 = vshrl.u32 %v893, 7
        %v895 = vsub.s32 %v892, %v894
        %v896 = vrot.slane %v874, %v895
        %v898 = vunpack.c.l.s4 1966171168
        %v899 = vunpack.c.0.s8 %v898
        %v900 = vlaneseq
        %v901 = vshrl.u32 %v900, 7
        %v902 = vsub.s32 %v899, %v901
        %v903 = vrot.slane %v875, %v902
        %v904 = vcombine.high %v882, %v882
        %v905 = vcombine.high %v889, %v889
        %v906 = vcombine.high %v896, %v896
        %v907 = vcombine.high %v903, %v903
        %v908 = vcombine.high %v244, %v244
        %v910 = vunpack.c.l.s4 1966171168
        %v911 = vunpack.c.0.s8 %v910
        %v912 = vlaneseq
        %v913 = vshrl.u32 %v912, 7
        %v914 = vsub.s32 %v911, %v913
        %v915 = vrot.slane %v244, %v914
        %v917 = vunpack.c.l.s4 1966171168
        %v918 = vunpack.c.0.s8 %v917
        %v919 = vlaneseq
        %v920 = vshrl.u32 %v919, 7
        %v921 = vsub.s32 %v918, %v920
        %v922 = vrot.slane %v908, %v921
        %v923 = vcombine.high %v915, %v915
        %v924 = vcombine.high %v922, %v922
        %v926 = vunpack.c.l.s4 1966171168
        %v927 = vunpack.c.0.s8 %v926
        %v928 = vlaneseq
        %v929 = vshrl.u32 %v928, 7
        %v930 = vsub.s32 %v927, %v929
        %v931 = vrot.slane %v915, %v930
        %v933 = vunpack.c.l.s4 1966171168
        %v934 = vunpack.c.0.s8 %v933
        %v935 = vlaneseq
        %v936 = vshrl.u32 %v935, 7
        %v937 = vsub.s32 %v934, %v936
        %v938 = vrot.slane %v922, %v937
        %v940 = vunpack.c.l.s4 1966171168
        %v941 = vunpack.c.0.s8 %v940
        %v942 = vlaneseq
        %v943 = vshrl.u32 %v942, 7
        %v944 = vsub.s32 %v941, %v943
        %v945 = vrot.slane %v923, %v944
        %v947 = vunpack.c.l.s4 1966171168
        %v948 = vunpack.c.0.s8 %v947
        %v949 = vlaneseq
        %v950 = vshrl.u32 %v949, 7
        %v951 = vsub.s32 %v948, %v950
        %v952 = vrot.slane %v924, %v951
        %v953 = vcombine.high %v931, %v931
        %v954 = vcombine.high %v938, %v938
        %v955 = vcombine.high %v945, %v945
        %v956 = vcombine.high %v952, %v952
        %v1501 = vunpack.c.l.b16 %v245
        %v1502 = vunpack.c.h.b16 %v245
        %v1503 = vunpack.c.l.b16 %v246
        %v1504 = vunpack.c.h.b16 %v246
        %v1505 = vunpack.c.l.b16 %v247
        %v1506 = vunpack.c.h.b16 %v247
        %v1507 = vunpack.c.l.b16 %v248
        %v1508 = vunpack.c.h.b16 %v248
        %v1509 = vunpack.c.l.b16 %v249
        %v1510 = vunpack.c.h.b16 %v249
        %v1511 = vunpack.c.l.b16 %v250
        %v1512 = vunpack.c.h.b16 %v250
        %v1513 = vunpack.c.l.b16 %v251
        %v1514 = vunpack.c.h.b16 %v251
        %v1515 = vunpack.c.l.b16 %v252
        %v1516 = vunpack.c.h.b16 %v252
        %v1517 = vunpack.c.l.b16 %v253
        %v1518 = vunpack.c.h.b16 %v253
        %v1519 = vunpack.c.l.b16 %v254
        %v1520 = vunpack.c.h.b16 %v254
        %v1521 = vunpack.c.l.b16 %v255
        %v1522 = vunpack.c.h.b16 %v255
        %v1523 = vunpack.c.l.b16 %v256
        %v1524 = vunpack.c.h.b16 %v256
        %v1525 = vunpack.c.l.b16 %v257
        %v1526 = vunpack.c.h.b16 %v257
        %v1527 = vunpack.c.l.b16 %v258
        %v1528 = vunpack.c.h.b16 %v258
        %v1529 = vunpack.c.l.b16 %v259
        %v1530 = vunpack.c.h.b16 %v259
        %v1531 = vunpack.c.l.b16 %v260
        %v1532 = vunpack.c.h.b16 %v260
        %v1533 = vunpack.c.l.b16 %v261
        %v1534 = vunpack.c.h.b16 %v261
        %v1535 = vunpack.c.l.b16 %v262
        %v1536 = vunpack.c.h.b16 %v262
        %v1537 = vunpack.c.l.b16 %v263
        %v1538 = vunpack.c.h.b16 %v263
        %v1539 = vunpack.c.l.b16 %v264
        %v1540 = vunpack.c.h.b16 %v264
        %v1541 = vunpack.c.l.b16 %v265
        %v1542 = vunpack.c.h.b16 %v265
        %v1543 = vunpack.c.l.b16 %v266
        %v1544 = vunpack.c.h.b16 %v266
        %v1545 = vunpack.c.l.b16 %v267
        %v1546 = vunpack.c.h.b16 %v267
        %v1547 = vunpack.c.l.b16 %v268
        %v1548 = vunpack.c.h.b16 %v268
        %v1549 = vunpack.c.l.b16 %v269
        %v1550 = vunpack.c.h.b16 %v269
        %v1551 = vunpack.c.l.b16 %v270
        %v1552 = vunpack.c.h.b16 %v270
        %v1553 = vunpack.c.l.b16 %v271
        %v1554 = vunpack.c.h.b16 %v271
        %v1555 = vunpack.c.l.b16 %v272
        %v1556 = vunpack.c.h.b16 %v272
        %v1557 = vunpack.c.l.b16 %v273
        %v1558 = vunpack.c.h.b16 %v273
        %v1559 = vunpack.c.l.b16 %v274
        %v1560 = vunpack.c.h.b16 %v274
        %v1561 = vunpack.c.l.b16 %v275
        %v1562 = vunpack.c.h.b16 %v275
        %v1563 = vunpack.c.l.b16 %v276
        %v1564 = vunpack.c.h.b16 %v276
        %v1565 = vunpack.c.l.b16 %v277
        %v1566 = vunpack.c.h.b16 %v277
        %v1567 = vunpack.c.l.b16 %v278
        %v1568 = vunpack.c.h.b16 %v278
        %v1569 = vunpack.c.l.b16 %v279
        %v1570 = vunpack.c.h.b16 %v279
        %v1571 = vunpack.c.l.b16 %v280
        %v1572 = vunpack.c.h.b16 %v280
        %v1573 = vunpack.c.l.b16 %v281
        %v1574 = vunpack.c.h.b16 %v281
        %v1575 = vunpack.c.l.b16 %v282
        %v1576 = vunpack.c.h.b16 %v282
        %v1577 = vunpack.c.l.b16 %v283
        %v1578 = vunpack.c.h.b16 %v283
        %v1579 = vunpack.c.l.b16 %v284
        %v1580 = vunpack.c.h.b16 %v284
        %v1581 = vunpack.c.l.b16 %v285
        %v1582 = vunpack.c.h.b16 %v285
        %v1583 = vunpack.c.l.b16 %v286
        %v1584 = vunpack.c.h.b16 %v286
        %v1585 = vunpack.c.l.b16 %v287
        %v1586 = vunpack.c.h.b16 %v287
        %v1587 = vunpack.c.l.b16 %v288
        %v1588 = vunpack.c.h.b16 %v288
        %v1589 = vunpack.c.l.b16 %v289
        %v1590 = vunpack.c.h.b16 %v289
        %v1591 = vunpack.c.l.b16 %v290
        %v1592 = vunpack.c.h.b16 %v290
        %v1593 = vunpack.c.l.b16 %v291
        %v1594 = vunpack.c.h.b16 %v291
        %v1595 = vunpack.c.l.b16 %v292
        %v1596 = vunpack.c.h.b16 %v292
        %v1597 = vunpack.c.l.b16 %v293
        %v1598 = vunpack.c.h.b16 %v293
        %v1599 = vunpack.c.l.b16 %v294
        %v1600 = vunpack.c.h.b16 %v294
        %v1601 = vunpack.c.l.b16 %v295
        %v1602 = vunpack.c.h.b16 %v295
        %v1603 = vunpack.c.l.b16 %v296
        %v1604 = vunpack.c.h.b16 %v296
        %v1605 = vunpack.c.l.b16 %v297
        %v1606 = vunpack.c.h.b16 %v297
        %v1607 = vunpack.c.l.b16 %v298
        %v1608 = vunpack.c.h.b16 %v298
        %v1609 = vunpack.c.l.b16 %v299
        %v1610 = vunpack.c.h.b16 %v299
        %v1611 = vunpack.c.l.b16 %v300
        %v1612 = vunpack.c.h.b16 %v300
        %v1613 = vunpack.c.l.b16 %v301
        %v1614 = vunpack.c.h.b16 %v301
        %v1615 = vunpack.c.l.b16 %v302
        %v1616 = vunpack.c.h.b16 %v302
        %v1617 = vunpack.c.l.b16 %v303
        %v1618 = vunpack.c.h.b16 %v303
        %v1619 = vunpack.c.l.b16 %v304
        %v1620 = vunpack.c.h.b16 %v304
        %v1621 = vunpack.c.l.b16 %v305
        %v1622 = vunpack.c.h.b16 %v305
        %v1623 = vunpack.c.l.b16 %v306
        %v1624 = vunpack.c.h.b16 %v306
        %v1625 = vunpack.c.l.b16 %v307
        %v1626 = vunpack.c.h.b16 %v307
        %v1627 = vunpack.c.l.b16 %v308
        %v1628 = vunpack.c.h.b16 %v308
        %v1629 = vunpack.c.l.b16 %v309
        %v1630 = vunpack.c.h.b16 %v309
        %v1631 = vunpack.c.l.b16 %v310
        %v1632 = vunpack.c.h.b16 %v310
        %v1633 = vunpack.c.l.b16 %v311
        %v1634 = vunpack.c.h.b16 %v311
        %v1635 = vunpack.c.l.b16 %v312
        %v1636 = vunpack.c.h.b16 %v312
        %v1637 = vunpack.c.l.b16 %v313
        %v1638 = vunpack.c.h.b16 %v313
        %v1639 = vunpack.c.l.b16 %v314
        %v1640 = vunpack.c.h.b16 %v314
        %v1641 = vunpack.c.l.b16 %v315
        %v1642 = vunpack.c.h.b16 %v315
        %v1643 = vunpack.c.l.b16 %v316
        %v1644 = vunpack.c.h.b16 %v316
        %v1645 = vunpack.c.l.b16 %v317
        %v1646 = vunpack.c.h.b16 %v317
        %v1647 = vunpack.c.l.b16 %v318
        %v1648 = vunpack.c.h.b16 %v318
        %v1649 = vunpack.c.l.b16 %v319
        %v1650 = vunpack.c.h.b16 %v319
        %v1651 = vunpack.c.l.b16 %v320
        %v1652 = vunpack.c.h.b16 %v320
        %v1653 = vunpack.c.l.b16 %v321
        %v1654 = vunpack.c.h.b16 %v321
        %v1655 = vunpack.c.l.b16 %v322
        %v1656 = vunpack.c.h.b16 %v322
        %v1657 = vunpack.c.l.b16 %v323
        %v1658 = vunpack.c.h.b16 %v323
        %v1659 = vunpack.c.l.b16 %v324
        %v1660 = vunpack.c.h.b16 %v324
        %v1661 = vunpack.c.l.b16 %v325
        %v1662 = vunpack.c.h.b16 %v325
        %v1663 = vunpack.c.l.b16 %v326
        %v1664 = vunpack.c.h.b16 %v326
        %v1665 = vunpack.c.l.b16 %v327
        %v1666 = vunpack.c.h.b16 %v327
        %v1667 = vunpack.c.l.b16 %v328
        %v1668 = vunpack.c.h.b16 %v328
        %v1669 = vunpack.c.l.b16 %v329
        %v1670 = vunpack.c.h.b16 %v329
        %v1671 = vunpack.c.l.b16 %v330
        %v1672 = vunpack.c.h.b16 %v330
        %v1673 = vunpack.c.l.b16 %v331
        %v1674 = vunpack.c.h.b16 %v331
        %v1675 = vunpack.c.l.b16 %v332
        %v1676 = vunpack.c.h.b16 %v332
        %v1677 = vunpack.c.l.b16 %v333
        %v1678 = vunpack.c.h.b16 %v333
        %v1679 = vunpack.c.l.b16 %v334
        %v1680 = vunpack.c.h.b16 %v334
        %v1681 = vunpack.c.l.b16 %v335
        %v1682 = vunpack.c.h.b16 %v335
        %v1683 = vunpack.c.l.b16 %v336
        %v1684 = vunpack.c.h.b16 %v336
        %v1685 = vunpack.c.l.b16 %v337
        %v1686 = vunpack.c.h.b16 %v337
        %v1687 = vunpack.c.l.b16 %v338
        %v1688 = vunpack.c.h.b16 %v338
        %v1689 = vunpack.c.l.b16 %v339
        %v1690 = vunpack.c.h.b16 %v339
        %v1691 = vunpack.c.l.b16 %v340
        %v1692 = vunpack.c.h.b16 %v340
        %v1693 = vunpack.c.l.b16 %v341
        %v1694 = vunpack.c.h.b16 %v341
        %v1695 = vunpack.c.l.b16 %v342
        %v1696 = vunpack.c.h.b16 %v342
        %v1697 = vunpack.c.l.b16 %v343
        %v1698 = vunpack.c.h.b16 %v343
        %v1699 = vunpack.c.l.b16 %v344
        %v1700 = vunpack.c.h.b16 %v344
        %v1701 = vunpack.c.l.b16 %v345
        %v1702 = vunpack.c.h.b16 %v345
        %v1703 = vunpack.c.l.b16 %v346
        %v1704 = vunpack.c.h.b16 %v346
        %v1705 = vunpack.c.l.b16 %v347
        %v1706 = vunpack.c.h.b16 %v347
        %v1707 = vunpack.c.l.b16 %v348
        %v1708 = vunpack.c.h.b16 %v348
        %v1709 = vunpack.c.l.b16 %v349
        %v1710 = vunpack.c.h.b16 %v349
        %v1711 = vunpack.c.l.b16 %v350
        %v1712 = vunpack.c.h.b16 %v350
        %v1713 = vunpack.c.l.b16 %v351
        %v1714 = vunpack.c.h.b16 %v351
        %v1715 = vunpack.c.l.b16 %v352
        %v1716 = vunpack.c.h.b16 %v352
        %v1717 = vunpack.c.l.b16 %v353
        %v1718 = vunpack.c.h.b16 %v353
        %v1719 = vunpack.c.l.b16 %v354
        %v1720 = vunpack.c.h.b16 %v354
        %v1721 = vunpack.c.l.b16 %v355
        %v1722 = vunpack.c.h.b16 %v355
        %v1723 = vunpack.c.l.b16 %v356
        %v1724 = vunpack.c.h.b16 %v356
        %v1725 = vunpack.c.l.b16 %v357
        %v1726 = vunpack.c.h.b16 %v357
        %v1727 = vunpack.c.l.b16 %v358
        %v1728 = vunpack.c.h.b16 %v358
        %v1729 = vunpack.c.l.b16 %v359
        %v1730 = vunpack.c.h.b16 %v359
        %v1731 = vunpack.c.l.b16 %v360
        %v1732 = vunpack.c.h.b16 %v360
        %v1733 = vunpack.c.l.b16 %v361
        %v1734 = vunpack.c.h.b16 %v361
        %v1735 = vunpack.c.l.b16 %v362
        %v1736 = vunpack.c.h.b16 %v362
        %v1737 = vunpack.c.l.b16 %v363
        %v1738 = vunpack.c.h.b16 %v363
        %v1739 = vunpack.c.l.b16 %v364
        %v1740 = vunpack.c.h.b16 %v364
        %v1741 = vunpack.c.l.b16 %v365
        %v1742 = vunpack.c.h.b16 %v365
        %v1743 = vunpack.c.l.b16 %v366
        %v1744 = vunpack.c.h.b16 %v366
        %v1745 = vunpack.c.l.b16 %v367
        %v1746 = vunpack.c.h.b16 %v367
        %v1747 = vunpack.c.l.b16 %v368
        %v1748 = vunpack.c.h.b16 %v368
        %v1749 = vunpack.c.l.b16 %v369
        %v1750 = vunpack.c.h.b16 %v369
        %v1751 = vunpack.c.l.b16 %v370
        %v1752 = vunpack.c.h.b16 %v370
        %v1753 = vunpack.c.l.b16 %v371
        %v1754 = vunpack.c.h.b16 %v371
        %v1755 = vunpack.c.l.b16 %v372
        %v1756 = vunpack.c.h.b16 %v372
        %v1757 = vunpack.c.l.b16 %v373
        %v1758 = vunpack.c.h.b16 %v373
        %v1759 = vunpack.c.l.b16 %v374
        %v1760 = vunpack.c.h.b16 %v374
        %v1761 = vunpack.c.l.b16 %v375
        %v1762 = vunpack.c.h.b16 %v375
        %v1763 = vunpack.c.l.b16 %v376
        %v1764 = vunpack.c.h.b16 %v376
        %v1765 = vunpack.c.l.b16 %v377
        %v1766 = vunpack.c.h.b16 %v377
        %v1767 = vunpack.c.l.b16 %v378
        %v1768 = vunpack.c.h.b16 %v378
        %v1769 = vunpack.c.l.b16 %v379
        %v1770 = vunpack.c.h.b16 %v379
        %v1771 = vunpack.c.l.b16 %v380
        %v1772 = vunpack.c.h.b16 %v380
        %v1773 = vunpack.c.l.b16 %v381
        %v1774 = vunpack.c.h.b16 %v381
        %v1775 = vunpack.c.l.b16 %v382
        %v1776 = vunpack.c.h.b16 %v382
        %v1777 = vunpack.c.l.b16 %v383
        %v1778 = vunpack.c.h.b16 %v383
        %v1779 = vunpack.c.l.b16 %v384
        %v1780 = vunpack.c.h.b16 %v384
        %v1781 = vunpack.c.l.b16 %v385
        %v1782 = vunpack.c.h.b16 %v385
        %v1783 = vunpack.c.l.b16 %v386
        %v1784 = vunpack.c.h.b16 %v386
        %v1785 = vunpack.c.l.b16 %v387
        %v1786 = vunpack.c.h.b16 %v387
        %v1787 = vunpack.c.l.b16 %v388
        %v1788 = vunpack.c.h.b16 %v388
        %v1789 = vunpack.c.l.b16 %v389
        %v1790 = vunpack.c.h.b16 %v389
        %v1791 = vunpack.c.l.b16 %v390
        %v1792 = vunpack.c.h.b16 %v390
        %v1793 = vunpack.c.l.b16 %v391
        %v1794 = vunpack.c.h.b16 %v391
        %v1795 = vunpack.c.l.b16 %v392
        %v1796 = vunpack.c.h.b16 %v392
        %v1797 = vunpack.c.l.b16 %v393
        %v1798 = vunpack.c.h.b16 %v393
        %v1799 = vunpack.c.l.b16 %v394
        %v1800 = vunpack.c.h.b16 %v394
        %v1801 = vunpack.c.l.b16 %v395
        %v1802 = vunpack.c.h.b16 %v395
        %v1803 = vunpack.c.l.b16 %v396
        %v1804 = vunpack.c.h.b16 %v396
        %v1805 = vunpack.c.l.b16 %v397
        %v1806 = vunpack.c.h.b16 %v397
        %v1807 = vunpack.c.l.b16 %v398
        %v1808 = vunpack.c.h.b16 %v398
        %v1809 = vunpack.c.l.b16 %v399
        %v1810 = vunpack.c.h.b16 %v399
        %v1811 = vunpack.c.l.b16 %v400
        %v1812 = vunpack.c.h.b16 %v400
        %v1813 = vunpack.c.l.b16 %v401
        %v1814 = vunpack.c.h.b16 %v401
        %v1815 = vunpack.c.l.b16 %v402
        %v1816 = vunpack.c.h.b16 %v402
        %v1817 = vunpack.c.l.b16 %v403
        %v1818 = vunpack.c.h.b16 %v403
        %v1819 = vunpack.c.l.b16 %v404
        %v1820 = vunpack.c.h.b16 %v404
        %v1821 = vunpack.c.l.b16 %v405
        %v1822 = vunpack.c.h.b16 %v405
        %v1823 = vunpack.c.l.b16 %v406
        %v1824 = vunpack.c.h.b16 %v406
        %v1825 = vunpack.c.l.b16 %v407
        %v1826 = vunpack.c.h.b16 %v407
        %v1827 = vunpack.c.l.b16 %v408
        %v1828 = vunpack.c.h.b16 %v408
        %v1829 = vunpack.c.l.b16 %v409
        %v1830 = vunpack.c.h.b16 %v409
        %v1831 = vunpack.c.l.b16 %v410
        %v1832 = vunpack.c.h.b16 %v410
        %v1833 = vunpack.c.l.b16 %v411
        %v1834 = vunpack.c.h.b16 %v411
        %v1835 = vunpack.c.l.b16 %v412
        %v1836 = vunpack.c.h.b16 %v412
        %v1837 = vunpack.c.l.b16 %v413
        %v1838 = vunpack.c.h.b16 %v413
        %v1839 = vunpack.c.l.b16 %v414
        %v1840 = vunpack.c.h.b16 %v414
        %v1841 = vunpack.c.l.b16 %v415
        %v1842 = vunpack.c.h.b16 %v415
        %v1843 = vunpack.c.l.b16 %v416
        %v1844 = vunpack.c.h.b16 %v416
        %v1845 = vunpack.c.l.b16 %v417
        %v1846 = vunpack.c.h.b16 %v417
        %v1847 = vunpack.c.l.b16 %v418
        %v1848 = vunpack.c.h.b16 %v418
        %v1849 = vunpack.c.l.b16 %v419
        %v1850 = vunpack.c.h.b16 %v419
        %v1851 = vunpack.c.l.b16 %v420
        %v1852 = vunpack.c.h.b16 %v420
        %v1853 = vunpack.c.l.b16 %v421
        %v1854 = vunpack.c.h.b16 %v421
        %v1855 = vunpack.c.l.b16 %v422
        %v1856 = vunpack.c.h.b16 %v422
        %v1857 = vunpack.c.l.b16 %v423
        %v1858 = vunpack.c.h.b16 %v423
        %v1859 = vunpack.c.l.b16 %v424
        %v1860 = vunpack.c.h.b16 %v424
        %v1861 = vunpack.c.l.b16 %v425
        %v1862 = vunpack.c.h.b16 %v425
        %v1863 = vunpack.c.l.b16 %v426
        %v1864 = vunpack.c.h.b16 %v426
        %v1865 = vunpack.c.l.b16 %v427
        %v1866 = vunpack.c.h.b16 %v427
        %v1867 = vunpack.c.l.b16 %v428
        %v1868 = vunpack.c.h.b16 %v428
        %v1869 = vunpack.c.l.b16 %v429
        %v1870 = vunpack.c.h.b16 %v429
        %v1871 = vunpack.c.l.b16 %v430
        %v1872 = vunpack.c.h.b16 %v430
        %v1873 = vunpack.c.l.b16 %v431
        %v1874 = vunpack.c.h.b16 %v431
        %v1875 = vunpack.c.l.b16 %v432
        %v1876 = vunpack.c.h.b16 %v432
        %v1877 = vunpack.c.l.b16 %v433
        %v1878 = vunpack.c.h.b16 %v433
        %v1879 = vunpack.c.l.b16 %v434
        %v1880 = vunpack.c.h.b16 %v434
        %v1881 = vunpack.c.l.b16 %v435
        %v1882 = vunpack.c.h.b16 %v435
        %v1883 = vunpack.c.l.b16 %v436
        %v1884 = vunpack.c.h.b16 %v436
        %v1885 = vunpack.c.l.b16 %v437
        %v1886 = vunpack.c.h.b16 %v437
        %v1887 = vunpack.c.l.b16 %v438
        %v1888 = vunpack.c.h.b16 %v438
        %v1889 = vunpack.c.l.b16 %v439
        %v1890 = vunpack.c.h.b16 %v439
        %v1891 = vunpack.c.l.b16 %v440
        %v1892 = vunpack.c.h.b16 %v440
        %v1893 = vunpack.c.l.b16 %v441
        %v1894 = vunpack.c.h.b16 %v441
        %v1895 = vunpack.c.l.b16 %v442
        %v1896 = vunpack.c.h.b16 %v442
        %v1897 = vunpack.c.l.b16 %v443
        %v1898 = vunpack.c.h.b16 %v443
        %v1899 = vunpack.c.l.b16 %v444
        %v1900 = vunpack.c.h.b16 %v444
        %v1901 = vunpack.c.l.b16 %v445
        %v1902 = vunpack.c.h.b16 %v445
        %v1903 = vunpack.c.l.b16 %v446
        %v1904 = vunpack.c.h.b16 %v446
        %v1905 = vunpack.c.l.b16 %v447
        %v1906 = vunpack.c.h.b16 %v447
        %v1907 = vunpack.c.l.b16 %v448
        %v1908 = vunpack.c.h.b16 %v448
        %v1909 = vunpack.c.l.b16 %v449
        %v1910 = vunpack.c.h.b16 %v449
        %v1911 = vunpack.c.l.b16 %v450
        %v1912 = vunpack.c.h.b16 %v450
        %v1913 = vunpack.c.l.b16 %v451
        %v1914 = vunpack.c.h.b16 %v451
        %v1915 = vunpack.c.l.b16 %v452
        %v1916 = vunpack.c.h.b16 %v452
        %v1917 = vunpack.c.l.b16 %v453
        %v1918 = vunpack.c.h.b16 %v453
        %v1919 = vunpack.c.l.b16 %v454
        %v1920 = vunpack.c.h.b16 %v454
        %v1921 = vunpack.c.l.b16 %v455
        %v1922 = vunpack.c.h.b16 %v455
        %v1923 = vunpack.c.l.b16 %v456
        %v1924 = vunpack.c.h.b16 %v456
        %v1925 = vunpack.c.l.b16 %v457
        %v1926 = vunpack.c.h.b16 %v457
        %v1927 = vunpack.c.l.b16 %v458
        %v1928 = vunpack.c.h.b16 %v458
        %v1929 = vunpack.c.l.b16 %v459
        %v1930 = vunpack.c.h.b16 %v459
        %v1931 = vunpack.c.l.b16 %v460
        %v1932 = vunpack.c.h.b16 %v460
        %v1933 = vunpack.c.l.b16 %v461
        %v1934 = vunpack.c.h.b16 %v461
        %v1935 = vunpack.c.l.b16 %v462
        %v1936 = vunpack.c.h.b16 %v462
        %v1937 = vunpack.c.l.b16 %v463
        %v1938 = vunpack.c.h.b16 %v463
        %v1939 = vunpack.c.l.b16 %v464
        %v1940 = vunpack.c.h.b16 %v464
        %v1941 = vunpack.c.l.b16 %v465
        %v1942 = vunpack.c.h.b16 %v465
        %v1943 = vunpack.c.l.b16 %v466
        %v1944 = vunpack.c.h.b16 %v466
        %v1945 = vunpack.c.l.b16 %v467
        %v1946 = vunpack.c.h.b16 %v467
        %v1947 = vunpack.c.l.b16 %v468
        %v1948 = vunpack.c.h.b16 %v468
        %v1949 = vunpack.c.l.b16 %v469
        %v1950 = vunpack.c.h.b16 %v469
        %v1951 = vunpack.c.l.b16 %v470
        %v1952 = vunpack.c.h.b16 %v470
        %v1953 = vunpack.c.l.b16 %v471
        %v1954 = vunpack.c.h.b16 %v471
        %v1955 = vunpack.c.l.b16 %v472
        %v1956 = vunpack.c.h.b16 %v472
        %v1957 = vunpack.c.l.b16 %v473
        %v1958 = vunpack.c.h.b16 %v473
        %v1959 = vunpack.c.l.b16 %v474
        %v1960 = vunpack.c.h.b16 %v474
        %v1961 = vunpack.c.l.b16 %v475
        %v1962 = vunpack.c.h.b16 %v475
        %v1963 = vunpack.c.l.b16 %v476
        %v1964 = vunpack.c.h.b16 %v476
        %v1965 = vunpack.c.l.b16 %v477
        %v1966 = vunpack.c.h.b16 %v477
        %v1967 = vunpack.c.l.b16 %v478
        %v1968 = vunpack.c.h.b16 %v478
        %v1969 = vunpack.c.l.b16 %v479
        %v1970 = vunpack.c.h.b16 %v479
        %v1971 = vunpack.c.l.b16 %v480
        %v1972 = vunpack.c.h.b16 %v480
        %v1973 = vunpack.c.l.b16 %v481
        %v1974 = vunpack.c.h.b16 %v481
        %v1975 = vunpack.c.l.b16 %v482
        %v1976 = vunpack.c.h.b16 %v482
        %v1977 = vunpack.c.l.b16 %v483
        %v1978 = vunpack.c.h.b16 %v483
        %v1979 = vunpack.c.l.b16 %v484
        %v1980 = vunpack.c.h.b16 %v484
        %v1981 = vunpack.c.l.b16 %v485
        %v1982 = vunpack.c.h.b16 %v485
        %v1983 = vunpack.c.l.b16 %v486
        %v1984 = vunpack.c.h.b16 %v486
        %v1985 = vunpack.c.l.b16 %v487
        %v1986 = vunpack.c.h.b16 %v487
        %v1987 = vunpack.c.l.b16 %v488
        %v1988 = vunpack.c.h.b16 %v488
        %v1989 = vunpack.c.l.b16 %v489
        %v1990 = vunpack.c.h.b16 %v489
        %v1991 = vunpack.c.l.b16 %v490
        %v1992 = vunpack.c.h.b16 %v490
        %v1993 = vunpack.c.l.b16 %v491
        %v1994 = vunpack.c.h.b16 %v491
        %v1995 = vunpack.c.l.b16 %v492
        %v1996 = vunpack.c.h.b16 %v492
        %v1997 = vunpack.c.l.b16 %v493
        %v1998 = vunpack.c.h.b16 %v493
        %v1999 = vunpack.c.l.b16 %v494
        %v2000 = vunpack.c.h.b16 %v494
        %v2001 = vunpack.c.l.b16 %v495
        %v2002 = vunpack.c.h.b16 %v495
        %v2003 = vunpack.c.l.b16 %v496
        %v2004 = vunpack.c.h.b16 %v496
        %v2005 = vunpack.c.l.b16 %v497
        %v2006 = vunpack.c.h.b16 %v497
        %v2007 = vunpack.c.l.b16 %v498
        %v2008 = vunpack.c.h.b16 %v498
        %v2009 = vunpack.c.l.b16 %v499
        %v2010 = vunpack.c.h.b16 %v499
        %v2011 = vunpack.c.l.b16 %v500
        %v2012 = vunpack.c.h.b16 %v500
        %v2013 = vunpack.c.l.b16 %v501
        %v2014 = vunpack.c.h.b16 %v501
        %v2015 = vunpack.c.l.b16 %v502
        %v2016 = vunpack.c.h.b16 %v502
        %v2017 = vunpack.c.l.b16 %v503
        %v2018 = vunpack.c.h.b16 %v503
        %v2019 = vunpack.c.l.b16 %v504
        %v2020 = vunpack.c.h.b16 %v504
        %v2021 = vunpack.c.l.b16 %v505
        %v2022 = vunpack.c.h.b16 %v505
        %v2023 = vunpack.c.l.b16 %v506
        %v2024 = vunpack.c.h.b16 %v506
        %v2025 = vunpack.c.l.b16 %v507
        %v2026 = vunpack.c.h.b16 %v507
        %v2027 = vunpack.c.l.b16 %v508
        %v2028 = vunpack.c.h.b16 %v508
        %v2029 = vunpack.c.l.b16 %v509
        %v2030 = vunpack.c.h.b16 %v509
        %v2031 = vunpack.c.l.b16 %v510
        %v2032 = vunpack.c.h.b16 %v510
        %v2033 = vunpack.c.l.b16 %v511
        %v2034 = vunpack.c.h.b16 %v511
        %v2035 = vunpack.c.l.b16 %v512
        %v2036 = vunpack.c.h.b16 %v512
        %v2037 = vunpack.c.l.b16 %v513
        %v2038 = vunpack.c.h.b16 %v513
        %v2039 = vunpack.c.l.b16 %v514
        %v2040 = vunpack.c.h.b16 %v514
        %v2041 = vunpack.c.l.b16 %v515
        %v2042 = vunpack.c.h.b16 %v515
        %v2043 = vunpack.c.l.b16 %v516
        %v2044 = vunpack.c.h.b16 %v516
        %v2045 = vunpack.c.l.b16 %v517
        %v2046 = vunpack.c.h.b16 %v517
        %v2047 = vunpack.c.l.b16 %v518
        %v2048 = vunpack.c.h.b16 %v518
        %v2049 = vunpack.c.l.b16 %v519
        %v2050 = vunpack.c.h.b16 %v519
        %v2051 = vunpack.c.l.b16 %v520
        %v2052 = vunpack.c.h.b16 %v520
        %v2053 = vunpack.c.l.b16 %v521
        %v2054 = vunpack.c.h.b16 %v521
        %v2055 = vunpack.c.l.b16 %v522
        %v2056 = vunpack.c.h.b16 %v522
        %v2057 = vunpack.c.l.b16 %v523
        %v2058 = vunpack.c.h.b16 %v523
        %v2059 = vunpack.c.l.b16 %v524
        %v2060 = vunpack.c.h.b16 %v524
        %v2061 = vunpack.c.l.b16 %v525
        %v2062 = vunpack.c.h.b16 %v525
        %v2063 = vunpack.c.l.b16 %v526
        %v2064 = vunpack.c.h.b16 %v526
        %v2065 = vunpack.c.l.b16 %v527
        %v2066 = vunpack.c.h.b16 %v527
        %v2067 = vunpack.c.l.b16 %v528
        %v2068 = vunpack.c.h.b16 %v528
        %v2069 = vunpack.c.l.b16 %v529
        %v2070 = vunpack.c.h.b16 %v529
        %v2071 = vunpack.c.l.b16 %v530
        %v2072 = vunpack.c.h.b16 %v530
        %v2073 = vunpack.c.l.b16 %v531
        %v2074 = vunpack.c.h.b16 %v531
        %v2075 = vunpack.c.l.b16 %v532
        %v2076 = vunpack.c.h.b16 %v532
        %v2077 = vunpack.c.l.b16 %v533
        %v2078 = vunpack.c.h.b16 %v533
        %v2079 = vunpack.c.l.b16 %v534
        %v2080 = vunpack.c.h.b16 %v534
        %v2081 = vunpack.c.l.b16 %v535
        %v2082 = vunpack.c.h.b16 %v535
        %v2083 = vunpack.c.l.b16 %v536
        %v2084 = vunpack.c.h.b16 %v536
        %v2085 = vunpack.c.l.b16 %v537
        %v2086 = vunpack.c.h.b16 %v537
        %v2087 = vunpack.c.l.b16 %v538
        %v2088 = vunpack.c.h.b16 %v538
        %v2089 = vunpack.c.l.b16 %v539
        %v2090 = vunpack.c.h.b16 %v539
        %v2091 = vunpack.c.l.b16 %v540
        %v2092 = vunpack.c.h.b16 %v540
        %v2093 = vunpack.c.l.b16 %v541
        %v2094 = vunpack.c.h.b16 %v541
        %v2095 = vunpack.c.l.b16 %v542
        %v2096 = vunpack.c.h.b16 %v542
        %v2097 = vunpack.c.l.b16 %v543
        %v2098 = vunpack.c.h.b16 %v543
        %v2099 = vunpack.c.l.b16 %v544
        %v2100 = vunpack.c.h.b16 %v544
        %v2101 = vunpack.c.l.b16 %v545
        %v2102 = vunpack.c.h.b16 %v545
        %v2103 = vunpack.c.l.b16 %v546
        %v2104 = vunpack.c.h.b16 %v546
        %v2105 = vunpack.c.l.b16 %v547
        %v2106 = vunpack.c.h.b16 %v547
        %v2107 = vunpack.c.l.b16 %v548
        %v2108 = vunpack.c.h.b16 %v548
        %v2109 = vunpack.c.l.b16 %v549
        %v2110 = vunpack.c.h.b16 %v549
        %v2111 = vunpack.c.l.b16 %v550
        %v2112 = vunpack.c.h.b16 %v550
        %v2113 = vunpack.c.l.b16 %v551
        %v2114 = vunpack.c.h.b16 %v551
        %v2115 = vunpack.c.l.b16 %v552
        %v2116 = vunpack.c.h.b16 %v552
        %v2117 = vunpack.c.l.b16 %v553
        %v2118 = vunpack.c.h.b16 %v553
        %v2119 = vunpack.c.l.b16 %v554
        %v2120 = vunpack.c.h.b16 %v554
        %v2121 = vunpack.c.l.b16 %v555
        %v2122 = vunpack.c.h.b16 %v555
        %v2123 = vunpack.c.l.b16 %v556
        %v2124 = vunpack.c.h.b16 %v556
        %v2125 = vunpack.c.l.b16 %v557
        %v2126 = vunpack.c.h.b16 %v557
        %v2127 = vunpack.c.l.b16 %v558
        %v2128 = vunpack.c.h.b16 %v558
        %v2129 = vunpack.c.l.b16 %v559
        %v2130 = vunpack.c.h.b16 %v559
        %v2131 = vunpack.c.l.b16 %v560
        %v2132 = vunpack.c.h.b16 %v560
        %v2133 = vunpack.c.l.b16 %v561
        %v2134 = vunpack.c.h.b16 %v561
        %v2135 = vunpack.c.l.b16 %v562
        %v2136 = vunpack.c.h.b16 %v562
        %v2137 = vunpack.c.l.b16 %v563
        %v2138 = vunpack.c.h.b16 %v563
        %v2139 = vunpack.c.l.b16 %v564
        %v2140 = vunpack.c.h.b16 %v564
        %v2141 = vunpack.c.l.b16 %v565
        %v2142 = vunpack.c.h.b16 %v565
        %v2143 = vunpack.c.l.b16 %v566
        %v2144 = vunpack.c.h.b16 %v566
        %v2145 = vunpack.c.l.b16 %v567
        %v2146 = vunpack.c.h.b16 %v567
        %v2147 = vunpack.c.l.b16 %v568
        %v2148 = vunpack.c.h.b16 %v568
        %v2149 = vunpack.c.l.b16 %v569
        %v2150 = vunpack.c.h.b16 %v569
        %v2151 = vunpack.c.l.b16 %v570
        %v2152 = vunpack.c.h.b16 %v570
        %v2153 = vunpack.c.l.b16 %v571
        %v2154 = vunpack.c.h.b16 %v571
        %v2155 = vunpack.c.l.b16 %v572
        %v2156 = vunpack.c.h.b16 %v572
        %v2157 = vunpack.c.l.b16 %v573
        %v2158 = vunpack.c.h.b16 %v573
        %v2159 = vunpack.c.l.b16 %v574
        %v2160 = vunpack.c.h.b16 %v574
        %v2161 = vunpack.c.l.b16 %v575
        %v2162 = vunpack.c.h.b16 %v575
        %v2163 = vunpack.c.l.b16 %v576
        %v2164 = vunpack.c.h.b16 %v576
        %v2165 = vunpack.c.l.b16 %v577
        %v2166 = vunpack.c.h.b16 %v577
        %v2167 = vunpack.c.l.b16 %v578
        %v2168 = vunpack.c.h.b16 %v578
        %v2169 = vunpack.c.l.b16 %v579
        %v2170 = vunpack.c.h.b16 %v579
        %v2171 = vunpack.c.l.b16 %v580
        %v2172 = vunpack.c.h.b16 %v580
        %v2173 = vunpack.c.l.b16 %v581
        %v2174 = vunpack.c.h.b16 %v581
        %v2175 = vunpack.c.l.b16 %v582
        %v2176 = vunpack.c.h.b16 %v582
        %v2177 = vunpack.c.l.b16 %v583
        %v2178 = vunpack.c.h.b16 %v583
        %v2179 = vunpack.c.l.b16 %v584
        %v2180 = vunpack.c.h.b16 %v584
        %v2181 = vunpack.c.l.b16 %v585
        %v2182 = vunpack.c.h.b16 %v585
        %v2183 = vunpack.c.l.b16 %v586
        %v2184 = vunpack.c.h.b16 %v586
        %v2185 = vunpack.c.l.b16 %v587
        %v2186 = vunpack.c.h.b16 %v587
        %v2187 = vunpack.c.l.b16 %v588
        %v2188 = vunpack.c.h.b16 %v588
        %v2189 = vunpack.c.l.b16 %v589
        %v2190 = vunpack.c.h.b16 %v589
        %v2191 = vunpack.c.l.b16 %v590
        %v2192 = vunpack.c.h.b16 %v590
        %v2193 = vunpack.c.l.b16 %v591
        %v2194 = vunpack.c.h.b16 %v591
        %v2195 = vunpack.c.l.b16 %v592
        %v2196 = vunpack.c.h.b16 %v592
        %v2197 = vunpack.c.l.b16 %v593
        %v2198 = vunpack.c.h.b16 %v593
        %v2199 = vunpack.c.l.b16 %v594
        %v2200 = vunpack.c.h.b16 %v594
        %v2201 = vunpack.c.l.b16 %v595
        %v2202 = vunpack.c.h.b16 %v595
        %v2203 = vunpack.c.l.b16 %v596
        %v2204 = vunpack.c.h.b16 %v596
        %v2205 = vunpack.c.l.b16 %v597
        %v2206 = vunpack.c.h.b16 %v597
        %v2207 = vunpack.c.l.b16 %v598
        %v2208 = vunpack.c.h.b16 %v598
        %v2209 = vunpack.c.l.b16 %v599
        %v2210 = vunpack.c.h.b16 %v599
        %v2211 = vunpack.c.l.b16 %v600
        %v2212 = vunpack.c.h.b16 %v600
        %v2213 = vunpack.c.l.b16 %v601
        %v2214 = vunpack.c.h.b16 %v601
        %v2215 = vunpack.c.l.b16 %v602
        %v2216 = vunpack.c.h.b16 %v602
        %v2217 = vunpack.c.l.b16 %v603
        %v2218 = vunpack.c.h.b16 %v603
        %v2219 = vunpack.c.l.b16 %v604
        %v2220 = vunpack.c.h.b16 %v604
        %v2221 = vunpack.c.l.b16 %v605
        %v2222 = vunpack.c.h.b16 %v605
        %v2223 = vunpack.c.l.b16 %v606
        %v2224 = vunpack.c.h.b16 %v606
        %v2225 = vunpack.c.l.b16 %v607
        %v2226 = vunpack.c.h.b16 %v607
        %v2227 = vunpack.c.l.b16 %v608
        %v2228 = vunpack.c.h.b16 %v608
        %v2229 = vunpack.c.l.b16 %v609
        %v2230 = vunpack.c.h.b16 %v609
        %v2231 = vunpack.c.l.b16 %v610
        %v2232 = vunpack.c.h.b16 %v610
        %v2233 = vunpack.c.l.b16 %v611
        %v2234 = vunpack.c.h.b16 %v611
        %v2235 = vunpack.c.l.b16 %v612
        %v2236 = vunpack.c.h.b16 %v612
        %v2237 = vunpack.c.l.b16 %v613
        %v2238 = vunpack.c.h.b16 %v613
        %v2239 = vunpack.c.l.b16 %v614
        %v2240 = vunpack.c.h.b16 %v614
        %v2241 = vunpack.c.l.b16 %v615
        %v2242 = vunpack.c.h.b16 %v615
        %v2243 = vunpack.c.l.b16 %v616
        %v2244 = vunpack.c.h.b16 %v616
        %v2245 = vunpack.c.l.b16 %v617
        %v2246 = vunpack.c.h.b16 %v617
        %v2247 = vunpack.c.l.b16 %v618
        %v2248 = vunpack.c.h.b16 %v618
        %v2249 = vunpack.c.l.b16 %v619
        %v2250 = vunpack.c.h.b16 %v619
        %v2251 = vunpack.c.l.b16 %v620
        %v2252 = vunpack.c.h.b16 %v620
        %v2253 = vunpack.c.l.b16 %v621
        %v2254 = vunpack.c.h.b16 %v621
        %v2255 = vunpack.c.l.b16 %v622
        %v2256 = vunpack.c.h.b16 %v622
        %v2257 = vunpack.c.l.b16 %v623
        %v2258 = vunpack.c.h.b16 %v623
        %v2259 = vunpack.c.l.b16 %v624
        %v2260 = vunpack.c.h.b16 %v624
        %v2261 = vunpack.c.l.b16 %v625
        %v2262 = vunpack.c.h.b16 %v625
        %v2263 = vunpack.c.l.b16 %v626
        %v2264 = vunpack.c.h.b16 %v626
        %v2265 = vunpack.c.l.b16 %v627
        %v2266 = vunpack.c.h.b16 %v627
        %v2267 = vunpack.c.l.b16 %v628
        %v2268 = vunpack.c.h.b16 %v628
        %v2269 = vunpack.c.l.b16 %v629
        %v2270 = vunpack.c.h.b16 %v629
        %v2271 = vunpack.c.l.b16 %v630
        %v2272 = vunpack.c.h.b16 %v630
        %v2273 = vunpack.c.l.b16 %v631
        %v2274 = vunpack.c.h.b16 %v631
        %v2275 = vunpack.c.l.b16 %v632
        %v2276 = vunpack.c.h.b16 %v632
        %v2277 = vunpack.c.l.b16 %v633
        %v2278 = vunpack.c.h.b16 %v633
        %v2279 = vunpack.c.l.b16 %v634
        %v2280 = vunpack.c.h.b16 %v634
        %v2281 = vunpack.c.l.b16 %v635
        %v2282 = vunpack.c.h.b16 %v635
        %v2283 = vunpack.c.l.b16 %v636
        %v2284 = vunpack.c.h.b16 %v636
        %v2285 = vunpack.c.l.b16 %v637
        %v2286 = vunpack.c.h.b16 %v637
        %v2287 = vunpack.c.l.b16 %v638
        %v2288 = vunpack.c.h.b16 %v638
        %v2289 = vunpack.c.l.b16 %v639
        %v2290 = vunpack.c.h.b16 %v639
        %v2291 = vunpack.c.l.b16 %v640
        %v2292 = vunpack.c.h.b16 %v640
        %v2293 = vunpack.c.l.b16 %v641
        %v2294 = vunpack.c.h.b16 %v641
        %v2295 = vunpack.c.l.b16 %v642
        %v2296 = vunpack.c.h.b16 %v642
        %v2297 = vunpack.c.l.b16 %v643
        %v2298 = vunpack.c.h.b16 %v643
        %v2299 = vunpack.c.l.b16 %v644
        %v2300 = vunpack.c.h.b16 %v644
        %v2301 = vunpack.c.l.b16 %v645
        %v2302 = vunpack.c.h.b16 %v645
        %v2303 = vunpack.c.l.b16 %v646
        %v2304 = vunpack.c.h.b16 %v646
        %v2305 = vunpack.c.l.b16 %v647
        %v2306 = vunpack.c.h.b16 %v647
        %v2307 = vunpack.c.l.b16 %v648
        %v2308 = vunpack.c.h.b16 %v648
        %v2309 = vunpack.c.l.b16 %v649
        %v2310 = vunpack.c.h.b16 %v649
        %v2311 = vunpack.c.l.b16 %v650
        %v2312 = vunpack.c.h.b16 %v650
        %v2313 = vunpack.c.l.b16 %v651
        %v2314 = vunpack.c.h.b16 %v651
        %v2315 = vunpack.c.l.b16 %v652
        %v2316 = vunpack.c.h.b16 %v652
        %v2317 = vunpack.c.l.b16 %v653
        %v2318 = vunpack.c.h.b16 %v653
        %v2319 = vunpack.c.l.b16 %v654
        %v2320 = vunpack.c.h.b16 %v654
        %v2321 = vunpack.c.l.b16 %v655
        %v2322 = vunpack.c.h.b16 %v655
        %v2323 = vunpack.c.l.b16 %v656
        %v2324 = vunpack.c.h.b16 %v656
        %v2325 = vunpack.c.l.b16 %v657
        %v2326 = vunpack.c.h.b16 %v657
        %v2327 = vunpack.c.l.b16 %v658
        %v2328 = vunpack.c.h.b16 %v658
        %v2329 = vunpack.c.l.b16 %v659
        %v2330 = vunpack.c.h.b16 %v659
        %v2331 = vunpack.c.l.b16 %v660
        %v2332 = vunpack.c.h.b16 %v660
        %v2333 = vunpack.c.l.b16 %v661
        %v2334 = vunpack.c.h.b16 %v661
        %v2335 = vunpack.c.l.b16 %v662
        %v2336 = vunpack.c.h.b16 %v662
        %v2337 = vunpack.c.l.b16 %v663
        %v2338 = vunpack.c.h.b16 %v663
        %v2339 = vunpack.c.l.b16 %v664
        %v2340 = vunpack.c.h.b16 %v664
        %v2341 = vunpack.c.l.b16 %v665
        %v2342 = vunpack.c.h.b16 %v665
        %v2343 = vunpack.c.l.b16 %v666
        %v2344 = vunpack.c.h.b16 %v666
        %v2345 = vunpack.c.l.b16 %v667
        %v2346 = vunpack.c.h.b16 %v667
        %v2347 = vunpack.c.l.b16 %v668
        %v2348 = vunpack.c.h.b16 %v668
        %v2349 = vunpack.c.l.b16 %v669
        %v2350 = vunpack.c.h.b16 %v669
        %v2351 = vunpack.c.l.b16 %v670
        %v2352 = vunpack.c.h.b16 %v670
        %v2353 = vunpack.c.l.b16 %v671
        %v2354 = vunpack.c.h.b16 %v671
        %v2355 = vunpack.c.l.b16 %v672
        %v2356 = vunpack.c.h.b16 %v672
        %v2357 = vunpack.c.l.b16 %v673
        %v2358 = vunpack.c.h.b16 %v673
        %v2359 = vunpack.c.l.b16 %v674
        %v2360 = vunpack.c.h.b16 %v674
        %v2361 = vunpack.c.l.b16 %v675
        %v2362 = vunpack.c.h.b16 %v675
        %v2363 = vunpack.c.l.b16 %v676
        %v2364 = vunpack.c.h.b16 %v676
        %v2365 = vunpack.c.l.b16 %v677
        %v2366 = vunpack.c.h.b16 %v677
        %v2367 = vunpack.c.l.b16 %v678
        %v2368 = vunpack.c.h.b16 %v678
        %v2369 = vunpack.c.l.b16 %v679
        %v2370 = vunpack.c.h.b16 %v679
        %v2371 = vunpack.c.l.b16 %v680
        %v2372 = vunpack.c.h.b16 %v680
        %v2373 = vunpack.c.l.b16 %v681
        %v2374 = vunpack.c.h.b16 %v681
        %v2375 = vunpack.c.l.b16 %v682
        %v2376 = vunpack.c.h.b16 %v682
        %v2377 = vunpack.c.l.b16 %v683
        %v2378 = vunpack.c.h.b16 %v683
        %v2379 = vunpack.c.l.b16 %v684
        %v2380 = vunpack.c.h.b16 %v684
        %v2381 = vunpack.c.l.b16 %v685
        %v2382 = vunpack.c.h.b16 %v685
        %v2383 = vunpack.c.l.b16 %v686
        %v2384 = vunpack.c.h.b16 %v686
        %v2385 = vunpack.c.l.b16 %v687
        %v2386 = vunpack.c.h.b16 %v687
        %v2387 = vunpack.c.l.b16 %v688
        %v2388 = vunpack.c.h.b16 %v688
        %v2389 = vunpack.c.l.b16 %v689
        %v2390 = vunpack.c.h.b16 %v689
        %v2391 = vunpack.c.l.b16 %v690
        %v2392 = vunpack.c.h.b16 %v690
        %v2393 = vunpack.c.l.b16 %v691
        %v2394 = vunpack.c.h.b16 %v691
        %v2395 = vunpack.c.l.b16 %v692
        %v2396 = vunpack.c.h.b16 %v692
        %v2397 = vunpack.c.l.b16 %v693
        %v2398 = vunpack.c.h.b16 %v693
        %v2399 = vunpack.c.l.b16 %v694
        %v2400 = vunpack.c.h.b16 %v694
        %v2401 = vunpack.c.l.b16 %v695
        %v2402 = vunpack.c.h.b16 %v695
        %v2403 = vunpack.c.l.b16 %v696
        %v2404 = vunpack.c.h.b16 %v696
        %v2405 = vunpack.c.l.b16 %v697
        %v2406 = vunpack.c.h.b16 %v697
        %v2407 = vunpack.c.l.b16 %v698
        %v2408 = vunpack.c.h.b16 %v698
        %v2409 = vunpack.c.l.b16 %v699
        %v2410 = vunpack.c.h.b16 %v699
        %v2411 = vunpack.c.l.b16 %v700
        %v2412 = vunpack.c.h.b16 %v700
        %v2413 = vunpack.c.l.b16 %v701
        %v2414 = vunpack.c.h.b16 %v701
        %v2415 = vunpack.c.l.b16 %v702
        %v2416 = vunpack.c.h.b16 %v702
        %v2417 = vunpack.c.l.b16 %v703
        %v2418 = vunpack.c.h.b16 %v703
        %v2419 = vunpack.c.l.b16 %v704
        %v2420 = vunpack.c.h.b16 %v704
        %v2421 = vunpack.c.l.b16 %v705
        %v2422 = vunpack.c.h.b16 %v705
        %v2423 = vunpack.c.l.b16 %v706
        %v2424 = vunpack.c.h.b16 %v706
        %v2425 = vunpack.c.l.b16 %v707
        %v2426 = vunpack.c.h.b16 %v707
        %v2427 = vunpack.c.l.b16 %v708
        %v2428 = vunpack.c.h.b16 %v708
        %v2429 = vunpack.c.l.b16 %v709
        %v2430 = vunpack.c.h.b16 %v709
        %v2431 = vunpack.c.l.b16 %v710
        %v2432 = vunpack.c.h.b16 %v710
        %v2433 = vunpack.c.l.b16 %v711
        %v2434 = vunpack.c.h.b16 %v711
        %v2435 = vunpack.c.l.b16 %v712
        %v2436 = vunpack.c.h.b16 %v712
        %v2437 = vunpack.c.l.b16 %v713
        %v2438 = vunpack.c.h.b16 %v713
        %v2439 = vunpack.c.l.b16 %v714
        %v2440 = vunpack.c.h.b16 %v714
        %v2441 = vunpack.c.l.b16 %v715
        %v2442 = vunpack.c.h.b16 %v715
        %v2443 = vunpack.c.l.b16 %v716
        %v2444 = vunpack.c.h.b16 %v716
        %v2445 = vunpack.c.l.b16 %v717
        %v2446 = vunpack.c.h.b16 %v717
        %v2447 = vunpack.c.l.b16 %v718
        %v2448 = vunpack.c.h.b16 %v718
        %v2449 = vunpack.c.l.b16 %v719
        %v2450 = vunpack.c.h.b16 %v719
        %v2451 = vunpack.c.l.b16 %v720
        %v2452 = vunpack.c.h.b16 %v720
        %v2453 = vunpack.c.l.b16 %v721
        %v2454 = vunpack.c.h.b16 %v721
        %v2455 = vunpack.c.l.b16 %v722
        %v2456 = vunpack.c.h.b16 %v722
        %v2457 = vunpack.c.l.b16 %v723
        %v2458 = vunpack.c.h.b16 %v723
        %v2459 = vunpack.c.l.b16 %v724
        %v2460 = vunpack.c.h.b16 %v724
        %v2461 = vunpack.c.l.b16 %v725
        %v2462 = vunpack.c.h.b16 %v725
        %v2463 = vunpack.c.l.b16 %v726
        %v2464 = vunpack.c.h.b16 %v726
        %v2465 = vunpack.c.l.b16 %v727
        %v2466 = vunpack.c.h.b16 %v727
        %v2467 = vunpack.c.l.b16 %v728
        %v2468 = vunpack.c.h.b16 %v728
        %v2469 = vunpack.c.l.b16 %v729
        %v2470 = vunpack.c.h.b16 %v729
        %v2471 = vunpack.c.l.b16 %v730
        %v2472 = vunpack.c.h.b16 %v730
        %v2473 = vunpack.c.l.b16 %v731
        %v2474 = vunpack.c.h.b16 %v731
        %v2475 = vunpack.c.l.b16 %v732
        %v2476 = vunpack.c.h.b16 %v732
        %v2477 = vunpack.c.l.b16 %v733
        %v2478 = vunpack.c.h.b16 %v733
        %v2479 = vunpack.c.l.b16 %v734
        %v2480 = vunpack.c.h.b16 %v734
        %v2481 = vunpack.c.l.b16 %v735
        %v2482 = vunpack.c.h.b16 %v735
        %v2483 = vunpack.c.l.b16 %v736
        %v2484 = vunpack.c.h.b16 %v736
        %v2485 = vunpack.c.l.b16 %v737
        %v2486 = vunpack.c.h.b16 %v737
        %v2487 = vunpack.c.l.b16 %v738
        %v2488 = vunpack.c.h.b16 %v738
        %v2489 = vunpack.c.l.b16 %v739
        %v2490 = vunpack.c.h.b16 %v739
        %v2491 = vunpack.c.l.b16 %v740
        %v2492 = vunpack.c.h.b16 %v740
        %v2493 = vunpack.c.l.b16 %v741
        %v2494 = vunpack.c.h.b16 %v741
        %v2495 = vunpack.c.l.b16 %v742
        %v2496 = vunpack.c.h.b16 %v742
        %v2497 = vunpack.c.l.b16 %v743
        %v2498 = vunpack.c.h.b16 %v743
        %v2499 = vunpack.c.l.b16 %v744
        %v2500 = vunpack.c.h.b16 %v744
        %v2501 = vunpack.c.l.b16 %v745
        %v2502 = vunpack.c.h.b16 %v745
        %v2503 = vunpack.c.l.b16 %v746
        %v2504 = vunpack.c.h.b16 %v746
        %v2505 = vunpack.c.l.b16 %v747
        %v2506 = vunpack.c.h.b16 %v747
        %v2507 = vunpack.c.l.b16 %v748
        %v2508 = vunpack.c.h.b16 %v748
        %v2509 = vunpack.c.l.b16 %v749
        %v2510 = vunpack.c.h.b16 %v749
        %v2511 = vunpack.c.l.b16 %v750
        %v2512 = vunpack.c.h.b16 %v750
        %v2513 = vunpack.c.l.b16 %v751
        %v2514 = vunpack.c.h.b16 %v751
        %v2515 = vunpack.c.l.b16 %v752
        %v2516 = vunpack.c.h.b16 %v752
        %v2517 = vunpack.c.l.b16 %v753
        %v2518 = vunpack.c.h.b16 %v753
        %v2519 = vunpack.c.l.b16 %v754
        %v2520 = vunpack.c.h.b16 %v754
        %v2521 = vunpack.c.l.b16 %v755
        %v2522 = vunpack.c.h.b16 %v755
        %v2523 = vunpack.c.l.b16 %v756
        %v2524 = vunpack.c.h.b16 %v756
        %v2525 = vpack.c.b16 %v1503, %v1501
        %v2526 = vpack.c.b16 %v1504, %v1502
        %v2527 = vpack.c.b16 %v1507, %v1505
        %v2528 = vpack.c.b16 %v1508, %v1506
        %v2529 = vpack.c.b16 %v1511, %v1509
        %v2530 = vpack.c.b16 %v1512, %v1510
        %v2531 = vpack.c.b16 %v1515, %v1513
        %v2532 = vpack.c.b16 %v1516, %v1514
        %v2533 = vpack.c.b16 %v1519, %v1517
        %v2534 = vpack.c.b16 %v1520, %v1518
        %v2535 = vpack.c.b16 %v1523, %v1521
        %v2536 = vpack.c.b16 %v1524, %v1522
        %v2537 = vpack.c.b16 %v1527, %v1525
        %v2538 = vpack.c.b16 %v1528, %v1526
        %v2539 = vpack.c.b16 %v1531, %v1529
        %v2540 = vpack.c.b16 %v1532, %v1530
        %v2541 = vpack.c.b16 %v1535, %v1533
        %v2542 = vpack.c.b16 %v1536, %v1534
        %v2543 = vpack.c.b16 %v1539, %v1537
        %v2544 = vpack.c.b16 %v1540, %v1538
        %v2545 = vpack.c.b16 %v1543, %v1541
        %v2546 = vpack.c.b16 %v1544, %v1542
        %v2547 = vpack.c.b16 %v1547, %v1545
        %v2548 = vpack.c.b16 %v1548, %v1546
        %v2549 = vpack.c.b16 %v1551, %v1549
        %v2550 = vpack.c.b16 %v1552, %v1550
        %v2551 = vpack.c.b16 %v1555, %v1553
        %v2552 = vpack.c.b16 %v1556, %v1554
        %v2553 = vpack.c.b16 %v1559, %v1557
        %v2554 = vpack.c.b16 %v1560, %v1558
        %v2555 = vpack.c.b16 %v1563, %v1561
        %v2556 = vpack.c.b16 %v1564, %v1562
        %v2557 = vpack.c.b16 %v1567, %v1565
        %v2558 = vpack.c.b16 %v1568, %v1566
        %v2559 = vpack.c.b16 %v1571, %v1569
        %v2560 = vpack.c.b16 %v1572, %v1570
        %v2561 = vpack.c.b16 %v1575, %v1573
        %v2562 = vpack.c.b16 %v1576, %v1574
        %v2563 = vpack.c.b16 %v1579, %v1577
        %v2564 = vpack.c.b16 %v1580, %v1578
        %v2565 = vpack.c.b16 %v1583, %v1581
        %v2566 = vpack.c.b16 %v1584, %v1582
        %v2567 = vpack.c.b16 %v1587, %v1585
        %v2568 = vpack.c.b16 %v1588, %v1586
        %v2569 = vpack.c.b16 %v1591, %v1589
        %v2570 = vpack.c.b16 %v1592, %v1590
        %v2571 = vpack.c.b16 %v1595, %v1593
        %v2572 = vpack.c.b16 %v1596, %v1594
        %v2573 = vpack.c.b16 %v1599, %v1597
        %v2574 = vpack.c.b16 %v1600, %v1598
        %v2575 = vpack.c.b16 %v1603, %v1601
        %v2576 = vpack.c.b16 %v1604, %v1602
        %v2577 = vpack.c.b16 %v1607, %v1605
        %v2578 = vpack.c.b16 %v1608, %v1606
        %v2579 = vpack.c.b16 %v1611, %v1609
        %v2580 = vpack.c.b16 %v1612, %v1610
        %v2581 = vpack.c.b16 %v1615, %v1613
        %v2582 = vpack.c.b16 %v1616, %v1614
        %v2583 = vpack.c.b16 %v1619, %v1617
        %v2584 = vpack.c.b16 %v1620, %v1618
        %v2585 = vpack.c.b16 %v1623, %v1621
        %v2586 = vpack.c.b16 %v1624, %v1622
        %v2587 = vpack.c.b16 %v1627, %v1625
        %v2588 = vpack.c.b16 %v1628, %v1626
        %v2589 = vpack.c.b16 %v1631, %v1629
        %v2590 = vpack.c.b16 %v1632, %v1630
        %v2591 = vpack.c.b16 %v1635, %v1633
        %v2592 = vpack.c.b16 %v1636, %v1634
        %v2593 = vpack.c.b16 %v1639, %v1637
        %v2594 = vpack.c.b16 %v1640, %v1638
        %v2595 = vpack.c.b16 %v1643, %v1641
        %v2596 = vpack.c.b16 %v1644, %v1642
        %v2597 = vpack.c.b16 %v1647, %v1645
        %v2598 = vpack.c.b16 %v1648, %v1646
        %v2599 = vpack.c.b16 %v1651, %v1649
        %v2600 = vpack.c.b16 %v1652, %v1650
        %v2601 = vpack.c.b16 %v1655, %v1653
        %v2602 = vpack.c.b16 %v1656, %v1654
        %v2603 = vpack.c.b16 %v1659, %v1657
        %v2604 = vpack.c.b16 %v1660, %v1658
        %v2605 = vpack.c.b16 %v1663, %v1661
        %v2606 = vpack.c.b16 %v1664, %v1662
        %v2607 = vpack.c.b16 %v1667, %v1665
        %v2608 = vpack.c.b16 %v1668, %v1666
        %v2609 = vpack.c.b16 %v1671, %v1669
        %v2610 = vpack.c.b16 %v1672, %v1670
        %v2611 = vpack.c.b16 %v1675, %v1673
        %v2612 = vpack.c.b16 %v1676, %v1674
        %v2613 = vpack.c.b16 %v1679, %v1677
        %v2614 = vpack.c.b16 %v1680, %v1678
        %v2615 = vpack.c.b16 %v1683, %v1681
        %v2616 = vpack.c.b16 %v1684, %v1682
        %v2617 = vpack.c.b16 %v1687, %v1685
        %v2618 = vpack.c.b16 %v1688, %v1686
        %v2619 = vpack.c.b16 %v1691, %v1689
        %v2620 = vpack.c.b16 %v1692, %v1690
        %v2621 = vpack.c.b16 %v1695, %v1693
        %v2622 = vpack.c.b16 %v1696, %v1694
        %v2623 = vpack.c.b16 %v1699, %v1697
        %v2624 = vpack.c.b16 %v1700, %v1698
        %v2625 = vpack.c.b16 %v1703, %v1701
        %v2626 = vpack.c.b16 %v1704, %v1702
        %v2627 = vpack.c.b16 %v1707, %v1705
        %v2628 = vpack.c.b16 %v1708, %v1706
        %v2629 = vpack.c.b16 %v1711, %v1709
        %v2630 = vpack.c.b16 %v1712, %v1710
        %v2631 = vpack.c.b16 %v1715, %v1713
        %v2632 = vpack.c.b16 %v1716, %v1714
        %v2633 = vpack.c.b16 %v1719, %v1717
        %v2634 = vpack.c.b16 %v1720, %v1718
        %v2635 = vpack.c.b16 %v1723, %v1721
        %v2636 = vpack.c.b16 %v1724, %v1722
        %v2637 = vpack.c.b16 %v1727, %v1725
        %v2638 = vpack.c.b16 %v1728, %v1726
        %v2639 = vpack.c.b16 %v1731, %v1729
        %v2640 = vpack.c.b16 %v1732, %v1730
        %v2641 = vpack.c.b16 %v1735, %v1733
        %v2642 = vpack.c.b16 %v1736, %v1734
        %v2643 = vpack.c.b16 %v1739, %v1737
        %v2644 = vpack.c.b16 %v1740, %v1738
        %v2645 = vpack.c.b16 %v1743, %v1741
        %v2646 = vpack.c.b16 %v1744, %v1742
        %v2647 = vpack.c.b16 %v1747, %v1745
        %v2648 = vpack.c.b16 %v1748, %v1746
        %v2649 = vpack.c.b16 %v1751, %v1749
        %v2650 = vpack.c.b16 %v1752, %v1750
        %v2651 = vpack.c.b16 %v1755, %v1753
        %v2652 = vpack.c.b16 %v1756, %v1754
        %v2653 = vpack.c.b16 %v1759, %v1757
        %v2654 = vpack.c.b16 %v1760, %v1758
        %v2655 = vpack.c.b16 %v1763, %v1761
        %v2656 = vpack.c.b16 %v1764, %v1762
        %v2657 = vpack.c.b16 %v1767, %v1765
        %v2658 = vpack.c.b16 %v1768, %v1766
        %v2659 = vpack.c.b16 %v1771, %v1769
        %v2660 = vpack.c.b16 %v1772, %v1770
        %v2661 = vpack.c.b16 %v1775, %v1773
        %v2662 = vpack.c.b16 %v1776, %v1774
        %v2663 = vpack.c.b16 %v1779, %v1777
        %v2664 = vpack.c.b16 %v1780, %v1778
        %v2665 = vpack.c.b16 %v1783, %v1781
        %v2666 = vpack.c.b16 %v1784, %v1782
        %v2667 = vpack.c.b16 %v1787, %v1785
        %v2668 = vpack.c.b16 %v1788, %v1786
        %v2669 = vpack.c.b16 %v1791, %v1789
        %v2670 = vpack.c.b16 %v1792, %v1790
        %v2671 = vpack.c.b16 %v1795, %v1793
        %v2672 = vpack.c.b16 %v1796, %v1794
        %v2673 = vpack.c.b16 %v1799, %v1797
        %v2674 = vpack.c.b16 %v1800, %v1798
        %v2675 = vpack.c.b16 %v1803, %v1801
        %v2676 = vpack.c.b16 %v1804, %v1802
        %v2677 = vpack.c.b16 %v1807, %v1805
        %v2678 = vpack.c.b16 %v1808, %v1806
        %v2679 = vpack.c.b16 %v1811, %v1809
        %v2680 = vpack.c.b16 %v1812, %v1810
        %v2681 = vpack.c.b16 %v1815, %v1813
        %v2682 = vpack.c.b16 %v1816, %v1814
        %v2683 = vpack.c.b16 %v1819, %v1817
        %v2684 = vpack.c.b16 %v1820, %v1818
        %v2685 = vpack.c.b16 %v1823, %v1821
        %v2686 = vpack.c.b16 %v1824, %v1822
        %v2687 = vpack.c.b16 %v1827, %v1825
        %v2688 = vpack.c.b16 %v1828, %v1826
        %v2689 = vpack.c.b16 %v1831, %v1829
        %v2690 = vpack.c.b16 %v1832, %v1830
        %v2691 = vpack.c.b16 %v1835, %v1833
        %v2692 = vpack.c.b16 %v1836, %v1834
        %v2693 = vpack.c.b16 %v1839, %v1837
        %v2694 = vpack.c.b16 %v1840, %v1838
        %v2695 = vpack.c.b16 %v1843, %v1841
        %v2696 = vpack.c.b16 %v1844, %v1842
        %v2697 = vpack.c.b16 %v1847, %v1845
        %v2698 = vpack.c.b16 %v1848, %v1846
        %v2699 = vpack.c.b16 %v1851, %v1849
        %v2700 = vpack.c.b16 %v1852, %v1850
        %v2701 = vpack.c.b16 %v1855, %v1853
        %v2702 = vpack.c.b16 %v1856, %v1854
        %v2703 = vpack.c.b16 %v1859, %v1857
        %v2704 = vpack.c.b16 %v1860, %v1858
        %v2705 = vpack.c.b16 %v1863, %v1861
        %v2706 = vpack.c.b16 %v1864, %v1862
        %v2707 = vpack.c.b16 %v1867, %v1865
        %v2708 = vpack.c.b16 %v1868, %v1866
        %v2709 = vpack.c.b16 %v1871, %v1869
        %v2710 = vpack.c.b16 %v1872, %v1870
        %v2711 = vpack.c.b16 %v1875, %v1873
        %v2712 = vpack.c.b16 %v1876, %v1874
        %v2713 = vpack.c.b16 %v1879, %v1877
        %v2714 = vpack.c.b16 %v1880, %v1878
        %v2715 = vpack.c.b16 %v1883, %v1881
        %v2716 = vpack.c.b16 %v1884, %v1882
        %v2717 = vpack.c.b16 %v1887, %v1885
        %v2718 = vpack.c.b16 %v1888, %v1886
        %v2719 = vpack.c.b16 %v1891, %v1889
        %v2720 = vpack.c.b16 %v1892, %v1890
        %v2721 = vpack.c.b16 %v1895, %v1893
        %v2722 = vpack.c.b16 %v1896, %v1894
        %v2723 = vpack.c.b16 %v1899, %v1897
        %v2724 = vpack.c.b16 %v1900, %v1898
        %v2725 = vpack.c.b16 %v1903, %v1901
        %v2726 = vpack.c.b16 %v1904, %v1902
        %v2727 = vpack.c.b16 %v1907, %v1905
        %v2728 = vpack.c.b16 %v1908, %v1906
        %v2729 = vpack.c.b16 %v1911, %v1909
        %v2730 = vpack.c.b16 %v1912, %v1910
        %v2731 = vpack.c.b16 %v1915, %v1913
        %v2732 = vpack.c.b16 %v1916, %v1914
        %v2733 = vpack.c.b16 %v1919, %v1917
        %v2734 = vpack.c.b16 %v1920, %v1918
        %v2735 = vpack.c.b16 %v1923, %v1921
        %v2736 = vpack.c.b16 %v1924, %v1922
        %v2737 = vpack.c.b16 %v1927, %v1925
        %v2738 = vpack.c.b16 %v1928, %v1926
        %v2739 = vpack.c.b16 %v1931, %v1929
        %v2740 = vpack.c.b16 %v1932, %v1930
        %v2741 = vpack.c.b16 %v1935, %v1933
        %v2742 = vpack.c.b16 %v1936, %v1934
        %v2743 = vpack.c.b16 %v1939, %v1937
        %v2744 = vpack.c.b16 %v1940, %v1938
        %v2745 = vpack.c.b16 %v1943, %v1941
        %v2746 = vpack.c.b16 %v1944, %v1942
        %v2747 = vpack.c.b16 %v1947, %v1945
        %v2748 = vpack.c.b16 %v1948, %v1946
        %v2749 = vpack.c.b16 %v1951, %v1949
        %v2750 = vpack.c.b16 %v1952, %v1950
        %v2751 = vpack.c.b16 %v1955, %v1953
        %v2752 = vpack.c.b16 %v1956, %v1954
        %v2753 = vpack.c.b16 %v1959, %v1957
        %v2754 = vpack.c.b16 %v1960, %v1958
        %v2755 = vpack.c.b16 %v1963, %v1961
        %v2756 = vpack.c.b16 %v1964, %v1962
        %v2757 = vpack.c.b16 %v1967, %v1965
        %v2758 = vpack.c.b16 %v1968, %v1966
        %v2759 = vpack.c.b16 %v1971, %v1969
        %v2760 = vpack.c.b16 %v1972, %v1970
        %v2761 = vpack.c.b16 %v1975, %v1973
        %v2762 = vpack.c.b16 %v1976, %v1974
        %v2763 = vpack.c.b16 %v1979, %v1977
        %v2764 = vpack.c.b16 %v1980, %v1978
        %v2765 = vpack.c.b16 %v1983, %v1981
        %v2766 = vpack.c.b16 %v1984, %v1982
        %v2767 = vpack.c.b16 %v1987, %v1985
        %v2768 = vpack.c.b16 %v1988, %v1986
        %v2769 = vpack.c.b16 %v1991, %v1989
        %v2770 = vpack.c.b16 %v1992, %v1990
        %v2771 = vpack.c.b16 %v1995, %v1993
        %v2772 = vpack.c.b16 %v1996, %v1994
        %v2773 = vpack.c.b16 %v1999, %v1997
        %v2774 = vpack.c.b16 %v2000, %v1998
        %v2775 = vpack.c.b16 %v2003, %v2001
        %v2776 = vpack.c.b16 %v2004, %v2002
        %v2777 = vpack.c.b16 %v2007, %v2005
        %v2778 = vpack.c.b16 %v2008, %v2006
        %v2779 = vpack.c.b16 %v2011, %v2009
        %v2780 = vpack.c.b16 %v2012, %v2010
        %v2781 = vpack.c.b16 %v2015, %v2013
        %v2782 = vpack.c.b16 %v2016, %v2014
        %v2783 = vpack.c.b16 %v2019, %v2017
        %v2784 = vpack.c.b16 %v2020, %v2018
        %v2785 = vpack.c.b16 %v2023, %v2021
        %v2786 = vpack.c.b16 %v2024, %v2022
        %v2787 = vpack.c.b16 %v2027, %v2025
        %v2788 = vpack.c.b16 %v2028, %v2026
        %v2789 = vpack.c.b16 %v2031, %v2029
        %v2790 = vpack.c.b16 %v2032, %v2030
        %v2791 = vpack.c.b16 %v2035, %v2033
        %v2792 = vpack.c.b16 %v2036, %v2034
        %v2793 = vpack.c.b16 %v2039, %v2037
        %v2794 = vpack.c.b16 %v2040, %v2038
        %v2795 = vpack.c.b16 %v2043, %v2041
        %v2796 = vpack.c.b16 %v2044, %v2042
        %v2797 = vpack.c.b16 %v2047, %v2045
        %v2798 = vpack.c.b16 %v2048, %v2046
        %v2799 = vpack.c.b16 %v2051, %v2049
        %v2800 = vpack.c.b16 %v2052, %v2050
        %v2801 = vpack.c.b16 %v2055, %v2053
        %v2802 = vpack.c.b16 %v2056, %v2054
        %v2803 = vpack.c.b16 %v2059, %v2057
        %v2804 = vpack.c.b16 %v2060, %v2058
        %v2805 = vpack.c.b16 %v2063, %v2061
        %v2806 = vpack.c.b16 %v2064, %v2062
        %v2807 = vpack.c.b16 %v2067, %v2065
        %v2808 = vpack.c.b16 %v2068, %v2066
        %v2809 = vpack.c.b16 %v2071, %v2069
        %v2810 = vpack.c.b16 %v2072, %v2070
        %v2811 = vpack.c.b16 %v2075, %v2073
        %v2812 = vpack.c.b16 %v2076, %v2074
        %v2813 = vpack.c.b16 %v2079, %v2077
        %v2814 = vpack.c.b16 %v2080, %v2078
        %v2815 = vpack.c.b16 %v2083, %v2081
        %v2816 = vpack.c.b16 %v2084, %v2082
        %v2817 = vpack.c.b16 %v2087, %v2085
        %v2818 = vpack.c.b16 %v2088, %v2086
        %v2819 = vpack.c.b16 %v2091, %v2089
        %v2820 = vpack.c.b16 %v2092, %v2090
        %v2821 = vpack.c.b16 %v2095, %v2093
        %v2822 = vpack.c.b16 %v2096, %v2094
        %v2823 = vpack.c.b16 %v2099, %v2097
        %v2824 = vpack.c.b16 %v2100, %v2098
        %v2825 = vpack.c.b16 %v2103, %v2101
        %v2826 = vpack.c.b16 %v2104, %v2102
        %v2827 = vpack.c.b16 %v2107, %v2105
        %v2828 = vpack.c.b16 %v2108, %v2106
        %v2829 = vpack.c.b16 %v2111, %v2109
        %v2830 = vpack.c.b16 %v2112, %v2110
        %v2831 = vpack.c.b16 %v2115, %v2113
        %v2832 = vpack.c.b16 %v2116, %v2114
        %v2833 = vpack.c.b16 %v2119, %v2117
        %v2834 = vpack.c.b16 %v2120, %v2118
        %v2835 = vpack.c.b16 %v2123, %v2121
        %v2836 = vpack.c.b16 %v2124, %v2122
        %v2837 = vpack.c.b16 %v2127, %v2125
        %v2838 = vpack.c.b16 %v2128, %v2126
        %v2839 = vpack.c.b16 %v2131, %v2129
        %v2840 = vpack.c.b16 %v2132, %v2130
        %v2841 = vpack.c.b16 %v2135, %v2133
        %v2842 = vpack.c.b16 %v2136, %v2134
        %v2843 = vpack.c.b16 %v2139, %v2137
        %v2844 = vpack.c.b16 %v2140, %v2138
        %v2845 = vpack.c.b16 %v2143, %v2141
        %v2846 = vpack.c.b16 %v2144, %v2142
        %v2847 = vpack.c.b16 %v2147, %v2145
        %v2848 = vpack.c.b16 %v2148, %v2146
        %v2849 = vpack.c.b16 %v2151, %v2149
        %v2850 = vpack.c.b16 %v2152, %v2150
        %v2851 = vpack.c.b16 %v2155, %v2153
        %v2852 = vpack.c.b16 %v2156, %v2154
        %v2853 = vpack.c.b16 %v2159, %v2157
        %v2854 = vpack.c.b16 %v2160, %v2158
        %v2855 = vpack.c.b16 %v2163, %v2161
        %v2856 = vpack.c.b16 %v2164, %v2162
        %v2857 = vpack.c.b16 %v2167, %v2165
        %v2858 = vpack.c.b16 %v2168, %v2166
        %v2859 = vpack.c.b16 %v2171, %v2169
        %v2860 = vpack.c.b16 %v2172, %v2170
        %v2861 = vpack.c.b16 %v2175, %v2173
        %v2862 = vpack.c.b16 %v2176, %v2174
        %v2863 = vpack.c.b16 %v2179, %v2177
        %v2864 = vpack.c.b16 %v2180, %v2178
        %v2865 = vpack.c.b16 %v2183, %v2181
        %v2866 = vpack.c.b16 %v2184, %v2182
        %v2867 = vpack.c.b16 %v2187, %v2185
        %v2868 = vpack.c.b16 %v2188, %v2186
        %v2869 = vpack.c.b16 %v2191, %v2189
        %v2870 = vpack.c.b16 %v2192, %v2190
        %v2871 = vpack.c.b16 %v2195, %v2193
        %v2872 = vpack.c.b16 %v2196, %v2194
        %v2873 = vpack.c.b16 %v2199, %v2197
        %v2874 = vpack.c.b16 %v2200, %v2198
        %v2875 = vpack.c.b16 %v2203, %v2201
        %v2876 = vpack.c.b16 %v2204, %v2202
        %v2877 = vpack.c.b16 %v2207, %v2205
        %v2878 = vpack.c.b16 %v2208, %v2206
        %v2879 = vpack.c.b16 %v2211, %v2209
        %v2880 = vpack.c.b16 %v2212, %v2210
        %v2881 = vpack.c.b16 %v2215, %v2213
        %v2882 = vpack.c.b16 %v2216, %v2214
        %v2883 = vpack.c.b16 %v2219, %v2217
        %v2884 = vpack.c.b16 %v2220, %v2218
        %v2885 = vpack.c.b16 %v2223, %v2221
        %v2886 = vpack.c.b16 %v2224, %v2222
        %v2887 = vpack.c.b16 %v2227, %v2225
        %v2888 = vpack.c.b16 %v2228, %v2226
        %v2889 = vpack.c.b16 %v2231, %v2229
        %v2890 = vpack.c.b16 %v2232, %v2230
        %v2891 = vpack.c.b16 %v2235, %v2233
        %v2892 = vpack.c.b16 %v2236, %v2234
        %v2893 = vpack.c.b16 %v2239, %v2237
        %v2894 = vpack.c.b16 %v2240, %v2238
        %v2895 = vpack.c.b16 %v2243, %v2241
        %v2896 = vpack.c.b16 %v2244, %v2242
        %v2897 = vpack.c.b16 %v2247, %v2245
        %v2898 = vpack.c.b16 %v2248, %v2246
        %v2899 = vpack.c.b16 %v2251, %v2249
        %v2900 = vpack.c.b16 %v2252, %v2250
        %v2901 = vpack.c.b16 %v2255, %v2253
        %v2902 = vpack.c.b16 %v2256, %v2254
        %v2903 = vpack.c.b16 %v2259, %v2257
        %v2904 = vpack.c.b16 %v2260, %v2258
        %v2905 = vpack.c.b16 %v2263, %v2261
        %v2906 = vpack.c.b16 %v2264, %v2262
        %v2907 = vpack.c.b16 %v2267, %v2265
        %v2908 = vpack.c.b16 %v2268, %v2266
        %v2909 = vpack.c.b16 %v2271, %v2269
        %v2910 = vpack.c.b16 %v2272, %v2270
        %v2911 = vpack.c.b16 %v2275, %v2273
        %v2912 = vpack.c.b16 %v2276, %v2274
        %v2913 = vpack.c.b16 %v2279, %v2277
        %v2914 = vpack.c.b16 %v2280, %v2278
        %v2915 = vpack.c.b16 %v2283, %v2281
        %v2916 = vpack.c.b16 %v2284, %v2282
        %v2917 = vpack.c.b16 %v2287, %v2285
        %v2918 = vpack.c.b16 %v2288, %v2286
        %v2919 = vpack.c.b16 %v2291, %v2289
        %v2920 = vpack.c.b16 %v2292, %v2290
        %v2921 = vpack.c.b16 %v2295, %v2293
        %v2922 = vpack.c.b16 %v2296, %v2294
        %v2923 = vpack.c.b16 %v2299, %v2297
        %v2924 = vpack.c.b16 %v2300, %v2298
        %v2925 = vpack.c.b16 %v2303, %v2301
        %v2926 = vpack.c.b16 %v2304, %v2302
        %v2927 = vpack.c.b16 %v2307, %v2305
        %v2928 = vpack.c.b16 %v2308, %v2306
        %v2929 = vpack.c.b16 %v2311, %v2309
        %v2930 = vpack.c.b16 %v2312, %v2310
        %v2931 = vpack.c.b16 %v2315, %v2313
        %v2932 = vpack.c.b16 %v2316, %v2314
        %v2933 = vpack.c.b16 %v2319, %v2317
        %v2934 = vpack.c.b16 %v2320, %v2318
        %v2935 = vpack.c.b16 %v2323, %v2321
        %v2936 = vpack.c.b16 %v2324, %v2322
        %v2937 = vpack.c.b16 %v2327, %v2325
        %v2938 = vpack.c.b16 %v2328, %v2326
        %v2939 = vpack.c.b16 %v2331, %v2329
        %v2940 = vpack.c.b16 %v2332, %v2330
        %v2941 = vpack.c.b16 %v2335, %v2333
        %v2942 = vpack.c.b16 %v2336, %v2334
        %v2943 = vpack.c.b16 %v2339, %v2337
        %v2944 = vpack.c.b16 %v2340, %v2338
        %v2945 = vpack.c.b16 %v2343, %v2341
        %v2946 = vpack.c.b16 %v2344, %v2342
        %v2947 = vpack.c.b16 %v2347, %v2345
        %v2948 = vpack.c.b16 %v2348, %v2346
        %v2949 = vpack.c.b16 %v2351, %v2349
        %v2950 = vpack.c.b16 %v2352, %v2350
        %v2951 = vpack.c.b16 %v2355, %v2353
        %v2952 = vpack.c.b16 %v2356, %v2354
        %v2953 = vpack.c.b16 %v2359, %v2357
        %v2954 = vpack.c.b16 %v2360, %v2358
        %v2955 = vpack.c.b16 %v2363, %v2361
        %v2956 = vpack.c.b16 %v2364, %v2362
        %v2957 = vpack.c.b16 %v2367, %v2365
        %v2958 = vpack.c.b16 %v2368, %v2366
        %v2959 = vpack.c.b16 %v2371, %v2369
        %v2960 = vpack.c.b16 %v2372, %v2370
        %v2961 = vpack.c.b16 %v2375, %v2373
        %v2962 = vpack.c.b16 %v2376, %v2374
        %v2963 = vpack.c.b16 %v2379, %v2377
        %v2964 = vpack.c.b16 %v2380, %v2378
        %v2965 = vpack.c.b16 %v2383, %v2381
        %v2966 = vpack.c.b16 %v2384, %v2382
        %v2967 = vpack.c.b16 %v2387, %v2385
        %v2968 = vpack.c.b16 %v2388, %v2386
        %v2969 = vpack.c.b16 %v2391, %v2389
        %v2970 = vpack.c.b16 %v2392, %v2390
        %v2971 = vpack.c.b16 %v2395, %v2393
        %v2972 = vpack.c.b16 %v2396, %v2394
        %v2973 = vpack.c.b16 %v2399, %v2397
        %v2974 = vpack.c.b16 %v2400, %v2398
        %v2975 = vpack.c.b16 %v2403, %v2401
        %v2976 = vpack.c.b16 %v2404, %v2402
        %v2977 = vpack.c.b16 %v2407, %v2405
        %v2978 = vpack.c.b16 %v2408, %v2406
        %v2979 = vpack.c.b16 %v2411, %v2409
        %v2980 = vpack.c.b16 %v2412, %v2410
        %v2981 = vpack.c.b16 %v2415, %v2413
        %v2982 = vpack.c.b16 %v2416, %v2414
        %v2983 = vpack.c.b16 %v2419, %v2417
        %v2984 = vpack.c.b16 %v2420, %v2418
        %v2985 = vpack.c.b16 %v2423, %v2421
        %v2986 = vpack.c.b16 %v2424, %v2422
        %v2987 = vpack.c.b16 %v2427, %v2425
        %v2988 = vpack.c.b16 %v2428, %v2426
        %v2989 = vpack.c.b16 %v2431, %v2429
        %v2990 = vpack.c.b16 %v2432, %v2430
        %v2991 = vpack.c.b16 %v2435, %v2433
        %v2992 = vpack.c.b16 %v2436, %v2434
        %v2993 = vpack.c.b16 %v2439, %v2437
        %v2994 = vpack.c.b16 %v2440, %v2438
        %v2995 = vpack.c.b16 %v2443, %v2441
        %v2996 = vpack.c.b16 %v2444, %v2442
        %v2997 = vpack.c.b16 %v2447, %v2445
        %v2998 = vpack.c.b16 %v2448, %v2446
        %v2999 = vpack.c.b16 %v2451, %v2449
        %v3000 = vpack.c.b16 %v2452, %v2450
        %v3001 = vpack.c.b16 %v2455, %v2453
        %v3002 = vpack.c.b16 %v2456, %v2454
        %v3003 = vpack.c.b16 %v2459, %v2457
        %v3004 = vpack.c.b16 %v2460, %v2458
        %v3005 = vpack.c.b16 %v2463, %v2461
        %v3006 = vpack.c.b16 %v2464, %v2462
        %v3007 = vpack.c.b16 %v2467, %v2465
        %v3008 = vpack.c.b16 %v2468, %v2466
        %v3009 = vpack.c.b16 %v2471, %v2469
        %v3010 = vpack.c.b16 %v2472, %v2470
        %v3011 = vpack.c.b16 %v2475, %v2473
        %v3012 = vpack.c.b16 %v2476, %v2474
        %v3013 = vpack.c.b16 %v2479, %v2477
        %v3014 = vpack.c.b16 %v2480, %v2478
        %v3015 = vpack.c.b16 %v2483, %v2481
        %v3016 = vpack.c.b16 %v2484, %v2482
        %v3017 = vpack.c.b16 %v2487, %v2485
        %v3018 = vpack.c.b16 %v2488, %v2486
        %v3019 = vpack.c.b16 %v2491, %v2489
        %v3020 = vpack.c.b16 %v2492, %v2490
        %v3021 = vpack.c.b16 %v2495, %v2493
        %v3022 = vpack.c.b16 %v2496, %v2494
        %v3023 = vpack.c.b16 %v2499, %v2497
        %v3024 = vpack.c.b16 %v2500, %v2498
        %v3025 = vpack.c.b16 %v2503, %v2501
        %v3026 = vpack.c.b16 %v2504, %v2502
        %v3027 = vpack.c.b16 %v2507, %v2505
        %v3028 = vpack.c.b16 %v2508, %v2506
        %v3029 = vpack.c.b16 %v2511, %v2509
        %v3030 = vpack.c.b16 %v2512, %v2510
        %v3031 = vpack.c.b16 %v2515, %v2513
        %v3032 = vpack.c.b16 %v2516, %v2514
        %v3033 = vpack.c.b16 %v2519, %v2517
        %v3034 = vpack.c.b16 %v2520, %v2518
        %v3035 = vpack.c.b16 %v2523, %v2521
        %v3036 = vpack.c.b16 %v2524, %v2522
        %3549 = vmatprep.subr.bf16.mxu0 %v2540
        %3550 = vmatpush1.bf16.msra.mxu0 %v2539
        %3551 = vmatprep.subr.bf16.mxu0 %v2538
        %3552 = vmatpush1.bf16.msra.mxu0 %v2537
        %3553 = vmatprep.subr.bf16.mxu0 %v2536
        %3554 = vmatpush1.bf16.msra.mxu0 %v2535
        %3555 = vmatprep.subr.bf16.mxu0 %v2534
        %3556 = vmatpush1.bf16.msra.mxu0 %v2533
        %3557 = vmatprep.subr.bf16.mxu0 %v2532
        %3558 = vmatpush1.bf16.msra.mxu0 %v2531
        %3559 = vmatprep.subr.bf16.mxu0 %v2530
        %3560 = vmatpush1.bf16.msra.mxu0 %v2529
        %3561 = vmatprep.subr.bf16.mxu0 %v2528
        %3562 = vmatpush1.bf16.msra.mxu0 %v2527
        %3563 = vmatprep.subr.bf16.mxu0 %v2526
        %3564 = vmatpush1.bf16.msra.mxu0 %v2525
        %3565 = vmatprep.subr.bf16.mxu0 %v2556
        %3566 = vmatpush2.bf16.msra.mxu0 %v2555
        %3567 = vmatprep.subr.bf16.mxu0 %v2554
        %3568 = vmatpush2.bf16.msra.mxu0 %v2553
        %3569 = vmatprep.subr.bf16.mxu0 %v2552
        %3570 = vmatpush2.bf16.msra.mxu0 %v2551
        %3571 = vmatprep.subr.bf16.mxu0 %v2550
        %3572 = vmatpush2.bf16.msra.mxu0 %v2549
        %3573 = vmatprep.subr.bf16.mxu0 %v2548
        %3574 = vmatpush2.bf16.msra.mxu0 %v2547
        %3575 = vmatprep.subr.bf16.mxu0 %v2546
        %3576 = vmatpush2.bf16.msra.mxu0 %v2545
        %3577 = vmatprep.subr.bf16.mxu0 %v2544
        %3578 = vmatpush2.bf16.msra.mxu0 %v2543
        %3579 = vmatprep.subr.bf16.mxu0 %v2542
        %3580 = vmatpush2.bf16.msra.mxu0 %v2541
        %3581 = vmatprep.mubr.bf16.mxu0 %v798
        %3582 = vmatmul.mubr.bf16.gmra.mxu0 %v784
        %v3583 = vpop.f32.mrf.mxu0
        %v3584 = vadd.f32 0.0, %v3583
        %v3585 = vpop.f32.mrf.mxu0
        %v3586 = vadd.f32 0.0, %v3585
        %v3587 = vpop.f32.mrf.mxu0
        %v3588 = vpop.f32.mrf.mxu0
        %3589 = vdwg.mxu0
        %3590 = vmatprep.subr.bf16.mxu0 %v2572
        %3591 = vmatpush1.bf16.msra.mxu0 %v2571
        %3592 = vmatprep.subr.bf16.mxu0 %v2570
        %3593 = vmatpush1.bf16.msra.mxu0 %v2569
        %3594 = vmatprep.subr.bf16.mxu0 %v2568
        %3595 = vmatpush1.bf16.msra.mxu0 %v2567
        %3596 = vmatprep.subr.bf16.mxu0 %v2566
        %3597 = vmatpush1.bf16.msra.mxu0 %v2565
        %3598 = vmatprep.subr.bf16.mxu0 %v2564
        %3599 = vmatpush1.bf16.msra.mxu0 %v2563
        %3600 = vmatprep.subr.bf16.mxu0 %v2562
        %3601 = vmatpush1.bf16.msra.mxu0 %v2561
        %3602 = vmatprep.subr.bf16.mxu0 %v2560
        %3603 = vmatpush1.bf16.msra.mxu0 %v2559
        %3604 = vmatprep.subr.bf16.mxu0 %v2558
        %3605 = vmatpush1.bf16.msra.mxu0 %v2557
        %3606 = vmatprep.subr.bf16.mxu0 %v2588
        %3607 = vmatpush2.bf16.msra.mxu0 %v2587
        %3608 = vmatprep.subr.bf16.mxu0 %v2586
        %3609 = vmatpush2.bf16.msra.mxu0 %v2585
        %3610 = vmatprep.subr.bf16.mxu0 %v2584
        %3611 = vmatpush2.bf16.msra.mxu0 %v2583
        %3612 = vmatprep.subr.bf16.mxu0 %v2582
        %3613 = vmatpush2.bf16.msra.mxu0 %v2581
        %3614 = vmatprep.subr.bf16.mxu0 %v2580
        %3615 = vmatpush2.bf16.msra.mxu0 %v2579
        %3616 = vmatprep.subr.bf16.mxu0 %v2578
        %3617 = vmatpush2.bf16.msra.mxu0 %v2577
        %3618 = vmatprep.subr.bf16.mxu0 %v2576
        %3619 = vmatpush2.bf16.msra.mxu0 %v2575
        %3620 = vmatprep.subr.bf16.mxu0 %v2574
        %3621 = vmatpush2.bf16.msra.mxu0 %v2573
        %3622 = vmatprep.mubr.bf16.mxu0 %v808
        %3623 = vmatmul.mubr.bf16.gmra.mxu0 %v806
        %v3624 = vpop.f32.mrf.mxu0
        %v3625 = vadd.f32 %v3584, %v3624
        %v3626 = vpop.f32.mrf.mxu0
        %v3627 = vadd.f32 %v3586, %v3626
        %v3628 = vpop.f32.mrf.mxu0
        %v3629 = vpop.f32.mrf.mxu0
        %3630 = vdwg.mxu0
        %3631 = vmatprep.subr.bf16.mxu0 %v2604
        %3632 = vmatpush1.bf16.msra.mxu0 %v2603
        %3633 = vmatprep.subr.bf16.mxu0 %v2602
        %3634 = vmatpush1.bf16.msra.mxu0 %v2601
        %3635 = vmatprep.subr.bf16.mxu0 %v2600
        %3636 = vmatpush1.bf16.msra.mxu0 %v2599
        %3637 = vmatprep.subr.bf16.mxu0 %v2598
        %3638 = vmatpush1.bf16.msra.mxu0 %v2597
        %3639 = vmatprep.subr.bf16.mxu0 %v2596
        %3640 = vmatpush1.bf16.msra.mxu0 %v2595
        %3641 = vmatprep.subr.bf16.mxu0 %v2594
        %3642 = vmatpush1.bf16.msra.mxu0 %v2593
        %3643 = vmatprep.subr.bf16.mxu0 %v2592
        %3644 = vmatpush1.bf16.msra.mxu0 %v2591
        %3645 = vmatprep.subr.bf16.mxu0 %v2590
        %3646 = vmatpush1.bf16.msra.mxu0 %v2589
        %3647 = vmatprep.subr.bf16.mxu0 %v2620
        %3648 = vmatpush2.bf16.msra.mxu0 %v2619
        %3649 = vmatprep.subr.bf16.mxu0 %v2618
        %3650 = vmatpush2.bf16.msra.mxu0 %v2617
        %3651 = vmatprep.subr.bf16.mxu0 %v2616
        %3652 = vmatpush2.bf16.msra.mxu0 %v2615
        %3653 = vmatprep.subr.bf16.mxu0 %v2614
        %3654 = vmatpush2.bf16.msra.mxu0 %v2613
        %3655 = vmatprep.subr.bf16.mxu0 %v2612
        %3656 = vmatpush2.bf16.msra.mxu0 %v2611
        %3657 = vmatprep.subr.bf16.mxu0 %v2610
        %3658 = vmatpush2.bf16.msra.mxu0 %v2609
        %3659 = vmatprep.subr.bf16.mxu0 %v2608
        %3660 = vmatpush2.bf16.msra.mxu0 %v2607
        %3661 = vmatprep.subr.bf16.mxu0 %v2606
        %3662 = vmatpush2.bf16.msra.mxu0 %v2605
        %3663 = vmatprep.mubr.bf16.mxu0 %v805
        %3664 = vmatmul.mubr.bf16.gmra.mxu0 %v791
        %v3665 = vpop.f32.mrf.mxu0
        %v3666 = vadd.f32 %v3625, %v3665
        %v3667 = vpop.f32.mrf.mxu0
        %v3668 = vadd.f32 %v3627, %v3667
        %v3669 = vpop.f32.mrf.mxu0
        %v3670 = vpop.f32.mrf.mxu0
        %3671 = vdwg.mxu0
        %3672 = vmatprep.subr.bf16.mxu0 %v2636
        %3673 = vmatpush1.bf16.msra.mxu0 %v2635
        %3674 = vmatprep.subr.bf16.mxu0 %v2634
        %3675 = vmatpush1.bf16.msra.mxu0 %v2633
        %3676 = vmatprep.subr.bf16.mxu0 %v2632
        %3677 = vmatpush1.bf16.msra.mxu0 %v2631
        %3678 = vmatprep.subr.bf16.mxu0 %v2630
        %3679 = vmatpush1.bf16.msra.mxu0 %v2629
        %3680 = vmatprep.subr.bf16.mxu0 %v2628
        %3681 = vmatpush1.bf16.msra.mxu0 %v2627
        %3682 = vmatprep.subr.bf16.mxu0 %v2626
        %3683 = vmatpush1.bf16.msra.mxu0 %v2625
        %3684 = vmatprep.subr.bf16.mxu0 %v2624
        %3685 = vmatpush1.bf16.msra.mxu0 %v2623
        %3686 = vmatprep.subr.bf16.mxu0 %v2622
        %3687 = vmatpush1.bf16.msra.mxu0 %v2621
        %3688 = vmatprep.subr.bf16.mxu0 %v2652
        %3689 = vmatpush2.bf16.msra.mxu0 %v2651
        %3690 = vmatprep.subr.bf16.mxu0 %v2650
        %3691 = vmatpush2.bf16.msra.mxu0 %v2649
        %3692 = vmatprep.subr.bf16.mxu0 %v2648
        %3693 = vmatpush2.bf16.msra.mxu0 %v2647
        %3694 = vmatprep.subr.bf16.mxu0 %v2646
        %3695 = vmatpush2.bf16.msra.mxu0 %v2645
        %3696 = vmatprep.subr.bf16.mxu0 %v2644
        %3697 = vmatpush2.bf16.msra.mxu0 %v2643
        %3698 = vmatprep.subr.bf16.mxu0 %v2642
        %3699 = vmatpush2.bf16.msra.mxu0 %v2641
        %3700 = vmatprep.subr.bf16.mxu0 %v2640
        %3701 = vmatpush2.bf16.msra.mxu0 %v2639
        %3702 = vmatprep.subr.bf16.mxu0 %v2638
        %3703 = vmatpush2.bf16.msra.mxu0 %v2637
        %3704 = vmatprep.mubr.bf16.mxu0 %v809
        %3705 = vmatmul.mubr.bf16.gmra.mxu0 %v807
        %v3706 = vpop.f32.mrf.mxu0
        %v3707 = vadd.f32 %v3666, %v3706
        %v3708 = vpop.f32.mrf.mxu0
        %v3709 = vadd.f32 %v3668, %v3708
        %v3710 = vpop.f32.mrf.mxu0
        %v3711 = vpop.f32.mrf.mxu0
        %3712 = vdwg.mxu0
        %3713 = vmatprep.subr.bf16.mxu0 %v2668
        %3714 = vmatpush1.bf16.msra.mxu0 %v2667
        %3715 = vmatprep.subr.bf16.mxu0 %v2666
        %3716 = vmatpush1.bf16.msra.mxu0 %v2665
        %3717 = vmatprep.subr.bf16.mxu0 %v2664
        %3718 = vmatpush1.bf16.msra.mxu0 %v2663
        %3719 = vmatprep.subr.bf16.mxu0 %v2662
        %3720 = vmatpush1.bf16.msra.mxu0 %v2661
        %3721 = vmatprep.subr.bf16.mxu0 %v2660
        %3722 = vmatpush1.bf16.msra.mxu0 %v2659
        %3723 = vmatprep.subr.bf16.mxu0 %v2658
        %3724 = vmatpush1.bf16.msra.mxu0 %v2657
        %3725 = vmatprep.subr.bf16.mxu0 %v2656
        %3726 = vmatpush1.bf16.msra.mxu0 %v2655
        %3727 = vmatprep.subr.bf16.mxu0 %v2654
        %3728 = vmatpush1.bf16.msra.mxu0 %v2653
        %3729 = vmatprep.subr.bf16.mxu0 %v2684
        %3730 = vmatpush2.bf16.msra.mxu0 %v2683
        %3731 = vmatprep.subr.bf16.mxu0 %v2682
        %3732 = vmatpush2.bf16.msra.mxu0 %v2681
        %3733 = vmatprep.subr.bf16.mxu0 %v2680
        %3734 = vmatpush2.bf16.msra.mxu0 %v2679
        %3735 = vmatprep.subr.bf16.mxu0 %v2678
        %3736 = vmatpush2.bf16.msra.mxu0 %v2677
        %3737 = vmatprep.subr.bf16.mxu0 %v2676
        %3738 = vmatpush2.bf16.msra.mxu0 %v2675
        %3739 = vmatprep.subr.bf16.mxu0 %v2674
        %3740 = vmatpush2.bf16.msra.mxu0 %v2673
        %3741 = vmatprep.subr.bf16.mxu0 %v2672
        %3742 = vmatpush2.bf16.msra.mxu0 %v2671
        %3743 = vmatprep.subr.bf16.mxu0 %v2670
        %3744 = vmatpush2.bf16.msra.mxu0 %v2669
        %3745 = vmatprep.mubr.bf16.mxu0 %v847
        %3746 = vmatmul.mubr.bf16.gmra.mxu0 %v833
        %v3747 = vpop.f32.mrf.mxu0
        %v3748 = vadd.f32 %v3707, %v3747
        %v3749 = vpop.f32.mrf.mxu0
        %v3750 = vadd.f32 %v3709, %v3749
        %v3751 = vpop.f32.mrf.mxu0
        %v3752 = vpop.f32.mrf.mxu0
        %3753 = vdwg.mxu0
        %3754 = vmatprep.subr.bf16.mxu0 %v2700
        %3755 = vmatpush1.bf16.msra.mxu0 %v2699
        %3756 = vmatprep.subr.bf16.mxu0 %v2698
        %3757 = vmatpush1.bf16.msra.mxu0 %v2697
        %3758 = vmatprep.subr.bf16.mxu0 %v2696
        %3759 = vmatpush1.bf16.msra.mxu0 %v2695
        %3760 = vmatprep.subr.bf16.mxu0 %v2694
        %3761 = vmatpush1.bf16.msra.mxu0 %v2693
        %3762 = vmatprep.subr.bf16.mxu0 %v2692
        %3763 = vmatpush1.bf16.msra.mxu0 %v2691
        %3764 = vmatprep.subr.bf16.mxu0 %v2690
        %3765 = vmatpush1.bf16.msra.mxu0 %v2689
        %3766 = vmatprep.subr.bf16.mxu0 %v2688
        %3767 = vmatpush1.bf16.msra.mxu0 %v2687
        %3768 = vmatprep.subr.bf16.mxu0 %v2686
        %3769 = vmatpush1.bf16.msra.mxu0 %v2685
        %3770 = vmatprep.subr.bf16.mxu0 %v2716
        %3771 = vmatpush2.bf16.msra.mxu0 %v2715
        %3772 = vmatprep.subr.bf16.mxu0 %v2714
        %3773 = vmatpush2.bf16.msra.mxu0 %v2713
        %3774 = vmatprep.subr.bf16.mxu0 %v2712
        %3775 = vmatpush2.bf16.msra.mxu0 %v2711
        %3776 = vmatprep.subr.bf16.mxu0 %v2710
        %3777 = vmatpush2.bf16.msra.mxu0 %v2709
        %3778 = vmatprep.subr.bf16.mxu0 %v2708
        %3779 = vmatpush2.bf16.msra.mxu0 %v2707
        %3780 = vmatprep.subr.bf16.mxu0 %v2706
        %3781 = vmatpush2.bf16.msra.mxu0 %v2705
        %3782 = vmatprep.subr.bf16.mxu0 %v2704
        %3783 = vmatpush2.bf16.msra.mxu0 %v2703
        %3784 = vmatprep.subr.bf16.mxu0 %v2702
        %3785 = vmatpush2.bf16.msra.mxu0 %v2701
        %3786 = vmatprep.mubr.bf16.mxu0 %v857
        %3787 = vmatmul.mubr.bf16.gmra.mxu0 %v855
        %v3788 = vpop.f32.mrf.mxu0
        %v3789 = vadd.f32 %v3748, %v3788
        %v3790 = vpop.f32.mrf.mxu0
        %v3791 = vadd.f32 %v3750, %v3790
        %v3792 = vpop.f32.mrf.mxu0
        %v3793 = vpop.f32.mrf.mxu0
        %3794 = vdwg.mxu0
        %3795 = vmatprep.subr.bf16.mxu0 %v2732
        %3796 = vmatpush1.bf16.msra.mxu0 %v2731
        %3797 = vmatprep.subr.bf16.mxu0 %v2730
        %3798 = vmatpush1.bf16.msra.mxu0 %v2729
        %3799 = vmatprep.subr.bf16.mxu0 %v2728
        %3800 = vmatpush1.bf16.msra.mxu0 %v2727
        %3801 = vmatprep.subr.bf16.mxu0 %v2726
        %3802 = vmatpush1.bf16.msra.mxu0 %v2725
        %3803 = vmatprep.subr.bf16.mxu0 %v2724
        %3804 = vmatpush1.bf16.msra.mxu0 %v2723
        %3805 = vmatprep.subr.bf16.mxu0 %v2722
        %3806 = vmatpush1.bf16.msra.mxu0 %v2721
        %3807 = vmatprep.subr.bf16.mxu0 %v2720
        %3808 = vmatpush1.bf16.msra.mxu0 %v2719
        %3809 = vmatprep.subr.bf16.mxu0 %v2718
        %3810 = vmatpush1.bf16.msra.mxu0 %v2717
        %3811 = vmatprep.subr.bf16.mxu0 %v2748
        %3812 = vmatpush2.bf16.msra.mxu0 %v2747
        %3813 = vmatprep.subr.bf16.mxu0 %v2746
        %3814 = vmatpush2.bf16.msra.mxu0 %v2745
        %3815 = vmatprep.subr.bf16.mxu0 %v2744
        %3816 = vmatpush2.bf16.msra.mxu0 %v2743
        %3817 = vmatprep.subr.bf16.mxu0 %v2742
        %3818 = vmatpush2.bf16.msra.mxu0 %v2741
        %3819 = vmatprep.subr.bf16.mxu0 %v2740
        %3820 = vmatpush2.bf16.msra.mxu0 %v2739
        %3821 = vmatprep.subr.bf16.mxu0 %v2738
        %3822 = vmatpush2.bf16.msra.mxu0 %v2737
        %3823 = vmatprep.subr.bf16.mxu0 %v2736
        %3824 = vmatpush2.bf16.msra.mxu0 %v2735
        %3825 = vmatprep.subr.bf16.mxu0 %v2734
        %3826 = vmatpush2.bf16.msra.mxu0 %v2733
        %3827 = vmatprep.mubr.bf16.mxu0 %v854
        %3828 = vmatmul.mubr.bf16.gmra.mxu0 %v840
        %v3829 = vpop.f32.mrf.mxu0
        %v3830 = vadd.f32 %v3789, %v3829
        %v3831 = vpop.f32.mrf.mxu0
        %v3832 = vadd.f32 %v3791, %v3831
        %v3833 = vpop.f32.mrf.mxu0
        %v3834 = vpop.f32.mrf.mxu0
        %3835 = vdwg.mxu0
        %3836 = vmatprep.subr.bf16.mxu0 %v2764
        %3837 = vmatpush1.bf16.msra.mxu0 %v2763
        %3838 = vmatprep.subr.bf16.mxu0 %v2762
        %3839 = vmatpush1.bf16.msra.mxu0 %v2761
        %3840 = vmatprep.subr.bf16.mxu0 %v2760
        %3841 = vmatpush1.bf16.msra.mxu0 %v2759
        %3842 = vmatprep.subr.bf16.mxu0 %v2758
        %3843 = vmatpush1.bf16.msra.mxu0 %v2757
        %3844 = vmatprep.subr.bf16.mxu0 %v2756
        %3845 = vmatpush1.bf16.msra.mxu0 %v2755
        %3846 = vmatprep.subr.bf16.mxu0 %v2754
        %3847 = vmatpush1.bf16.msra.mxu0 %v2753
        %3848 = vmatprep.subr.bf16.mxu0 %v2752
        %3849 = vmatpush1.bf16.msra.mxu0 %v2751
        %3850 = vmatprep.subr.bf16.mxu0 %v2750
        %3851 = vmatpush1.bf16.msra.mxu0 %v2749
        %3852 = vmatprep.subr.bf16.mxu0 %v2780
        %3853 = vmatpush2.bf16.msra.mxu0 %v2779
        %3854 = vmatprep.subr.bf16.mxu0 %v2778
        %3855 = vmatpush2.bf16.msra.mxu0 %v2777
        %3856 = vmatprep.subr.bf16.mxu0 %v2776
        %3857 = vmatpush2.bf16.msra.mxu0 %v2775
        %3858 = vmatprep.subr.bf16.mxu0 %v2774
        %3859 = vmatpush2.bf16.msra.mxu0 %v2773
        %3860 = vmatprep.subr.bf16.mxu0 %v2772
        %3861 = vmatpush2.bf16.msra.mxu0 %v2771
        %3862 = vmatprep.subr.bf16.mxu0 %v2770
        %3863 = vmatpush2.bf16.msra.mxu0 %v2769
        %3864 = vmatprep.subr.bf16.mxu0 %v2768
        %3865 = vmatpush2.bf16.msra.mxu0 %v2767
        %3866 = vmatprep.subr.bf16.mxu0 %v2766
        %3867 = vmatpush2.bf16.msra.mxu0 %v2765
        %3868 = vmatprep.mubr.bf16.mxu0 %v858
        %3869 = vmatmul.mubr.bf16.gmra.mxu0 %v856
        %v3870 = vpop.f32.mrf.mxu0
        %v3871 = vadd.f32 %v3830, %v3870
        %v3872 = vpop.f32.mrf.mxu0
        %v3873 = vadd.f32 %v3832, %v3872
        %v3874 = vpop.f32.mrf.mxu0
        %v3875 = vpop.f32.mrf.mxu0
        %3876 = vdwg.mxu0
        %3877 = vmatprep.subr.bf16.mxu0 %v2796
        %3878 = vmatpush1.bf16.msra.mxu0 %v2795
        %3879 = vmatprep.subr.bf16.mxu0 %v2794
        %3880 = vmatpush1.bf16.msra.mxu0 %v2793
        %3881 = vmatprep.subr.bf16.mxu0 %v2792
        %3882 = vmatpush1.bf16.msra.mxu0 %v2791
        %3883 = vmatprep.subr.bf16.mxu0 %v2790
        %3884 = vmatpush1.bf16.msra.mxu0 %v2789
        %3885 = vmatprep.subr.bf16.mxu0 %v2788
        %3886 = vmatpush1.bf16.msra.mxu0 %v2787
        %3887 = vmatprep.subr.bf16.mxu0 %v2786
        %3888 = vmatpush1.bf16.msra.mxu0 %v2785
        %3889 = vmatprep.subr.bf16.mxu0 %v2784
        %3890 = vmatpush1.bf16.msra.mxu0 %v2783
        %3891 = vmatprep.subr.bf16.mxu0 %v2782
        %3892 = vmatpush1.bf16.msra.mxu0 %v2781
        %3893 = vmatprep.subr.bf16.mxu0 %v2812
        %3894 = vmatpush2.bf16.msra.mxu0 %v2811
        %3895 = vmatprep.subr.bf16.mxu0 %v2810
        %3896 = vmatpush2.bf16.msra.mxu0 %v2809
        %3897 = vmatprep.subr.bf16.mxu0 %v2808
        %3898 = vmatpush2.bf16.msra.mxu0 %v2807
        %3899 = vmatprep.subr.bf16.mxu0 %v2806
        %3900 = vmatpush2.bf16.msra.mxu0 %v2805
        %3901 = vmatprep.subr.bf16.mxu0 %v2804
        %3902 = vmatpush2.bf16.msra.mxu0 %v2803
        %3903 = vmatprep.subr.bf16.mxu0 %v2802
        %3904 = vmatpush2.bf16.msra.mxu0 %v2801
        %3905 = vmatprep.subr.bf16.mxu0 %v2800
        %3906 = vmatpush2.bf16.msra.mxu0 %v2799
        %3907 = vmatprep.subr.bf16.mxu0 %v2798
        %3908 = vmatpush2.bf16.msra.mxu0 %v2797
        %3909 = vmatprep.mubr.bf16.mxu0 %v896
        %3910 = vmatmul.mubr.bf16.gmra.mxu0 %v882
        %v3911 = vpop.f32.mrf.mxu0
        %v3912 = vadd.f32 %v3871, %v3911
        %v3913 = vpop.f32.mrf.mxu0
        %v3914 = vadd.f32 %v3873, %v3913
        %v3915 = vpop.f32.mrf.mxu0
        %v3916 = vpop.f32.mrf.mxu0
        %3917 = vdwg.mxu0
        %3918 = vmatprep.subr.bf16.mxu0 %v2828
        %3919 = vmatpush1.bf16.msra.mxu0 %v2827
        %3920 = vmatprep.subr.bf16.mxu0 %v2826
        %3921 = vmatpush1.bf16.msra.mxu0 %v2825
        %3922 = vmatprep.subr.bf16.mxu0 %v2824
        %3923 = vmatpush1.bf16.msra.mxu0 %v2823
        %3924 = vmatprep.subr.bf16.mxu0 %v2822
        %3925 = vmatpush1.bf16.msra.mxu0 %v2821
        %3926 = vmatprep.subr.bf16.mxu0 %v2820
        %3927 = vmatpush1.bf16.msra.mxu0 %v2819
        %3928 = vmatprep.subr.bf16.mxu0 %v2818
        %3929 = vmatpush1.bf16.msra.mxu0 %v2817
        %3930 = vmatprep.subr.bf16.mxu0 %v2816
        %3931 = vmatpush1.bf16.msra.mxu0 %v2815
        %3932 = vmatprep.subr.bf16.mxu0 %v2814
        %3933 = vmatpush1.bf16.msra.mxu0 %v2813
        %3934 = vmatprep.subr.bf16.mxu0 %v2844
        %3935 = vmatpush2.bf16.msra.mxu0 %v2843
        %3936 = vmatprep.subr.bf16.mxu0 %v2842
        %3937 = vmatpush2.bf16.msra.mxu0 %v2841
        %3938 = vmatprep.subr.bf16.mxu0 %v2840
        %3939 = vmatpush2.bf16.msra.mxu0 %v2839
        %3940 = vmatprep.subr.bf16.mxu0 %v2838
        %3941 = vmatpush2.bf16.msra.mxu0 %v2837
        %3942 = vmatprep.subr.bf16.mxu0 %v2836
        %3943 = vmatpush2.bf16.msra.mxu0 %v2835
        %3944 = vmatprep.subr.bf16.mxu0 %v2834
        %3945 = vmatpush2.bf16.msra.mxu0 %v2833
        %3946 = vmatprep.subr.bf16.mxu0 %v2832
        %3947 = vmatpush2.bf16.msra.mxu0 %v2831
        %3948 = vmatprep.subr.bf16.mxu0 %v2830
        %3949 = vmatpush2.bf16.msra.mxu0 %v2829
        %3950 = vmatprep.mubr.bf16.mxu0 %v906
        %3951 = vmatmul.mubr.bf16.gmra.mxu0 %v904
        %v3952 = vpop.f32.mrf.mxu0
        %v3953 = vadd.f32 %v3912, %v3952
        %v3954 = vpop.f32.mrf.mxu0
        %v3955 = vadd.f32 %v3914, %v3954
        %v3956 = vpop.f32.mrf.mxu0
        %v3957 = vpop.f32.mrf.mxu0
        %3958 = vdwg.mxu0
        %3959 = vmatprep.subr.bf16.mxu0 %v2860
        %3960 = vmatpush1.bf16.msra.mxu0 %v2859
        %3961 = vmatprep.subr.bf16.mxu0 %v2858
        %3962 = vmatpush1.bf16.msra.mxu0 %v2857
        %3963 = vmatprep.subr.bf16.mxu0 %v2856
        %3964 = vmatpush1.bf16.msra.mxu0 %v2855
        %3965 = vmatprep.subr.bf16.mxu0 %v2854
        %3966 = vmatpush1.bf16.msra.mxu0 %v2853
        %3967 = vmatprep.subr.bf16.mxu0 %v2852
        %3968 = vmatpush1.bf16.msra.mxu0 %v2851
        %3969 = vmatprep.subr.bf16.mxu0 %v2850
        %3970 = vmatpush1.bf16.msra.mxu0 %v2849
        %3971 = vmatprep.subr.bf16.mxu0 %v2848
        %3972 = vmatpush1.bf16.msra.mxu0 %v2847
        %3973 = vmatprep.subr.bf16.mxu0 %v2846
        %3974 = vmatpush1.bf16.msra.mxu0 %v2845
        %3975 = vmatprep.subr.bf16.mxu0 %v2876
        %3976 = vmatpush2.bf16.msra.mxu0 %v2875
        %3977 = vmatprep.subr.bf16.mxu0 %v2874
        %3978 = vmatpush2.bf16.msra.mxu0 %v2873
        %3979 = vmatprep.subr.bf16.mxu0 %v2872
        %3980 = vmatpush2.bf16.msra.mxu0 %v2871
        %3981 = vmatprep.subr.bf16.mxu0 %v2870
        %3982 = vmatpush2.bf16.msra.mxu0 %v2869
        %3983 = vmatprep.subr.bf16.mxu0 %v2868
        %3984 = vmatpush2.bf16.msra.mxu0 %v2867
        %3985 = vmatprep.subr.bf16.mxu0 %v2866
        %3986 = vmatpush2.bf16.msra.mxu0 %v2865
        %3987 = vmatprep.subr.bf16.mxu0 %v2864
        %3988 = vmatpush2.bf16.msra.mxu0 %v2863
        %3989 = vmatprep.subr.bf16.mxu0 %v2862
        %3990 = vmatpush2.bf16.msra.mxu0 %v2861
        %3991 = vmatprep.mubr.bf16.mxu0 %v903
        %3992 = vmatmul.mubr.bf16.gmra.mxu0 %v889
        %v3993 = vpop.f32.mrf.mxu0
        %v3994 = vadd.f32 %v3953, %v3993
        %v3995 = vpop.f32.mrf.mxu0
        %v3996 = vadd.f32 %v3955, %v3995
        %v3997 = vpop.f32.mrf.mxu0
        %v3998 = vpop.f32.mrf.mxu0
        %3999 = vdwg.mxu0
        %4000 = vmatprep.subr.bf16.mxu0 %v2892
        %4001 = vmatpush1.bf16.msra.mxu0 %v2891
        %4002 = vmatprep.subr.bf16.mxu0 %v2890
        %4003 = vmatpush1.bf16.msra.mxu0 %v2889
        %4004 = vmatprep.subr.bf16.mxu0 %v2888
        %4005 = vmatpush1.bf16.msra.mxu0 %v2887
        %4006 = vmatprep.subr.bf16.mxu0 %v2886
        %4007 = vmatpush1.bf16.msra.mxu0 %v2885
        %4008 = vmatprep.subr.bf16.mxu0 %v2884
        %4009 = vmatpush1.bf16.msra.mxu0 %v2883
        %4010 = vmatprep.subr.bf16.mxu0 %v2882
        %4011 = vmatpush1.bf16.msra.mxu0 %v2881
        %4012 = vmatprep.subr.bf16.mxu0 %v2880
        %4013 = vmatpush1.bf16.msra.mxu0 %v2879
        %4014 = vmatprep.subr.bf16.mxu0 %v2878
        %4015 = vmatpush1.bf16.msra.mxu0 %v2877
        %4016 = vmatprep.subr.bf16.mxu0 %v2908
        %4017 = vmatpush2.bf16.msra.mxu0 %v2907
        %4018 = vmatprep.subr.bf16.mxu0 %v2906
        %4019 = vmatpush2.bf16.msra.mxu0 %v2905
        %4020 = vmatprep.subr.bf16.mxu0 %v2904
        %4021 = vmatpush2.bf16.msra.mxu0 %v2903
        %4022 = vmatprep.subr.bf16.mxu0 %v2902
        %4023 = vmatpush2.bf16.msra.mxu0 %v2901
        %4024 = vmatprep.subr.bf16.mxu0 %v2900
        %4025 = vmatpush2.bf16.msra.mxu0 %v2899
        %4026 = vmatprep.subr.bf16.mxu0 %v2898
        %4027 = vmatpush2.bf16.msra.mxu0 %v2897
        %4028 = vmatprep.subr.bf16.mxu0 %v2896
        %4029 = vmatpush2.bf16.msra.mxu0 %v2895
        %4030 = vmatprep.subr.bf16.mxu0 %v2894
        %4031 = vmatpush2.bf16.msra.mxu0 %v2893
        %4032 = vmatprep.mubr.bf16.mxu0 %v907
        %4033 = vmatmul.mubr.bf16.gmra.mxu0 %v905
        %v4034 = vpop.f32.mrf.mxu0
        %v4035 = vadd.f32 %v3994, %v4034
        %v4036 = vpop.f32.mrf.mxu0
        %v4037 = vadd.f32 %v3996, %v4036
        %v4038 = vpop.f32.mrf.mxu0
        %v4039 = vpop.f32.mrf.mxu0
        %4040 = vdwg.mxu0
        %4041 = vmatprep.subr.bf16.mxu0 %v2924
        %4042 = vmatpush1.bf16.msra.mxu0 %v2923
        %4043 = vmatprep.subr.bf16.mxu0 %v2922
        %4044 = vmatpush1.bf16.msra.mxu0 %v2921
        %4045 = vmatprep.subr.bf16.mxu0 %v2920
        %4046 = vmatpush1.bf16.msra.mxu0 %v2919
        %4047 = vmatprep.subr.bf16.mxu0 %v2918
        %4048 = vmatpush1.bf16.msra.mxu0 %v2917
        %4049 = vmatprep.subr.bf16.mxu0 %v2916
        %4050 = vmatpush1.bf16.msra.mxu0 %v2915
        %4051 = vmatprep.subr.bf16.mxu0 %v2914
        %4052 = vmatpush1.bf16.msra.mxu0 %v2913
        %4053 = vmatprep.subr.bf16.mxu0 %v2912
        %4054 = vmatpush1.bf16.msra.mxu0 %v2911
        %4055 = vmatprep.subr.bf16.mxu0 %v2910
        %4056 = vmatpush1.bf16.msra.mxu0 %v2909
        %4057 = vmatprep.subr.bf16.mxu0 %v2940
        %4058 = vmatpush2.bf16.msra.mxu0 %v2939
        %4059 = vmatprep.subr.bf16.mxu0 %v2938
        %4060 = vmatpush2.bf16.msra.mxu0 %v2937
        %4061 = vmatprep.subr.bf16.mxu0 %v2936
        %4062 = vmatpush2.bf16.msra.mxu0 %v2935
        %4063 = vmatprep.subr.bf16.mxu0 %v2934
        %4064 = vmatpush2.bf16.msra.mxu0 %v2933
        %4065 = vmatprep.subr.bf16.mxu0 %v2932
        %4066 = vmatpush2.bf16.msra.mxu0 %v2931
        %4067 = vmatprep.subr.bf16.mxu0 %v2930
        %4068 = vmatpush2.bf16.msra.mxu0 %v2929
        %4069 = vmatprep.subr.bf16.mxu0 %v2928
        %4070 = vmatpush2.bf16.msra.mxu0 %v2927
        %4071 = vmatprep.subr.bf16.mxu0 %v2926
        %4072 = vmatpush2.bf16.msra.mxu0 %v2925
        %4073 = vmatprep.mubr.bf16.mxu0 %v945
        %4074 = vmatmul.mubr.bf16.gmra.mxu0 %v931
        %v4075 = vpop.f32.mrf.mxu0
        %v4076 = vadd.f32 %v4035, %v4075
        %v4077 = vpop.f32.mrf.mxu0
        %v4078 = vadd.f32 %v4037, %v4077
        %v4079 = vpop.f32.mrf.mxu0
        %v4080 = vpop.f32.mrf.mxu0
        %4081 = vdwg.mxu0
        %4082 = vmatprep.subr.bf16.mxu0 %v2956
        %4083 = vmatpush1.bf16.msra.mxu0 %v2955
        %4084 = vmatprep.subr.bf16.mxu0 %v2954
        %4085 = vmatpush1.bf16.msra.mxu0 %v2953
        %4086 = vmatprep.subr.bf16.mxu0 %v2952
        %4087 = vmatpush1.bf16.msra.mxu0 %v2951
        %4088 = vmatprep.subr.bf16.mxu0 %v2950
        %4089 = vmatpush1.bf16.msra.mxu0 %v2949
        %4090 = vmatprep.subr.bf16.mxu0 %v2948
        %4091 = vmatpush1.bf16.msra.mxu0 %v2947
        %4092 = vmatprep.subr.bf16.mxu0 %v2946
        %4093 = vmatpush1.bf16.msra.mxu0 %v2945
        %4094 = vmatprep.subr.bf16.mxu0 %v2944
        %4095 = vmatpush1.bf16.msra.mxu0 %v2943
        %4096 = vmatprep.subr.bf16.mxu0 %v2942
        %4097 = vmatpush1.bf16.msra.mxu0 %v2941
        %4098 = vmatprep.subr.bf16.mxu0 %v2972
        %4099 = vmatpush2.bf16.msra.mxu0 %v2971
        %4100 = vmatprep.subr.bf16.mxu0 %v2970
        %4101 = vmatpush2.bf16.msra.mxu0 %v2969
        %4102 = vmatprep.subr.bf16.mxu0 %v2968
        %4103 = vmatpush2.bf16.msra.mxu0 %v2967
        %4104 = vmatprep.subr.bf16.mxu0 %v2966
        %4105 = vmatpush2.bf16.msra.mxu0 %v2965
        %4106 = vmatprep.subr.bf16.mxu0 %v2964
        %4107 = vmatpush2.bf16.msra.mxu0 %v2963
        %4108 = vmatprep.subr.bf16.mxu0 %v2962
        %4109 = vmatpush2.bf16.msra.mxu0 %v2961
        %4110 = vmatprep.subr.bf16.mxu0 %v2960
        %4111 = vmatpush2.bf16.msra.mxu0 %v2959
        %4112 = vmatprep.subr.bf16.mxu0 %v2958
        %4113 = vmatpush2.bf16.msra.mxu0 %v2957
        %4114 = vmatprep.mubr.bf16.mxu0 %v955
        %4115 = vmatmul.mubr.bf16.gmra.mxu0 %v953
        %v4116 = vpop.f32.mrf.mxu0
        %v4117 = vadd.f32 %v4076, %v4116
        %v4118 = vpop.f32.mrf.mxu0
        %v4119 = vadd.f32 %v4078, %v4118
        %v4120 = vpop.f32.mrf.mxu0
        %v4121 = vpop.f32.mrf.mxu0
        %4122 = vdwg.mxu0
        %4123 = vmatprep.subr.bf16.mxu0 %v2988
        %4124 = vmatpush1.bf16.msra.mxu0 %v2987
        %4125 = vmatprep.subr.bf16.mxu0 %v2986
        %4126 = vmatpush1.bf16.msra.mxu0 %v2985
        %4127 = vmatprep.subr.bf16.mxu0 %v2984
        %4128 = vmatpush1.bf16.msra.mxu0 %v2983
        %4129 = vmatprep.subr.bf16.mxu0 %v2982
        %4130 = vmatpush1.bf16.msra.mxu0 %v2981
        %4131 = vmatprep.subr.bf16.mxu0 %v2980
        %4132 = vmatpush1.bf16.msra.mxu0 %v2979
        %4133 = vmatprep.subr.bf16.mxu0 %v2978
        %4134 = vmatpush1.bf16.msra.mxu0 %v2977
        %4135 = vmatprep.subr.bf16.mxu0 %v2976
        %4136 = vmatpush1.bf16.msra.mxu0 %v2975
        %4137 = vmatprep.subr.bf16.mxu0 %v2974
        %4138 = vmatpush1.bf16.msra.mxu0 %v2973
        %4139 = vmatprep.subr.bf16.mxu0 %v3004
        %4140 = vmatpush2.bf16.msra.mxu0 %v3003
        %4141 = vmatprep.subr.bf16.mxu0 %v3002
        %4142 = vmatpush2.bf16.msra.mxu0 %v3001
        %4143 = vmatprep.subr.bf16.mxu0 %v3000
        %4144 = vmatpush2.bf16.msra.mxu0 %v2999
        %4145 = vmatprep.subr.bf16.mxu0 %v2998
        %4146 = vmatpush2.bf16.msra.mxu0 %v2997
        %4147 = vmatprep.subr.bf16.mxu0 %v2996
        %4148 = vmatpush2.bf16.msra.mxu0 %v2995
        %4149 = vmatprep.subr.bf16.mxu0 %v2994
        %4150 = vmatpush2.bf16.msra.mxu0 %v2993
        %4151 = vmatprep.subr.bf16.mxu0 %v2992
        %4152 = vmatpush2.bf16.msra.mxu0 %v2991
        %4153 = vmatprep.subr.bf16.mxu0 %v2990
        %4154 = vmatpush2.bf16.msra.mxu0 %v2989
        %4155 = vmatprep.mubr.bf16.mxu0 %v952
        %4156 = vmatmul.mubr.bf16.gmra.mxu0 %v938
        %v4157 = vpop.f32.mrf.mxu0
        %v4158 = vadd.f32 %v4117, %v4157
        %v4159 = vpop.f32.mrf.mxu0
        %v4160 = vadd.f32 %v4119, %v4159
        %v4161 = vpop.f32.mrf.mxu0
        %v4162 = vpop.f32.mrf.mxu0
        %4163 = vdwg.mxu0
        %4164 = vmatprep.subr.bf16.mxu0 %v3020
        %4165 = vmatpush1.bf16.msra.mxu0 %v3019
        %4166 = vmatprep.subr.bf16.mxu0 %v3018
        %4167 = vmatpush1.bf16.msra.mxu0 %v3017
        %4168 = vmatprep.subr.bf16.mxu0 %v3016
        %4169 = vmatpush1.bf16.msra.mxu0 %v3015
        %4170 = vmatprep.subr.bf16.mxu0 %v3014
        %4171 = vmatpush1.bf16.msra.mxu0 %v3013
        %4172 = vmatprep.subr.bf16.mxu0 %v3012
        %4173 = vmatpush1.bf16.msra.mxu0 %v3011
        %4174 = vmatprep.subr.bf16.mxu0 %v3010
        %4175 = vmatpush1.bf16.msra.mxu0 %v3009
        %4176 = vmatprep.subr.bf16.mxu0 %v3008
        %4177 = vmatpush1.bf16.msra.mxu0 %v3007
        %4178 = vmatprep.subr.bf16.mxu0 %v3006
        %4179 = vmatpush1.bf16.msra.mxu0 %v3005
        %4180 = vmatprep.subr.bf16.mxu0 %v3036
        %4181 = vmatpush2.bf16.msra.mxu0 %v3035
        %4182 = vmatprep.subr.bf16.mxu0 %v3034
        %4183 = vmatpush2.bf16.msra.mxu0 %v3033
        %4184 = vmatprep.subr.bf16.mxu0 %v3032
        %4185 = vmatpush2.bf16.msra.mxu0 %v3031
        %4186 = vmatprep.subr.bf16.mxu0 %v3030
        %4187 = vmatpush2.bf16.msra.mxu0 %v3029
        %4188 = vmatprep.subr.bf16.mxu0 %v3028
        %4189 = vmatpush2.bf16.msra.mxu0 %v3027
        %4190 = vmatprep.subr.bf16.mxu0 %v3026
        %4191 = vmatpush2.bf16.msra.mxu0 %v3025
        %4192 = vmatprep.subr.bf16.mxu0 %v3024
        %4193 = vmatpush2.bf16.msra.mxu0 %v3023
        %4194 = vmatprep.subr.bf16.mxu0 %v3022
        %4195 = vmatpush2.bf16.msra.mxu0 %v3021
        %4196 = vmatprep.mubr.bf16.mxu0 %v956
        %4197 = vmatmul.mubr.bf16.gmra.mxu0 %v954
        %v4198 = vpop.f32.mrf.mxu0
        %v4199 = vadd.f32 %v4158, %v4198
        %v4200 = vpop.f32.mrf.mxu0
        %v4201 = vadd.f32 %v4160, %v4200
        %v4202 = vpop.f32.mrf.mxu0
        %v4203 = vpop.f32.mrf.mxu0
        %4204 = vdwg.mxu0
        %v4207 = vcombine.low %v4199, %v4201
        %v4209 = vunpack.c.l.s4 1983009808
        %v4210 = vunpack.c.0.s8 %v4209
        %v4211 = vlaneseq
        %v4212 = vshrl.u32 %v4211, 7
        %v4213 = vsub.s32 %v4210, %v4212
        %v4214 = vrot.slane %v4207, %v4213
        %v4216 = vadd.f32 %v240, %v4214
        %4217 = vst [vmem:[#allocation2] sm:$0xf] %v4216
        %p4218 = scmp.eq.s32.totalorder %s17, 1
        // Predicated region
        $region45: #{forward.5} parent=39 // pred_check
          %p4219 = pneg %p4218
        $region46: #{forward.5} parent=39 // pred_check_branch
          %4221 = sbr.rel (%p4219) target = $region48
        $region47: #{forward.5} parent=39 // pred_region
          %v4222 = vld [vmem:[#allocation2] sm:$0xf]
          %v4223 = vld [vmem:[%s2] sm:$0x3]
          %v4225 = vlaneseq
          %v4226 = vshrl.u32 %v4225, 7
          %v4227 = vsub.s32 0, %v4226
          %v4228 = vrot.slane %v4223, %v4227
          %v4229 = vlaneseq
          %v4230 = vshrl.u32 %v4229, 7
          %v4231 = vsub.s32 1, %v4230
          %v4232 = vrot.slane %v4223, %v4231
          %v4233 = vcombine.low %v4228, %v4232
          %v4235 = vunpack.c.l.s4 1983009808
          %v4236 = vunpack.c.0.s8 %v4235
          %v4237 = vlaneseq
          %v4238 = vshrl.u32 %v4237, 7
          %v4239 = vsub.s32 %v4236, %v4238
          %v4240 = vrot.slane %v4233, %v4239
          %v4242 = vadd.f32 %v4222, %v4240
          %v4243 = vmax.f32 %v4242, 0.0
          %v4244 = vld [vmem:[%s3] sm:$0xff]
          %v4245 = vld [vmem:[%s3 + $0x8] sm:$0xff]
          %v4246 = vld [vmem:[%s3 + $0x10] sm:$0xff]
          %v4247 = vld [vmem:[%s3 + $0x18] sm:$0xff]
          %v4248 = vld [vmem:[%s3 + $0x20] sm:$0xff]
          %v4249 = vld [vmem:[%s3 + $0x28] sm:$0xff]
          %v4250 = vld [vmem:[%s3 + $0x30] sm:$0xff]
          %v4251 = vld [vmem:[%s3 + $0x38] sm:$0xff]
          %v4252 = vld [vmem:[%s3 + $0x40] sm:$0xff]
          %v4253 = vld [vmem:[%s3 + $0x48] sm:$0xff]
          %v4254 = vld [vmem:[%s3 + $0x50] sm:$0xff]
          %v4255 = vld [vmem:[%s3 + $0x58] sm:$0xff]
          %v4256 = vld [vmem:[%s3 + $0x60] sm:$0xff]
          %v4257 = vld [vmem:[%s3 + $0x68] sm:$0xff]
          %v4258 = vld [vmem:[%s3 + $0x70] sm:$0xff]
          %v4259 = vld [vmem:[%s3 + $0x78] sm:$0xff]
          %v4260 = vld [vmem:[%s3 + $0x80] sm:$0xff]
          %v4261 = vld [vmem:[%s3 + $0x88] sm:$0xff]
          %v4262 = vld [vmem:[%s3 + $0x90] sm:$0xff]
          %v4263 = vld [vmem:[%s3 + $0x98] sm:$0xff]
          %v4264 = vld [vmem:[%s3 + $0xa0] sm:$0xff]
          %v4265 = vld [vmem:[%s3 + $0xa8] sm:$0xff]
          %v4266 = vld [vmem:[%s3 + $0xb0] sm:$0xff]
          %v4267 = vld [vmem:[%s3 + $0xb8] sm:$0xff]
          %v4268 = vld [vmem:[%s3 + $0xc0] sm:$0xff]
          %v4269 = vld [vmem:[%s3 + $0xc8] sm:$0xff]
          %v4270 = vld [vmem:[%s3 + $0xd0] sm:$0xff]
          %v4271 = vld [vmem:[%s3 + $0xd8] sm:$0xff]
          %v4272 = vld [vmem:[%s3 + $0xe0] sm:$0xff]
          %v4273 = vld [vmem:[%s3 + $0xe8] sm:$0xff]
          %v4274 = vld [vmem:[%s3 + $0xf0] sm:$0xff]
          %v4275 = vld [vmem:[%s3 + $0xf8] sm:$0xff]
          %v4276 = vld [vmem:[%s4] sm:$0x1]
          %v4278 = vlaneseq
          %v4279 = vshrl.u32 %v4278, 7
          %v4280 = vsub.s32 0, %v4279
          %v4281 = vrot.slane %v4276, %v4280
          %v4285 = vunpack.c.l.s4 1983009808
          %v4286 = vunpack.c.0.s8 %v4285
          %v4287 = vlaneseq
          %v4288 = vshrl.u32 %v4287, 7
          %v4289 = vsub.s32 %v4286, %v4288
          %v4290 = vrot.slane %v4243, %v4289
          %v4291 = vcombine.high %v4290, %v4290
          %4294 = vmatprep.subr.mxu0 0.0
          %4295 = vmatpush1.msra.mxu0 %v4259
          %4296 = vmatprep.subr.mxu0 0.0
          %4297 = vmatpush1.msra.mxu0 %v4258
          %4298 = vmatprep.subr.mxu0 0.0
          %4299 = vmatpush1.msra.mxu0 %v4257
          %4300 = vmatprep.subr.mxu0 0.0
          %4301 = vmatpush1.msra.mxu0 %v4256
          %4302 = vmatprep.subr.mxu0 0.0
          %4303 = vmatpush1.msra.mxu0 %v4255
          %4304 = vmatprep.subr.mxu0 0.0
          %4305 = vmatpush1.msra.mxu0 %v4254
          %4306 = vmatprep.subr.mxu0 0.0
          %4307 = vmatpush1.msra.mxu0 %v4253
          %4308 = vmatprep.subr.mxu0 0.0
          %4309 = vmatpush1.msra.mxu0 %v4252
          %4310 = vmatprep.subr.mxu0 0.0
          %4311 = vmatpush1.msra.mxu0 %v4251
          %4312 = vmatprep.subr.mxu0 0.0
          %4313 = vmatpush1.msra.mxu0 %v4250
          %4314 = vmatprep.subr.mxu0 0.0
          %4315 = vmatpush1.msra.mxu0 %v4249
          %4316 = vmatprep.subr.mxu0 0.0
          %4317 = vmatpush1.msra.mxu0 %v4248
          %4318 = vmatprep.subr.mxu0 0.0
          %4319 = vmatpush1.msra.mxu0 %v4247
          %4320 = vmatprep.subr.mxu0 0.0
          %4321 = vmatpush1.msra.mxu0 %v4246
          %4322 = vmatprep.subr.mxu0 0.0
          %4323 = vmatpush1.msra.mxu0 %v4245
          %4324 = vmatprep.subr.mxu0 0.0
          %4325 = vmatpush1.msra.mxu0 %v4244
          %4326 = vmatprep.subr.mxu0 0.0
          %4327 = vmatpush2.msra.mxu0 %v4275
          %4328 = vmatprep.subr.mxu0 0.0
          %4329 = vmatpush2.msra.mxu0 %v4274
          %4330 = vmatprep.subr.mxu0 0.0
          %4331 = vmatpush2.msra.mxu0 %v4273
          %4332 = vmatprep.subr.mxu0 0.0
          %4333 = vmatpush2.msra.mxu0 %v4272
          %4334 = vmatprep.subr.mxu0 0.0
          %4335 = vmatpush2.msra.mxu0 %v4271
          %4336 = vmatprep.subr.mxu0 0.0
          %4337 = vmatpush2.msra.mxu0 %v4270
          %4338 = vmatprep.subr.mxu0 0.0
          %4339 = vmatpush2.msra.mxu0 %v4269
          %4340 = vmatprep.subr.mxu0 0.0
          %4341 = vmatpush2.msra.mxu0 %v4268
          %4342 = vmatprep.subr.mxu0 0.0
          %4343 = vmatpush2.msra.mxu0 %v4267
          %4344 = vmatprep.subr.mxu0 0.0
          %4345 = vmatpush2.msra.mxu0 %v4266
          %4346 = vmatprep.subr.mxu0 0.0
          %4347 = vmatpush2.msra.mxu0 %v4265
          %4348 = vmatprep.subr.mxu0 0.0
          %4349 = vmatpush2.msra.mxu0 %v4264
          %4350 = vmatprep.subr.mxu0 0.0
          %4351 = vmatpush2.msra.mxu0 %v4263
          %4352 = vmatprep.subr.mxu0 0.0
          %4353 = vmatpush2.msra.mxu0 %v4262
          %4354 = vmatprep.subr.mxu0 0.0
          %4355 = vmatpush2.msra.mxu0 %v4261
          %4356 = vmatprep.subr.mxu0 0.0
          %4357 = vmatpush2.msra.mxu0 %v4260
          %4358 = vmatprep.mubr.f32.mxu0 %v4291
          %4359 = vmatmul.mubr.f32.gmra.mxu0 %v4290
          %v4360 = vpop.f32.mrf.mxu0
          %v4361 = vadd.f32 %v4281, %v4360
          %v4362 = vpop.f32.mrf.mxu0
          %4363 = vdwg.mxu0
          %vm4364 = vcmask 74752
          %4365 = vst.msk [vmem:[#allocation3] sm:$0x3] %vm4364, %v4361
        $region48: #{forward.5} parent=39 // pred_fallthru
          _
        // Predicated region
        $region49: #{forward.5} parent=39 // pred_check
          %p4366 = pneg %p145
        $region50: #{forward.5} parent=39 // pred_check_branch
          %4368 = sbr.rel (%p4366) target = $region52
        $region51: #{forward.5} parent=39 // pred_region
          %s4370 = ssub.s32 32, 32
          %4371 = vsyncadd [#allocation4], %s4370
          %s4373 = sshll.u32 [#allocation3], 4
          %s4374 = int_to_ptr.vmem [resolvable:$true] %s4373
          %4376 = dma.vmem_to_hbm [thread:$0]  %s4374, 32, %s5, [#allocation4]
        $region52: #{forward.5} parent=39 // pred_fallthru
          _
        // Predicated region
        $region53: #{forward.5} parent=39 // pred_check
          %p4377 = pneg %p145
        $region54: #{forward.5} parent=39 // pred_check_branch
          %4379 = sbr.rel (%p4377) target = $region56
        $region55: #{forward.5} parent=39 // pred_region
          %4380 = dma.done [#allocation4], 32
        $region56: #{forward.5} parent=39 // pred_fallthru
          _
      $region40: #{forward.5} parent=5 // pred_fallthru
        _
      %p4381 = scmp.le.s32.totalorder 2, %s12
      // Predicated region
      $region57: #{forward.5} parent=5 // pred_check
        %p4382 = pneg %p4381
      $region58: #{forward.5} parent=5 // pred_check_branch
        %4384 = sbr.rel (%p4382) target = $region60
      $region59: #{forward.5} parent=5 // pred_region
        %s4385 = ssub.s32 %s12, 2
      $region60: #{forward.5} parent=5 // pred_fallthru
        _
    $region6: #{forward.5} parent=1 // loop_footer
      %s16 = sadd.s32 1, %s12
    $region7: #{forward.5} parent=1 // loop_footer_branch
      %11 = sbr.rel target = $region3
    $region8: #{forward.5} parent=1 // loop_exit
      _
    %4386 = vsyncpa [#allocation4], 1
    %s4387 = scalar_lea.sflag [#allocation4], 1
    %4388 = vsyncpa %s4387, 1

</llo_original>
